<compile_context>
chip_gen: v7x
topology: tpu7x:2x2x1
jax: 0.10.0
libtpu: 0.0.40
codegen_flags: <defaults>
</compile_context>

<pallas_src>
import jax
import jax.numpy as jnp
from jax.experimental import pallas as pl
from jax.experimental.pallas import tpu as pltpu

_VMEM = pl.BlockSpec(memory_space=pltpu.MemorySpace.VMEM)
_EPS = 1e-5  # nn.BatchNorm2d default


def _round_up(x, m):
    return (x + m - 1) // m * m


def _pack_conv_weight(w_oihw, cp):
    """(Cout, Cin, 3, 3) -> (3, 3*cp, cp) bf16.

    Per row-tap di the three column-taps dj are stacked along the contraction
    dim (row index = dj*cp + ci), zero padded in both channel dims.
    """
    cout, cin, kh, kw = w_oihw.shape
    w = jnp.transpose(w_oihw, (2, 3, 1, 0))                       # (kh,kw,cin,cout)
    w = jnp.pad(w, ((0, 0), (0, 0), (0, cp - cin), (0, cp - cout)))
    return w.reshape(kh, kw * cp, cp).astype(jnp.bfloat16)


# --------------------------------------------------------------------------
# Fused BasicBlock kernel
# --------------------------------------------------------------------------

def _make_block_kernel(n, cin, cout, h, w, ho, wo, cp, stride, eps=_EPS):
    m_in = n * h * w
    m_out = n * ho * wo
    bf16 = jnp.bfloat16
    f32 = jnp.float32

    def _bn_train(x2, g, b):
        # Training-mode batch stats; centered variance (numerically stable).
        mu = jnp.mean(x2, axis=0, keepdims=True)
        xc = x2 - mu
        var = jnp.mean(xc * xc, axis=0, keepdims=True)
        return xc * jax.lax.rsqrt(var + eps) * g + b

    def _pad_lanes(v, width):
        c = v.shape[-1]
        if width == c:
            return v
        return jnp.concatenate(
            [v, jnp.zeros(v.shape[:-1] + (width - c,), v.dtype)], axis=-1)

    def _zero_halo(ref, rows, cols):
        # Zero only the requested 1-wide halo rows / columns; the interior is
        # written exactly once by the caller (no double vst traffic).
        n_, hh, ww, c_ = ref.shape
        zrow = jnp.zeros((n_, 1, ww, c_), ref.dtype)
        zcol = jnp.zeros((n_, hh, 1, c_), ref.dtype)
        for r in rows:
            ref[:, pl.ds(r, 1), :, :] = zrow
        for c in cols:
            ref[:, :, pl.ds(c, 1), :] = zcol

    def _conv3x3(tap, w_ref):
        # Three K=3*cp matmuls per conv (column taps folded into the
        # contraction dim), accumulated in traced values — no VMEM
        # accumulator round-trips.
        acc = None
        for di in range(3):
            slab = jnp.concatenate([tap(di, 0), tap(di, 1), tap(di, 2)], axis=-1)
            part = jnp.dot(slab, w_ref[di], preferred_element_type=f32)
            acc = part if acc is None else acc + part
        return acc

    def kernel(*refs):
        if stride == 2:
            (x_ref, w1_ref, w2_ref, g1, b1, g2, b2, g3, b3, o_ref,
             p00, p01, p10, p11, hpad_ref) = refs
        else:
            (x_ref, w1_ref, w2_ref, g1, b1, g2, b2, g3, b3, o_ref,
             xpad_ref, hpad_ref) = refs

        # ---- bn1(x) on the real cin channels, then zero-pad lanes to cp ----
        xall = x_ref[...]                                    # f32, real cin
        x2 = xall.reshape(m_in, cin)
        xn = _pad_lanes(_bn_train(x2, g1[...], b1[...]), cp).astype(bf16)

        # ---- stage bn1(x) into spatially padded bf16 VMEM scratch -----------
        if stride == 2:
            # x arrives split into its four 2x2-parity planes; each plane gets
            # a 1-pixel leading halo so every stride-2 conv tap is a plain
            # (unstrided) slice.
            planes = ((p00, p01), (p10, p11))
            xn4 = xn.reshape(4, n, ho, wo, cp)
            for p in range(2):
                for q in range(2):
                    ref = planes[p][q]
                    _zero_halo(ref, rows=(0,), cols=(0,))
                    ref[:, pl.ds(1, ho), pl.ds(1, wo), :] = xn4[2 * p + q]

            _PAR = (1, 0, 1)   # parity plane used by tap offset d in {0,1,2}
            _OFF = (0, 1, 1)   # slice start inside the 1-halo parity plane

            def tap1(di, dj):
                ref = planes[_PAR[di]][_PAR[dj]]
                blk = ref[:, pl.ds(_OFF[di], ho), pl.ds(_OFF[dj], wo), :]
                return blk.reshape(m_out, cp)

            # 2x2 avg-pool shortcut = mean of the four raw parity planes (VPU).
            sc = jnp.mean(xall, axis=0).reshape(m_out, cin)
        else:
            _zero_halo(xpad_ref, rows=(0, h + 1), cols=(0, w + 1))
            xpad_ref[:, pl.ds(1, h), pl.ds(1, w), :] = xn.reshape(n, h, w, cp)

            def tap1(di, dj):
                blk = xpad_ref[:, pl.ds(di, h), pl.ds(dj, w), :]
                return blk.reshape(m_in, cp)

            sc = x2                                          # identity shortcut

        # ---- conv1 -> relu(bn2) ---------------------------------------------
        acc1 = _conv3x3(tap1, w1_ref)                        # (m_out, cp) f32
        h1 = jnp.maximum(_bn_train(acc1, g2[...], b2[...]), 0.0).astype(bf16)

        # ---- conv2 (stride 1) -------------------------------------------------
        _zero_halo(hpad_ref, rows=(0, ho + 1), cols=(0, wo + 1))
        hpad_ref[:, pl.ds(1, ho), pl.ds(1, wo), :] = h1.reshape(n, ho, wo, cp)

        def tap2(di, dj):
            blk = hpad_ref[:, pl.ds(di, ho), pl.ds(dj, wo), :]
            return blk.reshape(m_out, cp)

        acc2 = _conv3x3(tap2, w2_ref)                        # (m_out, cp) f32

        # ---- bn3 + shortcut (channel zero-pad via _pad_lanes) + residual ----
        y = _bn_train(acc2, g3[...], b3[...])
        out = y + _pad_lanes(sc, cp)
        o_ref[...] = out[:, :cout].reshape(n, ho, wo, cout)

    return kernel


def basic_block_forward(x_nchw, params, stride):
    """Forward of BasicBlock (training-mode BN), NCHW f32 in / NCHW f32 out."""
    assert stride in (1, 2)
    n, cin, h, w = x_nchw.shape
    cout = params["conv1_w"].shape[0]
    if stride == 2:
        assert h % 2 == 0 and w % 2 == 0
    ho = (h + 2 - 3) // stride + 1
    wo = (w + 2 - 3) // stride + 1
    # Keep the in-kernel row-merge reshapes layout-trivial.
    assert w % 8 == 0 and wo % 8 == 0

    cp = _round_up(max(cin, cout), 128)   # MXU lane width used inside the kernel

    x = jnp.transpose(x_nchw, (0, 2, 3, 1)).astype(jnp.float32)   # NHWC, real cin
    if stride == 2:
        # Split into the four 2x2-parity planes (pure relayout, 1x HBM traffic):
        # plane k = 2p+q holds x[:, 2i+p, 2j+q, :].
        x_in = (x.reshape(n, ho, 2, wo, 2, cin)
                 .transpose(2, 4, 0, 1, 3, 5)
                 .reshape(4, n, ho, wo, cin))
    else:
        x_in = x

    def bn_vec(v, c, width):
        v = v.astype(jnp.float32).reshape(1, c)
        return jnp.pad(v, ((0, 0), (0, width - c))) if width > c else v

    args = [
        x_in,
        _pack_conv_weight(params["conv1_w"], cp),
        _pack_conv_weight(params["conv2_w"], cp),
        bn_vec(params["bn1_g"], cin, cin), bn_vec(params["bn1_b"], cin, cin),
        bn_vec(params["bn2_g"], cout, cp), bn_vec(params["bn2_b"], cout, cp),
        bn_vec(params["bn3_g"], cout, cp), bn_vec(params["bn3_b"], cout, cp),
    ]

    if stride == 2:
        act_scratch = [pltpu.VMEM((n, ho + 1, wo + 1, cp), jnp.bfloat16)
                       for _ in range(4)]
        act_bytes = 4 * n * (ho + 1) * (wo + 1) * cp * 2
    else:
        act_scratch = [pltpu.VMEM((n, h + 2, w + 2, cp), jnp.bfloat16)]
        act_bytes = n * (h + 2) * (w + 2) * cp * 2
    scratch_shapes = act_scratch + [pltpu.VMEM((n, ho + 2, wo + 2, cp), jnp.bfloat16)]

    # Size the scoped-VMEM limit from the real operand + scratch footprint
    # (2x headroom for compiler temporaries / spilled traced accumulators).
    vmem_bytes = (n * h * w * cin * 4                       # input
                  + 2 * 3 * (3 * cp) * cp * 2               # two bf16 weight stacks
                  + 2 * cin * 4 + 4 * cp * 4                # BN scale/shift vectors
                  + n * ho * wo * cout * 4                  # output
                  + act_bytes                               # padded bn1(x) scratch
                  + n * (ho + 2) * (wo + 2) * cp * 2        # padded hidden scratch
                  + 3 * (n * ho * wo) * cp * 4)             # live f32 activations
    vmem_limit = int(min(max(2 * vmem_bytes + (8 << 20), 32 << 20), 96 << 20))

    kernel = _make_block_kernel(n, cin, cout, h, w, ho, wo, cp, stride)
    out = pl.pallas_call(
        kernel,
        out_shape=jax.ShapeDtypeStruct((n, ho, wo, cout), jnp.float32),
        in_specs=[_VMEM] * len(args),
        out_specs=_VMEM,
        scratch_shapes=scratch_shapes,
        compiler_params=pltpu.CompilerParams(vmem_limit_bytes=vmem_limit),
    )(*args)

    return jnp.transpose(out, (0, 3, 1, 2))                 # back to NCHW


# --------------------------------------------------------------------------
# Pure-JAX reference (for the correctness check)
# --------------------------------------------------------------------------

def _block_ref_nchw(x_nchw, p, stride):
    x = jnp.transpose(x_nchw, (0, 2, 3, 1)).astype(jnp.float32)

    def bn(t, g, b, eps=_EPS):
        mu = jnp.mean(t, axis=(0, 1, 2), keepdims=True)
        var = jnp.mean((t - mu) ** 2, axis=(0, 1, 2), keepdims=True)
        return (t - mu) * jax.lax.rsqrt(var + eps) * g + b

    def conv(t, w_oihw, s):
        return jax.lax.conv_general_dilated(
            t, jnp.transpose(w_oihw, (2, 3, 1, 0)), (s, s), ((1, 1), (1, 1)),
            dimension_numbers=("NHWC", "HWIO", "NHWC"),
            precision=jax.lax.Precision.HIGHEST)

    y = conv(bn(x, p["bn1_g"], p["bn1_b"]), p["conv1_w"], stride)
    y = jnp.maximum(bn(y, p["bn2_g"], p["bn2_b"]), 0.0)
    y = conv(y, p["conv2_w"], 1)
    y = bn(y, p["bn3_g"], p["bn3_b"])
    if stride == 2:
        n, h, w, c = x.shape
        sc = x.reshape(n, h // 2, 2, w // 2, 2, c).mean(axis=(2, 4))
    else:
        sc = x
    cin, cout = x.shape[-1], y.shape[-1]
    if cout != cin:
        sc = jnp.pad(sc, ((0, 0), (0, 0), (0, 0), (0, cout - cin)))
    return jnp.transpose(y + sc, (0, 3, 1, 2))


# --------------------------------------------------------------------------
# Parameters & main
# --------------------------------------------------------------------------

def build_block_params(key, cin, cout):
    ks = jax.random.split(key, 5)

    def bn(k, c):
        kg, kb = jax.random.split(k)
        return (1.0 + 0.1 * jax.random.normal(kg, (c,), jnp.float32),
                0.1 * jax.random.normal(kb, (c,), jnp.float32))

    p = {}
    p["bn1_g"], p["bn1_b"] = bn(ks[0], cin)
    p["conv1_w"] = 0.1 * jax.random.normal(ks[1], (cout, cin, 3, 3), jnp.float32)
    p["bn2_g"], p["bn2_b"] = bn(ks[2], cout)
    p["conv2_w"] = 0.1 * jax.random.normal(ks[3], (cout, cout, 3, 3), jnp.float32)
    p["bn3_g"], p["bn3_b"] = bn(ks[4], cout)
    return p


if __name__ == "__main__":
    key = jax.random.PRNGKey(0)
    kx, kp1, kp2, kp3 = jax.random.split(key, 4)

    n, cin, cout, h, w = 2, 16, 24, 16, 16
    x = jax.random.normal(kx, (n, cin, h, w), jnp.float32)

    # Downsampling block: stride=2 -> 2x2 avg-pool shortcut + channel zero-pad.
    p_down = build_block_params(kp1, cin, cout)
    out_down = jax.block_until_ready(basic_block_forward(x, p_down, stride=2))
    assert out_down.shape == (n, cout, h // 2, w // 2)
    err = float(jnp.max(jnp.abs(out_down - _block_ref_nchw(x, p_down, 2))))
    assert err < 1e-1, f"stride-2 block mismatch: max abs err {err}"

    # Identity-shortcut block: stride=1, cin == cout.
    p_id = build_block_params(kp2, cin, cin)
    out_id = jax.block_until_ready(basic_block_forward(x, p_id, stride=1))
    assert out_id.shape == (n, cin, h, w)
    err = float(jnp.max(jnp.abs(out_id - _block_ref_nchw(x, p_id, 1))))
    assert err < 1e-1, f"stride-1 block mismatch: max abs err {err}"

    # Channel-increasing block: stride=1, cout > cin (identity + zero-pad).
    p_wide = build_block_params(kp3, cin, cout)
    out_wide = jax.block_until_ready(basic_block_forward(x, p_wide, stride=1))
    assert out_wide.shape == (n, cout, h, w)
    err = float(jnp.max(jnp.abs(out_wide - _block_ref_nchw(x, p_wide, 1))))
    assert err < 1e-1, f"stride-1 widening block mismatch: max abs err {err}"

    print("KERNEL_OK")
</pallas_src>

<mosaic_0001>
module attributes {stable_mosaic.version = 11 : i64} {
  func.func @kernel(%arg0: memref<4x2x8x8x16xf32, #tpu.memory_space<vmem>>, %arg1: memref<3x384x128xbf16, #tpu.memory_space<vmem>>, %arg2: memref<3x384x128xbf16, #tpu.memory_space<vmem>>, %arg3: memref<1x16xf32, #tpu.memory_space<vmem>>, %arg4: memref<1x16xf32, #tpu.memory_space<vmem>>, %arg5: memref<1x128xf32, #tpu.memory_space<vmem>>, %arg6: memref<1x128xf32, #tpu.memory_space<vmem>>, %arg7: memref<1x128xf32, #tpu.memory_space<vmem>>, %arg8: memref<1x128xf32, #tpu.memory_space<vmem>>, %arg9: memref<2x8x8x24xf32, #tpu.memory_space<vmem>>, %arg10: memref<2x9x9x128xbf16, #tpu.memory_space<vmem>>, %arg11: memref<2x9x9x128xbf16, #tpu.memory_space<vmem>>, %arg12: memref<2x9x9x128xbf16, #tpu.memory_space<vmem>>, %arg13: memref<2x9x9x128xbf16, #tpu.memory_space<vmem>>, %arg14: memref<2x10x10x128xbf16, #tpu.memory_space<vmem>>) attributes {dimension_semantics = [], scalar_prefetch = 0 : i64, scratch_operands = 5 : i64, tpu.core_type = #tpu.core_type<tc>} {
    %c0 = arith.constant 0 : index
    %c0_0 = arith.constant 0 : index
    %c0_1 = arith.constant 0 : index
    %c0_2 = arith.constant 0 : index
    %c0_3 = arith.constant 0 : index
    %0 = vector.load %arg0[%c0, %c0_0, %c0_1, %c0_2, %c0_3] : memref<4x2x8x8x16xf32, #tpu.memory_space<vmem>>, vector<4x2x8x8x16xf32>
    %1 = vector.shape_cast %0 : vector<4x2x8x8x16xf32> to vector<512x16xf32>
    %c0_4 = arith.constant 0 : index
    %c0_5 = arith.constant 0 : index
    %2 = vector.load %arg3[%c0_4, %c0_5] : memref<1x16xf32, #tpu.memory_space<vmem>>, vector<1x16xf32>
    %c0_6 = arith.constant 0 : index
    %c0_7 = arith.constant 0 : index
    %3 = vector.load %arg4[%c0_6, %c0_7] : memref<1x16xf32, #tpu.memory_space<vmem>>, vector<1x16xf32>
    %cst = arith.constant dense<0.000000e+00> : vector<16xf32>
    %4 = vector.multi_reduction <add>, %1, %cst [0] : vector<512x16xf32> to vector<16xf32>
    %5 = vector.shape_cast %4 : vector<16xf32> to vector<1x16xf32>
    %cst_8 = arith.constant 5.120000e+02 : f32
    %6 = vector.broadcast %cst_8 : f32 to vector<1x16xf32>
    %7 = arith.divf %5, %6 : vector<1x16xf32>
    %8 = vector.broadcast %7 : vector<1x16xf32> to vector<512x16xf32>
    %9 = arith.subf %1, %8 : vector<512x16xf32>
    %10 = arith.mulf %9, %9 : vector<512x16xf32>
    %cst_9 = arith.constant dense<0.000000e+00> : vector<16xf32>
    %11 = vector.multi_reduction <add>, %10, %cst_9 [0] : vector<512x16xf32> to vector<16xf32>
    %12 = vector.shape_cast %11 : vector<16xf32> to vector<1x16xf32>
    %cst_10 = arith.constant 5.120000e+02 : f32
    %13 = vector.broadcast %cst_10 : f32 to vector<1x16xf32>
    %14 = arith.divf %12, %13 : vector<1x16xf32>
    %cst_11 = arith.constant 9.99999974E-6 : f32
    %15 = vector.broadcast %cst_11 : f32 to vector<1x16xf32>
    %16 = arith.addf %14, %15 : vector<1x16xf32>
    %17 = math.rsqrt %16 : vector<1x16xf32>
    %18 = vector.broadcast %17 : vector<1x16xf32> to vector<512x16xf32>
    %19 = arith.mulf %9, %18 : vector<512x16xf32>
    %20 = vector.broadcast %2 : vector<1x16xf32> to vector<512x16xf32>
    %21 = arith.mulf %19, %20 : vector<512x16xf32>
    %22 = vector.broadcast %3 : vector<1x16xf32> to vector<512x16xf32>
    %23 = arith.addf %21, %22 : vector<512x16xf32>
    %cst_12 = arith.constant 0.000000e+00 : f32
    %24 = vector.broadcast %cst_12 : f32 to vector<512x112xf32>
    %25 = tpu.concatenate %23, %24 in 1 : vector<512x16xf32>, vector<512x112xf32> -> vector<512x128xf32>
    %26 = arith.truncf %25 : vector<512x128xf32> to vector<512x128xbf16>
    %27 = vector.shape_cast %26 : vector<512x128xbf16> to vector<4x2x8x8x128xbf16>
    %cst_13 = arith.constant 0.000000e+00 : bf16
    %28 = vector.broadcast %cst_13 : bf16 to vector<2x1x9x128xbf16>
    %cst_14 = arith.constant 0.000000e+00 : bf16
    %29 = vector.broadcast %cst_14 : bf16 to vector<2x9x1x128xbf16>
    %c0_15 = arith.constant 0 : index
    %c0_16 = arith.constant 0 : index
    %c0_17 = arith.constant 0 : index
    %c0_18 = arith.constant 0 : index
    %30 = vector.load %arg10[%c0_15, %c0_16, %c0_17, %c0_18] : memref<2x9x9x128xbf16, #tpu.memory_space<vmem>>, vector<2x1x9x128xbf16>
    tpu.vector_store %arg10[%c0_15, %c0_16, %c0_17, %c0_18], %28 {strides = array<i32>} : memref<2x9x9x128xbf16, #tpu.memory_space<vmem>>, vector<2x1x9x128xbf16>,
    %c0_19 = arith.constant 0 : index
    %c0_20 = arith.constant 0 : index
    %c0_21 = arith.constant 0 : index
    %c0_22 = arith.constant 0 : index
    %31 = vector.load %arg10[%c0_19, %c0_20, %c0_21, %c0_22] : memref<2x9x9x128xbf16, #tpu.memory_space<vmem>>, vector<2x9x1x128xbf16>
    tpu.vector_store %arg10[%c0_19, %c0_20, %c0_21, %c0_22], %29 {strides = array<i32>} : memref<2x9x9x128xbf16, #tpu.memory_space<vmem>>, vector<2x9x1x128xbf16>,
    %32 = vector.extract_strided_slice %27 {offsets = [0, 0, 0, 0, 0], sizes = [1, 2, 8, 8, 128], strides = [1, 1, 1, 1, 1]} : vector<4x2x8x8x128xbf16> to vector<1x2x8x8x128xbf16>
    %33 = vector.shape_cast %32 : vector<1x2x8x8x128xbf16> to vector<2x8x8x128xbf16>
    %c0_23 = arith.constant 0 : index
    %c1 = arith.constant 1 : index
    %c1_24 = arith.constant 1 : index
    %c0_25 = arith.constant 0 : index
    %34 = vector.load %arg10[%c0_23, %c1, %c1_24, %c0_25] : memref<2x9x9x128xbf16, #tpu.memory_space<vmem>>, vector<2x8x8x128xbf16>
    tpu.vector_store %arg10[%c0_23, %c1, %c1_24, %c0_25], %33 {strides = array<i32>} : memref<2x9x9x128xbf16, #tpu.memory_space<vmem>>, vector<2x8x8x128xbf16>,
    %cst_26 = arith.constant 0.000000e+00 : bf16
    %35 = vector.broadcast %cst_26 : bf16 to vector<2x1x9x128xbf16>
    %cst_27 = arith.constant 0.000000e+00 : bf16
    %36 = vector.broadcast %cst_27 : bf16 to vector<2x9x1x128xbf16>
    %c0_28 = arith.constant 0 : index
    %c0_29 = arith.constant 0 : index
    %c0_30 = arith.constant 0 : index
    %c0_31 = arith.constant 0 : index
    %37 = vector.load %arg11[%c0_28, %c0_29, %c0_30, %c0_31] : memref<2x9x9x128xbf16, #tpu.memory_space<vmem>>, vector<2x1x9x128xbf16>
    tpu.vector_store %arg11[%c0_28, %c0_29, %c0_30, %c0_31], %35 {strides = array<i32>} : memref<2x9x9x128xbf16, #tpu.memory_space<vmem>>, vector<2x1x9x128xbf16>,
    %c0_32 = arith.constant 0 : index
    %c0_33 = arith.constant 0 : index
    %c0_34 = arith.constant 0 : index
    %c0_35 = arith.constant 0 : index
    %38 = vector.load %arg11[%c0_32, %c0_33, %c0_34, %c0_35] : memref<2x9x9x128xbf16, #tpu.memory_space<vmem>>, vector<2x9x1x128xbf16>
    tpu.vector_store %arg11[%c0_32, %c0_33, %c0_34, %c0_35], %36 {strides = array<i32>} : memref<2x9x9x128xbf16, #tpu.memory_space<vmem>>, vector<2x9x1x128xbf16>,
    %39 = vector.extract_strided_slice %27 {offsets = [1, 0, 0, 0, 0], sizes = [1, 2, 8, 8, 128], strides = [1, 1, 1, 1, 1]} : vector<4x2x8x8x128xbf16> to vector<1x2x8x8x128xbf16>
    %40 = vector.shape_cast %39 : vector<1x2x8x8x128xbf16> to vector<2x8x8x128xbf16>
    %c0_36 = arith.constant 0 : index
    %c1_37 = arith.constant 1 : index
    %c1_38 = arith.constant 1 : index
    %c0_39 = arith.constant 0 : index
    %41 = vector.load %arg11[%c0_36, %c1_37, %c1_38, %c0_39] : memref<2x9x9x128xbf16, #tpu.memory_space<vmem>>, vector<2x8x8x128xbf16>
    tpu.vector_store %arg11[%c0_36, %c1_37, %c1_38, %c0_39], %40 {strides = array<i32>} : memref<2x9x9x128xbf16, #tpu.memory_space<vmem>>, vector<2x8x8x128xbf16>,
    %cst_40 = arith.constant 0.000000e+00 : bf16
    %42 = vector.broadcast %cst_40 : bf16 to vector<2x1x9x128xbf16>
    %cst_41 = arith.constant 0.000000e+00 : bf16
    %43 = vector.broadcast %cst_41 : bf16 to vector<2x9x1x128xbf16>
    %c0_42 = arith.constant 0 : index
    %c0_43 = arith.constant 0 : index
    %c0_44 = arith.constant 0 : index
    %c0_45 = arith.constant 0 : index
    %44 = vector.load %arg12[%c0_42, %c0_43, %c0_44, %c0_45] : memref<2x9x9x128xbf16, #tpu.memory_space<vmem>>, vector<2x1x9x128xbf16>
    tpu.vector_store %arg12[%c0_42, %c0_43, %c0_44, %c0_45], %42 {strides = array<i32>} : memref<2x9x9x128xbf16, #tpu.memory_space<vmem>>, vector<2x1x9x128xbf16>,
    %c0_46 = arith.constant 0 : index
    %c0_47 = arith.constant 0 : index
    %c0_48 = arith.constant 0 : index
    %c0_49 = arith.constant 0 : index
    %45 = vector.load %arg12[%c0_46, %c0_47, %c0_48, %c0_49] : memref<2x9x9x128xbf16, #tpu.memory_space<vmem>>, vector<2x9x1x128xbf16>
    tpu.vector_store %arg12[%c0_46, %c0_47, %c0_48, %c0_49], %43 {strides = array<i32>} : memref<2x9x9x128xbf16, #tpu.memory_space<vmem>>, vector<2x9x1x128xbf16>,
    %46 = vector.extract_strided_slice %27 {offsets = [2, 0, 0, 0, 0], sizes = [1, 2, 8, 8, 128], strides = [1, 1, 1, 1, 1]} : vector<4x2x8x8x128xbf16> to vector<1x2x8x8x128xbf16>
    %47 = vector.shape_cast %46 : vector<1x2x8x8x128xbf16> to vector<2x8x8x128xbf16>
    %c0_50 = arith.constant 0 : index
    %c1_51 = arith.constant 1 : index
    %c1_52 = arith.constant 1 : index
    %c0_53 = arith.constant 0 : index
    %48 = vector.load %arg12[%c0_50, %c1_51, %c1_52, %c0_53] : memref<2x9x9x128xbf16, #tpu.memory_space<vmem>>, vector<2x8x8x128xbf16>
    tpu.vector_store %arg12[%c0_50, %c1_51, %c1_52, %c0_53], %47 {strides = array<i32>} : memref<2x9x9x128xbf16, #tpu.memory_space<vmem>>, vector<2x8x8x128xbf16>,
    %cst_54 = arith.constant 0.000000e+00 : bf16
    %49 = vector.broadcast %cst_54 : bf16 to vector<2x1x9x128xbf16>
    %cst_55 = arith.constant 0.000000e+00 : bf16
    %50 = vector.broadcast %cst_55 : bf16 to vector<2x9x1x128xbf16>
    %c0_56 = arith.constant 0 : index
    %c0_57 = arith.constant 0 : index
    %c0_58 = arith.constant 0 : index
    %c0_59 = arith.constant 0 : index
    %51 = vector.load %arg13[%c0_56, %c0_57, %c0_58, %c0_59] : memref<2x9x9x128xbf16, #tpu.memory_space<vmem>>, vector<2x1x9x128xbf16>
    tpu.vector_store %arg13[%c0_56, %c0_57, %c0_58, %c0_59], %49 {strides = array<i32>} : memref<2x9x9x128xbf16, #tpu.memory_space<vmem>>, vector<2x1x9x128xbf16>,
    %c0_60 = arith.constant 0 : index
    %c0_61 = arith.constant 0 : index
    %c0_62 = arith.constant 0 : index
    %c0_63 = arith.constant 0 : index
    %52 = vector.load %arg13[%c0_60, %c0_61, %c0_62, %c0_63] : memref<2x9x9x128xbf16, #tpu.memory_space<vmem>>, vector<2x9x1x128xbf16>
    tpu.vector_store %arg13[%c0_60, %c0_61, %c0_62, %c0_63], %50 {strides = array<i32>} : memref<2x9x9x128xbf16, #tpu.memory_space<vmem>>, vector<2x9x1x128xbf16>,
    %53 = vector.extract_strided_slice %27 {offsets = [3, 0, 0, 0, 0], sizes = [1, 2, 8, 8, 128], strides = [1, 1, 1, 1, 1]} : vector<4x2x8x8x128xbf16> to vector<1x2x8x8x128xbf16>
    %54 = vector.shape_cast %53 : vector<1x2x8x8x128xbf16> to vector<2x8x8x128xbf16>
    %c0_64 = arith.constant 0 : index
    %c1_65 = arith.constant 1 : index
    %c1_66 = arith.constant 1 : index
    %c0_67 = arith.constant 0 : index
    %55 = vector.load %arg13[%c0_64, %c1_65, %c1_66, %c0_67] : memref<2x9x9x128xbf16, #tpu.memory_space<vmem>>, vector<2x8x8x128xbf16>
    tpu.vector_store %arg13[%c0_64, %c1_65, %c1_66, %c0_67], %54 {strides = array<i32>} : memref<2x9x9x128xbf16, #tpu.memory_space<vmem>>, vector<2x8x8x128xbf16>,
    %cst_68 = arith.constant dense<0.000000e+00> : vector<2x8x8x16xf32>
    %56 = vector.multi_reduction <add>, %0, %cst_68 [0] : vector<4x2x8x8x16xf32> to vector<2x8x8x16xf32>
    %cst_69 = arith.constant 4.000000e+00 : f32
    %57 = vector.broadcast %cst_69 : f32 to vector<2x8x8x16xf32>
    %58 = arith.divf %56, %57 : vector<2x8x8x16xf32>
    %59 = vector.shape_cast %58 : vector<2x8x8x16xf32> to vector<128x16xf32>
    %c0_70 = arith.constant 0 : index
    %c0_71 = arith.constant 0 : index
    %c0_72 = arith.constant 0 : index
    %c0_73 = arith.constant 0 : index
    %60 = vector.load %arg13[%c0_70, %c0_71, %c0_72, %c0_73] : memref<2x9x9x128xbf16, #tpu.memory_space<vmem>>, vector<2x8x8x128xbf16>
    %61 = vector.shape_cast %60 : vector<2x8x8x128xbf16> to vector<128x128xbf16>
    %c0_74 = arith.constant 0 : index
    %c0_75 = arith.constant 0 : index
    %c1_76 = arith.constant 1 : index
    %c0_77 = arith.constant 0 : index
    %62 = vector.load %arg12[%c0_74, %c0_75, %c1_76, %c0_77] : memref<2x9x9x128xbf16, #tpu.memory_space<vmem>>, vector<2x8x8x128xbf16>
    %63 = vector.shape_cast %62 : vector<2x8x8x128xbf16> to vector<128x128xbf16>
    %c0_78 = arith.constant 0 : index
    %c0_79 = arith.constant 0 : index
    %c1_80 = arith.constant 1 : index
    %c0_81 = arith.constant 0 : index
    %64 = vector.load %arg13[%c0_78, %c0_79, %c1_80, %c0_81] : memref<2x9x9x128xbf16, #tpu.memory_space<vmem>>, vector<2x8x8x128xbf16>
    %65 = vector.shape_cast %64 : vector<2x8x8x128xbf16> to vector<128x128xbf16>
    %66 = tpu.concatenate %61, %63, %65 in 1 : vector<128x128xbf16>, vector<128x128xbf16>, vector<128x128xbf16> -> vector<128x384xbf16>
    %c0_82 = arith.constant 0 : index
    %c0_83 = arith.constant 0 : index
    %c0_84 = arith.constant 0 : index
    %67 = vector.load %arg1[%c0_82, %c0_83, %c0_84] : memref<3x384x128xbf16, #tpu.memory_space<vmem>>, vector<1x384x128xbf16>
    %68 = vector.shape_cast %67 : vector<1x384x128xbf16> to vector<384x128xbf16>
    %cst_85 = arith.constant dense<0.000000e+00> : vector<128x128xf32>
    %69 = tpu.matmul %66, %68, %cst_85 {dimension_numbers = #tpu.dot_dimension_numbers<[1], [0], [0], [1], [0, 0, 1, 1], [], []>} : vector<128x384xbf16>, vector<384x128xbf16>, vector<128x128xf32> -> vector<128x128xf32>
    %c0_86 = arith.constant 0 : index
    %c1_87 = arith.constant 1 : index
    %c0_88 = arith.constant 0 : index
    %c0_89 = arith.constant 0 : index
    %70 = vector.load %arg11[%c0_86, %c1_87, %c0_88, %c0_89] : memref<2x9x9x128xbf16, #tpu.memory_space<vmem>>, vector<2x8x8x128xbf16>
    %71 = vector.shape_cast %70 : vector<2x8x8x128xbf16> to vector<128x128xbf16>
    %c0_90 = arith.constant 0 : index
    %c1_91 = arith.constant 1 : index
    %c1_92 = arith.constant 1 : index
    %c0_93 = arith.constant 0 : index
    %72 = vector.load %arg10[%c0_90, %c1_91, %c1_92, %c0_93] : memref<2x9x9x128xbf16, #tpu.memory_space<vmem>>, vector<2x8x8x128xbf16>
    %73 = vector.shape_cast %72 : vector<2x8x8x128xbf16> to vector<128x128xbf16>
    %c0_94 = arith.constant 0 : index
    %c1_95 = arith.constant 1 : index
    %c1_96 = arith.constant 1 : index
    %c0_97 = arith.constant 0 : index
    %74 = vector.load %arg11[%c0_94, %c1_95, %c1_96, %c0_97] : memref<2x9x9x128xbf16, #tpu.memory_space<vmem>>, vector<2x8x8x128xbf16>
    %75 = vector.shape_cast %74 : vector<2x8x8x128xbf16> to vector<128x128xbf16>
    %76 = tpu.concatenate %71, %73, %75 in 1 : vector<128x128xbf16>, vector<128x128xbf16>, vector<128x128xbf16> -> vector<128x384xbf16>
    %c1_98 = arith.constant 1 : index
    %c0_99 = arith.constant 0 : index
    %c0_100 = arith.constant 0 : index
    %77 = vector.load %arg1[%c1_98, %c0_99, %c0_100] : memref<3x384x128xbf16, #tpu.memory_space<vmem>>, vector<1x384x128xbf16>
    %78 = vector.shape_cast %77 : vector<1x384x128xbf16> to vector<384x128xbf16>
    %cst_101 = arith.constant dense<0.000000e+00> : vector<128x128xf32>
    %79 = tpu.matmul %76, %78, %cst_101 {dimension_numbers = #tpu.dot_dimension_numbers<[1], [0], [0], [1], [0, 0, 1, 1], [], []>} : vector<128x384xbf16>, vector<384x128xbf16>, vector<128x128xf32> -> vector<128x128xf32>
    %80 = arith.addf %69, %79 : vector<128x128xf32>
    %c0_102 = arith.constant 0 : index
    %c1_103 = arith.constant 1 : index
    %c0_104 = arith.constant 0 : index
    %c0_105 = arith.constant 0 : index
    %81 = vector.load %arg13[%c0_102, %c1_103, %c0_104, %c0_105] : memref<2x9x9x128xbf16, #tpu.memory_space<vmem>>, vector<2x8x8x128xbf16>
    %82 = vector.shape_cast %81 : vector<2x8x8x128xbf16> to vector<128x128xbf16>
    %c0_106 = arith.constant 0 : index
    %c1_107 = arith.constant 1 : index
    %c1_108 = arith.constant 1 : index
    %c0_109 = arith.constant 0 : index
    %83 = vector.load %arg12[%c0_106, %c1_107, %c1_108, %c0_109] : memref<2x9x9x128xbf16, #tpu.memory_space<vmem>>, vector<2x8x8x128xbf16>
    %84 = vector.shape_cast %83 : vector<2x8x8x128xbf16> to vector<128x128xbf16>
    %c0_110 = arith.constant 0 : index
    %c1_111 = arith.constant 1 : index
    %c1_112 = arith.constant 1 : index
    %c0_113 = arith.constant 0 : index
    %85 = vector.load %arg13[%c0_110, %c1_111, %c1_112, %c0_113] : memref<2x9x9x128xbf16, #tpu.memory_space<vmem>>, vector<2x8x8x128xbf16>
    %86 = vector.shape_cast %85 : vector<2x8x8x128xbf16> to vector<128x128xbf16>
    %87 = tpu.concatenate %82, %84, %86 in 1 : vector<128x128xbf16>, vector<128x128xbf16>, vector<128x128xbf16> -> vector<128x384xbf16>
    %c2 = arith.constant 2 : index
    %c0_114 = arith.constant 0 : index
    %c0_115 = arith.constant 0 : index
    %88 = vector.load %arg1[%c2, %c0_114, %c0_115] : memref<3x384x128xbf16, #tpu.memory_space<vmem>>, vector<1x384x128xbf16>
    %89 = vector.shape_cast %88 : vector<1x384x128xbf16> to vector<384x128xbf16>
    %cst_116 = arith.constant dense<0.000000e+00> : vector<128x128xf32>
    %90 = tpu.matmul %87, %89, %cst_116 {dimension_numbers = #tpu.dot_dimension_numbers<[1], [0], [0], [1], [0, 0, 1, 1], [], []>} : vector<128x384xbf16>, vector<384x128xbf16>, vector<128x128xf32> -> vector<128x128xf32>
    %91 = arith.addf %80, %90 : vector<128x128xf32>
    %c0_117 = arith.constant 0 : index
    %c0_118 = arith.constant 0 : index
    %92 = vector.load %arg5[%c0_117, %c0_118] : memref<1x128xf32, #tpu.memory_space<vmem>>, vector<1x128xf32>
    %c0_119 = arith.constant 0 : index
    %c0_120 = arith.constant 0 : index
    %93 = vector.load %arg6[%c0_119, %c0_120] : memref<1x128xf32, #tpu.memory_space<vmem>>, vector<1x128xf32>
    %cst_121 = arith.constant dense<0.000000e+00> : vector<128xf32>
    %94 = vector.multi_reduction <add>, %91, %cst_121 [0] : vector<128x128xf32> to vector<128xf32>
    %95 = vector.shape_cast %94 : vector<128xf32> to vector<1x128xf32>
    %cst_122 = arith.constant 1.280000e+02 : f32
    %96 = vector.broadcast %cst_122 : f32 to vector<1x128xf32>
    %97 = arith.divf %95, %96 : vector<1x128xf32>
    %98 = vector.broadcast %97 : vector<1x128xf32> to vector<128x128xf32>
    %99 = arith.subf %91, %98 : vector<128x128xf32>
    %100 = arith.mulf %99, %99 : vector<128x128xf32>
    %cst_123 = arith.constant dense<0.000000e+00> : vector<128xf32>
    %101 = vector.multi_reduction <add>, %100, %cst_123 [0] : vector<128x128xf32> to vector<128xf32>
    %102 = vector.shape_cast %101 : vector<128xf32> to vector<1x128xf32>
    %cst_124 = arith.constant 1.280000e+02 : f32
    %103 = vector.broadcast %cst_124 : f32 to vector<1x128xf32>
    %104 = arith.divf %102, %103 : vector<1x128xf32>
    %cst_125 = arith.constant 9.99999974E-6 : f32
    %105 = vector.broadcast %cst_125 : f32 to vector<1x128xf32>
    %106 = arith.addf %104, %105 : vector<1x128xf32>
    %107 = math.rsqrt %106 : vector<1x128xf32>
    %108 = vector.broadcast %107 : vector<1x128xf32> to vector<128x128xf32>
    %109 = arith.mulf %99, %108 : vector<128x128xf32>
    %110 = vector.broadcast %92 : vector<1x128xf32> to vector<128x128xf32>
    %111 = arith.mulf %109, %110 : vector<128x128xf32>
    %112 = vector.broadcast %93 : vector<1x128xf32> to vector<128x128xf32>
    %113 = arith.addf %111, %112 : vector<128x128xf32>
    %cst_126 = arith.constant 0.000000e+00 : f32
    %114 = vector.broadcast %cst_126 : f32 to vector<128x128xf32>
    %115 = arith.maximumf %113, %114 : vector<128x128xf32>
    %116 = arith.truncf %115 : vector<128x128xf32> to vector<128x128xbf16>
    %cst_127 = arith.constant 0.000000e+00 : bf16
    %117 = vector.broadcast %cst_127 : bf16 to vector<2x1x10x128xbf16>
    %cst_128 = arith.constant 0.000000e+00 : bf16
    %118 = vector.broadcast %cst_128 : bf16 to vector<2x10x1x128xbf16>
    %c0_129 = arith.constant 0 : index
    %c0_130 = arith.constant 0 : index
    %c0_131 = arith.constant 0 : index
    %c0_132 = arith.constant 0 : index
    %119 = vector.load %arg14[%c0_129, %c0_130, %c0_131, %c0_132] : memref<2x10x10x128xbf16, #tpu.memory_space<vmem>>, vector<2x1x10x128xbf16>
    tpu.vector_store %arg14[%c0_129, %c0_130, %c0_131, %c0_132], %117 {strides = array<i32>} : memref<2x10x10x128xbf16, #tpu.memory_space<vmem>>, vector<2x1x10x128xbf16>,
    %c0_133 = arith.constant 0 : index
    %c9 = arith.constant 9 : index
    %c0_134 = arith.constant 0 : index
    %c0_135 = arith.constant 0 : index
    %120 = vector.load %arg14[%c0_133, %c9, %c0_134, %c0_135] : memref<2x10x10x128xbf16, #tpu.memory_space<vmem>>, vector<2x1x10x128xbf16>
    tpu.vector_store %arg14[%c0_133, %c9, %c0_134, %c0_135], %117 {strides = array<i32>} : memref<2x10x10x128xbf16, #tpu.memory_space<vmem>>, vector<2x1x10x128xbf16>,
    %c0_136 = arith.constant 0 : index
    %c0_137 = arith.constant 0 : index
    %c0_138 = arith.constant 0 : index
    %c0_139 = arith.constant 0 : index
    %121 = vector.load %arg14[%c0_136, %c0_137, %c0_138, %c0_139] : memref<2x10x10x128xbf16, #tpu.memory_space<vmem>>, vector<2x10x1x128xbf16>
    tpu.vector_store %arg14[%c0_136, %c0_137, %c0_138, %c0_139], %118 {strides = array<i32>} : memref<2x10x10x128xbf16, #tpu.memory_space<vmem>>, vector<2x10x1x128xbf16>,
    %c0_140 = arith.constant 0 : index
    %c0_141 = arith.constant 0 : index
    %c9_142 = arith.constant 9 : index
    %c0_143 = arith.constant 0 : index
    %122 = vector.load %arg14[%c0_140, %c0_141, %c9_142, %c0_143] : memref<2x10x10x128xbf16, #tpu.memory_space<vmem>>, vector<2x10x1x128xbf16>
    tpu.vector_store %arg14[%c0_140, %c0_141, %c9_142, %c0_143], %118 {strides = array<i32>} : memref<2x10x10x128xbf16, #tpu.memory_space<vmem>>, vector<2x10x1x128xbf16>,
    %123 = vector.shape_cast %116 : vector<128x128xbf16> to vector<2x8x8x128xbf16>
    %c0_144 = arith.constant 0 : index
    %c1_145 = arith.constant 1 : index
    %c1_146 = arith.constant 1 : index
    %c0_147 = arith.constant 0 : index
    %124 = vector.load %arg14[%c0_144, %c1_145, %c1_146, %c0_147] : memref<2x10x10x128xbf16, #tpu.memory_space<vmem>>, vector<2x8x8x128xbf16>
    tpu.vector_store %arg14[%c0_144, %c1_145, %c1_146, %c0_147], %123 {strides = array<i32>} : memref<2x10x10x128xbf16, #tpu.memory_space<vmem>>, vector<2x8x8x128xbf16>,
    %c0_148 = arith.constant 0 : index
    %c0_149 = arith.constant 0 : index
    %c0_150 = arith.constant 0 : index
    %c0_151 = arith.constant 0 : index
    %125 = vector.load %arg14[%c0_148, %c0_149, %c0_150, %c0_151] : memref<2x10x10x128xbf16, #tpu.memory_space<vmem>>, vector<2x8x8x128xbf16>
    %126 = vector.shape_cast %125 : vector<2x8x8x128xbf16> to vector<128x128xbf16>
    %c0_152 = arith.constant 0 : index
    %c0_153 = arith.constant 0 : index
    %c1_154 = arith.constant 1 : index
    %c0_155 = arith.constant 0 : index
    %127 = vector.load %arg14[%c0_152, %c0_153, %c1_154, %c0_155] : memref<2x10x10x128xbf16, #tpu.memory_space<vmem>>, vector<2x8x8x128xbf16>
    %128 = vector.shape_cast %127 : vector<2x8x8x128xbf16> to vector<128x128xbf16>
    %c0_156 = arith.constant 0 : index
    %c0_157 = arith.constant 0 : index
    %c2_158 = arith.constant 2 : index
    %c0_159 = arith.constant 0 : index
    %129 = vector.load %arg14[%c0_156, %c0_157, %c2_158, %c0_159] : memref<2x10x10x128xbf16, #tpu.memory_space<vmem>>, vector<2x8x8x128xbf16>
    %130 = vector.shape_cast %129 : vector<2x8x8x128xbf16> to vector<128x128xbf16>
    %131 = tpu.concatenate %126, %128, %130 in 1 : vector<128x128xbf16>, vector<128x128xbf16>, vector<128x128xbf16> -> vector<128x384xbf16>
    %c0_160 = arith.constant 0 : index
    %c0_161 = arith.constant 0 : index
    %c0_162 = arith.constant 0 : index
    %132 = vector.load %arg2[%c0_160, %c0_161, %c0_162] : memref<3x384x128xbf16, #tpu.memory_space<vmem>>, vector<1x384x128xbf16>
    %133 = vector.shape_cast %132 : vector<1x384x128xbf16> to vector<384x128xbf16>
    %cst_163 = arith.constant dense<0.000000e+00> : vector<128x128xf32>
    %134 = tpu.matmul %131, %133, %cst_163 {dimension_numbers = #tpu.dot_dimension_numbers<[1], [0], [0], [1], [0, 0, 1, 1], [], []>} : vector<128x384xbf16>, vector<384x128xbf16>, vector<128x128xf32> -> vector<128x128xf32>
    %c0_164 = arith.constant 0 : index
    %c1_165 = arith.constant 1 : index
    %c0_166 = arith.constant 0 : index
    %c0_167 = arith.constant 0 : index
    %135 = vector.load %arg14[%c0_164, %c1_165, %c0_166, %c0_167] : memref<2x10x10x128xbf16, #tpu.memory_space<vmem>>, vector<2x8x8x128xbf16>
    %136 = vector.shape_cast %135 : vector<2x8x8x128xbf16> to vector<128x128xbf16>
    %c0_168 = arith.constant 0 : index
    %c1_169 = arith.constant 1 : index
    %c1_170 = arith.constant 1 : index
    %c0_171 = arith.constant 0 : index
    %137 = vector.load %arg14[%c0_168, %c1_169, %c1_170, %c0_171] : memref<2x10x10x128xbf16, #tpu.memory_space<vmem>>, vector<2x8x8x128xbf16>
    %138 = vector.shape_cast %137 : vector<2x8x8x128xbf16> to vector<128x128xbf16>
    %c0_172 = arith.constant 0 : index
    %c1_173 = arith.constant 1 : index
    %c2_174 = arith.constant 2 : index
    %c0_175 = arith.constant 0 : index
    %139 = vector.load %arg14[%c0_172, %c1_173, %c2_174, %c0_175] : memref<2x10x10x128xbf16, #tpu.memory_space<vmem>>, vector<2x8x8x128xbf16>
    %140 = vector.shape_cast %139 : vector<2x8x8x128xbf16> to vector<128x128xbf16>
    %141 = tpu.concatenate %136, %138, %140 in 1 : vector<128x128xbf16>, vector<128x128xbf16>, vector<128x128xbf16> -> vector<128x384xbf16>
    %c1_176 = arith.constant 1 : index
    %c0_177 = arith.constant 0 : index
    %c0_178 = arith.constant 0 : index
    %142 = vector.load %arg2[%c1_176, %c0_177, %c0_178] : memref<3x384x128xbf16, #tpu.memory_space<vmem>>, vector<1x384x128xbf16>
    %143 = vector.shape_cast %142 : vector<1x384x128xbf16> to vector<384x128xbf16>
    %cst_179 = arith.constant dense<0.000000e+00> : vector<128x128xf32>
    %144 = tpu.matmul %141, %143, %cst_179 {dimension_numbers = #tpu.dot_dimension_numbers<[1], [0], [0], [1], [0, 0, 1, 1], [], []>} : vector<128x384xbf16>, vector<384x128xbf16>, vector<128x128xf32> -> vector<128x128xf32>
    %145 = arith.addf %134, %144 : vector<128x128xf32>
    %c0_180 = arith.constant 0 : index
    %c2_181 = arith.constant 2 : index
    %c0_182 = arith.constant 0 : index
    %c0_183 = arith.constant 0 : index
    %146 = vector.load %arg14[%c0_180, %c2_181, %c0_182, %c0_183] : memref<2x10x10x128xbf16, #tpu.memory_space<vmem>>, vector<2x8x8x128xbf16>
    %147 = vector.shape_cast %146 : vector<2x8x8x128xbf16> to vector<128x128xbf16>
    %c0_184 = arith.constant 0 : index
    %c2_185 = arith.constant 2 : index
    %c1_186 = arith.constant 1 : index
    %c0_187 = arith.constant 0 : index
    %148 = vector.load %arg14[%c0_184, %c2_185, %c1_186, %c0_187] : memref<2x10x10x128xbf16, #tpu.memory_space<vmem>>, vector<2x8x8x128xbf16>
    %149 = vector.shape_cast %148 : vector<2x8x8x128xbf16> to vector<128x128xbf16>
    %c0_188 = arith.constant 0 : index
    %c2_189 = arith.constant 2 : index
    %c2_190 = arith.constant 2 : index
    %c0_191 = arith.constant 0 : index
    %150 = vector.load %arg14[%c0_188, %c2_189, %c2_190, %c0_191] : memref<2x10x10x128xbf16, #tpu.memory_space<vmem>>, vector<2x8x8x128xbf16>
    %151 = vector.shape_cast %150 : vector<2x8x8x128xbf16> to vector<128x128xbf16>
    %152 = tpu.concatenate %147, %149, %151 in 1 : vector<128x128xbf16>, vector<128x128xbf16>, vector<128x128xbf16> -> vector<128x384xbf16>
    %c2_192 = arith.constant 2 : index
    %c0_193 = arith.constant 0 : index
    %c0_194 = arith.constant 0 : index
    %153 = vector.load %arg2[%c2_192, %c0_193, %c0_194] : memref<3x384x128xbf16, #tpu.memory_space<vmem>>, vector<1x384x128xbf16>
    %154 = vector.shape_cast %153 : vector<1x384x128xbf16> to vector<384x128xbf16>
    %cst_195 = arith.constant dense<0.000000e+00> : vector<128x128xf32>
    %155 = tpu.matmul %152, %154, %cst_195 {dimension_numbers = #tpu.dot_dimension_numbers<[1], [0], [0], [1], [0, 0, 1, 1], [], []>} : vector<128x384xbf16>, vector<384x128xbf16>, vector<128x128xf32> -> vector<128x128xf32>
    %156 = arith.addf %145, %155 : vector<128x128xf32>
    %c0_196 = arith.constant 0 : index
    %c0_197 = arith.constant 0 : index
    %157 = vector.load %arg7[%c0_196, %c0_197] : memref<1x128xf32, #tpu.memory_space<vmem>>, vector<1x128xf32>
    %c0_198 = arith.constant 0 : index
    %c0_199 = arith.constant 0 : index
    %158 = vector.load %arg8[%c0_198, %c0_199] : memref<1x128xf32, #tpu.memory_space<vmem>>, vector<1x128xf32>
    %cst_200 = arith.constant dense<0.000000e+00> : vector<128xf32>
    %159 = vector.multi_reduction <add>, %156, %cst_200 [0] : vector<128x128xf32> to vector<128xf32>
    %160 = vector.shape_cast %159 : vector<128xf32> to vector<1x128xf32>
    %cst_201 = arith.constant 1.280000e+02 : f32
    %161 = vector.broadcast %cst_201 : f32 to vector<1x128xf32>
    %162 = arith.divf %160, %161 : vector<1x128xf32>
    %163 = vector.broadcast %162 : vector<1x128xf32> to vector<128x128xf32>
    %164 = arith.subf %156, %163 : vector<128x128xf32>
    %165 = arith.mulf %164, %164 : vector<128x128xf32>
    %cst_202 = arith.constant dense<0.000000e+00> : vector<128xf32>
    %166 = vector.multi_reduction <add>, %165, %cst_202 [0] : vector<128x128xf32> to vector<128xf32>
    %167 = vector.shape_cast %166 : vector<128xf32> to vector<1x128xf32>
    %cst_203 = arith.constant 1.280000e+02 : f32
    %168 = vector.broadcast %cst_203 : f32 to vector<1x128xf32>
    %169 = arith.divf %167, %168 : vector<1x128xf32>
    %cst_204 = arith.constant 9.99999974E-6 : f32
    %170 = vector.broadcast %cst_204 : f32 to vector<1x128xf32>
    %171 = arith.addf %169, %170 : vector<1x128xf32>
    %172 = math.rsqrt %171 : vector<1x128xf32>
    %173 = vector.broadcast %172 : vector<1x128xf32> to vector<128x128xf32>
    %174 = arith.mulf %164, %173 : vector<128x128xf32>
    %175 = vector.broadcast %157 : vector<1x128xf32> to vector<128x128xf32>
    %176 = arith.mulf %174, %175 : vector<128x128xf32>
    %177 = vector.broadcast %158 : vector<1x128xf32> to vector<128x128xf32>
    %178 = arith.addf %176, %177 : vector<128x128xf32>
    %cst_205 = arith.constant 0.000000e+00 : f32
    %179 = vector.broadcast %cst_205 : f32 to vector<128x112xf32>
    %180 = tpu.concatenate %59, %179 in 1 : vector<128x16xf32>, vector<128x112xf32> -> vector<128x128xf32>
    %181 = arith.addf %178, %180 : vector<128x128xf32>
    %182 = vector.extract_strided_slice %181 {offsets = [0, 0], sizes = [128, 24], strides = [1, 1]} : vector<128x128xf32> to vector<128x24xf32>
    %183 = vector.shape_cast %182 : vector<128x24xf32> to vector<2x8x8x24xf32>
    %c0_206 = arith.constant 0 : index
    %c0_207 = arith.constant 0 : index
    %c0_208 = arith.constant 0 : index
    %c0_209 = arith.constant 0 : index
    %184 = vector.load %arg9[%c0_206, %c0_207, %c0_208, %c0_209] : memref<2x8x8x24xf32, #tpu.memory_space<vmem>>, vector<2x8x8x24xf32>
    tpu.vector_store %arg9[%c0_206, %c0_207, %c0_208, %c0_209], %183 {strides = array<i32>} : memref<2x8x8x24xf32, #tpu.memory_space<vmem>>, vector<2x8x8x24xf32>,
    return
  }
}

</mosaic_0001>

<llo_original>
// kernel: tpu_custom_call.1
$region0: #{tpu_custom_call.1}
  #allocation0 [shape = 'u32[]', space=smem, size = 0x4, offset = 0x4, fixed_abs, tag = 'smem constant byte address 0x4 - core index']
  #allocation1 [shape = 'u32[144,128]{1,0:T(1,128)}', space=vmem, size = 0x12000, scoped, tag = 'internal scratch']
  #allocation2 [shape = 'bf16[2,9,9,128]{3,2,1,0:T(8,128)(2,1)}', space=vmem, size = 0x12000, scoped, tag = 'scratch operand']
  #allocation3 [shape = 'bf16[2,9,9,128]{3,2,1,0:T(8,128)(2,1)}', space=vmem, size = 0x12000, scoped, tag = 'scratch operand']
  #allocation4 [shape = 'bf16[2,9,9,128]{3,2,1,0:T(8,128)(2,1)}', space=vmem, size = 0x12000, scoped, tag = 'scratch operand']
  #allocation5 [shape = 'bf16[2,9,9,128]{3,2,1,0:T(8,128)(2,1)}', space=vmem, size = 0x12000, scoped, tag = 'scratch operand']
  #allocation6 [shape = 'bf16[2,10,10,128]{3,2,1,0:T(8,128)(2,1)}', space=vmem, size = 0x14000, scoped, tag = 'scratch operand']
  %s0 = inlined_call_operand.hbm [shape: f32[4,2,8,8,16], index: 0, kind: input, shape index: {}]
  %s1 = inlined_call_operand.hbm [shape: bf16[3,384,128], index: 1, kind: input, shape index: {}]
  %s2 = inlined_call_operand.hbm [shape: bf16[3,384,128], index: 2, kind: input, shape index: {}]
  %s3 = inlined_call_operand.vmem [shape: f32[1,16], index: 3, kind: input, shape index: {}]
  %s4 = inlined_call_operand.vmem [shape: f32[1,16], index: 4, kind: input, shape index: {}]
  %s5 = inlined_call_operand.vmem [shape: f32[1,128], index: 5, kind: input, shape index: {}]
  %s6 = inlined_call_operand.vmem [shape: f32[1,128], index: 6, kind: input, shape index: {}]
  %s7 = inlined_call_operand.vmem [shape: f32[1,128], index: 7, kind: input, shape index: {}]
  %s8 = inlined_call_operand.vmem [shape: f32[1,128], index: 8, kind: input, shape index: {}]
  %s9 = inlined_call_operand.hbm [shape: f32[2,8,8,24], index: 9, kind: output, shape index: {}]
  %s10 = sld [smem:[#allocation0]]
  $region58: #{tpu_custom_call.1} parent=0
    _
  %s12 = ssub.s32 1, %s10
  %s13 = scalar_select 0, %s12, %s10
  $region1: #{tpu_custom_call.1} parent=0
    #allocation7 [shape = 'u8[262144]{0}', space=vmem, size = 0x40000, scoped, tag = 'input window, operand 0, single buffered']
    #allocation8 [shape = 's32[1]{0}', space=sflag, size = 0x4, scoped, tag = 'scoped memory for tpu_custom_call.1']
    #allocation9 [shape = 's32[1]{0}', space=sflag, size = 0x4, scoped, tag = 'scoped memory for tpu_custom_call.1']
    #allocation10 [shape = 'u8[294912]{0}', space=vmem, size = 0x48000, scoped, tag = 'input window, operand 1, single buffered']
    #allocation11 [shape = 's32[1]{0}', space=sflag, size = 0x4, scoped, tag = 'scoped memory for tpu_custom_call.1']
    #allocation12 [shape = 'u8[294912]{0}', space=vmem, size = 0x48000, scoped, tag = 'input window, operand 2, single buffered']
    #allocation13 [shape = 'u8[65536]{0}', space=vmem, size = 0x10000, scoped, tag = 'output window, operand 0, single buffered']
    %14 = vsyncpa [#allocation8], 0
    %15 = vsyncpa [#allocation11], 0
    %16 = vsyncpa [#allocation9], 0
    // Predicated region
    $region2: #{tpu_custom_call.1} parent=1 // pred_check
      _
    $region3: #{tpu_custom_call.1} parent=1 // pred_check_branch
      %18 = sbr.rel (0) target = $region5
    $region4: #{tpu_custom_call.1} parent=1 // pred_region
      %s20 = ssub.s32 8192, 8192
      %21 = vsyncadd [#allocation8], %s20
      %s22 = sshll.u32 [#allocation7], 4
      %s23 = int_to_ptr.vmem [resolvable:$true] %s22
      %28 = dma.hbm_to_vmem [thread:$0]  %s0, 8192, %s23, [#allocation8], 128, 128, 8
    $region5: #{tpu_custom_call.1} parent=1 // pred_fallthru
      _
    // Predicated region
    $region6: #{tpu_custom_call.1} parent=1 // pred_check
      _
    $region7: #{tpu_custom_call.1} parent=1 // pred_check_branch
      %30 = sbr.rel (0) target = $region9
    $region8: #{tpu_custom_call.1} parent=1 // pred_region
      %s32 = ssub.s32 9216, 9216
      %33 = vsyncadd [#allocation11], %s32
      %s34 = sshll.u32 [#allocation10], 4
      %s35 = int_to_ptr.vmem [resolvable:$true] %s34
      %40 = dma.hbm_to_vmem [thread:$0]  %s1, 9216, %s35, [#allocation11], 64, 64, 4
    $region9: #{tpu_custom_call.1} parent=1 // pred_fallthru
      _
    // Predicated region
    $region10: #{tpu_custom_call.1} parent=1 // pred_check
      _
    $region11: #{tpu_custom_call.1} parent=1 // pred_check_branch
      %42 = sbr.rel (0) target = $region13
    $region12: #{tpu_custom_call.1} parent=1 // pred_region
      %s44 = ssub.s32 9216, 9216
      %45 = vsyncadd [#allocation11], %s44
      %s46 = sshll.u32 [#allocation12], 4
      %s47 = int_to_ptr.vmem [resolvable:$true] %s46
      %52 = dma.hbm_to_vmem [thread:$0]  %s2, 9216, %s47, [#allocation11], 64, 64, 4
    $region13: #{tpu_custom_call.1} parent=1 // pred_fallthru
      _
    // Predicated region
    $region14: #{tpu_custom_call.1} parent=1 // pred_check
      _
    $region15: #{tpu_custom_call.1} parent=1 // pred_check_branch
      %54 = sbr.rel (0) target = $region17
    $region16: #{tpu_custom_call.1} parent=1 // pred_region
      _
    $region17: #{tpu_custom_call.1} parent=1 // pred_fallthru
      _
    // Predicated region
    $region18: #{tpu_custom_call.1} parent=1 // pred_check
      _
    $region19: #{tpu_custom_call.1} parent=1 // pred_check_branch
      %56 = sbr.rel (0) target = $region21
    $region20: #{tpu_custom_call.1} parent=1 // pred_region
      _
    $region21: #{tpu_custom_call.1} parent=1 // pred_fallthru
      _
    // Predicated region
    $region22: #{tpu_custom_call.1} parent=1 // pred_check
      _
    $region23: #{tpu_custom_call.1} parent=1 // pred_check_branch
      %58 = sbr.rel (0) target = $region25
    $region24: #{tpu_custom_call.1} parent=1 // pred_region
      _
    $region25: #{tpu_custom_call.1} parent=1 // pred_fallthru
      _
    // Predicated region
    $region26: #{tpu_custom_call.1} parent=1 // pred_check
      _
    $region27: #{tpu_custom_call.1} parent=1 // pred_check_branch
      %60 = sbr.rel (0) target = $region29
    $region28: #{tpu_custom_call.1} parent=1 // pred_region
      _
    $region29: #{tpu_custom_call.1} parent=1 // pred_fallthru
      _
    // Predicated region
    $region30: #{tpu_custom_call.1} parent=1 // pred_check
      _
    $region31: #{tpu_custom_call.1} parent=1 // pred_check_branch
      %62 = sbr.rel (0) target = $region33
    $region32: #{tpu_custom_call.1} parent=1 // pred_region
      _
    $region33: #{tpu_custom_call.1} parent=1 // pred_fallthru
      _
    // Predicated region
    $region34: #{tpu_custom_call.1} parent=1 // pred_check
      _
    $region35: #{tpu_custom_call.1} parent=1 // pred_check_branch
      %64 = sbr.rel (0) target = $region37
    $region36: #{tpu_custom_call.1} parent=1 // pred_region
      _
    $region37: #{tpu_custom_call.1} parent=1 // pred_fallthru
      _
    // Predicated region
    $region38: #{tpu_custom_call.1} parent=1 // pred_check
      _
    $region39: #{tpu_custom_call.1} parent=1 // pred_check_branch
      %66 = sbr.rel (0) target = $region41
    $region40: #{tpu_custom_call.1} parent=1 // pred_region
      %67 = dma.done [#allocation8], 8192
    $region41: #{tpu_custom_call.1} parent=1 // pred_fallthru
      _
    // Predicated region
    $region42: #{tpu_custom_call.1} parent=1 // pred_check
      _
    $region43: #{tpu_custom_call.1} parent=1 // pred_check_branch
      %69 = sbr.rel (0) target = $region45
    $region44: #{tpu_custom_call.1} parent=1 // pred_region
      %70 = dma.done [#allocation11], 9216
    $region45: #{tpu_custom_call.1} parent=1 // pred_fallthru
      _
    // Predicated region
    $region46: #{tpu_custom_call.1} parent=1 // pred_check
      _
    $region47: #{tpu_custom_call.1} parent=1 // pred_check_branch
      %72 = sbr.rel (0) target = $region49
    $region48: #{tpu_custom_call.1} parent=1 // pred_region
      %73 = dma.done [#allocation11], 9216
    $region49: #{tpu_custom_call.1} parent=1 // pred_fallthru
      _
    %v75 = vld [vmem:[#allocation7] sm:$0xff]
    %v76 = vld [vmem:[#allocation7 + $0x8] sm:$0xff]
    %v77 = vld [vmem:[#allocation7 + $0x10] sm:$0xff]
    %v78 = vld [vmem:[#allocation7 + $0x18] sm:$0xff]
    %v79 = vld [vmem:[#allocation7 + $0x20] sm:$0xff]
    %v80 = vld [vmem:[#allocation7 + $0x28] sm:$0xff]
    %v81 = vld [vmem:[#allocation7 + $0x30] sm:$0xff]
    %v82 = vld [vmem:[#allocation7 + $0x38] sm:$0xff]
    %v83 = vld [vmem:[#allocation7 + $0x40] sm:$0xff]
    %v84 = vld [vmem:[#allocation7 + $0x48] sm:$0xff]
    %v85 = vld [vmem:[#allocation7 + $0x50] sm:$0xff]
    %v86 = vld [vmem:[#allocation7 + $0x58] sm:$0xff]
    %v87 = vld [vmem:[#allocation7 + $0x60] sm:$0xff]
    %v88 = vld [vmem:[#allocation7 + $0x68] sm:$0xff]
    %v89 = vld [vmem:[#allocation7 + $0x70] sm:$0xff]
    %v90 = vld [vmem:[#allocation7 + $0x78] sm:$0xff]
    %v91 = vld [vmem:[#allocation7 + $0x80] sm:$0xff]
    %v92 = vld [vmem:[#allocation7 + $0x88] sm:$0xff]
    %v93 = vld [vmem:[#allocation7 + $0x90] sm:$0xff]
    %v94 = vld [vmem:[#allocation7 + $0x98] sm:$0xff]
    %v95 = vld [vmem:[#allocation7 + $0xa0] sm:$0xff]
    %v96 = vld [vmem:[#allocation7 + $0xa8] sm:$0xff]
    %v97 = vld [vmem:[#allocation7 + $0xb0] sm:$0xff]
    %v98 = vld [vmem:[#allocation7 + $0xb8] sm:$0xff]
    %v99 = vld [vmem:[#allocation7 + $0xc0] sm:$0xff]
    %v100 = vld [vmem:[#allocation7 + $0xc8] sm:$0xff]
    %v101 = vld [vmem:[#allocation7 + $0xd0] sm:$0xff]
    %v102 = vld [vmem:[#allocation7 + $0xd8] sm:$0xff]
    %v103 = vld [vmem:[#allocation7 + $0xe0] sm:$0xff]
    %v104 = vld [vmem:[#allocation7 + $0xe8] sm:$0xff]
    %v105 = vld [vmem:[#allocation7 + $0xf0] sm:$0xff]
    %v106 = vld [vmem:[#allocation7 + $0xf8] sm:$0xff]
    %v107 = vld [vmem:[#allocation7 + $0x100] sm:$0xff]
    %v108 = vld [vmem:[#allocation7 + $0x108] sm:$0xff]
    %v109 = vld [vmem:[#allocation7 + $0x110] sm:$0xff]
    %v110 = vld [vmem:[#allocation7 + $0x118] sm:$0xff]
    %v111 = vld [vmem:[#allocation7 + $0x120] sm:$0xff]
    %v112 = vld [vmem:[#allocation7 + $0x128] sm:$0xff]
    %v113 = vld [vmem:[#allocation7 + $0x130] sm:$0xff]
    %v114 = vld [vmem:[#allocation7 + $0x138] sm:$0xff]
    %v115 = vld [vmem:[#allocation7 + $0x140] sm:$0xff]
    %v116 = vld [vmem:[#allocation7 + $0x148] sm:$0xff]
    %v117 = vld [vmem:[#allocation7 + $0x150] sm:$0xff]
    %v118 = vld [vmem:[#allocation7 + $0x158] sm:$0xff]
    %v119 = vld [vmem:[#allocation7 + $0x160] sm:$0xff]
    %v120 = vld [vmem:[#allocation7 + $0x168] sm:$0xff]
    %v121 = vld [vmem:[#allocation7 + $0x170] sm:$0xff]
    %v122 = vld [vmem:[#allocation7 + $0x178] sm:$0xff]
    %v123 = vld [vmem:[#allocation7 + $0x180] sm:$0xff]
    %v124 = vld [vmem:[#allocation7 + $0x188] sm:$0xff]
    %v125 = vld [vmem:[#allocation7 + $0x190] sm:$0xff]
    %v126 = vld [vmem:[#allocation7 + $0x198] sm:$0xff]
    %v127 = vld [vmem:[#allocation7 + $0x1a0] sm:$0xff]
    %v128 = vld [vmem:[#allocation7 + $0x1a8] sm:$0xff]
    %v129 = vld [vmem:[#allocation7 + $0x1b0] sm:$0xff]
    %v130 = vld [vmem:[#allocation7 + $0x1b8] sm:$0xff]
    %v131 = vld [vmem:[#allocation7 + $0x1c0] sm:$0xff]
    %v132 = vld [vmem:[#allocation7 + $0x1c8] sm:$0xff]
    %v133 = vld [vmem:[#allocation7 + $0x1d0] sm:$0xff]
    %v134 = vld [vmem:[#allocation7 + $0x1d8] sm:$0xff]
    %v135 = vld [vmem:[#allocation7 + $0x1e0] sm:$0xff]
    %v136 = vld [vmem:[#allocation7 + $0x1e8] sm:$0xff]
    %v137 = vld [vmem:[#allocation7 + $0x1f0] sm:$0xff]
    %v138 = vld [vmem:[#allocation7 + $0x1f8] sm:$0xff]
    %v139 = vld [vmem:[%s3] sm:$0x1]
    %v140 = vld [vmem:[%s4] sm:$0x1]
    %vm141 = vcmask 130048
    %v142 = vsel %vm141, %v75, 0.0
    %v143 = vsel %vm141, %v76, 0.0
    %v144 = vadd.f32 %v142, %v143
    %v145 = vsel %vm141, %v77, 0.0
    %v146 = vadd.f32 %v144, %v145
    %v147 = vsel %vm141, %v78, 0.0
    %v148 = vadd.f32 %v146, %v147
    %v149 = vsel %vm141, %v79, 0.0
    %v150 = vadd.f32 %v148, %v149
    %v151 = vsel %vm141, %v80, 0.0
    %v152 = vadd.f32 %v150, %v151
    %v153 = vsel %vm141, %v81, 0.0
    %v154 = vadd.f32 %v152, %v153
    %v155 = vsel %vm141, %v82, 0.0
    %v156 = vadd.f32 %v154, %v155
    %v157 = vsel %vm141, %v83, 0.0
    %v158 = vadd.f32 %v156, %v157
    %v159 = vsel %vm141, %v84, 0.0
    %v160 = vadd.f32 %v158, %v159
    %v161 = vsel %vm141, %v85, 0.0
    %v162 = vadd.f32 %v160, %v161
    %v163 = vsel %vm141, %v86, 0.0
    %v164 = vadd.f32 %v162, %v163
    %v165 = vsel %vm141, %v87, 0.0
    %v166 = vadd.f32 %v164, %v165
    %v167 = vsel %vm141, %v88, 0.0
    %v168 = vadd.f32 %v166, %v167
    %v169 = vsel %vm141, %v89, 0.0
    %v170 = vadd.f32 %v168, %v169
    %v171 = vsel %vm141, %v90, 0.0
    %v172 = vadd.f32 %v170, %v171
    %v173 = vsel %vm141, %v91, 0.0
    %v174 = vadd.f32 %v172, %v173
    %v175 = vsel %vm141, %v92, 0.0
    %v176 = vadd.f32 %v174, %v175
    %v177 = vsel %vm141, %v93, 0.0
    %v178 = vadd.f32 %v176, %v177
    %v179 = vsel %vm141, %v94, 0.0
    %v180 = vadd.f32 %v178, %v179
    %v181 = vsel %vm141, %v95, 0.0
    %v182 = vadd.f32 %v180, %v181
    %v183 = vsel %vm141, %v96, 0.0
    %v184 = vadd.f32 %v182, %v183
    %v185 = vsel %vm141, %v97, 0.0
    %v186 = vadd.f32 %v184, %v185
    %v187 = vsel %vm141, %v98, 0.0
    %v188 = vadd.f32 %v186, %v187
    %v189 = vsel %vm141, %v99, 0.0
    %v190 = vadd.f32 %v188, %v189
    %v191 = vsel %vm141, %v100, 0.0
    %v192 = vadd.f32 %v190, %v191
    %v193 = vsel %vm141, %v101, 0.0
    %v194 = vadd.f32 %v192, %v193
    %v195 = vsel %vm141, %v102, 0.0
    %v196 = vadd.f32 %v194, %v195
    %v197 = vsel %vm141, %v103, 0.0
    %v198 = vadd.f32 %v196, %v197
    %v199 = vsel %vm141, %v104, 0.0
    %v200 = vadd.f32 %v198, %v199
    %v201 = vsel %vm141, %v105, 0.0
    %v202 = vadd.f32 %v200, %v201
    %v203 = vsel %vm141, %v106, 0.0
    %v204 = vadd.f32 %v202, %v203
    %v205 = vsel %vm141, %v107, 0.0
    %v206 = vadd.f32 %v204, %v205
    %v207 = vsel %vm141, %v108, 0.0
    %v208 = vadd.f32 %v206, %v207
    %v209 = vsel %vm141, %v109, 0.0
    %v210 = vadd.f32 %v208, %v209
    %v211 = vsel %vm141, %v110, 0.0
    %v212 = vadd.f32 %v210, %v211
    %v213 = vsel %vm141, %v111, 0.0
    %v214 = vadd.f32 %v212, %v213
    %v215 = vsel %vm141, %v112, 0.0
    %v216 = vadd.f32 %v214, %v215
    %v217 = vsel %vm141, %v113, 0.0
    %v218 = vadd.f32 %v216, %v217
    %v219 = vsel %vm141, %v114, 0.0
    %v220 = vadd.f32 %v218, %v219
    %v221 = vsel %vm141, %v115, 0.0
    %v222 = vadd.f32 %v220, %v221
    %v223 = vsel %vm141, %v116, 0.0
    %v224 = vadd.f32 %v222, %v223
    %v225 = vsel %vm141, %v117, 0.0
    %v226 = vadd.f32 %v224, %v225
    %v227 = vsel %vm141, %v118, 0.0
    %v228 = vadd.f32 %v226, %v227
    %v229 = vsel %vm141, %v119, 0.0
    %v230 = vadd.f32 %v228, %v229
    %v231 = vsel %vm141, %v120, 0.0
    %v232 = vadd.f32 %v230, %v231
    %v233 = vsel %vm141, %v121, 0.0
    %v234 = vadd.f32 %v232, %v233
    %v235 = vsel %vm141, %v122, 0.0
    %v236 = vadd.f32 %v234, %v235
    %v237 = vsel %vm141, %v123, 0.0
    %v238 = vadd.f32 %v236, %v237
    %v239 = vsel %vm141, %v124, 0.0
    %v240 = vadd.f32 %v238, %v239
    %v241 = vsel %vm141, %v125, 0.0
    %v242 = vadd.f32 %v240, %v241
    %v243 = vsel %vm141, %v126, 0.0
    %v244 = vadd.f32 %v242, %v243
    %v245 = vsel %vm141, %v127, 0.0
    %v246 = vadd.f32 %v244, %v245
    %v247 = vsel %vm141, %v128, 0.0
    %v248 = vadd.f32 %v246, %v247
    %v249 = vsel %vm141, %v129, 0.0
    %v250 = vadd.f32 %v248, %v249
    %v251 = vsel %vm141, %v130, 0.0
    %v252 = vadd.f32 %v250, %v251
    %v253 = vsel %vm141, %v131, 0.0
    %v254 = vadd.f32 %v252, %v253
    %v255 = vsel %vm141, %v132, 0.0
    %v256 = vadd.f32 %v254, %v255
    %v257 = vsel %vm141, %v133, 0.0
    %v258 = vadd.f32 %v256, %v257
    %v259 = vsel %vm141, %v134, 0.0
    %v260 = vadd.f32 %v258, %v259
    %v261 = vsel %vm141, %v135, 0.0
    %v262 = vadd.f32 %v260, %v261
    %v263 = vsel %vm141, %v136, 0.0
    %v264 = vadd.f32 %v262, %v263
    %v265 = vsel %vm141, %v137, 0.0
    %v266 = vadd.f32 %v264, %v265
    %v267 = vsel %vm141, %v138, 0.0
    %v268 = vadd.f32 %v266, %v267
    %v269 = vrot.slane %v268, 4
    %v270 = vadd.f32 %v268, %v269
    %v271 = vrot.slane %v270, 2
    %v272 = vadd.f32 %v270, %v271
    %v273 = vrot.slane %v272, 1
    %v274 = vadd.f32 %v272, %v273
    %v275 = vrcp.pop 512.0
    %v276 = vmul.f32 %v274, %v275
    %v277 = vsub.f32 %v75, %v276
    %v278 = vsub.f32 %v76, %v276
    %v279 = vsub.f32 %v77, %v276
    %v280 = vsub.f32 %v78, %v276
    %v281 = vsub.f32 %v79, %v276
    %v282 = vsub.f32 %v80, %v276
    %v283 = vsub.f32 %v81, %v276
    %v284 = vsub.f32 %v82, %v276
    %v285 = vsub.f32 %v83, %v276
    %v286 = vsub.f32 %v84, %v276
    %v287 = vsub.f32 %v85, %v276
    %v288 = vsub.f32 %v86, %v276
    %v289 = vsub.f32 %v87, %v276
    %v290 = vsub.f32 %v88, %v276
    %v291 = vsub.f32 %v89, %v276
    %v292 = vsub.f32 %v90, %v276
    %v293 = vsub.f32 %v91, %v276
    %v294 = vsub.f32 %v92, %v276
    %v295 = vsub.f32 %v93, %v276
    %v296 = vsub.f32 %v94, %v276
    %v297 = vsub.f32 %v95, %v276
    %v298 = vsub.f32 %v96, %v276
    %v299 = vsub.f32 %v97, %v276
    %v300 = vsub.f32 %v98, %v276
    %v301 = vsub.f32 %v99, %v276
    %v302 = vsub.f32 %v100, %v276
    %v303 = vsub.f32 %v101, %v276
    %v304 = vsub.f32 %v102, %v276
    %v305 = vsub.f32 %v103, %v276
    %v306 = vsub.f32 %v104, %v276
    %v307 = vsub.f32 %v105, %v276
    %v308 = vsub.f32 %v106, %v276
    %v309 = vsub.f32 %v107, %v276
    %v310 = vsub.f32 %v108, %v276
    %v311 = vsub.f32 %v109, %v276
    %v312 = vsub.f32 %v110, %v276
    %v313 = vsub.f32 %v111, %v276
    %v314 = vsub.f32 %v112, %v276
    %v315 = vsub.f32 %v113, %v276
    %v316 = vsub.f32 %v114, %v276
    %v317 = vsub.f32 %v115, %v276
    %v318 = vsub.f32 %v116, %v276
    %v319 = vsub.f32 %v117, %v276
    %v320 = vsub.f32 %v118, %v276
    %v321 = vsub.f32 %v119, %v276
    %v322 = vsub.f32 %v120, %v276
    %v323 = vsub.f32 %v121, %v276
    %v324 = vsub.f32 %v122, %v276
    %v325 = vsub.f32 %v123, %v276
    %v326 = vsub.f32 %v124, %v276
    %v327 = vsub.f32 %v125, %v276
    %v328 = vsub.f32 %v126, %v276
    %v329 = vsub.f32 %v127, %v276
    %v330 = vsub.f32 %v128, %v276
    %v331 = vsub.f32 %v129, %v276
    %v332 = vsub.f32 %v130, %v276
    %v333 = vsub.f32 %v131, %v276
    %v334 = vsub.f32 %v132, %v276
    %v335 = vsub.f32 %v133, %v276
    %v336 = vsub.f32 %v134, %v276
    %v337 = vsub.f32 %v135, %v276
    %v338 = vsub.f32 %v136, %v276
    %v339 = vsub.f32 %v137, %v276
    %v340 = vsub.f32 %v138, %v276
    %v341 = vmul.f32 %v277, %v277
    %v342 = vmul.f32 %v278, %v278
    %v343 = vmul.f32 %v279, %v279
    %v344 = vmul.f32 %v280, %v280
    %v345 = vmul.f32 %v281, %v281
    %v346 = vmul.f32 %v282, %v282
    %v347 = vmul.f32 %v283, %v283
    %v348 = vmul.f32 %v284, %v284
    %v349 = vmul.f32 %v285, %v285
    %v350 = vmul.f32 %v286, %v286
    %v351 = vmul.f32 %v287, %v287
    %v352 = vmul.f32 %v288, %v288
    %v353 = vmul.f32 %v289, %v289
    %v354 = vmul.f32 %v290, %v290
    %v355 = vmul.f32 %v291, %v291
    %v356 = vmul.f32 %v292, %v292
    %v357 = vmul.f32 %v293, %v293
    %v358 = vmul.f32 %v294, %v294
    %v359 = vmul.f32 %v295, %v295
    %v360 = vmul.f32 %v296, %v296
    %v361 = vmul.f32 %v297, %v297
    %v362 = vmul.f32 %v298, %v298
    %v363 = vmul.f32 %v299, %v299
    %v364 = vmul.f32 %v300, %v300
    %v365 = vmul.f32 %v301, %v301
    %v366 = vmul.f32 %v302, %v302
    %v367 = vmul.f32 %v303, %v303
    %v368 = vmul.f32 %v304, %v304
    %v369 = vmul.f32 %v305, %v305
    %v370 = vmul.f32 %v306, %v306
    %v371 = vmul.f32 %v307, %v307
    %v372 = vmul.f32 %v308, %v308
    %v373 = vmul.f32 %v309, %v309
    %v374 = vmul.f32 %v310, %v310
    %v375 = vmul.f32 %v311, %v311
    %v376 = vmul.f32 %v312, %v312
    %v377 = vmul.f32 %v313, %v313
    %v378 = vmul.f32 %v314, %v314
    %v379 = vmul.f32 %v315, %v315
    %v380 = vmul.f32 %v316, %v316
    %v381 = vmul.f32 %v317, %v317
    %v382 = vmul.f32 %v318, %v318
    %v383 = vmul.f32 %v319, %v319
    %v384 = vmul.f32 %v320, %v320
    %v385 = vmul.f32 %v321, %v321
    %v386 = vmul.f32 %v322, %v322
    %v387 = vmul.f32 %v323, %v323
    %v388 = vmul.f32 %v324, %v324
    %v389 = vmul.f32 %v325, %v325
    %v390 = vmul.f32 %v326, %v326
    %v391 = vmul.f32 %v327, %v327
    %v392 = vmul.f32 %v328, %v328
    %v393 = vmul.f32 %v329, %v329
    %v394 = vmul.f32 %v330, %v330
    %v395 = vmul.f32 %v331, %v331
    %v396 = vmul.f32 %v332, %v332
    %v397 = vmul.f32 %v333, %v333
    %v398 = vmul.f32 %v334, %v334
    %v399 = vmul.f32 %v335, %v335
    %v400 = vmul.f32 %v336, %v336
    %v401 = vmul.f32 %v337, %v337
    %v402 = vmul.f32 %v338, %v338
    %v403 = vmul.f32 %v339, %v339
    %v404 = vmul.f32 %v340, %v340
    %v405 = vsel %vm141, %v341, 0.0
    %v406 = vsel %vm141, %v342, 0.0
    %v407 = vadd.f32 %v405, %v406
    %v408 = vsel %vm141, %v343, 0.0
    %v409 = vadd.f32 %v407, %v408
    %v410 = vsel %vm141, %v344, 0.0
    %v411 = vadd.f32 %v409, %v410
    %v412 = vsel %vm141, %v345, 0.0
    %v413 = vadd.f32 %v411, %v412
    %v414 = vsel %vm141, %v346, 0.0
    %v415 = vadd.f32 %v413, %v414
    %v416 = vsel %vm141, %v347, 0.0
    %v417 = vadd.f32 %v415, %v416
    %v418 = vsel %vm141, %v348, 0.0
    %v419 = vadd.f32 %v417, %v418
    %v420 = vsel %vm141, %v349, 0.0
    %v421 = vadd.f32 %v419, %v420
    %v422 = vsel %vm141, %v350, 0.0
    %v423 = vadd.f32 %v421, %v422
    %v424 = vsel %vm141, %v351, 0.0
    %v425 = vadd.f32 %v423, %v424
    %v426 = vsel %vm141, %v352, 0.0
    %v427 = vadd.f32 %v425, %v426
    %v428 = vsel %vm141, %v353, 0.0
    %v429 = vadd.f32 %v427, %v428
    %v430 = vsel %vm141, %v354, 0.0
    %v431 = vadd.f32 %v429, %v430
    %v432 = vsel %vm141, %v355, 0.0
    %v433 = vadd.f32 %v431, %v432
    %v434 = vsel %vm141, %v356, 0.0
    %v435 = vadd.f32 %v433, %v434
    %v436 = vsel %vm141, %v357, 0.0
    %v437 = vadd.f32 %v435, %v436
    %v438 = vsel %vm141, %v358, 0.0
    %v439 = vadd.f32 %v437, %v438
    %v440 = vsel %vm141, %v359, 0.0
    %v441 = vadd.f32 %v439, %v440
    %v442 = vsel %vm141, %v360, 0.0
    %v443 = vadd.f32 %v441, %v442
    %v444 = vsel %vm141, %v361, 0.0
    %v445 = vadd.f32 %v443, %v444
    %v446 = vsel %vm141, %v362, 0.0
    %v447 = vadd.f32 %v445, %v446
    %v448 = vsel %vm141, %v363, 0.0
    %v449 = vadd.f32 %v447, %v448
    %v450 = vsel %vm141, %v364, 0.0
    %v451 = vadd.f32 %v449, %v450
    %v452 = vsel %vm141, %v365, 0.0
    %v453 = vadd.f32 %v451, %v452
    %v454 = vsel %vm141, %v366, 0.0
    %v455 = vadd.f32 %v453, %v454
    %v456 = vsel %vm141, %v367, 0.0
    %v457 = vadd.f32 %v455, %v456
    %v458 = vsel %vm141, %v368, 0.0
    %v459 = vadd.f32 %v457, %v458
    %v460 = vsel %vm141, %v369, 0.0
    %v461 = vadd.f32 %v459, %v460
    %v462 = vsel %vm141, %v370, 0.0
    %v463 = vadd.f32 %v461, %v462
    %v464 = vsel %vm141, %v371, 0.0
    %v465 = vadd.f32 %v463, %v464
    %v466 = vsel %vm141, %v372, 0.0
    %v467 = vadd.f32 %v465, %v466
    %v468 = vsel %vm141, %v373, 0.0
    %v469 = vadd.f32 %v467, %v468
    %v470 = vsel %vm141, %v374, 0.0
    %v471 = vadd.f32 %v469, %v470
    %v472 = vsel %vm141, %v375, 0.0
    %v473 = vadd.f32 %v471, %v472
    %v474 = vsel %vm141, %v376, 0.0
    %v475 = vadd.f32 %v473, %v474
    %v476 = vsel %vm141, %v377, 0.0
    %v477 = vadd.f32 %v475, %v476
    %v478 = vsel %vm141, %v378, 0.0
    %v479 = vadd.f32 %v477, %v478
    %v480 = vsel %vm141, %v379, 0.0
    %v481 = vadd.f32 %v479, %v480
    %v482 = vsel %vm141, %v380, 0.0
    %v483 = vadd.f32 %v481, %v482
    %v484 = vsel %vm141, %v381, 0.0
    %v485 = vadd.f32 %v483, %v484
    %v486 = vsel %vm141, %v382, 0.0
    %v487 = vadd.f32 %v485, %v486
    %v488 = vsel %vm141, %v383, 0.0
    %v489 = vadd.f32 %v487, %v488
    %v490 = vsel %vm141, %v384, 0.0
    %v491 = vadd.f32 %v489, %v490
    %v492 = vsel %vm141, %v385, 0.0
    %v493 = vadd.f32 %v491, %v492
    %v494 = vsel %vm141, %v386, 0.0
    %v495 = vadd.f32 %v493, %v494
    %v496 = vsel %vm141, %v387, 0.0
    %v497 = vadd.f32 %v495, %v496
    %v498 = vsel %vm141, %v388, 0.0
    %v499 = vadd.f32 %v497, %v498
    %v500 = vsel %vm141, %v389, 0.0
    %v501 = vadd.f32 %v499, %v500
    %v502 = vsel %vm141, %v390, 0.0
    %v503 = vadd.f32 %v501, %v502
    %v504 = vsel %vm141, %v391, 0.0
    %v505 = vadd.f32 %v503, %v504
    %v506 = vsel %vm141, %v392, 0.0
    %v507 = vadd.f32 %v505, %v506
    %v508 = vsel %vm141, %v393, 0.0
    %v509 = vadd.f32 %v507, %v508
    %v510 = vsel %vm141, %v394, 0.0
    %v511 = vadd.f32 %v509, %v510
    %v512 = vsel %vm141, %v395, 0.0
    %v513 = vadd.f32 %v511, %v512
    %v514 = vsel %vm141, %v396, 0.0
    %v515 = vadd.f32 %v513, %v514
    %v516 = vsel %vm141, %v397, 0.0
    %v517 = vadd.f32 %v515, %v516
    %v518 = vsel %vm141, %v398, 0.0
    %v519 = vadd.f32 %v517, %v518
    %v520 = vsel %vm141, %v399, 0.0
    %v521 = vadd.f32 %v519, %v520
    %v522 = vsel %vm141, %v400, 0.0
    %v523 = vadd.f32 %v521, %v522
    %v524 = vsel %vm141, %v401, 0.0
    %v525 = vadd.f32 %v523, %v524
    %v526 = vsel %vm141, %v402, 0.0
    %v527 = vadd.f32 %v525, %v526
    %v528 = vsel %vm141, %v403, 0.0
    %v529 = vadd.f32 %v527, %v528
    %v530 = vsel %vm141, %v404, 0.0
    %v531 = vadd.f32 %v529, %v530
    %v532 = vrot.slane %v531, 4
    %v533 = vadd.f32 %v531, %v532
    %v534 = vrot.slane %v533, 2
    %v535 = vadd.f32 %v533, %v534
    %v536 = vrot.slane %v535, 1
    %v537 = vadd.f32 %v535, %v536
    %v538 = vmul.f32 %v537, %v275
    %v539 = vadd.f32 %v538, 1e-05
    %v540 = vrsqrt.pop %v539
    %v541 = vmul.f32 %v277, %v540
    %v542 = vmul.f32 %v278, %v540
    %v543 = vmul.f32 %v279, %v540
    %v544 = vmul.f32 %v280, %v540
    %v545 = vmul.f32 %v281, %v540
    %v546 = vmul.f32 %v282, %v540
    %v547 = vmul.f32 %v283, %v540
    %v548 = vmul.f32 %v284, %v540
    %v549 = vmul.f32 %v285, %v540
    %v550 = vmul.f32 %v286, %v540
    %v551 = vmul.f32 %v287, %v540
    %v552 = vmul.f32 %v288, %v540
    %v553 = vmul.f32 %v289, %v540
    %v554 = vmul.f32 %v290, %v540
    %v555 = vmul.f32 %v291, %v540
    %v556 = vmul.f32 %v292, %v540
    %v557 = vmul.f32 %v293, %v540
    %v558 = vmul.f32 %v294, %v540
    %v559 = vmul.f32 %v295, %v540
    %v560 = vmul.f32 %v296, %v540
    %v561 = vmul.f32 %v297, %v540
    %v562 = vmul.f32 %v298, %v540
    %v563 = vmul.f32 %v299, %v540
    %v564 = vmul.f32 %v300, %v540
    %v565 = vmul.f32 %v301, %v540
    %v566 = vmul.f32 %v302, %v540
    %v567 = vmul.f32 %v303, %v540
    %v568 = vmul.f32 %v304, %v540
    %v569 = vmul.f32 %v305, %v540
    %v570 = vmul.f32 %v306, %v540
    %v571 = vmul.f32 %v307, %v540
    %v572 = vmul.f32 %v308, %v540
    %v573 = vmul.f32 %v309, %v540
    %v574 = vmul.f32 %v310, %v540
    %v575 = vmul.f32 %v311, %v540
    %v576 = vmul.f32 %v312, %v540
    %v577 = vmul.f32 %v313, %v540
    %v578 = vmul.f32 %v314, %v540
    %v579 = vmul.f32 %v315, %v540
    %v580 = vmul.f32 %v316, %v540
    %v581 = vmul.f32 %v317, %v540
    %v582 = vmul.f32 %v318, %v540
    %v583 = vmul.f32 %v319, %v540
    %v584 = vmul.f32 %v320, %v540
    %v585 = vmul.f32 %v321, %v540
    %v586 = vmul.f32 %v322, %v540
    %v587 = vmul.f32 %v323, %v540
    %v588 = vmul.f32 %v324, %v540
    %v589 = vmul.f32 %v325, %v540
    %v590 = vmul.f32 %v326, %v540
    %v591 = vmul.f32 %v327, %v540
    %v592 = vmul.f32 %v328, %v540
    %v593 = vmul.f32 %v329, %v540
    %v594 = vmul.f32 %v330, %v540
    %v595 = vmul.f32 %v331, %v540
    %v596 = vmul.f32 %v332, %v540
    %v597 = vmul.f32 %v333, %v540
    %v598 = vmul.f32 %v334, %v540
    %v599 = vmul.f32 %v335, %v540
    %v600 = vmul.f32 %v336, %v540
    %v601 = vmul.f32 %v337, %v540
    %v602 = vmul.f32 %v338, %v540
    %v603 = vmul.f32 %v339, %v540
    %v604 = vmul.f32 %v340, %v540
    %v606 = vlaneseq
    %v607 = vshrl.u32 %v606, 7
    %v608 = vsub.s32 0, %v607
    %v609 = vrot.slane %v139, %v608
    %v611 = vmul.f32 %v541, %v609
    %v612 = vmul.f32 %v542, %v609
    %v613 = vmul.f32 %v543, %v609
    %v614 = vmul.f32 %v544, %v609
    %v615 = vmul.f32 %v545, %v609
    %v616 = vmul.f32 %v546, %v609
    %v617 = vmul.f32 %v547, %v609
    %v618 = vmul.f32 %v548, %v609
    %v619 = vmul.f32 %v549, %v609
    %v620 = vmul.f32 %v550, %v609
    %v621 = vmul.f32 %v551, %v609
    %v622 = vmul.f32 %v552, %v609
    %v623 = vmul.f32 %v553, %v609
    %v624 = vmul.f32 %v554, %v609
    %v625 = vmul.f32 %v555, %v609
    %v626 = vmul.f32 %v556, %v609
    %v627 = vmul.f32 %v557, %v609
    %v628 = vmul.f32 %v558, %v609
    %v629 = vmul.f32 %v559, %v609
    %v630 = vmul.f32 %v560, %v609
    %v631 = vmul.f32 %v561, %v609
    %v632 = vmul.f32 %v562, %v609
    %v633 = vmul.f32 %v563, %v609
    %v634 = vmul.f32 %v564, %v609
    %v635 = vmul.f32 %v565, %v609
    %v636 = vmul.f32 %v566, %v609
    %v637 = vmul.f32 %v567, %v609
    %v638 = vmul.f32 %v568, %v609
    %v639 = vmul.f32 %v569, %v609
    %v640 = vmul.f32 %v570, %v609
    %v641 = vmul.f32 %v571, %v609
    %v642 = vmul.f32 %v572, %v609
    %v643 = vmul.f32 %v573, %v609
    %v644 = vmul.f32 %v574, %v609
    %v645 = vmul.f32 %v575, %v609
    %v646 = vmul.f32 %v576, %v609
    %v647 = vmul.f32 %v577, %v609
    %v648 = vmul.f32 %v578, %v609
    %v649 = vmul.f32 %v579, %v609
    %v650 = vmul.f32 %v580, %v609
    %v651 = vmul.f32 %v581, %v609
    %v652 = vmul.f32 %v582, %v609
    %v653 = vmul.f32 %v583, %v609
    %v654 = vmul.f32 %v584, %v609
    %v655 = vmul.f32 %v585, %v609
    %v656 = vmul.f32 %v586, %v609
    %v657 = vmul.f32 %v587, %v609
    %v658 = vmul.f32 %v588, %v609
    %v659 = vmul.f32 %v589, %v609
    %v660 = vmul.f32 %v590, %v609
    %v661 = vmul.f32 %v591, %v609
    %v662 = vmul.f32 %v592, %v609
    %v663 = vmul.f32 %v593, %v609
    %v664 = vmul.f32 %v594, %v609
    %v665 = vmul.f32 %v595, %v609
    %v666 = vmul.f32 %v596, %v609
    %v667 = vmul.f32 %v597, %v609
    %v668 = vmul.f32 %v598, %v609
    %v669 = vmul.f32 %v599, %v609
    %v670 = vmul.f32 %v600, %v609
    %v671 = vmul.f32 %v601, %v609
    %v672 = vmul.f32 %v602, %v609
    %v673 = vmul.f32 %v603, %v609
    %v674 = vmul.f32 %v604, %v609
    %v676 = vlaneseq
    %v677 = vshrl.u32 %v676, 7
    %v678 = vsub.s32 0, %v677
    %v679 = vrot.slane %v140, %v678
    %v681 = vadd.f32 %v611, %v679
    %v682 = vadd.f32 %v612, %v679
    %v683 = vadd.f32 %v613, %v679
    %v684 = vadd.f32 %v614, %v679
    %v685 = vadd.f32 %v615, %v679
    %v686 = vadd.f32 %v616, %v679
    %v687 = vadd.f32 %v617, %v679
    %v688 = vadd.f32 %v618, %v679
    %v689 = vadd.f32 %v619, %v679
    %v690 = vadd.f32 %v620, %v679
    %v691 = vadd.f32 %v621, %v679
    %v692 = vadd.f32 %v622, %v679
    %v693 = vadd.f32 %v623, %v679
    %v694 = vadd.f32 %v624, %v679
    %v695 = vadd.f32 %v625, %v679
    %v696 = vadd.f32 %v626, %v679
    %v697 = vadd.f32 %v627, %v679
    %v698 = vadd.f32 %v628, %v679
    %v699 = vadd.f32 %v629, %v679
    %v700 = vadd.f32 %v630, %v679
    %v701 = vadd.f32 %v631, %v679
    %v702 = vadd.f32 %v632, %v679
    %v703 = vadd.f32 %v633, %v679
    %v704 = vadd.f32 %v634, %v679
    %v705 = vadd.f32 %v635, %v679
    %v706 = vadd.f32 %v636, %v679
    %v707 = vadd.f32 %v637, %v679
    %v708 = vadd.f32 %v638, %v679
    %v709 = vadd.f32 %v639, %v679
    %v710 = vadd.f32 %v640, %v679
    %v711 = vadd.f32 %v641, %v679
    %v712 = vadd.f32 %v642, %v679
    %v713 = vadd.f32 %v643, %v679
    %v714 = vadd.f32 %v644, %v679
    %v715 = vadd.f32 %v645, %v679
    %v716 = vadd.f32 %v646, %v679
    %v717 = vadd.f32 %v647, %v679
    %v718 = vadd.f32 %v648, %v679
    %v719 = vadd.f32 %v649, %v679
    %v720 = vadd.f32 %v650, %v679
    %v721 = vadd.f32 %v651, %v679
    %v722 = vadd.f32 %v652, %v679
    %v723 = vadd.f32 %v653, %v679
    %v724 = vadd.f32 %v654, %v679
    %v725 = vadd.f32 %v655, %v679
    %v726 = vadd.f32 %v656, %v679
    %v727 = vadd.f32 %v657, %v679
    %v728 = vadd.f32 %v658, %v679
    %v729 = vadd.f32 %v659, %v679
    %v730 = vadd.f32 %v660, %v679
    %v731 = vadd.f32 %v661, %v679
    %v732 = vadd.f32 %v662, %v679
    %v733 = vadd.f32 %v663, %v679
    %v734 = vadd.f32 %v664, %v679
    %v735 = vadd.f32 %v665, %v679
    %v736 = vadd.f32 %v666, %v679
    %v737 = vadd.f32 %v667, %v679
    %v738 = vadd.f32 %v668, %v679
    %v739 = vadd.f32 %v669, %v679
    %v740 = vadd.f32 %v670, %v679
    %v741 = vadd.f32 %v671, %v679
    %v742 = vadd.f32 %v672, %v679
    %v743 = vadd.f32 %v673, %v679
    %v744 = vadd.f32 %v674, %v679
    %v745 = vsel %vm141, %v681, 0.0
    %v746 = vsel %vm141, %v682, 0.0
    %v747 = vsel %vm141, %v683, 0.0
    %v748 = vsel %vm141, %v684, 0.0
    %v749 = vsel %vm141, %v685, 0.0
    %v750 = vsel %vm141, %v686, 0.0
    %v751 = vsel %vm141, %v687, 0.0
    %v752 = vsel %vm141, %v688, 0.0
    %v753 = vsel %vm141, %v689, 0.0
    %v754 = vsel %vm141, %v690, 0.0
    %v755 = vsel %vm141, %v691, 0.0
    %v756 = vsel %vm141, %v692, 0.0
    %v757 = vsel %vm141, %v693, 0.0
    %v758 = vsel %vm141, %v694, 0.0
    %v759 = vsel %vm141, %v695, 0.0
    %v760 = vsel %vm141, %v696, 0.0
    %v761 = vsel %vm141, %v697, 0.0
    %v762 = vsel %vm141, %v698, 0.0
    %v763 = vsel %vm141, %v699, 0.0
    %v764 = vsel %vm141, %v700, 0.0
    %v765 = vsel %vm141, %v701, 0.0
    %v766 = vsel %vm141, %v702, 0.0
    %v767 = vsel %vm141, %v703, 0.0
    %v768 = vsel %vm141, %v704, 0.0
    %v769 = vsel %vm141, %v705, 0.0
    %v770 = vsel %vm141, %v706, 0.0
    %v771 = vsel %vm141, %v707, 0.0
    %v772 = vsel %vm141, %v708, 0.0
    %v773 = vsel %vm141, %v709, 0.0
    %v774 = vsel %vm141, %v710, 0.0
    %v775 = vsel %vm141, %v711, 0.0
    %v776 = vsel %vm141, %v712, 0.0
    %v777 = vsel %vm141, %v713, 0.0
    %v778 = vsel %vm141, %v714, 0.0
    %v779 = vsel %vm141, %v715, 0.0
    %v780 = vsel %vm141, %v716, 0.0
    %v781 = vsel %vm141, %v717, 0.0
    %v782 = vsel %vm141, %v718, 0.0
    %v783 = vsel %vm141, %v719, 0.0
    %v784 = vsel %vm141, %v720, 0.0
    %v785 = vsel %vm141, %v721, 0.0
    %v786 = vsel %vm141, %v722, 0.0
    %v787 = vsel %vm141, %v723, 0.0
    %v788 = vsel %vm141, %v724, 0.0
    %v789 = vsel %vm141, %v725, 0.0
    %v790 = vsel %vm141, %v726, 0.0
    %v791 = vsel %vm141, %v727, 0.0
    %v792 = vsel %vm141, %v728, 0.0
    %v793 = vsel %vm141, %v729, 0.0
    %v794 = vsel %vm141, %v730, 0.0
    %v795 = vsel %vm141, %v731, 0.0
    %v796 = vsel %vm141, %v732, 0.0
    %v797 = vsel %vm141, %v733, 0.0
    %v798 = vsel %vm141, %v734, 0.0
    %v799 = vsel %vm141, %v735, 0.0
    %v800 = vsel %vm141, %v736, 0.0
    %v801 = vsel %vm141, %v737, 0.0
    %v802 = vsel %vm141, %v738, 0.0
    %v803 = vsel %vm141, %v739, 0.0
    %v804 = vsel %vm141, %v740, 0.0
    %v805 = vsel %vm141, %v741, 0.0
    %v806 = vsel %vm141, %v742, 0.0
    %v807 = vsel %vm141, %v743, 0.0
    %v808 = vsel %vm141, %v744, 0.0
    %v809 = vpack.c.bf16 %v746, %v745
    %v810 = vpack.c.bf16 %v748, %v747
    %v811 = vpack.c.bf16 %v750, %v749
    %v812 = vpack.c.bf16 %v752, %v751
    %v813 = vpack.c.bf16 %v754, %v753
    %v814 = vpack.c.bf16 %v756, %v755
    %v815 = vpack.c.bf16 %v758, %v757
    %v816 = vpack.c.bf16 %v760, %v759
    %v817 = vpack.c.bf16 %v762, %v761
    %v818 = vpack.c.bf16 %v764, %v763
    %v819 = vpack.c.bf16 %v766, %v765
    %v820 = vpack.c.bf16 %v768, %v767
    %v821 = vpack.c.bf16 %v770, %v769
    %v822 = vpack.c.bf16 %v772, %v771
    %v823 = vpack.c.bf16 %v774, %v773
    %v824 = vpack.c.bf16 %v776, %v775
    %v825 = vpack.c.bf16 %v778, %v777
    %v826 = vpack.c.bf16 %v780, %v779
    %v827 = vpack.c.bf16 %v782, %v781
    %v828 = vpack.c.bf16 %v784, %v783
    %v829 = vpack.c.bf16 %v786, %v785
    %v830 = vpack.c.bf16 %v788, %v787
    %v831 = vpack.c.bf16 %v790, %v789
    %v832 = vpack.c.bf16 %v792, %v791
    %v833 = vpack.c.bf16 %v794, %v793
    %v834 = vpack.c.bf16 %v796, %v795
    %v835 = vpack.c.bf16 %v798, %v797
    %v836 = vpack.c.bf16 %v800, %v799
    %v837 = vpack.c.bf16 %v802, %v801
    %v838 = vpack.c.bf16 %v804, %v803
    %v839 = vpack.c.bf16 %v806, %v805
    %v840 = vpack.c.bf16 %v808, %v807
    %v873 = vunpack.c.l.b16 %v809
    %v874 = vunpack.c.h.b16 %v809
    %v875 = vunpack.c.l.b16 %v810
    %v876 = vunpack.c.h.b16 %v810
    %v877 = vunpack.c.l.b16 %v811
    %v878 = vunpack.c.h.b16 %v811
    %v879 = vunpack.c.l.b16 %v812
    %v880 = vunpack.c.h.b16 %v812
    %v881 = vunpack.c.l.b16 %v813
    %v882 = vunpack.c.h.b16 %v813
    %v883 = vunpack.c.l.b16 %v814
    %v884 = vunpack.c.h.b16 %v814
    %v885 = vunpack.c.l.b16 %v815
    %v886 = vunpack.c.h.b16 %v815
    %v887 = vunpack.c.l.b16 %v816
    %v888 = vunpack.c.h.b16 %v816
    %v889 = vunpack.c.l.b16 %v817
    %v890 = vunpack.c.h.b16 %v817
    %v891 = vunpack.c.l.b16 %v818
    %v892 = vunpack.c.h.b16 %v818
    %v893 = vunpack.c.l.b16 %v819
    %v894 = vunpack.c.h.b16 %v819
    %v895 = vunpack.c.l.b16 %v820
    %v896 = vunpack.c.h.b16 %v820
    %v897 = vunpack.c.l.b16 %v821
    %v898 = vunpack.c.h.b16 %v821
    %v899 = vunpack.c.l.b16 %v822
    %v900 = vunpack.c.h.b16 %v822
    %v901 = vunpack.c.l.b16 %v823
    %v902 = vunpack.c.h.b16 %v823
    %v903 = vunpack.c.l.b16 %v824
    %v904 = vunpack.c.h.b16 %v824
    %v905 = vunpack.c.l.b16 %v825
    %v906 = vunpack.c.h.b16 %v825
    %v907 = vunpack.c.l.b16 %v826
    %v908 = vunpack.c.h.b16 %v826
    %v909 = vunpack.c.l.b16 %v827
    %v910 = vunpack.c.h.b16 %v827
    %v911 = vunpack.c.l.b16 %v828
    %v912 = vunpack.c.h.b16 %v828
    %v913 = vunpack.c.l.b16 %v829
    %v914 = vunpack.c.h.b16 %v829
    %v915 = vunpack.c.l.b16 %v830
    %v916 = vunpack.c.h.b16 %v830
    %v917 = vunpack.c.l.b16 %v831
    %v918 = vunpack.c.h.b16 %v831
    %v919 = vunpack.c.l.b16 %v832
    %v920 = vunpack.c.h.b16 %v832
    %v921 = vunpack.c.l.b16 %v833
    %v922 = vunpack.c.h.b16 %v833
    %v923 = vunpack.c.l.b16 %v834
    %v924 = vunpack.c.h.b16 %v834
    %v925 = vunpack.c.l.b16 %v835
    %v926 = vunpack.c.h.b16 %v835
    %v927 = vunpack.c.l.b16 %v836
    %v928 = vunpack.c.h.b16 %v836
    %v929 = vunpack.c.l.b16 %v837
    %v930 = vunpack.c.h.b16 %v837
    %v931 = vunpack.c.l.b16 %v838
    %v932 = vunpack.c.h.b16 %v838
    %v933 = vunpack.c.l.b16 %v839
    %v934 = vunpack.c.h.b16 %v839
    %v935 = vunpack.c.l.b16 %v840
    %v936 = vunpack.c.h.b16 %v840
    %v937 = vpack.c.b16 %v873, %v873
    %v938 = vpack.c.b16 %v874, %v874
    %v939 = vpack.c.b16 %v875, %v875
    %v940 = vpack.c.b16 %v876, %v876
    %v941 = vpack.c.b16 %v877, %v877
    %v942 = vpack.c.b16 %v878, %v878
    %v943 = vpack.c.b16 %v879, %v879
    %v944 = vpack.c.b16 %v880, %v880
    %v945 = vpack.c.b16 %v881, %v881
    %v946 = vpack.c.b16 %v882, %v882
    %v947 = vpack.c.b16 %v883, %v883
    %v948 = vpack.c.b16 %v884, %v884
    %v949 = vpack.c.b16 %v885, %v885
    %v950 = vpack.c.b16 %v886, %v886
    %v951 = vpack.c.b16 %v887, %v887
    %v952 = vpack.c.b16 %v888, %v888
    %v953 = vpack.c.b16 %v889, %v889
    %v954 = vpack.c.b16 %v890, %v890
    %v955 = vpack.c.b16 %v891, %v891
    %v956 = vpack.c.b16 %v892, %v892
    %v957 = vpack.c.b16 %v893, %v893
    %v958 = vpack.c.b16 %v894, %v894
    %v959 = vpack.c.b16 %v895, %v895
    %v960 = vpack.c.b16 %v896, %v896
    %v961 = vpack.c.b16 %v897, %v897
    %v962 = vpack.c.b16 %v898, %v898
    %v963 = vpack.c.b16 %v899, %v899
    %v964 = vpack.c.b16 %v900, %v900
    %v965 = vpack.c.b16 %v901, %v901
    %v966 = vpack.c.b16 %v902, %v902
    %v967 = vpack.c.b16 %v903, %v903
    %v968 = vpack.c.b16 %v904, %v904
    %v969 = vpack.c.b16 %v905, %v905
    %v970 = vpack.c.b16 %v906, %v906
    %v971 = vpack.c.b16 %v907, %v907
    %v972 = vpack.c.b16 %v908, %v908
    %v973 = vpack.c.b16 %v909, %v909
    %v974 = vpack.c.b16 %v910, %v910
    %v975 = vpack.c.b16 %v911, %v911
    %v976 = vpack.c.b16 %v912, %v912
    %v977 = vpack.c.b16 %v913, %v913
    %v978 = vpack.c.b16 %v914, %v914
    %v979 = vpack.c.b16 %v915, %v915
    %v980 = vpack.c.b16 %v916, %v916
    %v981 = vpack.c.b16 %v917, %v917
    %v982 = vpack.c.b16 %v918, %v918
    %v983 = vpack.c.b16 %v919, %v919
    %v984 = vpack.c.b16 %v920, %v920
    %v985 = vpack.c.b16 %v921, %v921
    %v986 = vpack.c.b16 %v922, %v922
    %v987 = vpack.c.b16 %v923, %v923
    %v988 = vpack.c.b16 %v924, %v924
    %v989 = vpack.c.b16 %v925, %v925
    %v990 = vpack.c.b16 %v926, %v926
    %v991 = vpack.c.b16 %v927, %v927
    %v992 = vpack.c.b16 %v928, %v928
    %v993 = vpack.c.b16 %v929, %v929
    %v994 = vpack.c.b16 %v930, %v930
    %v995 = vpack.c.b16 %v931, %v931
    %v996 = vpack.c.b16 %v932, %v932
    %v997 = vpack.c.b16 %v933, %v933
    %v998 = vpack.c.b16 %v934, %v934
    %v999 = vpack.c.b16 %v935, %v935
    %v1000 = vpack.c.b16 %v936, %v936
    %1001 = vst [vmem:[#allocation2] sm:$0xf] 0
    %vm1002 = vcmask 1040384
    %vm1003 = vsmask.f32 256
    %vm1004 = vmand %vm1002, %vm1003
    %v1005 = vld [vmem:[#allocation2 + $0x4] sm:$0x1]
    %v1006 = vsel %vm1004, 0, %v1005
    %1007 = vst [vmem:[#allocation2 + $0x4] sm:$0x1] %v1006
    %1008 = vst [vmem:[#allocation2 + $0x48] sm:$0xf] 0
    %v1009 = vld [vmem:[#allocation2 + $0x4c] sm:$0x1]
    %v1010 = vsel %vm1004, 0, %v1009
    %1011 = vst [vmem:[#allocation2 + $0x4c] sm:$0x1] %v1010
    %v1012 = vld [vmem:[#allocation2] sm:$0x1]
    %v1013 = vsel %vm1004, 0, %v1012
    %1014 = vst [vmem:[#allocation2] sm:$0x1] %v1013
    %v1015 = vld [vmem:[#allocation2 + $0x8] sm:$0x1]
    %v1016 = vsel %vm1004, 0, %v1015
    %1017 = vst [vmem:[#allocation2 + $0x8] sm:$0x1] %v1016
    %v1018 = vld [vmem:[#allocation2 + $0x10] sm:$0x1]
    %v1019 = vsel %vm1004, 0, %v1018
    %1020 = vst [vmem:[#allocation2 + $0x10] sm:$0x1] %v1019
    %v1021 = vld [vmem:[#allocation2 + $0x18] sm:$0x1]
    %v1022 = vsel %vm1004, 0, %v1021
    %1023 = vst [vmem:[#allocation2 + $0x18] sm:$0x1] %v1022
    %v1024 = vld [vmem:[#allocation2 + $0x20] sm:$0x1]
    %v1025 = vsel %vm1004, 0, %v1024
    %1026 = vst [vmem:[#allocation2 + $0x20] sm:$0x1] %v1025
    %v1027 = vld [vmem:[#allocation2 + $0x28] sm:$0x1]
    %v1028 = vsel %vm1004, 0, %v1027
    %1029 = vst [vmem:[#allocation2 + $0x28] sm:$0x1] %v1028
    %v1030 = vld [vmem:[#allocation2 + $0x30] sm:$0x1]
    %v1031 = vsel %vm1004, 0, %v1030
    %1032 = vst [vmem:[#allocation2 + $0x30] sm:$0x1] %v1031
    %v1033 = vld [vmem:[#allocation2 + $0x38] sm:$0x1]
    %v1034 = vsel %vm1004, 0, %v1033
    %1035 = vst [vmem:[#allocation2 + $0x38] sm:$0x1] %v1034
    %v1036 = vld [vmem:[#allocation2 + $0x40] sm:$0x1]
    %v1037 = vsel %vm1004, 0, %v1036
    %1038 = vst [vmem:[#allocation2 + $0x40] sm:$0x1] %v1037
    %v1039 = vld [vmem:[#allocation2 + $0x48] sm:$0x1]
    %v1040 = vsel %vm1004, 0, %v1039
    %1041 = vst [vmem:[#allocation2 + $0x48] sm:$0x1] %v1040
    %v1042 = vld [vmem:[#allocation2 + $0x50] sm:$0x1]
    %v1043 = vsel %vm1004, 0, %v1042
    %1044 = vst [vmem:[#allocation2 + $0x50] sm:$0x1] %v1043
    %v1045 = vld [vmem:[#allocation2 + $0x58] sm:$0x1]
    %v1046 = vsel %vm1004, 0, %v1045
    %1047 = vst [vmem:[#allocation2 + $0x58] sm:$0x1] %v1046
    %v1048 = vld [vmem:[#allocation2 + $0x60] sm:$0x1]
    %v1049 = vsel %vm1004, 0, %v1048
    %1050 = vst [vmem:[#allocation2 + $0x60] sm:$0x1] %v1049
    %v1051 = vld [vmem:[#allocation2 + $0x68] sm:$0x1]
    %v1052 = vsel %vm1004, 0, %v1051
    %1053 = vst [vmem:[#allocation2 + $0x68] sm:$0x1] %v1052
    %v1054 = vld [vmem:[#allocation2 + $0x70] sm:$0x1]
    %v1055 = vsel %vm1004, 0, %v1054
    %1056 = vst [vmem:[#allocation2 + $0x70] sm:$0x1] %v1055
    %v1057 = vld [vmem:[#allocation2 + $0x78] sm:$0x1]
    %v1058 = vsel %vm1004, 0, %v1057
    %1059 = vst [vmem:[#allocation2 + $0x78] sm:$0x1] %v1058
    %v1060 = vld [vmem:[#allocation2 + $0x80] sm:$0x1]
    %v1061 = vsel %vm1004, 0, %v1060
    %1062 = vst [vmem:[#allocation2 + $0x80] sm:$0x1] %v1061
    %v1063 = vld [vmem:[#allocation2 + $0x88] sm:$0x1]
    %v1064 = vsel %vm1004, 0, %v1063
    %1065 = vst [vmem:[#allocation2 + $0x88] sm:$0x1] %v1064
    %v1067 = vshrl.u32 %v937, 16
    %v1069 = vrot.slane %v1067, 7
    %v1070 = vshll.u32 %v937, 16
    %v1072 = vor.u32 %v1069, %v1070
    %v1073 = vrot.slane %v1069, 4
    %v1075 = vshrl.u32 %v938, 16
    %v1077 = vrot.slane %v1075, 7
    %v1078 = vshll.u32 %v938, 16
    %v1080 = vor.u32 %v1077, %v1078
    %v1081 = vrot.slane %v1077, 4
    %v1083 = vshrl.u32 %v939, 16
    %v1085 = vrot.slane %v1083, 7
    %v1086 = vshll.u32 %v939, 16
    %v1088 = vor.u32 %v1085, %v1086
    %v1089 = vrot.slane %v1085, 4
    %v1091 = vshrl.u32 %v940, 16
    %v1093 = vrot.slane %v1091, 7
    %v1094 = vshll.u32 %v940, 16
    %v1096 = vor.u32 %v1093, %v1094
    %v1097 = vrot.slane %v1093, 4
    %v1099 = vshrl.u32 %v941, 16
    %v1101 = vrot.slane %v1099, 7
    %v1102 = vshll.u32 %v941, 16
    %v1104 = vor.u32 %v1101, %v1102
    %v1105 = vrot.slane %v1101, 4
    %v1107 = vshrl.u32 %v942, 16
    %v1109 = vrot.slane %v1107, 7
    %v1110 = vshll.u32 %v942, 16
    %v1112 = vor.u32 %v1109, %v1110
    %v1113 = vrot.slane %v1109, 4
    %v1115 = vshrl.u32 %v943, 16
    %v1117 = vrot.slane %v1115, 7
    %v1118 = vshll.u32 %v943, 16
    %v1120 = vor.u32 %v1117, %v1118
    %v1121 = vrot.slane %v1117, 4
    %v1123 = vshrl.u32 %v944, 16
    %v1125 = vrot.slane %v1123, 7
    %v1126 = vshll.u32 %v944, 16
    %v1128 = vor.u32 %v1125, %v1126
    %v1129 = vrot.slane %v1125, 4
    %v1131 = vshrl.u32 %v945, 16
    %v1133 = vrot.slane %v1131, 7
    %v1134 = vshll.u32 %v945, 16
    %v1136 = vor.u32 %v1133, %v1134
    %v1137 = vrot.slane %v1133, 4
    %v1139 = vshrl.u32 %v946, 16
    %v1141 = vrot.slane %v1139, 7
    %v1142 = vshll.u32 %v946, 16
    %v1144 = vor.u32 %v1141, %v1142
    %v1145 = vrot.slane %v1141, 4
    %v1147 = vshrl.u32 %v947, 16
    %v1149 = vrot.slane %v1147, 7
    %v1150 = vshll.u32 %v947, 16
    %v1152 = vor.u32 %v1149, %v1150
    %v1153 = vrot.slane %v1149, 4
    %v1155 = vshrl.u32 %v948, 16
    %v1157 = vrot.slane %v1155, 7
    %v1158 = vshll.u32 %v948, 16
    %v1160 = vor.u32 %v1157, %v1158
    %v1161 = vrot.slane %v1157, 4
    %v1163 = vshrl.u32 %v949, 16
    %v1165 = vrot.slane %v1163, 7
    %v1166 = vshll.u32 %v949, 16
    %v1168 = vor.u32 %v1165, %v1166
    %v1169 = vrot.slane %v1165, 4
    %v1171 = vshrl.u32 %v950, 16
    %v1173 = vrot.slane %v1171, 7
    %v1174 = vshll.u32 %v950, 16
    %v1176 = vor.u32 %v1173, %v1174
    %v1177 = vrot.slane %v1173, 4
    %v1179 = vshrl.u32 %v951, 16
    %v1181 = vrot.slane %v1179, 7
    %v1182 = vshll.u32 %v951, 16
    %v1184 = vor.u32 %v1181, %v1182
    %v1185 = vrot.slane %v1181, 4
    %v1187 = vshrl.u32 %v952, 16
    %v1189 = vrot.slane %v1187, 7
    %v1190 = vshll.u32 %v952, 16
    %v1192 = vor.u32 %v1189, %v1190
    %v1193 = vrot.slane %v1189, 4
    %s1226 = scalar_lea.vmem [#allocation2], 8
    %vm1227 = vcmask 1043456
    %vm1228 = vsmask.f32 7938
    %vm1229 = vmand %vm1227, %vm1228
    %v1230 = vld [vmem:[%s1226] sm:$0xf]
    %v1231 = vsel %vm1229, %v1072, %v1230
    %1232 = vst [vmem:[%s1226] sm:$0xf] %v1231
    %v1233 = vld [vmem:[%s1226 + $0x4] sm:$0x1]
    %v1234 = vsel %vm1004, %v1073, %v1233
    %1235 = vst [vmem:[%s1226 + $0x4] sm:$0x1] %v1234
    %v1236 = vld [vmem:[%s1226 + $0x8] sm:$0xf]
    %v1237 = vsel %vm1229, %v1080, %v1236
    %1238 = vst [vmem:[%s1226 + $0x8] sm:$0xf] %v1237
    %v1239 = vld [vmem:[%s1226 + $0xc] sm:$0x1]
    %v1240 = vsel %vm1004, %v1081, %v1239
    %1241 = vst [vmem:[%s1226 + $0xc] sm:$0x1] %v1240
    %v1242 = vld [vmem:[%s1226 + $0x10] sm:$0xf]
    %v1243 = vsel %vm1229, %v1088, %v1242
    %1244 = vst [vmem:[%s1226 + $0x10] sm:$0xf] %v1243
    %v1245 = vld [vmem:[%s1226 + $0x14] sm:$0x1]
    %v1246 = vsel %vm1004, %v1089, %v1245
    %1247 = vst [vmem:[%s1226 + $0x14] sm:$0x1] %v1246
    %v1248 = vld [vmem:[%s1226 + $0x18] sm:$0xf]
    %v1249 = vsel %vm1229, %v1096, %v1248
    %1250 = vst [vmem:[%s1226 + $0x18] sm:$0xf] %v1249
    %v1251 = vld [vmem:[%s1226 + $0x1c] sm:$0x1]
    %v1252 = vsel %vm1004, %v1097, %v1251
    %1253 = vst [vmem:[%s1226 + $0x1c] sm:$0x1] %v1252
    %v1254 = vld [vmem:[%s1226 + $0x20] sm:$0xf]
    %v1255 = vsel %vm1229, %v1104, %v1254
    %1256 = vst [vmem:[%s1226 + $0x20] sm:$0xf] %v1255
    %v1257 = vld [vmem:[%s1226 + $0x24] sm:$0x1]
    %v1258 = vsel %vm1004, %v1105, %v1257
    %1259 = vst [vmem:[%s1226 + $0x24] sm:$0x1] %v1258
    %v1260 = vld [vmem:[%s1226 + $0x28] sm:$0xf]
    %v1261 = vsel %vm1229, %v1112, %v1260
    %1262 = vst [vmem:[%s1226 + $0x28] sm:$0xf] %v1261
    %v1263 = vld [vmem:[%s1226 + $0x2c] sm:$0x1]
    %v1264 = vsel %vm1004, %v1113, %v1263
    %1265 = vst [vmem:[%s1226 + $0x2c] sm:$0x1] %v1264
    %v1266 = vld [vmem:[%s1226 + $0x30] sm:$0xf]
    %v1267 = vsel %vm1229, %v1120, %v1266
    %1268 = vst [vmem:[%s1226 + $0x30] sm:$0xf] %v1267
    %v1269 = vld [vmem:[%s1226 + $0x34] sm:$0x1]
    %v1270 = vsel %vm1004, %v1121, %v1269
    %1271 = vst [vmem:[%s1226 + $0x34] sm:$0x1] %v1270
    %v1272 = vld [vmem:[%s1226 + $0x38] sm:$0xf]
    %v1273 = vsel %vm1229, %v1128, %v1272
    %1274 = vst [vmem:[%s1226 + $0x38] sm:$0xf] %v1273
    %v1275 = vld [vmem:[%s1226 + $0x3c] sm:$0x1]
    %v1276 = vsel %vm1004, %v1129, %v1275
    %1277 = vst [vmem:[%s1226 + $0x3c] sm:$0x1] %v1276
    %v1278 = vld [vmem:[%s1226 + $0x48] sm:$0xf]
    %v1279 = vsel %vm1229, %v1136, %v1278
    %1280 = vst [vmem:[%s1226 + $0x48] sm:$0xf] %v1279
    %v1281 = vld [vmem:[%s1226 + $0x4c] sm:$0x1]
    %v1282 = vsel %vm1004, %v1137, %v1281
    %1283 = vst [vmem:[%s1226 + $0x4c] sm:$0x1] %v1282
    %v1284 = vld [vmem:[%s1226 + $0x50] sm:$0xf]
    %v1285 = vsel %vm1229, %v1144, %v1284
    %1286 = vst [vmem:[%s1226 + $0x50] sm:$0xf] %v1285
    %v1287 = vld [vmem:[%s1226 + $0x54] sm:$0x1]
    %v1288 = vsel %vm1004, %v1145, %v1287
    %1289 = vst [vmem:[%s1226 + $0x54] sm:$0x1] %v1288
    %v1290 = vld [vmem:[%s1226 + $0x58] sm:$0xf]
    %v1291 = vsel %vm1229, %v1152, %v1290
    %1292 = vst [vmem:[%s1226 + $0x58] sm:$0xf] %v1291
    %v1293 = vld [vmem:[%s1226 + $0x5c] sm:$0x1]
    %v1294 = vsel %vm1004, %v1153, %v1293
    %1295 = vst [vmem:[%s1226 + $0x5c] sm:$0x1] %v1294
    %v1296 = vld [vmem:[%s1226 + $0x60] sm:$0xf]
    %v1297 = vsel %vm1229, %v1160, %v1296
    %1298 = vst [vmem:[%s1226 + $0x60] sm:$0xf] %v1297
    %v1299 = vld [vmem:[%s1226 + $0x64] sm:$0x1]
    %v1300 = vsel %vm1004, %v1161, %v1299
    %1301 = vst [vmem:[%s1226 + $0x64] sm:$0x1] %v1300
    %v1302 = vld [vmem:[%s1226 + $0x68] sm:$0xf]
    %v1303 = vsel %vm1229, %v1168, %v1302
    %1304 = vst [vmem:[%s1226 + $0x68] sm:$0xf] %v1303
    %v1305 = vld [vmem:[%s1226 + $0x6c] sm:$0x1]
    %v1306 = vsel %vm1004, %v1169, %v1305
    %1307 = vst [vmem:[%s1226 + $0x6c] sm:$0x1] %v1306
    %v1308 = vld [vmem:[%s1226 + $0x70] sm:$0xf]
    %v1309 = vsel %vm1229, %v1176, %v1308
    %1310 = vst [vmem:[%s1226 + $0x70] sm:$0xf] %v1309
    %v1311 = vld [vmem:[%s1226 + $0x74] sm:$0x1]
    %v1312 = vsel %vm1004, %v1177, %v1311
    %1313 = vst [vmem:[%s1226 + $0x74] sm:$0x1] %v1312
    %v1314 = vld [vmem:[%s1226 + $0x78] sm:$0xf]
    %v1315 = vsel %vm1229, %v1184, %v1314
    %1316 = vst [vmem:[%s1226 + $0x78] sm:$0xf] %v1315
    %v1317 = vld [vmem:[%s1226 + $0x7c] sm:$0x1]
    %v1318 = vsel %vm1004, %v1185, %v1317
    %1319 = vst [vmem:[%s1226 + $0x7c] sm:$0x1] %v1318
    %v1320 = vld [vmem:[%s1226 + $0x80] sm:$0xf]
    %v1321 = vsel %vm1229, %v1192, %v1320
    %1322 = vst [vmem:[%s1226 + $0x80] sm:$0xf] %v1321
    %v1323 = vld [vmem:[%s1226 + $0x84] sm:$0x1]
    %v1324 = vsel %vm1004, %v1193, %v1323
    %1325 = vst [vmem:[%s1226 + $0x84] sm:$0x1] %v1324
    %1326 = vst [vmem:[#allocation3] sm:$0xf] 0
    %v1327 = vld [vmem:[#allocation3 + $0x4] sm:$0x1]
    %v1328 = vsel %vm1004, 0, %v1327
    %1329 = vst [vmem:[#allocation3 + $0x4] sm:$0x1] %v1328
    %1330 = vst [vmem:[#allocation3 + $0x48] sm:$0xf] 0
    %v1331 = vld [vmem:[#allocation3 + $0x4c] sm:$0x1]
    %v1332 = vsel %vm1004, 0, %v1331
    %1333 = vst [vmem:[#allocation3 + $0x4c] sm:$0x1] %v1332
    %v1334 = vld [vmem:[#allocation3] sm:$0x1]
    %v1335 = vsel %vm1004, 0, %v1334
    %1336 = vst [vmem:[#allocation3] sm:$0x1] %v1335
    %v1337 = vld [vmem:[#allocation3 + $0x8] sm:$0x1]
    %v1338 = vsel %vm1004, 0, %v1337
    %1339 = vst [vmem:[#allocation3 + $0x8] sm:$0x1] %v1338
    %v1340 = vld [vmem:[#allocation3 + $0x10] sm:$0x1]
    %v1341 = vsel %vm1004, 0, %v1340
    %1342 = vst [vmem:[#allocation3 + $0x10] sm:$0x1] %v1341
    %v1343 = vld [vmem:[#allocation3 + $0x18] sm:$0x1]
    %v1344 = vsel %vm1004, 0, %v1343
    %1345 = vst [vmem:[#allocation3 + $0x18] sm:$0x1] %v1344
    %v1346 = vld [vmem:[#allocation3 + $0x20] sm:$0x1]
    %v1347 = vsel %vm1004, 0, %v1346
    %1348 = vst [vmem:[#allocation3 + $0x20] sm:$0x1] %v1347
    %v1349 = vld [vmem:[#allocation3 + $0x28] sm:$0x1]
    %v1350 = vsel %vm1004, 0, %v1349
    %1351 = vst [vmem:[#allocation3 + $0x28] sm:$0x1] %v1350
    %v1352 = vld [vmem:[#allocation3 + $0x30] sm:$0x1]
    %v1353 = vsel %vm1004, 0, %v1352
    %1354 = vst [vmem:[#allocation3 + $0x30] sm:$0x1] %v1353
    %v1355 = vld [vmem:[#allocation3 + $0x38] sm:$0x1]
    %v1356 = vsel %vm1004, 0, %v1355
    %1357 = vst [vmem:[#allocation3 + $0x38] sm:$0x1] %v1356
    %v1358 = vld [vmem:[#allocation3 + $0x40] sm:$0x1]
    %v1359 = vsel %vm1004, 0, %v1358
    %1360 = vst [vmem:[#allocation3 + $0x40] sm:$0x1] %v1359
    %v1361 = vld [vmem:[#allocation3 + $0x48] sm:$0x1]
    %v1362 = vsel %vm1004, 0, %v1361
    %1363 = vst [vmem:[#allocation3 + $0x48] sm:$0x1] %v1362
    %v1364 = vld [vmem:[#allocation3 + $0x50] sm:$0x1]
    %v1365 = vsel %vm1004, 0, %v1364
    %1366 = vst [vmem:[#allocation3 + $0x50] sm:$0x1] %v1365
    %v1367 = vld [vmem:[#allocation3 + $0x58] sm:$0x1]
    %v1368 = vsel %vm1004, 0, %v1367
    %1369 = vst [vmem:[#allocation3 + $0x58] sm:$0x1] %v1368
    %v1370 = vld [vmem:[#allocation3 + $0x60] sm:$0x1]
    %v1371 = vsel %vm1004, 0, %v1370
    %1372 = vst [vmem:[#allocation3 + $0x60] sm:$0x1] %v1371
    %v1373 = vld [vmem:[#allocation3 + $0x68] sm:$0x1]
    %v1374 = vsel %vm1004, 0, %v1373
    %1375 = vst [vmem:[#allocation3 + $0x68] sm:$0x1] %v1374
    %v1376 = vld [vmem:[#allocation3 + $0x70] sm:$0x1]
    %v1377 = vsel %vm1004, 0, %v1376
    %1378 = vst [vmem:[#allocation3 + $0x70] sm:$0x1] %v1377
    %v1379 = vld [vmem:[#allocation3 + $0x78] sm:$0x1]
    %v1380 = vsel %vm1004, 0, %v1379
    %1381 = vst [vmem:[#allocation3 + $0x78] sm:$0x1] %v1380
    %v1382 = vld [vmem:[#allocation3 + $0x80] sm:$0x1]
    %v1383 = vsel %vm1004, 0, %v1382
    %1384 = vst [vmem:[#allocation3 + $0x80] sm:$0x1] %v1383
    %v1385 = vld [vmem:[#allocation3 + $0x88] sm:$0x1]
    %v1386 = vsel %vm1004, 0, %v1385
    %1387 = vst [vmem:[#allocation3 + $0x88] sm:$0x1] %v1386
    %v1389 = vshrl.u32 %v953, 16
    %v1391 = vrot.slane %v1389, 7
    %v1392 = vshll.u32 %v953, 16
    %v1394 = vor.u32 %v1391, %v1392
    %v1395 = vrot.slane %v1391, 4
    %v1397 = vshrl.u32 %v954, 16
    %v1399 = vrot.slane %v1397, 7
    %v1400 = vshll.u32 %v954, 16
    %v1402 = vor.u32 %v1399, %v1400
    %v1403 = vrot.slane %v1399, 4
    %v1405 = vshrl.u32 %v955, 16
    %v1407 = vrot.slane %v1405, 7
    %v1408 = vshll.u32 %v955, 16
    %v1410 = vor.u32 %v1407, %v1408
    %v1411 = vrot.slane %v1407, 4
    %v1413 = vshrl.u32 %v956, 16
    %v1415 = vrot.slane %v1413, 7
    %v1416 = vshll.u32 %v956, 16
    %v1418 = vor.u32 %v1415, %v1416
    %v1419 = vrot.slane %v1415, 4
    %v1421 = vshrl.u32 %v957, 16
    %v1423 = vrot.slane %v1421, 7
    %v1424 = vshll.u32 %v957, 16
    %v1426 = vor.u32 %v1423, %v1424
    %v1427 = vrot.slane %v1423, 4
    %v1429 = vshrl.u32 %v958, 16
    %v1431 = vrot.slane %v1429, 7
    %v1432 = vshll.u32 %v958, 16
    %v1434 = vor.u32 %v1431, %v1432
    %v1435 = vrot.slane %v1431, 4
    %v1437 = vshrl.u32 %v959, 16
    %v1439 = vrot.slane %v1437, 7
    %v1440 = vshll.u32 %v959, 16
    %v1442 = vor.u32 %v1439, %v1440
    %v1443 = vrot.slane %v1439, 4
    %v1445 = vshrl.u32 %v960, 16
    %v1447 = vrot.slane %v1445, 7
    %v1448 = vshll.u32 %v960, 16
    %v1450 = vor.u32 %v1447, %v1448
    %v1451 = vrot.slane %v1447, 4
    %v1453 = vshrl.u32 %v961, 16
    %v1455 = vrot.slane %v1453, 7
    %v1456 = vshll.u32 %v961, 16
    %v1458 = vor.u32 %v1455, %v1456
    %v1459 = vrot.slane %v1455, 4
    %v1461 = vshrl.u32 %v962, 16
    %v1463 = vrot.slane %v1461, 7
    %v1464 = vshll.u32 %v962, 16
    %v1466 = vor.u32 %v1463, %v1464
    %v1467 = vrot.slane %v1463, 4
    %v1469 = vshrl.u32 %v963, 16
    %v1471 = vrot.slane %v1469, 7
    %v1472 = vshll.u32 %v963, 16
    %v1474 = vor.u32 %v1471, %v1472
    %v1475 = vrot.slane %v1471, 4
    %v1477 = vshrl.u32 %v964, 16
    %v1479 = vrot.slane %v1477, 7
    %v1480 = vshll.u32 %v964, 16
    %v1482 = vor.u32 %v1479, %v1480
    %v1483 = vrot.slane %v1479, 4
    %v1485 = vshrl.u32 %v965, 16
    %v1487 = vrot.slane %v1485, 7
    %v1488 = vshll.u32 %v965, 16
    %v1490 = vor.u32 %v1487, %v1488
    %v1491 = vrot.slane %v1487, 4
    %v1493 = vshrl.u32 %v966, 16
    %v1495 = vrot.slane %v1493, 7
    %v1496 = vshll.u32 %v966, 16
    %v1498 = vor.u32 %v1495, %v1496
    %v1499 = vrot.slane %v1495, 4
    %v1501 = vshrl.u32 %v967, 16
    %v1503 = vrot.slane %v1501, 7
    %v1504 = vshll.u32 %v967, 16
    %v1506 = vor.u32 %v1503, %v1504
    %v1507 = vrot.slane %v1503, 4
    %v1509 = vshrl.u32 %v968, 16
    %v1511 = vrot.slane %v1509, 7
    %v1512 = vshll.u32 %v968, 16
    %v1514 = vor.u32 %v1511, %v1512
    %v1515 = vrot.slane %v1511, 4
    %s1548 = scalar_lea.vmem [#allocation3], 8
    %v1549 = vld [vmem:[%s1548] sm:$0xf]
    %v1550 = vsel %vm1229, %v1394, %v1549
    %1551 = vst [vmem:[%s1548] sm:$0xf] %v1550
    %v1552 = vld [vmem:[%s1548 + $0x4] sm:$0x1]
    %v1553 = vsel %vm1004, %v1395, %v1552
    %1554 = vst [vmem:[%s1548 + $0x4] sm:$0x1] %v1553
    %v1555 = vld [vmem:[%s1548 + $0x8] sm:$0xf]
    %v1556 = vsel %vm1229, %v1402, %v1555
    %1557 = vst [vmem:[%s1548 + $0x8] sm:$0xf] %v1556
    %v1558 = vld [vmem:[%s1548 + $0xc] sm:$0x1]
    %v1559 = vsel %vm1004, %v1403, %v1558
    %1560 = vst [vmem:[%s1548 + $0xc] sm:$0x1] %v1559
    %v1561 = vld [vmem:[%s1548 + $0x10] sm:$0xf]
    %v1562 = vsel %vm1229, %v1410, %v1561
    %1563 = vst [vmem:[%s1548 + $0x10] sm:$0xf] %v1562
    %v1564 = vld [vmem:[%s1548 + $0x14] sm:$0x1]
    %v1565 = vsel %vm1004, %v1411, %v1564
    %1566 = vst [vmem:[%s1548 + $0x14] sm:$0x1] %v1565
    %v1567 = vld [vmem:[%s1548 + $0x18] sm:$0xf]
    %v1568 = vsel %vm1229, %v1418, %v1567
    %1569 = vst [vmem:[%s1548 + $0x18] sm:$0xf] %v1568
    %v1570 = vld [vmem:[%s1548 + $0x1c] sm:$0x1]
    %v1571 = vsel %vm1004, %v1419, %v1570
    %1572 = vst [vmem:[%s1548 + $0x1c] sm:$0x1] %v1571
    %v1573 = vld [vmem:[%s1548 + $0x20] sm:$0xf]
    %v1574 = vsel %vm1229, %v1426, %v1573
    %1575 = vst [vmem:[%s1548 + $0x20] sm:$0xf] %v1574
    %v1576 = vld [vmem:[%s1548 + $0x24] sm:$0x1]
    %v1577 = vsel %vm1004, %v1427, %v1576
    %1578 = vst [vmem:[%s1548 + $0x24] sm:$0x1] %v1577
    %v1579 = vld [vmem:[%s1548 + $0x28] sm:$0xf]
    %v1580 = vsel %vm1229, %v1434, %v1579
    %1581 = vst [vmem:[%s1548 + $0x28] sm:$0xf] %v1580
    %v1582 = vld [vmem:[%s1548 + $0x2c] sm:$0x1]
    %v1583 = vsel %vm1004, %v1435, %v1582
    %1584 = vst [vmem:[%s1548 + $0x2c] sm:$0x1] %v1583
    %v1585 = vld [vmem:[%s1548 + $0x30] sm:$0xf]
    %v1586 = vsel %vm1229, %v1442, %v1585
    %1587 = vst [vmem:[%s1548 + $0x30] sm:$0xf] %v1586
    %v1588 = vld [vmem:[%s1548 + $0x34] sm:$0x1]
    %v1589 = vsel %vm1004, %v1443, %v1588
    %1590 = vst [vmem:[%s1548 + $0x34] sm:$0x1] %v1589
    %v1591 = vld [vmem:[%s1548 + $0x38] sm:$0xf]
    %v1592 = vsel %vm1229, %v1450, %v1591
    %1593 = vst [vmem:[%s1548 + $0x38] sm:$0xf] %v1592
    %v1594 = vld [vmem:[%s1548 + $0x3c] sm:$0x1]
    %v1595 = vsel %vm1004, %v1451, %v1594
    %1596 = vst [vmem:[%s1548 + $0x3c] sm:$0x1] %v1595
    %v1597 = vld [vmem:[%s1548 + $0x48] sm:$0xf]
    %v1598 = vsel %vm1229, %v1458, %v1597
    %1599 = vst [vmem:[%s1548 + $0x48] sm:$0xf] %v1598
    %v1600 = vld [vmem:[%s1548 + $0x4c] sm:$0x1]
    %v1601 = vsel %vm1004, %v1459, %v1600
    %1602 = vst [vmem:[%s1548 + $0x4c] sm:$0x1] %v1601
    %v1603 = vld [vmem:[%s1548 + $0x50] sm:$0xf]
    %v1604 = vsel %vm1229, %v1466, %v1603
    %1605 = vst [vmem:[%s1548 + $0x50] sm:$0xf] %v1604
    %v1606 = vld [vmem:[%s1548 + $0x54] sm:$0x1]
    %v1607 = vsel %vm1004, %v1467, %v1606
    %1608 = vst [vmem:[%s1548 + $0x54] sm:$0x1] %v1607
    %v1609 = vld [vmem:[%s1548 + $0x58] sm:$0xf]
    %v1610 = vsel %vm1229, %v1474, %v1609
    %1611 = vst [vmem:[%s1548 + $0x58] sm:$0xf] %v1610
    %v1612 = vld [vmem:[%s1548 + $0x5c] sm:$0x1]
    %v1613 = vsel %vm1004, %v1475, %v1612
    %1614 = vst [vmem:[%s1548 + $0x5c] sm:$0x1] %v1613
    %v1615 = vld [vmem:[%s1548 + $0x60] sm:$0xf]
    %v1616 = vsel %vm1229, %v1482, %v1615
    %1617 = vst [vmem:[%s1548 + $0x60] sm:$0xf] %v1616
    %v1618 = vld [vmem:[%s1548 + $0x64] sm:$0x1]
    %v1619 = vsel %vm1004, %v1483, %v1618
    %1620 = vst [vmem:[%s1548 + $0x64] sm:$0x1] %v1619
    %v1621 = vld [vmem:[%s1548 + $0x68] sm:$0xf]
    %v1622 = vsel %vm1229, %v1490, %v1621
    %1623 = vst [vmem:[%s1548 + $0x68] sm:$0xf] %v1622
    %v1624 = vld [vmem:[%s1548 + $0x6c] sm:$0x1]
    %v1625 = vsel %vm1004, %v1491, %v1624
    %1626 = vst [vmem:[%s1548 + $0x6c] sm:$0x1] %v1625
    %v1627 = vld [vmem:[%s1548 + $0x70] sm:$0xf]
    %v1628 = vsel %vm1229, %v1498, %v1627
    %1629 = vst [vmem:[%s1548 + $0x70] sm:$0xf] %v1628
    %v1630 = vld [vmem:[%s1548 + $0x74] sm:$0x1]
    %v1631 = vsel %vm1004, %v1499, %v1630
    %1632 = vst [vmem:[%s1548 + $0x74] sm:$0x1] %v1631
    %v1633 = vld [vmem:[%s1548 + $0x78] sm:$0xf]
    %v1634 = vsel %vm1229, %v1506, %v1633
    %1635 = vst [vmem:[%s1548 + $0x78] sm:$0xf] %v1634
    %v1636 = vld [vmem:[%s1548 + $0x7c] sm:$0x1]
    %v1637 = vsel %vm1004, %v1507, %v1636
    %1638 = vst [vmem:[%s1548 + $0x7c] sm:$0x1] %v1637
    %v1639 = vld [vmem:[%s1548 + $0x80] sm:$0xf]
    %v1640 = vsel %vm1229, %v1514, %v1639
    %1641 = vst [vmem:[%s1548 + $0x80] sm:$0xf] %v1640
    %v1642 = vld [vmem:[%s1548 + $0x84] sm:$0x1]
    %v1643 = vsel %vm1004, %v1515, %v1642
    %1644 = vst [vmem:[%s1548 + $0x84] sm:$0x1] %v1643
    %1645 = vst [vmem:[#allocation4] sm:$0xf] 0
    %v1646 = vld [vmem:[#allocation4 + $0x4] sm:$0x1]
    %v1647 = vsel %vm1004, 0, %v1646
    %1648 = vst [vmem:[#allocation4 + $0x4] sm:$0x1] %v1647
    %1649 = vst [vmem:[#allocation4 + $0x48] sm:$0xf] 0
    %v1650 = vld [vmem:[#allocation4 + $0x4c] sm:$0x1]
    %v1651 = vsel %vm1004, 0, %v1650
    %1652 = vst [vmem:[#allocation4 + $0x4c] sm:$0x1] %v1651
    %v1653 = vld [vmem:[#allocation4] sm:$0x1]
    %v1654 = vsel %vm1004, 0, %v1653
    %1655 = vst [vmem:[#allocation4] sm:$0x1] %v1654
    %v1656 = vld [vmem:[#allocation4 + $0x8] sm:$0x1]
    %v1657 = vsel %vm1004, 0, %v1656
    %1658 = vst [vmem:[#allocation4 + $0x8] sm:$0x1] %v1657
    %v1659 = vld [vmem:[#allocation4 + $0x10] sm:$0x1]
    %v1660 = vsel %vm1004, 0, %v1659
    %1661 = vst [vmem:[#allocation4 + $0x10] sm:$0x1] %v1660
    %v1662 = vld [vmem:[#allocation4 + $0x18] sm:$0x1]
    %v1663 = vsel %vm1004, 0, %v1662
    %1664 = vst [vmem:[#allocation4 + $0x18] sm:$0x1] %v1663
    %v1665 = vld [vmem:[#allocation4 + $0x20] sm:$0x1]
    %v1666 = vsel %vm1004, 0, %v1665
    %1667 = vst [vmem:[#allocation4 + $0x20] sm:$0x1] %v1666
    %v1668 = vld [vmem:[#allocation4 + $0x28] sm:$0x1]
    %v1669 = vsel %vm1004, 0, %v1668
    %1670 = vst [vmem:[#allocation4 + $0x28] sm:$0x1] %v1669
    %v1671 = vld [vmem:[#allocation4 + $0x30] sm:$0x1]
    %v1672 = vsel %vm1004, 0, %v1671
    %1673 = vst [vmem:[#allocation4 + $0x30] sm:$0x1] %v1672
    %v1674 = vld [vmem:[#allocation4 + $0x38] sm:$0x1]
    %v1675 = vsel %vm1004, 0, %v1674
    %1676 = vst [vmem:[#allocation4 + $0x38] sm:$0x1] %v1675
    %v1677 = vld [vmem:[#allocation4 + $0x40] sm:$0x1]
    %v1678 = vsel %vm1004, 0, %v1677
    %1679 = vst [vmem:[#allocation4 + $0x40] sm:$0x1] %v1678
    %v1680 = vld [vmem:[#allocation4 + $0x48] sm:$0x1]
    %v1681 = vsel %vm1004, 0, %v1680
    %1682 = vst [vmem:[#allocation4 + $0x48] sm:$0x1] %v1681
    %v1683 = vld [vmem:[#allocation4 + $0x50] sm:$0x1]
    %v1684 = vsel %vm1004, 0, %v1683
    %1685 = vst [vmem:[#allocation4 + $0x50] sm:$0x1] %v1684
    %v1686 = vld [vmem:[#allocation4 + $0x58] sm:$0x1]
    %v1687 = vsel %vm1004, 0, %v1686
    %1688 = vst [vmem:[#allocation4 + $0x58] sm:$0x1] %v1687
    %v1689 = vld [vmem:[#allocation4 + $0x60] sm:$0x1]
    %v1690 = vsel %vm1004, 0, %v1689
    %1691 = vst [vmem:[#allocation4 + $0x60] sm:$0x1] %v1690
    %v1692 = vld [vmem:[#allocation4 + $0x68] sm:$0x1]
    %v1693 = vsel %vm1004, 0, %v1692
    %1694 = vst [vmem:[#allocation4 + $0x68] sm:$0x1] %v1693
    %v1695 = vld [vmem:[#allocation4 + $0x70] sm:$0x1]
    %v1696 = vsel %vm1004, 0, %v1695
    %1697 = vst [vmem:[#allocation4 + $0x70] sm:$0x1] %v1696
    %v1698 = vld [vmem:[#allocation4 + $0x78] sm:$0x1]
    %v1699 = vsel %vm1004, 0, %v1698
    %1700 = vst [vmem:[#allocation4 + $0x78] sm:$0x1] %v1699
    %v1701 = vld [vmem:[#allocation4 + $0x80] sm:$0x1]
    %v1702 = vsel %vm1004, 0, %v1701
    %1703 = vst [vmem:[#allocation4 + $0x80] sm:$0x1] %v1702
    %v1704 = vld [vmem:[#allocation4 + $0x88] sm:$0x1]
    %v1705 = vsel %vm1004, 0, %v1704
    %1706 = vst [vmem:[#allocation4 + $0x88] sm:$0x1] %v1705
    %v1708 = vshrl.u32 %v969, 16
    %v1710 = vrot.slane %v1708, 7
    %v1711 = vshll.u32 %v969, 16
    %v1713 = vor.u32 %v1710, %v1711
    %v1714 = vrot.slane %v1710, 4
    %v1716 = vshrl.u32 %v970, 16
    %v1718 = vrot.slane %v1716, 7
    %v1719 = vshll.u32 %v970, 16
    %v1721 = vor.u32 %v1718, %v1719
    %v1722 = vrot.slane %v1718, 4
    %v1724 = vshrl.u32 %v971, 16
    %v1726 = vrot.slane %v1724, 7
    %v1727 = vshll.u32 %v971, 16
    %v1729 = vor.u32 %v1726, %v1727
    %v1730 = vrot.slane %v1726, 4
    %v1732 = vshrl.u32 %v972, 16
    %v1734 = vrot.slane %v1732, 7
    %v1735 = vshll.u32 %v972, 16
    %v1737 = vor.u32 %v1734, %v1735
    %v1738 = vrot.slane %v1734, 4
    %v1740 = vshrl.u32 %v973, 16
    %v1742 = vrot.slane %v1740, 7
    %v1743 = vshll.u32 %v973, 16
    %v1745 = vor.u32 %v1742, %v1743
    %v1746 = vrot.slane %v1742, 4
    %v1748 = vshrl.u32 %v974, 16
    %v1750 = vrot.slane %v1748, 7
    %v1751 = vshll.u32 %v974, 16
    %v1753 = vor.u32 %v1750, %v1751
    %v1754 = vrot.slane %v1750, 4
    %v1756 = vshrl.u32 %v975, 16
    %v1758 = vrot.slane %v1756, 7
    %v1759 = vshll.u32 %v975, 16
    %v1761 = vor.u32 %v1758, %v1759
    %v1762 = vrot.slane %v1758, 4
    %v1764 = vshrl.u32 %v976, 16
    %v1766 = vrot.slane %v1764, 7
    %v1767 = vshll.u32 %v976, 16
    %v1769 = vor.u32 %v1766, %v1767
    %v1770 = vrot.slane %v1766, 4
    %v1772 = vshrl.u32 %v977, 16
    %v1774 = vrot.slane %v1772, 7
    %v1775 = vshll.u32 %v977, 16
    %v1777 = vor.u32 %v1774, %v1775
    %v1778 = vrot.slane %v1774, 4
    %v1780 = vshrl.u32 %v978, 16
    %v1782 = vrot.slane %v1780, 7
    %v1783 = vshll.u32 %v978, 16
    %v1785 = vor.u32 %v1782, %v1783
    %v1786 = vrot.slane %v1782, 4
    %v1788 = vshrl.u32 %v979, 16
    %v1790 = vrot.slane %v1788, 7
    %v1791 = vshll.u32 %v979, 16
    %v1793 = vor.u32 %v1790, %v1791
    %v1794 = vrot.slane %v1790, 4
    %v1796 = vshrl.u32 %v980, 16
    %v1798 = vrot.slane %v1796, 7
    %v1799 = vshll.u32 %v980, 16
    %v1801 = vor.u32 %v1798, %v1799
    %v1802 = vrot.slane %v1798, 4
    %v1804 = vshrl.u32 %v981, 16
    %v1806 = vrot.slane %v1804, 7
    %v1807 = vshll.u32 %v981, 16
    %v1809 = vor.u32 %v1806, %v1807
    %v1810 = vrot.slane %v1806, 4
    %v1812 = vshrl.u32 %v982, 16
    %v1814 = vrot.slane %v1812, 7
    %v1815 = vshll.u32 %v982, 16
    %v1817 = vor.u32 %v1814, %v1815
    %v1818 = vrot.slane %v1814, 4
    %v1820 = vshrl.u32 %v983, 16
    %v1822 = vrot.slane %v1820, 7
    %v1823 = vshll.u32 %v983, 16
    %v1825 = vor.u32 %v1822, %v1823
    %v1826 = vrot.slane %v1822, 4
    %v1828 = vshrl.u32 %v984, 16
    %v1830 = vrot.slane %v1828, 7
    %v1831 = vshll.u32 %v984, 16
    %v1833 = vor.u32 %v1830, %v1831
    %v1834 = vrot.slane %v1830, 4
    %s1867 = scalar_lea.vmem [#allocation4], 8
    %v1868 = vld [vmem:[%s1867] sm:$0xf]
    %v1869 = vsel %vm1229, %v1713, %v1868
    %1870 = vst [vmem:[%s1867] sm:$0xf] %v1869
    %v1871 = vld [vmem:[%s1867 + $0x4] sm:$0x1]
    %v1872 = vsel %vm1004, %v1714, %v1871
    %1873 = vst [vmem:[%s1867 + $0x4] sm:$0x1] %v1872
    %v1874 = vld [vmem:[%s1867 + $0x8] sm:$0xf]
    %v1875 = vsel %vm1229, %v1721, %v1874
    %1876 = vst [vmem:[%s1867 + $0x8] sm:$0xf] %v1875
    %v1877 = vld [vmem:[%s1867 + $0xc] sm:$0x1]
    %v1878 = vsel %vm1004, %v1722, %v1877
    %1879 = vst [vmem:[%s1867 + $0xc] sm:$0x1] %v1878
    %v1880 = vld [vmem:[%s1867 + $0x10] sm:$0xf]
    %v1881 = vsel %vm1229, %v1729, %v1880
    %1882 = vst [vmem:[%s1867 + $0x10] sm:$0xf] %v1881
    %v1883 = vld [vmem:[%s1867 + $0x14] sm:$0x1]
    %v1884 = vsel %vm1004, %v1730, %v1883
    %1885 = vst [vmem:[%s1867 + $0x14] sm:$0x1] %v1884
    %v1886 = vld [vmem:[%s1867 + $0x18] sm:$0xf]
    %v1887 = vsel %vm1229, %v1737, %v1886
    %1888 = vst [vmem:[%s1867 + $0x18] sm:$0xf] %v1887
    %v1889 = vld [vmem:[%s1867 + $0x1c] sm:$0x1]
    %v1890 = vsel %vm1004, %v1738, %v1889
    %1891 = vst [vmem:[%s1867 + $0x1c] sm:$0x1] %v1890
    %v1892 = vld [vmem:[%s1867 + $0x20] sm:$0xf]
    %v1893 = vsel %vm1229, %v1745, %v1892
    %1894 = vst [vmem:[%s1867 + $0x20] sm:$0xf] %v1893
    %v1895 = vld [vmem:[%s1867 + $0x24] sm:$0x1]
    %v1896 = vsel %vm1004, %v1746, %v1895
    %1897 = vst [vmem:[%s1867 + $0x24] sm:$0x1] %v1896
    %v1898 = vld [vmem:[%s1867 + $0x28] sm:$0xf]
    %v1899 = vsel %vm1229, %v1753, %v1898
    %1900 = vst [vmem:[%s1867 + $0x28] sm:$0xf] %v1899
    %v1901 = vld [vmem:[%s1867 + $0x2c] sm:$0x1]
    %v1902 = vsel %vm1004, %v1754, %v1901
    %1903 = vst [vmem:[%s1867 + $0x2c] sm:$0x1] %v1902
    %v1904 = vld [vmem:[%s1867 + $0x30] sm:$0xf]
    %v1905 = vsel %vm1229, %v1761, %v1904
    %1906 = vst [vmem:[%s1867 + $0x30] sm:$0xf] %v1905
    %v1907 = vld [vmem:[%s1867 + $0x34] sm:$0x1]
    %v1908 = vsel %vm1004, %v1762, %v1907
    %1909 = vst [vmem:[%s1867 + $0x34] sm:$0x1] %v1908
    %v1910 = vld [vmem:[%s1867 + $0x38] sm:$0xf]
    %v1911 = vsel %vm1229, %v1769, %v1910
    %1912 = vst [vmem:[%s1867 + $0x38] sm:$0xf] %v1911
    %v1913 = vld [vmem:[%s1867 + $0x3c] sm:$0x1]
    %v1914 = vsel %vm1004, %v1770, %v1913
    %1915 = vst [vmem:[%s1867 + $0x3c] sm:$0x1] %v1914
    %v1916 = vld [vmem:[%s1867 + $0x48] sm:$0xf]
    %v1917 = vsel %vm1229, %v1777, %v1916
    %1918 = vst [vmem:[%s1867 + $0x48] sm:$0xf] %v1917
    %v1919 = vld [vmem:[%s1867 + $0x4c] sm:$0x1]
    %v1920 = vsel %vm1004, %v1778, %v1919
    %1921 = vst [vmem:[%s1867 + $0x4c] sm:$0x1] %v1920
    %v1922 = vld [vmem:[%s1867 + $0x50] sm:$0xf]
    %v1923 = vsel %vm1229, %v1785, %v1922
    %1924 = vst [vmem:[%s1867 + $0x50] sm:$0xf] %v1923
    %v1925 = vld [vmem:[%s1867 + $0x54] sm:$0x1]
    %v1926 = vsel %vm1004, %v1786, %v1925
    %1927 = vst [vmem:[%s1867 + $0x54] sm:$0x1] %v1926
    %v1928 = vld [vmem:[%s1867 + $0x58] sm:$0xf]
    %v1929 = vsel %vm1229, %v1793, %v1928
    %1930 = vst [vmem:[%s1867 + $0x58] sm:$0xf] %v1929
    %v1931 = vld [vmem:[%s1867 + $0x5c] sm:$0x1]
    %v1932 = vsel %vm1004, %v1794, %v1931
    %1933 = vst [vmem:[%s1867 + $0x5c] sm:$0x1] %v1932
    %v1934 = vld [vmem:[%s1867 + $0x60] sm:$0xf]
    %v1935 = vsel %vm1229, %v1801, %v1934
    %1936 = vst [vmem:[%s1867 + $0x60] sm:$0xf] %v1935
    %v1937 = vld [vmem:[%s1867 + $0x64] sm:$0x1]
    %v1938 = vsel %vm1004, %v1802, %v1937
    %1939 = vst [vmem:[%s1867 + $0x64] sm:$0x1] %v1938
    %v1940 = vld [vmem:[%s1867 + $0x68] sm:$0xf]
    %v1941 = vsel %vm1229, %v1809, %v1940
    %1942 = vst [vmem:[%s1867 + $0x68] sm:$0xf] %v1941
    %v1943 = vld [vmem:[%s1867 + $0x6c] sm:$0x1]
    %v1944 = vsel %vm1004, %v1810, %v1943
    %1945 = vst [vmem:[%s1867 + $0x6c] sm:$0x1] %v1944
    %v1946 = vld [vmem:[%s1867 + $0x70] sm:$0xf]
    %v1947 = vsel %vm1229, %v1817, %v1946
    %1948 = vst [vmem:[%s1867 + $0x70] sm:$0xf] %v1947
    %v1949 = vld [vmem:[%s1867 + $0x74] sm:$0x1]
    %v1950 = vsel %vm1004, %v1818, %v1949
    %1951 = vst [vmem:[%s1867 + $0x74] sm:$0x1] %v1950
    %v1952 = vld [vmem:[%s1867 + $0x78] sm:$0xf]
    %v1953 = vsel %vm1229, %v1825, %v1952
    %1954 = vst [vmem:[%s1867 + $0x78] sm:$0xf] %v1953
    %v1955 = vld [vmem:[%s1867 + $0x7c] sm:$0x1]
    %v1956 = vsel %vm1004, %v1826, %v1955
    %1957 = vst [vmem:[%s1867 + $0x7c] sm:$0x1] %v1956
    %v1958 = vld [vmem:[%s1867 + $0x80] sm:$0xf]
    %v1959 = vsel %vm1229, %v1833, %v1958
    %1960 = vst [vmem:[%s1867 + $0x80] sm:$0xf] %v1959
    %v1961 = vld [vmem:[%s1867 + $0x84] sm:$0x1]
    %v1962 = vsel %vm1004, %v1834, %v1961
    %1963 = vst [vmem:[%s1867 + $0x84] sm:$0x1] %v1962
    %1964 = vst [vmem:[#allocation5] sm:$0xf] 0
    %v1965 = vld [vmem:[#allocation5 + $0x4] sm:$0x1]
    %v1966 = vsel %vm1004, 0, %v1965
    %1967 = vst [vmem:[#allocation5 + $0x4] sm:$0x1] %v1966
    %1968 = vst [vmem:[#allocation5 + $0x48] sm:$0xf] 0
    %v1969 = vld [vmem:[#allocation5 + $0x4c] sm:$0x1]
    %v1970 = vsel %vm1004, 0, %v1969
    %1971 = vst [vmem:[#allocation5 + $0x4c] sm:$0x1] %v1970
    %v1972 = vld [vmem:[#allocation5] sm:$0x1]
    %v1973 = vsel %vm1004, 0, %v1972
    %1974 = vst [vmem:[#allocation5] sm:$0x1] %v1973
    %v1975 = vld [vmem:[#allocation5 + $0x8] sm:$0x1]
    %v1976 = vsel %vm1004, 0, %v1975
    %1977 = vst [vmem:[#allocation5 + $0x8] sm:$0x1] %v1976
    %v1978 = vld [vmem:[#allocation5 + $0x10] sm:$0x1]
    %v1979 = vsel %vm1004, 0, %v1978
    %1980 = vst [vmem:[#allocation5 + $0x10] sm:$0x1] %v1979
    %v1981 = vld [vmem:[#allocation5 + $0x18] sm:$0x1]
    %v1982 = vsel %vm1004, 0, %v1981
    %1983 = vst [vmem:[#allocation5 + $0x18] sm:$0x1] %v1982
    %v1984 = vld [vmem:[#allocation5 + $0x20] sm:$0x1]
    %v1985 = vsel %vm1004, 0, %v1984
    %1986 = vst [vmem:[#allocation5 + $0x20] sm:$0x1] %v1985
    %v1987 = vld [vmem:[#allocation5 + $0x28] sm:$0x1]
    %v1988 = vsel %vm1004, 0, %v1987
    %1989 = vst [vmem:[#allocation5 + $0x28] sm:$0x1] %v1988
    %v1990 = vld [vmem:[#allocation5 + $0x30] sm:$0x1]
    %v1991 = vsel %vm1004, 0, %v1990
    %1992 = vst [vmem:[#allocation5 + $0x30] sm:$0x1] %v1991
    %v1993 = vld [vmem:[#allocation5 + $0x38] sm:$0x1]
    %v1994 = vsel %vm1004, 0, %v1993
    %1995 = vst [vmem:[#allocation5 + $0x38] sm:$0x1] %v1994
    %v1996 = vld [vmem:[#allocation5 + $0x40] sm:$0x1]
    %v1997 = vsel %vm1004, 0, %v1996
    %1998 = vst [vmem:[#allocation5 + $0x40] sm:$0x1] %v1997
    %v1999 = vld [vmem:[#allocation5 + $0x48] sm:$0x1]
    %v2000 = vsel %vm1004, 0, %v1999
    %2001 = vst [vmem:[#allocation5 + $0x48] sm:$0x1] %v2000
    %v2002 = vld [vmem:[#allocation5 + $0x50] sm:$0x1]
    %v2003 = vsel %vm1004, 0, %v2002
    %2004 = vst [vmem:[#allocation5 + $0x50] sm:$0x1] %v2003
    %v2005 = vld [vmem:[#allocation5 + $0x58] sm:$0x1]
    %v2006 = vsel %vm1004, 0, %v2005
    %2007 = vst [vmem:[#allocation5 + $0x58] sm:$0x1] %v2006
    %v2008 = vld [vmem:[#allocation5 + $0x60] sm:$0x1]
    %v2009 = vsel %vm1004, 0, %v2008
    %2010 = vst [vmem:[#allocation5 + $0x60] sm:$0x1] %v2009
    %v2011 = vld [vmem:[#allocation5 + $0x68] sm:$0x1]
    %v2012 = vsel %vm1004, 0, %v2011
    %2013 = vst [vmem:[#allocation5 + $0x68] sm:$0x1] %v2012
    %v2014 = vld [vmem:[#allocation5 + $0x70] sm:$0x1]
    %v2015 = vsel %vm1004, 0, %v2014
    %2016 = vst [vmem:[#allocation5 + $0x70] sm:$0x1] %v2015
    %v2017 = vld [vmem:[#allocation5 + $0x78] sm:$0x1]
    %v2018 = vsel %vm1004, 0, %v2017
    %2019 = vst [vmem:[#allocation5 + $0x78] sm:$0x1] %v2018
    %v2020 = vld [vmem:[#allocation5 + $0x80] sm:$0x1]
    %v2021 = vsel %vm1004, 0, %v2020
    %2022 = vst [vmem:[#allocation5 + $0x80] sm:$0x1] %v2021
    %v2023 = vld [vmem:[#allocation5 + $0x88] sm:$0x1]
    %v2024 = vsel %vm1004, 0, %v2023
    %2025 = vst [vmem:[#allocation5 + $0x88] sm:$0x1] %v2024
    %v2027 = vshrl.u32 %v985, 16
    %v2029 = vrot.slane %v2027, 7
    %v2030 = vshll.u32 %v985, 16
    %v2032 = vor.u32 %v2029, %v2030
    %v2033 = vrot.slane %v2029, 4
    %v2035 = vshrl.u32 %v986, 16
    %v2037 = vrot.slane %v2035, 7
    %v2038 = vshll.u32 %v986, 16
    %v2040 = vor.u32 %v2037, %v2038
    %v2041 = vrot.slane %v2037, 4
    %v2043 = vshrl.u32 %v987, 16
    %v2045 = vrot.slane %v2043, 7
    %v2046 = vshll.u32 %v987, 16
    %v2048 = vor.u32 %v2045, %v2046
    %v2049 = vrot.slane %v2045, 4
    %v2051 = vshrl.u32 %v988, 16
    %v2053 = vrot.slane %v2051, 7
    %v2054 = vshll.u32 %v988, 16
    %v2056 = vor.u32 %v2053, %v2054
    %v2057 = vrot.slane %v2053, 4
    %v2059 = vshrl.u32 %v989, 16
    %v2061 = vrot.slane %v2059, 7
    %v2062 = vshll.u32 %v989, 16
    %v2064 = vor.u32 %v2061, %v2062
    %v2065 = vrot.slane %v2061, 4
    %v2067 = vshrl.u32 %v990, 16
    %v2069 = vrot.slane %v2067, 7
    %v2070 = vshll.u32 %v990, 16
    %v2072 = vor.u32 %v2069, %v2070
    %v2073 = vrot.slane %v2069, 4
    %v2075 = vshrl.u32 %v991, 16
    %v2077 = vrot.slane %v2075, 7
    %v2078 = vshll.u32 %v991, 16
    %v2080 = vor.u32 %v2077, %v2078
    %v2081 = vrot.slane %v2077, 4
    %v2083 = vshrl.u32 %v992, 16
    %v2085 = vrot.slane %v2083, 7
    %v2086 = vshll.u32 %v992, 16
    %v2088 = vor.u32 %v2085, %v2086
    %v2089 = vrot.slane %v2085, 4
    %v2091 = vshrl.u32 %v993, 16
    %v2093 = vrot.slane %v2091, 7
    %v2094 = vshll.u32 %v993, 16
    %v2096 = vor.u32 %v2093, %v2094
    %v2097 = vrot.slane %v2093, 4
    %v2099 = vshrl.u32 %v994, 16
    %v2101 = vrot.slane %v2099, 7
    %v2102 = vshll.u32 %v994, 16
    %v2104 = vor.u32 %v2101, %v2102
    %v2105 = vrot.slane %v2101, 4
    %v2107 = vshrl.u32 %v995, 16
    %v2109 = vrot.slane %v2107, 7
    %v2110 = vshll.u32 %v995, 16
    %v2112 = vor.u32 %v2109, %v2110
    %v2113 = vrot.slane %v2109, 4
    %v2115 = vshrl.u32 %v996, 16
    %v2117 = vrot.slane %v2115, 7
    %v2118 = vshll.u32 %v996, 16
    %v2120 = vor.u32 %v2117, %v2118
    %v2121 = vrot.slane %v2117, 4
    %v2123 = vshrl.u32 %v997, 16
    %v2125 = vrot.slane %v2123, 7
    %v2126 = vshll.u32 %v997, 16
    %v2128 = vor.u32 %v2125, %v2126
    %v2129 = vrot.slane %v2125, 4
    %v2131 = vshrl.u32 %v998, 16
    %v2133 = vrot.slane %v2131, 7
    %v2134 = vshll.u32 %v998, 16
    %v2136 = vor.u32 %v2133, %v2134
    %v2137 = vrot.slane %v2133, 4
    %v2139 = vshrl.u32 %v999, 16
    %v2141 = vrot.slane %v2139, 7
    %v2142 = vshll.u32 %v999, 16
    %v2144 = vor.u32 %v2141, %v2142
    %v2145 = vrot.slane %v2141, 4
    %v2147 = vshrl.u32 %v1000, 16
    %v2149 = vrot.slane %v2147, 7
    %v2150 = vshll.u32 %v1000, 16
    %v2152 = vor.u32 %v2149, %v2150
    %v2153 = vrot.slane %v2149, 4
    %s2186 = scalar_lea.vmem [#allocation5], 8
    %v2187 = vld [vmem:[%s2186] sm:$0xf]
    %v2188 = vsel %vm1229, %v2032, %v2187
    %2189 = vst [vmem:[%s2186] sm:$0xf] %v2188
    %v2190 = vld [vmem:[%s2186 + $0x4] sm:$0x1]
    %v2191 = vsel %vm1004, %v2033, %v2190
    %2192 = vst [vmem:[%s2186 + $0x4] sm:$0x1] %v2191
    %v2193 = vld [vmem:[%s2186 + $0x8] sm:$0xf]
    %v2194 = vsel %vm1229, %v2040, %v2193
    %2195 = vst [vmem:[%s2186 + $0x8] sm:$0xf] %v2194
    %v2196 = vld [vmem:[%s2186 + $0xc] sm:$0x1]
    %v2197 = vsel %vm1004, %v2041, %v2196
    %2198 = vst [vmem:[%s2186 + $0xc] sm:$0x1] %v2197
    %v2199 = vld [vmem:[%s2186 + $0x10] sm:$0xf]
    %v2200 = vsel %vm1229, %v2048, %v2199
    %2201 = vst [vmem:[%s2186 + $0x10] sm:$0xf] %v2200
    %v2202 = vld [vmem:[%s2186 + $0x14] sm:$0x1]
    %v2203 = vsel %vm1004, %v2049, %v2202
    %2204 = vst [vmem:[%s2186 + $0x14] sm:$0x1] %v2203
    %v2205 = vld [vmem:[%s2186 + $0x18] sm:$0xf]
    %v2206 = vsel %vm1229, %v2056, %v2205
    %2207 = vst [vmem:[%s2186 + $0x18] sm:$0xf] %v2206
    %v2208 = vld [vmem:[%s2186 + $0x1c] sm:$0x1]
    %v2209 = vsel %vm1004, %v2057, %v2208
    %2210 = vst [vmem:[%s2186 + $0x1c] sm:$0x1] %v2209
    %v2211 = vld [vmem:[%s2186 + $0x20] sm:$0xf]
    %v2212 = vsel %vm1229, %v2064, %v2211
    %2213 = vst [vmem:[%s2186 + $0x20] sm:$0xf] %v2212
    %v2214 = vld [vmem:[%s2186 + $0x24] sm:$0x1]
    %v2215 = vsel %vm1004, %v2065, %v2214
    %2216 = vst [vmem:[%s2186 + $0x24] sm:$0x1] %v2215
    %v2217 = vld [vmem:[%s2186 + $0x28] sm:$0xf]
    %v2218 = vsel %vm1229, %v2072, %v2217
    %2219 = vst [vmem:[%s2186 + $0x28] sm:$0xf] %v2218
    %v2220 = vld [vmem:[%s2186 + $0x2c] sm:$0x1]
    %v2221 = vsel %vm1004, %v2073, %v2220
    %2222 = vst [vmem:[%s2186 + $0x2c] sm:$0x1] %v2221
    %v2223 = vld [vmem:[%s2186 + $0x30] sm:$0xf]
    %v2224 = vsel %vm1229, %v2080, %v2223
    %2225 = vst [vmem:[%s2186 + $0x30] sm:$0xf] %v2224
    %v2226 = vld [vmem:[%s2186 + $0x34] sm:$0x1]
    %v2227 = vsel %vm1004, %v2081, %v2226
    %2228 = vst [vmem:[%s2186 + $0x34] sm:$0x1] %v2227
    %v2229 = vld [vmem:[%s2186 + $0x38] sm:$0xf]
    %v2230 = vsel %vm1229, %v2088, %v2229
    %2231 = vst [vmem:[%s2186 + $0x38] sm:$0xf] %v2230
    %v2232 = vld [vmem:[%s2186 + $0x3c] sm:$0x1]
    %v2233 = vsel %vm1004, %v2089, %v2232
    %2234 = vst [vmem:[%s2186 + $0x3c] sm:$0x1] %v2233
    %v2235 = vld [vmem:[%s2186 + $0x48] sm:$0xf]
    %v2236 = vsel %vm1229, %v2096, %v2235
    %2237 = vst [vmem:[%s2186 + $0x48] sm:$0xf] %v2236
    %v2238 = vld [vmem:[%s2186 + $0x4c] sm:$0x1]
    %v2239 = vsel %vm1004, %v2097, %v2238
    %2240 = vst [vmem:[%s2186 + $0x4c] sm:$0x1] %v2239
    %v2241 = vld [vmem:[%s2186 + $0x50] sm:$0xf]
    %v2242 = vsel %vm1229, %v2104, %v2241
    %2243 = vst [vmem:[%s2186 + $0x50] sm:$0xf] %v2242
    %v2244 = vld [vmem:[%s2186 + $0x54] sm:$0x1]
    %v2245 = vsel %vm1004, %v2105, %v2244
    %2246 = vst [vmem:[%s2186 + $0x54] sm:$0x1] %v2245
    %v2247 = vld [vmem:[%s2186 + $0x58] sm:$0xf]
    %v2248 = vsel %vm1229, %v2112, %v2247
    %2249 = vst [vmem:[%s2186 + $0x58] sm:$0xf] %v2248
    %v2250 = vld [vmem:[%s2186 + $0x5c] sm:$0x1]
    %v2251 = vsel %vm1004, %v2113, %v2250
    %2252 = vst [vmem:[%s2186 + $0x5c] sm:$0x1] %v2251
    %v2253 = vld [vmem:[%s2186 + $0x60] sm:$0xf]
    %v2254 = vsel %vm1229, %v2120, %v2253
    %2255 = vst [vmem:[%s2186 + $0x60] sm:$0xf] %v2254
    %v2256 = vld [vmem:[%s2186 + $0x64] sm:$0x1]
    %v2257 = vsel %vm1004, %v2121, %v2256
    %2258 = vst [vmem:[%s2186 + $0x64] sm:$0x1] %v2257
    %v2259 = vld [vmem:[%s2186 + $0x68] sm:$0xf]
    %v2260 = vsel %vm1229, %v2128, %v2259
    %2261 = vst [vmem:[%s2186 + $0x68] sm:$0xf] %v2260
    %v2262 = vld [vmem:[%s2186 + $0x6c] sm:$0x1]
    %v2263 = vsel %vm1004, %v2129, %v2262
    %2264 = vst [vmem:[%s2186 + $0x6c] sm:$0x1] %v2263
    %v2265 = vld [vmem:[%s2186 + $0x70] sm:$0xf]
    %v2266 = vsel %vm1229, %v2136, %v2265
    %2267 = vst [vmem:[%s2186 + $0x70] sm:$0xf] %v2266
    %v2268 = vld [vmem:[%s2186 + $0x74] sm:$0x1]
    %v2269 = vsel %vm1004, %v2137, %v2268
    %2270 = vst [vmem:[%s2186 + $0x74] sm:$0x1] %v2269
    %v2271 = vld [vmem:[%s2186 + $0x78] sm:$0xf]
    %v2272 = vsel %vm1229, %v2144, %v2271
    %2273 = vst [vmem:[%s2186 + $0x78] sm:$0xf] %v2272
    %v2274 = vld [vmem:[%s2186 + $0x7c] sm:$0x1]
    %v2275 = vsel %vm1004, %v2145, %v2274
    %2276 = vst [vmem:[%s2186 + $0x7c] sm:$0x1] %v2275
    %v2277 = vld [vmem:[%s2186 + $0x80] sm:$0xf]
    %v2278 = vsel %vm1229, %v2152, %v2277
    %2279 = vst [vmem:[%s2186 + $0x80] sm:$0xf] %v2278
    %v2280 = vld [vmem:[%s2186 + $0x84] sm:$0x1]
    %v2281 = vsel %vm1004, %v2153, %v2280
    %2282 = vst [vmem:[%s2186 + $0x84] sm:$0x1] %v2281
    %v2283 = vadd.f32 %v142, %v173
    %v2284 = vadd.f32 %v2283, %v205
    %v2285 = vadd.f32 %v2284, %v237
    %v2286 = vadd.f32 %v143, %v175
    %v2287 = vadd.f32 %v2286, %v207
    %v2288 = vadd.f32 %v2287, %v239
    %v2289 = vadd.f32 %v145, %v177
    %v2290 = vadd.f32 %v2289, %v209
    %v2291 = vadd.f32 %v2290, %v241
    %v2292 = vadd.f32 %v147, %v179
    %v2293 = vadd.f32 %v2292, %v211
    %v2294 = vadd.f32 %v2293, %v243
    %v2295 = vadd.f32 %v149, %v181
    %v2296 = vadd.f32 %v2295, %v213
    %v2297 = vadd.f32 %v2296, %v245
    %v2298 = vadd.f32 %v151, %v183
    %v2299 = vadd.f32 %v2298, %v215
    %v2300 = vadd.f32 %v2299, %v247
    %v2301 = vadd.f32 %v153, %v185
    %v2302 = vadd.f32 %v2301, %v217
    %v2303 = vadd.f32 %v2302, %v249
    %v2304 = vadd.f32 %v155, %v187
    %v2305 = vadd.f32 %v2304, %v219
    %v2306 = vadd.f32 %v2305, %v251
    %v2307 = vadd.f32 %v157, %v189
    %v2308 = vadd.f32 %v2307, %v221
    %v2309 = vadd.f32 %v2308, %v253
    %v2310 = vadd.f32 %v159, %v191
    %v2311 = vadd.f32 %v2310, %v223
    %v2312 = vadd.f32 %v2311, %v255
    %v2313 = vadd.f32 %v161, %v193
    %v2314 = vadd.f32 %v2313, %v225
    %v2315 = vadd.f32 %v2314, %v257
    %v2316 = vadd.f32 %v163, %v195
    %v2317 = vadd.f32 %v2316, %v227
    %v2318 = vadd.f32 %v2317, %v259
    %v2319 = vadd.f32 %v165, %v197
    %v2320 = vadd.f32 %v2319, %v229
    %v2321 = vadd.f32 %v2320, %v261
    %v2322 = vadd.f32 %v167, %v199
    %v2323 = vadd.f32 %v2322, %v231
    %v2324 = vadd.f32 %v2323, %v263
    %v2325 = vadd.f32 %v169, %v201
    %v2326 = vadd.f32 %v2325, %v233
    %v2327 = vadd.f32 %v2326, %v265
    %v2328 = vadd.f32 %v171, %v203
    %v2329 = vadd.f32 %v2328, %v235
    %v2330 = vadd.f32 %v2329, %v267
    %v2331 = vrcp.pop 4.0
    %v2332 = vmul.f32 %v2285, %v2331
    %v2333 = vmul.f32 %v2288, %v2331
    %v2334 = vmul.f32 %v2291, %v2331
    %v2335 = vmul.f32 %v2294, %v2331
    %v2336 = vmul.f32 %v2297, %v2331
    %v2337 = vmul.f32 %v2300, %v2331
    %v2338 = vmul.f32 %v2303, %v2331
    %v2339 = vmul.f32 %v2306, %v2331
    %v2340 = vmul.f32 %v2309, %v2331
    %v2341 = vmul.f32 %v2312, %v2331
    %v2342 = vmul.f32 %v2315, %v2331
    %v2343 = vmul.f32 %v2318, %v2331
    %v2344 = vmul.f32 %v2321, %v2331
    %v2345 = vmul.f32 %v2324, %v2331
    %v2346 = vmul.f32 %v2327, %v2331
    %v2347 = vmul.f32 %v2330, %v2331
    %v2348 = vld [vmem:[#allocation5] sm:$0xf]
    %v2349 = vld [vmem:[#allocation5 + $0x8] sm:$0xf]
    %v2350 = vld [vmem:[#allocation5 + $0x10] sm:$0xf]
    %v2351 = vld [vmem:[#allocation5 + $0x18] sm:$0xf]
    %v2352 = vld [vmem:[#allocation5 + $0x20] sm:$0xf]
    %v2353 = vld [vmem:[#allocation5 + $0x28] sm:$0xf]
    %v2354 = vld [vmem:[#allocation5 + $0x30] sm:$0xf]
    %v2355 = vld [vmem:[#allocation5 + $0x38] sm:$0xf]
    %v2356 = vld [vmem:[#allocation5 + $0x48] sm:$0xf]
    %v2357 = vld [vmem:[#allocation5 + $0x50] sm:$0xf]
    %v2358 = vld [vmem:[#allocation5 + $0x58] sm:$0xf]
    %v2359 = vld [vmem:[#allocation5 + $0x60] sm:$0xf]
    %v2360 = vld [vmem:[#allocation5 + $0x68] sm:$0xf]
    %v2361 = vld [vmem:[#allocation5 + $0x70] sm:$0xf]
    %v2362 = vld [vmem:[#allocation5 + $0x78] sm:$0xf]
    %v2363 = vld [vmem:[#allocation5 + $0x80] sm:$0xf]
    %v2364 = vld [vmem:[#allocation4] sm:$0xf]
    %v2365 = vld [vmem:[#allocation4 + $0x4] sm:$0x1]
    %v2366 = vld [vmem:[#allocation4 + $0x8] sm:$0xf]
    %v2367 = vld [vmem:[#allocation4 + $0xc] sm:$0x1]
    %v2368 = vld [vmem:[#allocation4 + $0x10] sm:$0xf]
    %v2369 = vld [vmem:[#allocation4 + $0x14] sm:$0x1]
    %v2370 = vld [vmem:[#allocation4 + $0x18] sm:$0xf]
    %v2371 = vld [vmem:[#allocation4 + $0x1c] sm:$0x1]
    %v2372 = vld [vmem:[#allocation4 + $0x20] sm:$0xf]
    %v2373 = vld [vmem:[#allocation4 + $0x24] sm:$0x1]
    %v2374 = vld [vmem:[#allocation4 + $0x28] sm:$0xf]
    %v2375 = vld [vmem:[#allocation4 + $0x2c] sm:$0x1]
    %v2376 = vld [vmem:[#allocation4 + $0x30] sm:$0xf]
    %v2377 = vld [vmem:[#allocation4 + $0x34] sm:$0x1]
    %v2378 = vld [vmem:[#allocation4 + $0x38] sm:$0xf]
    %v2379 = vld [vmem:[#allocation4 + $0x3c] sm:$0x1]
    %v2380 = vld [vmem:[#allocation4 + $0x48] sm:$0xf]
    %v2381 = vld [vmem:[#allocation4 + $0x4c] sm:$0x1]
    %v2382 = vld [vmem:[#allocation4 + $0x50] sm:$0xf]
    %v2383 = vld [vmem:[#allocation4 + $0x54] sm:$0x1]
    %v2384 = vld [vmem:[#allocation4 + $0x58] sm:$0xf]
    %v2385 = vld [vmem:[#allocation4 + $0x5c] sm:$0x1]
    %v2386 = vld [vmem:[#allocation4 + $0x60] sm:$0xf]
    %v2387 = vld [vmem:[#allocation4 + $0x64] sm:$0x1]
    %v2388 = vld [vmem:[#allocation4 + $0x68] sm:$0xf]
    %v2389 = vld [vmem:[#allocation4 + $0x6c] sm:$0x1]
    %v2390 = vld [vmem:[#allocation4 + $0x70] sm:$0xf]
    %v2391 = vld [vmem:[#allocation4 + $0x74] sm:$0x1]
    %v2392 = vld [vmem:[#allocation4 + $0x78] sm:$0xf]
    %v2393 = vld [vmem:[#allocation4 + $0x7c] sm:$0x1]
    %v2394 = vld [vmem:[#allocation4 + $0x80] sm:$0xf]
    %v2395 = vld [vmem:[#allocation4 + $0x84] sm:$0x1]
    %vm2396 = vsmask.f32 3328
    %vm2397 = vsmask.f32 7440
    %vm2398 = vmor %vm2396, %vm2397
    %v2400 = vshrl.u32 %v2364, 16
    %v2402 = vrot.slane %v2400, 4
    %v2403 = vshll.u32 %v2364, 16
    %v2405 = vrot.slane %v2403, 5
    %v2406 = vor.u32 %v2402, %v2405
    %v2407 = vrot.slane %v2406, 4
    %v2409 = vshll.u32 %v2365, 16
    %v2411 = vrot.slane %v2409, 5
    %v2412 = vsel %vm2398, %v2407, %v2411
    %v2414 = vshrl.u32 %v2366, 16
    %v2416 = vrot.slane %v2414, 4
    %v2417 = vshll.u32 %v2366, 16
    %v2419 = vrot.slane %v2417, 5
    %v2420 = vor.u32 %v2416, %v2419
    %v2421 = vrot.slane %v2420, 4
    %v2423 = vshll.u32 %v2367, 16
    %v2425 = vrot.slane %v2423, 5
    %v2426 = vsel %vm2398, %v2421, %v2425
    %v2428 = vshrl.u32 %v2368, 16
    %v2430 = vrot.slane %v2428, 4
    %v2431 = vshll.u32 %v2368, 16
    %v2433 = vrot.slane %v2431, 5
    %v2434 = vor.u32 %v2430, %v2433
    %v2435 = vrot.slane %v2434, 4
    %v2437 = vshll.u32 %v2369, 16
    %v2439 = vrot.slane %v2437, 5
    %v2440 = vsel %vm2398, %v2435, %v2439
    %v2442 = vshrl.u32 %v2370, 16
    %v2444 = vrot.slane %v2442, 4
    %v2445 = vshll.u32 %v2370, 16
    %v2447 = vrot.slane %v2445, 5
    %v2448 = vor.u32 %v2444, %v2447
    %v2449 = vrot.slane %v2448, 4
    %v2451 = vshll.u32 %v2371, 16
    %v2453 = vrot.slane %v2451, 5
    %v2454 = vsel %vm2398, %v2449, %v2453
    %v2456 = vshrl.u32 %v2372, 16
    %v2458 = vrot.slane %v2456, 4
    %v2459 = vshll.u32 %v2372, 16
    %v2461 = vrot.slane %v2459, 5
    %v2462 = vor.u32 %v2458, %v2461
    %v2463 = vrot.slane %v2462, 4
    %v2465 = vshll.u32 %v2373, 16
    %v2467 = vrot.slane %v2465, 5
    %v2468 = vsel %vm2398, %v2463, %v2467
    %v2470 = vshrl.u32 %v2374, 16
    %v2472 = vrot.slane %v2470, 4
    %v2473 = vshll.u32 %v2374, 16
    %v2475 = vrot.slane %v2473, 5
    %v2476 = vor.u32 %v2472, %v2475
    %v2477 = vrot.slane %v2476, 4
    %v2479 = vshll.u32 %v2375, 16
    %v2481 = vrot.slane %v2479, 5
    %v2482 = vsel %vm2398, %v2477, %v2481
    %v2484 = vshrl.u32 %v2376, 16
    %v2486 = vrot.slane %v2484, 4
    %v2487 = vshll.u32 %v2376, 16
    %v2489 = vrot.slane %v2487, 5
    %v2490 = vor.u32 %v2486, %v2489
    %v2491 = vrot.slane %v2490, 4
    %v2493 = vshll.u32 %v2377, 16
    %v2495 = vrot.slane %v2493, 5
    %v2496 = vsel %vm2398, %v2491, %v2495
    %v2498 = vshrl.u32 %v2378, 16
    %v2500 = vrot.slane %v2498, 4
    %v2501 = vshll.u32 %v2378, 16
    %v2503 = vrot.slane %v2501, 5
    %v2504 = vor.u32 %v2500, %v2503
    %v2505 = vrot.slane %v2504, 4
    %v2507 = vshll.u32 %v2379, 16
    %v2509 = vrot.slane %v2507, 5
    %v2510 = vsel %vm2398, %v2505, %v2509
    %v2512 = vshrl.u32 %v2380, 16
    %v2514 = vrot.slane %v2512, 4
    %v2515 = vshll.u32 %v2380, 16
    %v2517 = vrot.slane %v2515, 5
    %v2518 = vor.u32 %v2514, %v2517
    %v2519 = vrot.slane %v2518, 4
    %v2521 = vshll.u32 %v2381, 16
    %v2523 = vrot.slane %v2521, 5
    %v2524 = vsel %vm2398, %v2519, %v2523
    %v2526 = vshrl.u32 %v2382, 16
    %v2528 = vrot.slane %v2526, 4
    %v2529 = vshll.u32 %v2382, 16
    %v2531 = vrot.slane %v2529, 5
    %v2532 = vor.u32 %v2528, %v2531
    %v2533 = vrot.slane %v2532, 4
    %v2535 = vshll.u32 %v2383, 16
    %v2537 = vrot.slane %v2535, 5
    %v2538 = vsel %vm2398, %v2533, %v2537
    %v2540 = vshrl.u32 %v2384, 16
    %v2542 = vrot.slane %v2540, 4
    %v2543 = vshll.u32 %v2384, 16
    %v2545 = vrot.slane %v2543, 5
    %v2546 = vor.u32 %v2542, %v2545
    %v2547 = vrot.slane %v2546, 4
    %v2549 = vshll.u32 %v2385, 16
    %v2551 = vrot.slane %v2549, 5
    %v2552 = vsel %vm2398, %v2547, %v2551
    %v2554 = vshrl.u32 %v2386, 16
    %v2556 = vrot.slane %v2554, 4
    %v2557 = vshll.u32 %v2386, 16
    %v2559 = vrot.slane %v2557, 5
    %v2560 = vor.u32 %v2556, %v2559
    %v2561 = vrot.slane %v2560, 4
    %v2563 = vshll.u32 %v2387, 16
    %v2565 = vrot.slane %v2563, 5
    %v2566 = vsel %vm2398, %v2561, %v2565
    %v2568 = vshrl.u32 %v2388, 16
    %v2570 = vrot.slane %v2568, 4
    %v2571 = vshll.u32 %v2388, 16
    %v2573 = vrot.slane %v2571, 5
    %v2574 = vor.u32 %v2570, %v2573
    %v2575 = vrot.slane %v2574, 4
    %v2577 = vshll.u32 %v2389, 16
    %v2579 = vrot.slane %v2577, 5
    %v2580 = vsel %vm2398, %v2575, %v2579
    %v2582 = vshrl.u32 %v2390, 16
    %v2584 = vrot.slane %v2582, 4
    %v2585 = vshll.u32 %v2390, 16
    %v2587 = vrot.slane %v2585, 5
    %v2588 = vor.u32 %v2584, %v2587
    %v2589 = vrot.slane %v2588, 4
    %v2591 = vshll.u32 %v2391, 16
    %v2593 = vrot.slane %v2591, 5
    %v2594 = vsel %vm2398, %v2589, %v2593
    %v2596 = vshrl.u32 %v2392, 16
    %v2598 = vrot.slane %v2596, 4
    %v2599 = vshll.u32 %v2392, 16
    %v2601 = vrot.slane %v2599, 5
    %v2602 = vor.u32 %v2598, %v2601
    %v2603 = vrot.slane %v2602, 4
    %v2605 = vshll.u32 %v2393, 16
    %v2607 = vrot.slane %v2605, 5
    %v2608 = vsel %vm2398, %v2603, %v2607
    %v2610 = vshrl.u32 %v2394, 16
    %v2612 = vrot.slane %v2610, 4
    %v2613 = vshll.u32 %v2394, 16
    %v2615 = vrot.slane %v2613, 5
    %v2616 = vor.u32 %v2612, %v2615
    %v2617 = vrot.slane %v2616, 4
    %v2619 = vshll.u32 %v2395, 16
    %v2621 = vrot.slane %v2619, 5
    %v2622 = vsel %vm2398, %v2617, %v2621
    %v2623 = vld [vmem:[#allocation5 + $0x4] sm:$0x1]
    %v2624 = vld [vmem:[#allocation5 + $0xc] sm:$0x1]
    %v2625 = vld [vmem:[#allocation5 + $0x14] sm:$0x1]
    %v2626 = vld [vmem:[#allocation5 + $0x1c] sm:$0x1]
    %v2627 = vld [vmem:[#allocation5 + $0x24] sm:$0x1]
    %v2628 = vld [vmem:[#allocation5 + $0x2c] sm:$0x1]
    %v2629 = vld [vmem:[#allocation5 + $0x34] sm:$0x1]
    %v2630 = vld [vmem:[#allocation5 + $0x3c] sm:$0x1]
    %v2631 = vld [vmem:[#allocation5 + $0x4c] sm:$0x1]
    %v2632 = vld [vmem:[#allocation5 + $0x54] sm:$0x1]
    %v2633 = vld [vmem:[#allocation5 + $0x5c] sm:$0x1]
    %v2634 = vld [vmem:[#allocation5 + $0x64] sm:$0x1]
    %v2635 = vld [vmem:[#allocation5 + $0x6c] sm:$0x1]
    %v2636 = vld [vmem:[#allocation5 + $0x74] sm:$0x1]
    %v2637 = vld [vmem:[#allocation5 + $0x7c] sm:$0x1]
    %v2638 = vld [vmem:[#allocation5 + $0x84] sm:$0x1]
    %v2640 = vshrl.u32 %v2348, 16
    %v2642 = vrot.slane %v2640, 4
    %v2643 = vshll.u32 %v2348, 16
    %v2645 = vrot.slane %v2643, 5
    %v2646 = vor.u32 %v2642, %v2645
    %v2647 = vrot.slane %v2646, 4
    %v2649 = vshll.u32 %v2623, 16
    %v2651 = vrot.slane %v2649, 5
    %v2652 = vsel %vm2398, %v2647, %v2651
    %v2654 = vshrl.u32 %v2349, 16
    %v2656 = vrot.slane %v2654, 4
    %v2657 = vshll.u32 %v2349, 16
    %v2659 = vrot.slane %v2657, 5
    %v2660 = vor.u32 %v2656, %v2659
    %v2661 = vrot.slane %v2660, 4
    %v2663 = vshll.u32 %v2624, 16
    %v2665 = vrot.slane %v2663, 5
    %v2666 = vsel %vm2398, %v2661, %v2665
    %v2668 = vshrl.u32 %v2350, 16
    %v2670 = vrot.slane %v2668, 4
    %v2671 = vshll.u32 %v2350, 16
    %v2673 = vrot.slane %v2671, 5
    %v2674 = vor.u32 %v2670, %v2673
    %v2675 = vrot.slane %v2674, 4
    %v2677 = vshll.u32 %v2625, 16
    %v2679 = vrot.slane %v2677, 5
    %v2680 = vsel %vm2398, %v2675, %v2679
    %v2682 = vshrl.u32 %v2351, 16
    %v2684 = vrot.slane %v2682, 4
    %v2685 = vshll.u32 %v2351, 16
    %v2687 = vrot.slane %v2685, 5
    %v2688 = vor.u32 %v2684, %v2687
    %v2689 = vrot.slane %v2688, 4
    %v2691 = vshll.u32 %v2626, 16
    %v2693 = vrot.slane %v2691, 5
    %v2694 = vsel %vm2398, %v2689, %v2693
    %v2696 = vshrl.u32 %v2352, 16
    %v2698 = vrot.slane %v2696, 4
    %v2699 = vshll.u32 %v2352, 16
    %v2701 = vrot.slane %v2699, 5
    %v2702 = vor.u32 %v2698, %v2701
    %v2703 = vrot.slane %v2702, 4
    %v2705 = vshll.u32 %v2627, 16
    %v2707 = vrot.slane %v2705, 5
    %v2708 = vsel %vm2398, %v2703, %v2707
    %v2710 = vshrl.u32 %v2353, 16
    %v2712 = vrot.slane %v2710, 4
    %v2713 = vshll.u32 %v2353, 16
    %v2715 = vrot.slane %v2713, 5
    %v2716 = vor.u32 %v2712, %v2715
    %v2717 = vrot.slane %v2716, 4
    %v2719 = vshll.u32 %v2628, 16
    %v2721 = vrot.slane %v2719, 5
    %v2722 = vsel %vm2398, %v2717, %v2721
    %v2724 = vshrl.u32 %v2354, 16
    %v2726 = vrot.slane %v2724, 4
    %v2727 = vshll.u32 %v2354, 16
    %v2729 = vrot.slane %v2727, 5
    %v2730 = vor.u32 %v2726, %v2729
    %v2731 = vrot.slane %v2730, 4
    %v2733 = vshll.u32 %v2629, 16
    %v2735 = vrot.slane %v2733, 5
    %v2736 = vsel %vm2398, %v2731, %v2735
    %v2738 = vshrl.u32 %v2355, 16
    %v2740 = vrot.slane %v2738, 4
    %v2741 = vshll.u32 %v2355, 16
    %v2743 = vrot.slane %v2741, 5
    %v2744 = vor.u32 %v2740, %v2743
    %v2745 = vrot.slane %v2744, 4
    %v2747 = vshll.u32 %v2630, 16
    %v2749 = vrot.slane %v2747, 5
    %v2750 = vsel %vm2398, %v2745, %v2749
    %v2752 = vshrl.u32 %v2356, 16
    %v2754 = vrot.slane %v2752, 4
    %v2755 = vshll.u32 %v2356, 16
    %v2757 = vrot.slane %v2755, 5
    %v2758 = vor.u32 %v2754, %v2757
    %v2759 = vrot.slane %v2758, 4
    %v2761 = vshll.u32 %v2631, 16
    %v2763 = vrot.slane %v2761, 5
    %v2764 = vsel %vm2398, %v2759, %v2763
    %v2766 = vshrl.u32 %v2357, 16
    %v2768 = vrot.slane %v2766, 4
    %v2769 = vshll.u32 %v2357, 16
    %v2771 = vrot.slane %v2769, 5
    %v2772 = vor.u32 %v2768, %v2771
    %v2773 = vrot.slane %v2772, 4
    %v2775 = vshll.u32 %v2632, 16
    %v2777 = vrot.slane %v2775, 5
    %v2778 = vsel %vm2398, %v2773, %v2777
    %v2780 = vshrl.u32 %v2358, 16
    %v2782 = vrot.slane %v2780, 4
    %v2783 = vshll.u32 %v2358, 16
    %v2785 = vrot.slane %v2783, 5
    %v2786 = vor.u32 %v2782, %v2785
    %v2787 = vrot.slane %v2786, 4
    %v2789 = vshll.u32 %v2633, 16
    %v2791 = vrot.slane %v2789, 5
    %v2792 = vsel %vm2398, %v2787, %v2791
    %v2794 = vshrl.u32 %v2359, 16
    %v2796 = vrot.slane %v2794, 4
    %v2797 = vshll.u32 %v2359, 16
    %v2799 = vrot.slane %v2797, 5
    %v2800 = vor.u32 %v2796, %v2799
    %v2801 = vrot.slane %v2800, 4
    %v2803 = vshll.u32 %v2634, 16
    %v2805 = vrot.slane %v2803, 5
    %v2806 = vsel %vm2398, %v2801, %v2805
    %v2808 = vshrl.u32 %v2360, 16
    %v2810 = vrot.slane %v2808, 4
    %v2811 = vshll.u32 %v2360, 16
    %v2813 = vrot.slane %v2811, 5
    %v2814 = vor.u32 %v2810, %v2813
    %v2815 = vrot.slane %v2814, 4
    %v2817 = vshll.u32 %v2635, 16
    %v2819 = vrot.slane %v2817, 5
    %v2820 = vsel %vm2398, %v2815, %v2819
    %v2822 = vshrl.u32 %v2361, 16
    %v2824 = vrot.slane %v2822, 4
    %v2825 = vshll.u32 %v2361, 16
    %v2827 = vrot.slane %v2825, 5
    %v2828 = vor.u32 %v2824, %v2827
    %v2829 = vrot.slane %v2828, 4
    %v2831 = vshll.u32 %v2636, 16
    %v2833 = vrot.slane %v2831, 5
    %v2834 = vsel %vm2398, %v2829, %v2833
    %v2836 = vshrl.u32 %v2362, 16
    %v2838 = vrot.slane %v2836, 4
    %v2839 = vshll.u32 %v2362, 16
    %v2841 = vrot.slane %v2839, 5
    %v2842 = vor.u32 %v2838, %v2841
    %v2843 = vrot.slane %v2842, 4
    %v2845 = vshll.u32 %v2637, 16
    %v2847 = vrot.slane %v2845, 5
    %v2848 = vsel %vm2398, %v2843, %v2847
    %v2850 = vshrl.u32 %v2363, 16
    %v2852 = vrot.slane %v2850, 4
    %v2853 = vshll.u32 %v2363, 16
    %v2855 = vrot.slane %v2853, 5
    %v2856 = vor.u32 %v2852, %v2855
    %v2857 = vrot.slane %v2856, 4
    %v2859 = vshll.u32 %v2638, 16
    %v2861 = vrot.slane %v2859, 5
    %v2862 = vsel %vm2398, %v2857, %v2861
    %v2879 = vunpack.c.l.b16 %v2348
    %v2880 = vunpack.c.l.b16 %v2349
    %v2881 = vunpack.c.l.b16 %v2350
    %v2882 = vunpack.c.l.b16 %v2351
    %v2883 = vunpack.c.l.b16 %v2352
    %v2884 = vunpack.c.l.b16 %v2353
    %v2885 = vunpack.c.l.b16 %v2354
    %v2886 = vunpack.c.l.b16 %v2355
    %v2887 = vunpack.c.l.b16 %v2356
    %v2888 = vunpack.c.l.b16 %v2357
    %v2889 = vunpack.c.l.b16 %v2358
    %v2890 = vunpack.c.l.b16 %v2359
    %v2891 = vunpack.c.l.b16 %v2360
    %v2892 = vunpack.c.l.b16 %v2361
    %v2893 = vunpack.c.l.b16 %v2362
    %v2894 = vunpack.c.l.b16 %v2363
    %v2895 = vpack.c.b16 %v2880, %v2879
    %v2896 = vpack.c.b16 %v2882, %v2881
    %v2897 = vpack.c.b16 %v2884, %v2883
    %v2898 = vpack.c.b16 %v2886, %v2885
    %v2899 = vpack.c.b16 %v2888, %v2887
    %v2900 = vpack.c.b16 %v2890, %v2889
    %v2901 = vpack.c.b16 %v2892, %v2891
    %v2902 = vpack.c.b16 %v2894, %v2893
    %v2911 = vunpack.c.l.b16 %v2412
    %v2912 = vunpack.c.l.b16 %v2426
    %v2913 = vunpack.c.l.b16 %v2440
    %v2914 = vunpack.c.l.b16 %v2454
    %v2915 = vunpack.c.l.b16 %v2468
    %v2916 = vunpack.c.l.b16 %v2482
    %v2917 = vunpack.c.l.b16 %v2496
    %v2918 = vunpack.c.l.b16 %v2510
    %v2919 = vunpack.c.l.b16 %v2524
    %v2920 = vunpack.c.l.b16 %v2538
    %v2921 = vunpack.c.l.b16 %v2552
    %v2922 = vunpack.c.l.b16 %v2566
    %v2923 = vunpack.c.l.b16 %v2580
    %v2924 = vunpack.c.l.b16 %v2594
    %v2925 = vunpack.c.l.b16 %v2608
    %v2926 = vunpack.c.l.b16 %v2622
    %v2927 = vpack.c.b16 %v2912, %v2911
    %v2928 = vpack.c.b16 %v2914, %v2913
    %v2929 = vpack.c.b16 %v2916, %v2915
    %v2930 = vpack.c.b16 %v2918, %v2917
    %v2931 = vpack.c.b16 %v2920, %v2919
    %v2932 = vpack.c.b16 %v2922, %v2921
    %v2933 = vpack.c.b16 %v2924, %v2923
    %v2934 = vpack.c.b16 %v2926, %v2925
    %v2943 = vunpack.c.l.b16 %v2652
    %v2944 = vunpack.c.l.b16 %v2666
    %v2945 = vunpack.c.l.b16 %v2680
    %v2946 = vunpack.c.l.b16 %v2694
    %v2947 = vunpack.c.l.b16 %v2708
    %v2948 = vunpack.c.l.b16 %v2722
    %v2949 = vunpack.c.l.b16 %v2736
    %v2950 = vunpack.c.l.b16 %v2750
    %v2951 = vunpack.c.l.b16 %v2764
    %v2952 = vunpack.c.l.b16 %v2778
    %v2953 = vunpack.c.l.b16 %v2792
    %v2954 = vunpack.c.l.b16 %v2806
    %v2955 = vunpack.c.l.b16 %v2820
    %v2956 = vunpack.c.l.b16 %v2834
    %v2957 = vunpack.c.l.b16 %v2848
    %v2958 = vunpack.c.l.b16 %v2862
    %v2959 = vpack.c.b16 %v2944, %v2943
    %v2960 = vpack.c.b16 %v2946, %v2945
    %v2961 = vpack.c.b16 %v2948, %v2947
    %v2962 = vpack.c.b16 %v2950, %v2949
    %v2963 = vpack.c.b16 %v2952, %v2951
    %v2964 = vpack.c.b16 %v2954, %v2953
    %v2965 = vpack.c.b16 %v2956, %v2955
    %v2966 = vpack.c.b16 %v2958, %v2957
    %v2975 = vld [vmem:[#allocation10] sm:$0xf]
    %v2976 = vld [vmem:[#allocation10 + $0x4] sm:$0xf]
    %v2977 = vld [vmem:[#allocation10 + $0x8] sm:$0xf]
    %v2978 = vld [vmem:[#allocation10 + $0xc] sm:$0xf]
    %v2979 = vld [vmem:[#allocation10 + $0x10] sm:$0xf]
    %v2980 = vld [vmem:[#allocation10 + $0x14] sm:$0xf]
    %v2981 = vld [vmem:[#allocation10 + $0x18] sm:$0xf]
    %v2982 = vld [vmem:[#allocation10 + $0x1c] sm:$0xf]
    %v2983 = vld [vmem:[#allocation10 + $0x20] sm:$0xf]
    %v2984 = vld [vmem:[#allocation10 + $0x24] sm:$0xf]
    %v2985 = vld [vmem:[#allocation10 + $0x28] sm:$0xf]
    %v2986 = vld [vmem:[#allocation10 + $0x2c] sm:$0xf]
    %v2987 = vld [vmem:[#allocation10 + $0x30] sm:$0xf]
    %v2988 = vld [vmem:[#allocation10 + $0x34] sm:$0xf]
    %v2989 = vld [vmem:[#allocation10 + $0x38] sm:$0xf]
    %v2990 = vld [vmem:[#allocation10 + $0x3c] sm:$0xf]
    %v2991 = vld [vmem:[#allocation10 + $0x40] sm:$0xf]
    %v2992 = vld [vmem:[#allocation10 + $0x44] sm:$0xf]
    %v2993 = vld [vmem:[#allocation10 + $0x48] sm:$0xf]
    %v2994 = vld [vmem:[#allocation10 + $0x4c] sm:$0xf]
    %v2995 = vld [vmem:[#allocation10 + $0x50] sm:$0xf]
    %v2996 = vld [vmem:[#allocation10 + $0x54] sm:$0xf]
    %v2997 = vld [vmem:[#allocation10 + $0x58] sm:$0xf]
    %v2998 = vld [vmem:[#allocation10 + $0x5c] sm:$0xf]
    %v2999 = vld [vmem:[#allocation10 + $0x60] sm:$0xf]
    %v3000 = vld [vmem:[#allocation10 + $0x64] sm:$0xf]
    %v3001 = vld [vmem:[#allocation10 + $0x68] sm:$0xf]
    %v3002 = vld [vmem:[#allocation10 + $0x6c] sm:$0xf]
    %v3003 = vld [vmem:[#allocation10 + $0x70] sm:$0xf]
    %v3004 = vld [vmem:[#allocation10 + $0x74] sm:$0xf]
    %v3005 = vld [vmem:[#allocation10 + $0x78] sm:$0xf]
    %v3006 = vld [vmem:[#allocation10 + $0x7c] sm:$0xf]
    %v3007 = vld [vmem:[#allocation10 + $0x80] sm:$0xf]
    %v3008 = vld [vmem:[#allocation10 + $0x84] sm:$0xf]
    %v3009 = vld [vmem:[#allocation10 + $0x88] sm:$0xf]
    %v3010 = vld [vmem:[#allocation10 + $0x8c] sm:$0xf]
    %v3011 = vld [vmem:[#allocation10 + $0x90] sm:$0xf]
    %v3012 = vld [vmem:[#allocation10 + $0x94] sm:$0xf]
    %v3013 = vld [vmem:[#allocation10 + $0x98] sm:$0xf]
    %v3014 = vld [vmem:[#allocation10 + $0x9c] sm:$0xf]
    %v3015 = vld [vmem:[#allocation10 + $0xa0] sm:$0xf]
    %v3016 = vld [vmem:[#allocation10 + $0xa4] sm:$0xf]
    %v3017 = vld [vmem:[#allocation10 + $0xa8] sm:$0xf]
    %v3018 = vld [vmem:[#allocation10 + $0xac] sm:$0xf]
    %v3019 = vld [vmem:[#allocation10 + $0xb0] sm:$0xf]
    %v3020 = vld [vmem:[#allocation10 + $0xb4] sm:$0xf]
    %v3021 = vld [vmem:[#allocation10 + $0xb8] sm:$0xf]
    %v3022 = vld [vmem:[#allocation10 + $0xbc] sm:$0xf]
    %v3023 = vld [vmem:[%s1548] sm:$0xf]
    %v3024 = vld [vmem:[%s1548 + $0x8] sm:$0xf]
    %v3025 = vld [vmem:[%s1548 + $0x10] sm:$0xf]
    %v3026 = vld [vmem:[%s1548 + $0x18] sm:$0xf]
    %v3027 = vld [vmem:[%s1548 + $0x20] sm:$0xf]
    %v3028 = vld [vmem:[%s1548 + $0x28] sm:$0xf]
    %v3029 = vld [vmem:[%s1548 + $0x30] sm:$0xf]
    %v3030 = vld [vmem:[%s1548 + $0x38] sm:$0xf]
    %v3031 = vld [vmem:[%s1548 + $0x48] sm:$0xf]
    %v3032 = vld [vmem:[%s1548 + $0x50] sm:$0xf]
    %v3033 = vld [vmem:[%s1548 + $0x58] sm:$0xf]
    %v3034 = vld [vmem:[%s1548 + $0x60] sm:$0xf]
    %v3035 = vld [vmem:[%s1548 + $0x68] sm:$0xf]
    %v3036 = vld [vmem:[%s1548 + $0x70] sm:$0xf]
    %v3037 = vld [vmem:[%s1548 + $0x78] sm:$0xf]
    %v3038 = vld [vmem:[%s1548 + $0x80] sm:$0xf]
    %v3039 = vld [vmem:[%s1226] sm:$0xf]
    %v3040 = vld [vmem:[%s1226 + $0x4] sm:$0x1]
    %v3041 = vld [vmem:[%s1226 + $0x8] sm:$0xf]
    %v3042 = vld [vmem:[%s1226 + $0xc] sm:$0x1]
    %v3043 = vld [vmem:[%s1226 + $0x10] sm:$0xf]
    %v3044 = vld [vmem:[%s1226 + $0x14] sm:$0x1]
    %v3045 = vld [vmem:[%s1226 + $0x18] sm:$0xf]
    %v3046 = vld [vmem:[%s1226 + $0x1c] sm:$0x1]
    %v3047 = vld [vmem:[%s1226 + $0x20] sm:$0xf]
    %v3048 = vld [vmem:[%s1226 + $0x24] sm:$0x1]
    %v3049 = vld [vmem:[%s1226 + $0x28] sm:$0xf]
    %v3050 = vld [vmem:[%s1226 + $0x2c] sm:$0x1]
    %v3051 = vld [vmem:[%s1226 + $0x30] sm:$0xf]
    %v3052 = vld [vmem:[%s1226 + $0x34] sm:$0x1]
    %v3053 = vld [vmem:[%s1226 + $0x38] sm:$0xf]
    %v3054 = vld [vmem:[%s1226 + $0x3c] sm:$0x1]
    %v3055 = vld [vmem:[%s1226 + $0x48] sm:$0xf]
    %v3056 = vld [vmem:[%s1226 + $0x4c] sm:$0x1]
    %v3057 = vld [vmem:[%s1226 + $0x50] sm:$0xf]
    %v3058 = vld [vmem:[%s1226 + $0x54] sm:$0x1]
    %v3059 = vld [vmem:[%s1226 + $0x58] sm:$0xf]
    %v3060 = vld [vmem:[%s1226 + $0x5c] sm:$0x1]
    %v3061 = vld [vmem:[%s1226 + $0x60] sm:$0xf]
    %v3062 = vld [vmem:[%s1226 + $0x64] sm:$0x1]
    %v3063 = vld [vmem:[%s1226 + $0x68] sm:$0xf]
    %v3064 = vld [vmem:[%s1226 + $0x6c] sm:$0x1]
    %v3065 = vld [vmem:[%s1226 + $0x70] sm:$0xf]
    %v3066 = vld [vmem:[%s1226 + $0x74] sm:$0x1]
    %v3067 = vld [vmem:[%s1226 + $0x78] sm:$0xf]
    %v3068 = vld [vmem:[%s1226 + $0x7c] sm:$0x1]
    %v3069 = vld [vmem:[%s1226 + $0x80] sm:$0xf]
    %v3070 = vld [vmem:[%s1226 + $0x84] sm:$0x1]
    %v3072 = vshrl.u32 %v3039, 16
    %v3074 = vrot.slane %v3072, 4
    %v3075 = vshll.u32 %v3039, 16
    %v3077 = vrot.slane %v3075, 5
    %v3078 = vor.u32 %v3074, %v3077
    %v3079 = vrot.slane %v3078, 4
    %v3081 = vshll.u32 %v3040, 16
    %v3083 = vrot.slane %v3081, 5
    %v3084 = vsel %vm2398, %v3079, %v3083
    %v3086 = vshrl.u32 %v3041, 16
    %v3088 = vrot.slane %v3086, 4
    %v3089 = vshll.u32 %v3041, 16
    %v3091 = vrot.slane %v3089, 5
    %v3092 = vor.u32 %v3088, %v3091
    %v3093 = vrot.slane %v3092, 4
    %v3095 = vshll.u32 %v3042, 16
    %v3097 = vrot.slane %v3095, 5
    %v3098 = vsel %vm2398, %v3093, %v3097
    %v3100 = vshrl.u32 %v3043, 16
    %v3102 = vrot.slane %v3100, 4
    %v3103 = vshll.u32 %v3043, 16
    %v3105 = vrot.slane %v3103, 5
    %v3106 = vor.u32 %v3102, %v3105
    %v3107 = vrot.slane %v3106, 4
    %v3109 = vshll.u32 %v3044, 16
    %v3111 = vrot.slane %v3109, 5
    %v3112 = vsel %vm2398, %v3107, %v3111
    %v3114 = vshrl.u32 %v3045, 16
    %v3116 = vrot.slane %v3114, 4
    %v3117 = vshll.u32 %v3045, 16
    %v3119 = vrot.slane %v3117, 5
    %v3120 = vor.u32 %v3116, %v3119
    %v3121 = vrot.slane %v3120, 4
    %v3123 = vshll.u32 %v3046, 16
    %v3125 = vrot.slane %v3123, 5
    %v3126 = vsel %vm2398, %v3121, %v3125
    %v3128 = vshrl.u32 %v3047, 16
    %v3130 = vrot.slane %v3128, 4
    %v3131 = vshll.u32 %v3047, 16
    %v3133 = vrot.slane %v3131, 5
    %v3134 = vor.u32 %v3130, %v3133
    %v3135 = vrot.slane %v3134, 4
    %v3137 = vshll.u32 %v3048, 16
    %v3139 = vrot.slane %v3137, 5
    %v3140 = vsel %vm2398, %v3135, %v3139
    %v3142 = vshrl.u32 %v3049, 16
    %v3144 = vrot.slane %v3142, 4
    %v3145 = vshll.u32 %v3049, 16
    %v3147 = vrot.slane %v3145, 5
    %v3148 = vor.u32 %v3144, %v3147
    %v3149 = vrot.slane %v3148, 4
    %v3151 = vshll.u32 %v3050, 16
    %v3153 = vrot.slane %v3151, 5
    %v3154 = vsel %vm2398, %v3149, %v3153
    %v3156 = vshrl.u32 %v3051, 16
    %v3158 = vrot.slane %v3156, 4
    %v3159 = vshll.u32 %v3051, 16
    %v3161 = vrot.slane %v3159, 5
    %v3162 = vor.u32 %v3158, %v3161
    %v3163 = vrot.slane %v3162, 4
    %v3165 = vshll.u32 %v3052, 16
    %v3167 = vrot.slane %v3165, 5
    %v3168 = vsel %vm2398, %v3163, %v3167
    %v3170 = vshrl.u32 %v3053, 16
    %v3172 = vrot.slane %v3170, 4
    %v3173 = vshll.u32 %v3053, 16
    %v3175 = vrot.slane %v3173, 5
    %v3176 = vor.u32 %v3172, %v3175
    %v3177 = vrot.slane %v3176, 4
    %v3179 = vshll.u32 %v3054, 16
    %v3181 = vrot.slane %v3179, 5
    %v3182 = vsel %vm2398, %v3177, %v3181
    %v3184 = vshrl.u32 %v3055, 16
    %v3186 = vrot.slane %v3184, 4
    %v3187 = vshll.u32 %v3055, 16
    %v3189 = vrot.slane %v3187, 5
    %v3190 = vor.u32 %v3186, %v3189
    %v3191 = vrot.slane %v3190, 4
    %v3193 = vshll.u32 %v3056, 16
    %v3195 = vrot.slane %v3193, 5
    %v3196 = vsel %vm2398, %v3191, %v3195
    %v3198 = vshrl.u32 %v3057, 16
    %v3200 = vrot.slane %v3198, 4
    %v3201 = vshll.u32 %v3057, 16
    %v3203 = vrot.slane %v3201, 5
    %v3204 = vor.u32 %v3200, %v3203
    %v3205 = vrot.slane %v3204, 4
    %v3207 = vshll.u32 %v3058, 16
    %v3209 = vrot.slane %v3207, 5
    %v3210 = vsel %vm2398, %v3205, %v3209
    %v3212 = vshrl.u32 %v3059, 16
    %v3214 = vrot.slane %v3212, 4
    %v3215 = vshll.u32 %v3059, 16
    %v3217 = vrot.slane %v3215, 5
    %v3218 = vor.u32 %v3214, %v3217
    %v3219 = vrot.slane %v3218, 4
    %v3221 = vshll.u32 %v3060, 16
    %v3223 = vrot.slane %v3221, 5
    %v3224 = vsel %vm2398, %v3219, %v3223
    %v3226 = vshrl.u32 %v3061, 16
    %v3228 = vrot.slane %v3226, 4
    %v3229 = vshll.u32 %v3061, 16
    %v3231 = vrot.slane %v3229, 5
    %v3232 = vor.u32 %v3228, %v3231
    %v3233 = vrot.slane %v3232, 4
    %v3235 = vshll.u32 %v3062, 16
    %v3237 = vrot.slane %v3235, 5
    %v3238 = vsel %vm2398, %v3233, %v3237
    %v3240 = vshrl.u32 %v3063, 16
    %v3242 = vrot.slane %v3240, 4
    %v3243 = vshll.u32 %v3063, 16
    %v3245 = vrot.slane %v3243, 5
    %v3246 = vor.u32 %v3242, %v3245
    %v3247 = vrot.slane %v3246, 4
    %v3249 = vshll.u32 %v3064, 16
    %v3251 = vrot.slane %v3249, 5
    %v3252 = vsel %vm2398, %v3247, %v3251
    %v3254 = vshrl.u32 %v3065, 16
    %v3256 = vrot.slane %v3254, 4
    %v3257 = vshll.u32 %v3065, 16
    %v3259 = vrot.slane %v3257, 5
    %v3260 = vor.u32 %v3256, %v3259
    %v3261 = vrot.slane %v3260, 4
    %v3263 = vshll.u32 %v3066, 16
    %v3265 = vrot.slane %v3263, 5
    %v3266 = vsel %vm2398, %v3261, %v3265
    %v3268 = vshrl.u32 %v3067, 16
    %v3270 = vrot.slane %v3268, 4
    %v3271 = vshll.u32 %v3067, 16
    %v3273 = vrot.slane %v3271, 5
    %v3274 = vor.u32 %v3270, %v3273
    %v3275 = vrot.slane %v3274, 4
    %v3277 = vshll.u32 %v3068, 16
    %v3279 = vrot.slane %v3277, 5
    %v3280 = vsel %vm2398, %v3275, %v3279
    %v3282 = vshrl.u32 %v3069, 16
    %v3284 = vrot.slane %v3282, 4
    %v3285 = vshll.u32 %v3069, 16
    %v3287 = vrot.slane %v3285, 5
    %v3288 = vor.u32 %v3284, %v3287
    %v3289 = vrot.slane %v3288, 4
    %v3291 = vshll.u32 %v3070, 16
    %v3293 = vrot.slane %v3291, 5
    %v3294 = vsel %vm2398, %v3289, %v3293
    %v3295 = vld [vmem:[%s1548 + $0x4] sm:$0x1]
    %v3296 = vld [vmem:[%s1548 + $0xc] sm:$0x1]
    %v3297 = vld [vmem:[%s1548 + $0x14] sm:$0x1]
    %v3298 = vld [vmem:[%s1548 + $0x1c] sm:$0x1]
    %v3299 = vld [vmem:[%s1548 + $0x24] sm:$0x1]
    %v3300 = vld [vmem:[%s1548 + $0x2c] sm:$0x1]
    %v3301 = vld [vmem:[%s1548 + $0x34] sm:$0x1]
    %v3302 = vld [vmem:[%s1548 + $0x3c] sm:$0x1]
    %v3303 = vld [vmem:[%s1548 + $0x4c] sm:$0x1]
    %v3304 = vld [vmem:[%s1548 + $0x54] sm:$0x1]
    %v3305 = vld [vmem:[%s1548 + $0x5c] sm:$0x1]
    %v3306 = vld [vmem:[%s1548 + $0x64] sm:$0x1]
    %v3307 = vld [vmem:[%s1548 + $0x6c] sm:$0x1]
    %v3308 = vld [vmem:[%s1548 + $0x74] sm:$0x1]
    %v3309 = vld [vmem:[%s1548 + $0x7c] sm:$0x1]
    %v3310 = vld [vmem:[%s1548 + $0x84] sm:$0x1]
    %v3312 = vshrl.u32 %v3023, 16
    %v3314 = vrot.slane %v3312, 4
    %v3315 = vshll.u32 %v3023, 16
    %v3317 = vrot.slane %v3315, 5
    %v3318 = vor.u32 %v3314, %v3317
    %v3319 = vrot.slane %v3318, 4
    %v3321 = vshll.u32 %v3295, 16
    %v3323 = vrot.slane %v3321, 5
    %v3324 = vsel %vm2398, %v3319, %v3323
    %v3326 = vshrl.u32 %v3024, 16
    %v3328 = vrot.slane %v3326, 4
    %v3329 = vshll.u32 %v3024, 16
    %v3331 = vrot.slane %v3329, 5
    %v3332 = vor.u32 %v3328, %v3331
    %v3333 = vrot.slane %v3332, 4
    %v3335 = vshll.u32 %v3296, 16
    %v3337 = vrot.slane %v3335, 5
    %v3338 = vsel %vm2398, %v3333, %v3337
    %v3340 = vshrl.u32 %v3025, 16
    %v3342 = vrot.slane %v3340, 4
    %v3343 = vshll.u32 %v3025, 16
    %v3345 = vrot.slane %v3343, 5
    %v3346 = vor.u32 %v3342, %v3345
    %v3347 = vrot.slane %v3346, 4
    %v3349 = vshll.u32 %v3297, 16
    %v3351 = vrot.slane %v3349, 5
    %v3352 = vsel %vm2398, %v3347, %v3351
    %v3354 = vshrl.u32 %v3026, 16
    %v3356 = vrot.slane %v3354, 4
    %v3357 = vshll.u32 %v3026, 16
    %v3359 = vrot.slane %v3357, 5
    %v3360 = vor.u32 %v3356, %v3359
    %v3361 = vrot.slane %v3360, 4
    %v3363 = vshll.u32 %v3298, 16
    %v3365 = vrot.slane %v3363, 5
    %v3366 = vsel %vm2398, %v3361, %v3365
    %v3368 = vshrl.u32 %v3027, 16
    %v3370 = vrot.slane %v3368, 4
    %v3371 = vshll.u32 %v3027, 16
    %v3373 = vrot.slane %v3371, 5
    %v3374 = vor.u32 %v3370, %v3373
    %v3375 = vrot.slane %v3374, 4
    %v3377 = vshll.u32 %v3299, 16
    %v3379 = vrot.slane %v3377, 5
    %v3380 = vsel %vm2398, %v3375, %v3379
    %v3382 = vshrl.u32 %v3028, 16
    %v3384 = vrot.slane %v3382, 4
    %v3385 = vshll.u32 %v3028, 16
    %v3387 = vrot.slane %v3385, 5
    %v3388 = vor.u32 %v3384, %v3387
    %v3389 = vrot.slane %v3388, 4
    %v3391 = vshll.u32 %v3300, 16
    %v3393 = vrot.slane %v3391, 5
    %v3394 = vsel %vm2398, %v3389, %v3393
    %v3396 = vshrl.u32 %v3029, 16
    %v3398 = vrot.slane %v3396, 4
    %v3399 = vshll.u32 %v3029, 16
    %v3401 = vrot.slane %v3399, 5
    %v3402 = vor.u32 %v3398, %v3401
    %v3403 = vrot.slane %v3402, 4
    %v3405 = vshll.u32 %v3301, 16
    %v3407 = vrot.slane %v3405, 5
    %v3408 = vsel %vm2398, %v3403, %v3407
    %v3410 = vshrl.u32 %v3030, 16
    %v3412 = vrot.slane %v3410, 4
    %v3413 = vshll.u32 %v3030, 16
    %v3415 = vrot.slane %v3413, 5
    %v3416 = vor.u32 %v3412, %v3415
    %v3417 = vrot.slane %v3416, 4
    %v3419 = vshll.u32 %v3302, 16
    %v3421 = vrot.slane %v3419, 5
    %v3422 = vsel %vm2398, %v3417, %v3421
    %v3424 = vshrl.u32 %v3031, 16
    %v3426 = vrot.slane %v3424, 4
    %v3427 = vshll.u32 %v3031, 16
    %v3429 = vrot.slane %v3427, 5
    %v3430 = vor.u32 %v3426, %v3429
    %v3431 = vrot.slane %v3430, 4
    %v3433 = vshll.u32 %v3303, 16
    %v3435 = vrot.slane %v3433, 5
    %v3436 = vsel %vm2398, %v3431, %v3435
    %v3438 = vshrl.u32 %v3032, 16
    %v3440 = vrot.slane %v3438, 4
    %v3441 = vshll.u32 %v3032, 16
    %v3443 = vrot.slane %v3441, 5
    %v3444 = vor.u32 %v3440, %v3443
    %v3445 = vrot.slane %v3444, 4
    %v3447 = vshll.u32 %v3304, 16
    %v3449 = vrot.slane %v3447, 5
    %v3450 = vsel %vm2398, %v3445, %v3449
    %v3452 = vshrl.u32 %v3033, 16
    %v3454 = vrot.slane %v3452, 4
    %v3455 = vshll.u32 %v3033, 16
    %v3457 = vrot.slane %v3455, 5
    %v3458 = vor.u32 %v3454, %v3457
    %v3459 = vrot.slane %v3458, 4
    %v3461 = vshll.u32 %v3305, 16
    %v3463 = vrot.slane %v3461, 5
    %v3464 = vsel %vm2398, %v3459, %v3463
    %v3466 = vshrl.u32 %v3034, 16
    %v3468 = vrot.slane %v3466, 4
    %v3469 = vshll.u32 %v3034, 16
    %v3471 = vrot.slane %v3469, 5
    %v3472 = vor.u32 %v3468, %v3471
    %v3473 = vrot.slane %v3472, 4
    %v3475 = vshll.u32 %v3306, 16
    %v3477 = vrot.slane %v3475, 5
    %v3478 = vsel %vm2398, %v3473, %v3477
    %v3480 = vshrl.u32 %v3035, 16
    %v3482 = vrot.slane %v3480, 4
    %v3483 = vshll.u32 %v3035, 16
    %v3485 = vrot.slane %v3483, 5
    %v3486 = vor.u32 %v3482, %v3485
    %v3487 = vrot.slane %v3486, 4
    %v3489 = vshll.u32 %v3307, 16
    %v3491 = vrot.slane %v3489, 5
    %v3492 = vsel %vm2398, %v3487, %v3491
    %v3494 = vshrl.u32 %v3036, 16
    %v3496 = vrot.slane %v3494, 4
    %v3497 = vshll.u32 %v3036, 16
    %v3499 = vrot.slane %v3497, 5
    %v3500 = vor.u32 %v3496, %v3499
    %v3501 = vrot.slane %v3500, 4
    %v3503 = vshll.u32 %v3308, 16
    %v3505 = vrot.slane %v3503, 5
    %v3506 = vsel %vm2398, %v3501, %v3505
    %v3508 = vshrl.u32 %v3037, 16
    %v3510 = vrot.slane %v3508, 4
    %v3511 = vshll.u32 %v3037, 16
    %v3513 = vrot.slane %v3511, 5
    %v3514 = vor.u32 %v3510, %v3513
    %v3515 = vrot.slane %v3514, 4
    %v3517 = vshll.u32 %v3309, 16
    %v3519 = vrot.slane %v3517, 5
    %v3520 = vsel %vm2398, %v3515, %v3519
    %v3522 = vshrl.u32 %v3038, 16
    %v3524 = vrot.slane %v3522, 4
    %v3525 = vshll.u32 %v3038, 16
    %v3527 = vrot.slane %v3525, 5
    %v3528 = vor.u32 %v3524, %v3527
    %v3529 = vrot.slane %v3528, 4
    %v3531 = vshll.u32 %v3310, 16
    %v3533 = vrot.slane %v3531, 5
    %v3534 = vsel %vm2398, %v3529, %v3533
    %v3551 = vunpack.c.l.b16 %v3023
    %v3552 = vunpack.c.l.b16 %v3024
    %v3553 = vunpack.c.l.b16 %v3025
    %v3554 = vunpack.c.l.b16 %v3026
    %v3555 = vunpack.c.l.b16 %v3027
    %v3556 = vunpack.c.l.b16 %v3028
    %v3557 = vunpack.c.l.b16 %v3029
    %v3558 = vunpack.c.l.b16 %v3030
    %v3559 = vunpack.c.l.b16 %v3031
    %v3560 = vunpack.c.l.b16 %v3032
    %v3561 = vunpack.c.l.b16 %v3033
    %v3562 = vunpack.c.l.b16 %v3034
    %v3563 = vunpack.c.l.b16 %v3035
    %v3564 = vunpack.c.l.b16 %v3036
    %v3565 = vunpack.c.l.b16 %v3037
    %v3566 = vunpack.c.l.b16 %v3038
    %v3567 = vpack.c.b16 %v3552, %v3551
    %v3568 = vpack.c.b16 %v3554, %v3553
    %v3569 = vpack.c.b16 %v3556, %v3555
    %v3570 = vpack.c.b16 %v3558, %v3557
    %v3571 = vpack.c.b16 %v3560, %v3559
    %v3572 = vpack.c.b16 %v3562, %v3561
    %v3573 = vpack.c.b16 %v3564, %v3563
    %v3574 = vpack.c.b16 %v3566, %v3565
    %v3583 = vunpack.c.l.b16 %v3084
    %v3584 = vunpack.c.l.b16 %v3098
    %v3585 = vunpack.c.l.b16 %v3112
    %v3586 = vunpack.c.l.b16 %v3126
    %v3587 = vunpack.c.l.b16 %v3140
    %v3588 = vunpack.c.l.b16 %v3154
    %v3589 = vunpack.c.l.b16 %v3168
    %v3590 = vunpack.c.l.b16 %v3182
    %v3591 = vunpack.c.l.b16 %v3196
    %v3592 = vunpack.c.l.b16 %v3210
    %v3593 = vunpack.c.l.b16 %v3224
    %v3594 = vunpack.c.l.b16 %v3238
    %v3595 = vunpack.c.l.b16 %v3252
    %v3596 = vunpack.c.l.b16 %v3266
    %v3597 = vunpack.c.l.b16 %v3280
    %v3598 = vunpack.c.l.b16 %v3294
    %v3599 = vpack.c.b16 %v3584, %v3583
    %v3600 = vpack.c.b16 %v3586, %v3585
    %v3601 = vpack.c.b16 %v3588, %v3587
    %v3602 = vpack.c.b16 %v3590, %v3589
    %v3603 = vpack.c.b16 %v3592, %v3591
    %v3604 = vpack.c.b16 %v3594, %v3593
    %v3605 = vpack.c.b16 %v3596, %v3595
    %v3606 = vpack.c.b16 %v3598, %v3597
    %v3615 = vunpack.c.l.b16 %v3324
    %v3616 = vunpack.c.l.b16 %v3338
    %v3617 = vunpack.c.l.b16 %v3352
    %v3618 = vunpack.c.l.b16 %v3366
    %v3619 = vunpack.c.l.b16 %v3380
    %v3620 = vunpack.c.l.b16 %v3394
    %v3621 = vunpack.c.l.b16 %v3408
    %v3622 = vunpack.c.l.b16 %v3422
    %v3623 = vunpack.c.l.b16 %v3436
    %v3624 = vunpack.c.l.b16 %v3450
    %v3625 = vunpack.c.l.b16 %v3464
    %v3626 = vunpack.c.l.b16 %v3478
    %v3627 = vunpack.c.l.b16 %v3492
    %v3628 = vunpack.c.l.b16 %v3506
    %v3629 = vunpack.c.l.b16 %v3520
    %v3630 = vunpack.c.l.b16 %v3534
    %v3631 = vpack.c.b16 %v3616, %v3615
    %v3632 = vpack.c.b16 %v3618, %v3617
    %v3633 = vpack.c.b16 %v3620, %v3619
    %v3634 = vpack.c.b16 %v3622, %v3621
    %v3635 = vpack.c.b16 %v3624, %v3623
    %v3636 = vpack.c.b16 %v3626, %v3625
    %v3637 = vpack.c.b16 %v3628, %v3627
    %v3638 = vpack.c.b16 %v3630, %v3629
    %s3647 = scalar_lea.vmem [#allocation10], 192
    %v3648 = vld [vmem:[%s3647] sm:$0xf]
    %v3649 = vld [vmem:[%s3647 + $0x4] sm:$0xf]
    %v3650 = vld [vmem:[%s3647 + $0x8] sm:$0xf]
    %v3651 = vld [vmem:[%s3647 + $0xc] sm:$0xf]
    %v3652 = vld [vmem:[%s3647 + $0x10] sm:$0xf]
    %v3653 = vld [vmem:[%s3647 + $0x14] sm:$0xf]
    %v3654 = vld [vmem:[%s3647 + $0x18] sm:$0xf]
    %v3655 = vld [vmem:[%s3647 + $0x1c] sm:$0xf]
    %v3656 = vld [vmem:[%s3647 + $0x20] sm:$0xf]
    %v3657 = vld [vmem:[%s3647 + $0x24] sm:$0xf]
    %v3658 = vld [vmem:[%s3647 + $0x28] sm:$0xf]
    %v3659 = vld [vmem:[%s3647 + $0x2c] sm:$0xf]
    %v3660 = vld [vmem:[%s3647 + $0x30] sm:$0xf]
    %v3661 = vld [vmem:[%s3647 + $0x34] sm:$0xf]
    %v3662 = vld [vmem:[%s3647 + $0x38] sm:$0xf]
    %v3663 = vld [vmem:[%s3647 + $0x3c] sm:$0xf]
    %v3664 = vld [vmem:[%s3647 + $0x40] sm:$0xf]
    %v3665 = vld [vmem:[%s3647 + $0x44] sm:$0xf]
    %v3666 = vld [vmem:[%s3647 + $0x48] sm:$0xf]
    %v3667 = vld [vmem:[%s3647 + $0x4c] sm:$0xf]
    %v3668 = vld [vmem:[%s3647 + $0x50] sm:$0xf]
    %v3669 = vld [vmem:[%s3647 + $0x54] sm:$0xf]
    %v3670 = vld [vmem:[%s3647 + $0x58] sm:$0xf]
    %v3671 = vld [vmem:[%s3647 + $0x5c] sm:$0xf]
    %v3672 = vld [vmem:[%s3647 + $0x60] sm:$0xf]
    %v3673 = vld [vmem:[%s3647 + $0x64] sm:$0xf]
    %v3674 = vld [vmem:[%s3647 + $0x68] sm:$0xf]
    %v3675 = vld [vmem:[%s3647 + $0x6c] sm:$0xf]
    %v3676 = vld [vmem:[%s3647 + $0x70] sm:$0xf]
    %v3677 = vld [vmem:[%s3647 + $0x74] sm:$0xf]
    %v3678 = vld [vmem:[%s3647 + $0x78] sm:$0xf]
    %v3679 = vld [vmem:[%s3647 + $0x7c] sm:$0xf]
    %v3680 = vld [vmem:[%s3647 + $0x80] sm:$0xf]
    %v3681 = vld [vmem:[%s3647 + $0x84] sm:$0xf]
    %v3682 = vld [vmem:[%s3647 + $0x88] sm:$0xf]
    %v3683 = vld [vmem:[%s3647 + $0x8c] sm:$0xf]
    %v3684 = vld [vmem:[%s3647 + $0x90] sm:$0xf]
    %v3685 = vld [vmem:[%s3647 + $0x94] sm:$0xf]
    %v3686 = vld [vmem:[%s3647 + $0x98] sm:$0xf]
    %v3687 = vld [vmem:[%s3647 + $0x9c] sm:$0xf]
    %v3688 = vld [vmem:[%s3647 + $0xa0] sm:$0xf]
    %v3689 = vld [vmem:[%s3647 + $0xa4] sm:$0xf]
    %v3690 = vld [vmem:[%s3647 + $0xa8] sm:$0xf]
    %v3691 = vld [vmem:[%s3647 + $0xac] sm:$0xf]
    %v3692 = vld [vmem:[%s3647 + $0xb0] sm:$0xf]
    %v3693 = vld [vmem:[%s3647 + $0xb4] sm:$0xf]
    %v3694 = vld [vmem:[%s3647 + $0xb8] sm:$0xf]
    %v3695 = vld [vmem:[%s3647 + $0xbc] sm:$0xf]
    %v3744 = vunpack.c.l.b16 %v3648
    %v3745 = vunpack.c.l.b16 %v3649
    %v3746 = vunpack.c.l.b16 %v3650
    %v3747 = vunpack.c.l.b16 %v3651
    %v3748 = vunpack.c.l.b16 %v3652
    %v3749 = vunpack.c.l.b16 %v3653
    %v3750 = vunpack.c.l.b16 %v3654
    %v3751 = vunpack.c.l.b16 %v3655
    %v3752 = vunpack.c.l.b16 %v3656
    %v3753 = vunpack.c.l.b16 %v3657
    %v3754 = vunpack.c.l.b16 %v3658
    %v3755 = vunpack.c.l.b16 %v3659
    %v3756 = vunpack.c.l.b16 %v3660
    %v3757 = vunpack.c.l.b16 %v3661
    %v3758 = vunpack.c.l.b16 %v3662
    %v3759 = vunpack.c.l.b16 %v3663
    %v3760 = vunpack.c.l.b16 %v3664
    %v3761 = vunpack.c.l.b16 %v3665
    %v3762 = vunpack.c.l.b16 %v3666
    %v3763 = vunpack.c.l.b16 %v3667
    %v3764 = vunpack.c.l.b16 %v3668
    %v3765 = vunpack.c.l.b16 %v3669
    %v3766 = vunpack.c.l.b16 %v3670
    %v3767 = vunpack.c.l.b16 %v3671
    %v3768 = vunpack.c.l.b16 %v3672
    %v3769 = vunpack.c.l.b16 %v3673
    %v3770 = vunpack.c.l.b16 %v3674
    %v3771 = vunpack.c.l.b16 %v3675
    %v3772 = vunpack.c.l.b16 %v3676
    %v3773 = vunpack.c.l.b16 %v3677
    %v3774 = vunpack.c.l.b16 %v3678
    %v3775 = vunpack.c.l.b16 %v3679
    %v3776 = vunpack.c.l.b16 %v3680
    %v3777 = vunpack.c.l.b16 %v3681
    %v3778 = vunpack.c.l.b16 %v3682
    %v3779 = vunpack.c.l.b16 %v3683
    %v3780 = vunpack.c.l.b16 %v3684
    %v3781 = vunpack.c.l.b16 %v3685
    %v3782 = vunpack.c.l.b16 %v3686
    %v3783 = vunpack.c.l.b16 %v3687
    %v3784 = vunpack.c.l.b16 %v3688
    %v3785 = vunpack.c.l.b16 %v3689
    %v3786 = vunpack.c.l.b16 %v3690
    %v3787 = vunpack.c.l.b16 %v3691
    %v3788 = vunpack.c.l.b16 %v3692
    %v3789 = vunpack.c.l.b16 %v3693
    %v3790 = vunpack.c.l.b16 %v3694
    %v3791 = vunpack.c.l.b16 %v3695
    %v3792 = vpack.c.b16 %v3745, %v3744
    %v3793 = vpack.c.b16 %v3747, %v3746
    %v3794 = vpack.c.b16 %v3749, %v3748
    %v3795 = vpack.c.b16 %v3751, %v3750
    %v3796 = vpack.c.b16 %v3753, %v3752
    %v3797 = vpack.c.b16 %v3755, %v3754
    %v3798 = vpack.c.b16 %v3757, %v3756
    %v3799 = vpack.c.b16 %v3759, %v3758
    %v3800 = vpack.c.b16 %v3761, %v3760
    %v3801 = vpack.c.b16 %v3763, %v3762
    %v3802 = vpack.c.b16 %v3765, %v3764
    %v3803 = vpack.c.b16 %v3767, %v3766
    %v3804 = vpack.c.b16 %v3769, %v3768
    %v3805 = vpack.c.b16 %v3771, %v3770
    %v3806 = vpack.c.b16 %v3773, %v3772
    %v3807 = vpack.c.b16 %v3775, %v3774
    %v3808 = vpack.c.b16 %v3777, %v3776
    %v3809 = vpack.c.b16 %v3779, %v3778
    %v3810 = vpack.c.b16 %v3781, %v3780
    %v3811 = vpack.c.b16 %v3783, %v3782
    %v3812 = vpack.c.b16 %v3785, %v3784
    %v3813 = vpack.c.b16 %v3787, %v3786
    %v3814 = vpack.c.b16 %v3789, %v3788
    %v3815 = vpack.c.b16 %v3791, %v3790
    %3840 = vmatprep.subr.bf16.mxu0 0
    %3841 = vmatpush1.bf16.msra.mxu0 %v3792
    %3842 = vmatprep.subr.bf16.mxu0 0
    %3843 = vmatpush1.bf16.msra.mxu0 %v3793
    %3844 = vmatprep.subr.bf16.mxu0 0
    %3845 = vmatpush1.bf16.msra.mxu0 %v3794
    %3846 = vmatprep.subr.bf16.mxu0 0
    %3847 = vmatpush1.bf16.msra.mxu0 %v3795
    %3848 = vmatprep.subr.bf16.mxu0 0
    %3849 = vmatpush1.bf16.msra.mxu0 %v3796
    %3850 = vmatprep.subr.bf16.mxu0 0
    %3851 = vmatpush1.bf16.msra.mxu0 %v3797
    %3852 = vmatprep.subr.bf16.mxu0 0
    %3853 = vmatpush1.bf16.msra.mxu0 %v3798
    %3854 = vmatprep.subr.bf16.mxu0 0
    %3855 = vmatpush1.bf16.msra.mxu0 %v3799
    %3856 = vmatprep.subr.bf16.mxu0 0
    %3857 = vmatpush1.bf16.msra.mxu0 %v3800
    %3858 = vmatprep.subr.bf16.mxu0 0
    %3859 = vmatpush1.bf16.msra.mxu0 %v3801
    %3860 = vmatprep.subr.bf16.mxu0 0
    %3861 = vmatpush1.bf16.msra.mxu0 %v3802
    %3862 = vmatprep.subr.bf16.mxu0 0
    %3863 = vmatpush1.bf16.msra.mxu0 %v3803
    %3864 = vmatprep.subr.bf16.mxu0 0
    %3865 = vmatpush1.bf16.msra.mxu0 %v3804
    %3866 = vmatprep.subr.bf16.mxu0 0
    %3867 = vmatpush1.bf16.msra.mxu0 %v3805
    %3868 = vmatprep.subr.bf16.mxu0 0
    %3869 = vmatpush1.bf16.msra.mxu0 %v3806
    %3870 = vmatprep.subr.bf16.mxu0 0
    %3871 = vmatpush1.bf16.msra.mxu0 %v3807
    %3872 = vmatprep.mubr.bf16.mxu0 %v3599
    %3873 = vmatmul.mubr.bf16.gmra.mrb[0].mxu0 %v3567
    %v3874 = vpop.f32.mrb[0].mxu0
    %v3875 = vadd.f32 0.0, %v3874
    %v3876 = vpop.f32.mrb[0].mxu0
    %v3877 = vpop.f32.mrb[0].mxu0
    %v3878 = vadd.f32 0.0, %v3877
    %v3879 = vpop.f32.mrb[0].mxu0
    %3880 = vmatprep.mubr.bf16.mxu0 %v3600
    %3881 = vmatmul.mubr.bf16.gmra.mrb[0].mxu0 %v3568
    %v3882 = vpop.f32.mrb[0].mxu0
    %v3883 = vadd.f32 0.0, %v3882
    %v3884 = vpop.f32.mrb[0].mxu0
    %v3885 = vpop.f32.mrb[0].mxu0
    %v3886 = vadd.f32 0.0, %v3885
    %v3887 = vpop.f32.mrb[0].mxu0
    %3888 = vmatprep.mubr.bf16.mxu0 %v3601
    %3889 = vmatmul.mubr.bf16.gmra.mrb[0].mxu0 %v3569
    %v3890 = vpop.f32.mrb[0].mxu0
    %v3891 = vadd.f32 0.0, %v3890
    %v3892 = vpop.f32.mrb[0].mxu0
    %v3893 = vpop.f32.mrb[0].mxu0
    %v3894 = vadd.f32 0.0, %v3893
    %v3895 = vpop.f32.mrb[0].mxu0
    %3896 = vmatprep.mubr.bf16.mxu0 %v3602
    %3897 = vmatmul.mubr.bf16.gmra.mrb[0].mxu0 %v3570
    %v3898 = vpop.f32.mrb[0].mxu0
    %v3899 = vadd.f32 0.0, %v3898
    %v3900 = vpop.f32.mrb[0].mxu0
    %v3901 = vpop.f32.mrb[0].mxu0
    %v3902 = vadd.f32 0.0, %v3901
    %v3903 = vpop.f32.mrb[0].mxu0
    %3904 = vmatprep.mubr.bf16.mxu0 %v3603
    %3905 = vmatmul.mubr.bf16.gmra.mrb[0].mxu0 %v3571
    %v3906 = vpop.f32.mrb[0].mxu0
    %v3907 = vadd.f32 0.0, %v3906
    %v3908 = vpop.f32.mrb[0].mxu0
    %v3909 = vpop.f32.mrb[0].mxu0
    %v3910 = vadd.f32 0.0, %v3909
    %v3911 = vpop.f32.mrb[0].mxu0
    %3912 = vmatprep.mubr.bf16.mxu0 %v3604
    %3913 = vmatmul.mubr.bf16.gmra.mrb[0].mxu0 %v3572
    %v3914 = vpop.f32.mrb[0].mxu0
    %v3915 = vadd.f32 0.0, %v3914
    %v3916 = vpop.f32.mrb[0].mxu0
    %v3917 = vpop.f32.mrb[0].mxu0
    %v3918 = vadd.f32 0.0, %v3917
    %v3919 = vpop.f32.mrb[0].mxu0
    %3920 = vmatprep.mubr.bf16.mxu0 %v3605
    %3921 = vmatmul.mubr.bf16.gmra.mrb[0].mxu0 %v3573
    %v3922 = vpop.f32.mrb[0].mxu0
    %v3923 = vadd.f32 0.0, %v3922
    %v3924 = vpop.f32.mrb[0].mxu0
    %v3925 = vpop.f32.mrb[0].mxu0
    %v3926 = vadd.f32 0.0, %v3925
    %v3927 = vpop.f32.mrb[0].mxu0
    %3928 = vmatprep.mubr.bf16.mxu0 %v3606
    %3929 = vmatmul.mubr.bf16.gmra.mrb[0].mxu0 %v3574
    %v3930 = vpop.f32.mrb[0].mxu0
    %v3931 = vadd.f32 0.0, %v3930
    %v3932 = vpop.f32.mrb[0].mxu0
    %v3933 = vpop.f32.mrb[0].mxu0
    %v3934 = vadd.f32 0.0, %v3933
    %v3935 = vpop.f32.mrb[0].mxu0
    %3936 = vdwg.mxu0
    %3937 = vmatprep.subr.bf16.mxu0 0
    %3938 = vmatpush1.bf16.msra.mxu0 %v3808
    %3939 = vmatprep.subr.bf16.mxu0 0
    %3940 = vmatpush1.bf16.msra.mxu0 %v3809
    %3941 = vmatprep.subr.bf16.mxu0 0
    %3942 = vmatpush1.bf16.msra.mxu0 %v3810
    %3943 = vmatprep.subr.bf16.mxu0 0
    %3944 = vmatpush1.bf16.msra.mxu0 %v3811
    %3945 = vmatprep.subr.bf16.mxu0 0
    %3946 = vmatpush1.bf16.msra.mxu0 %v3812
    %3947 = vmatprep.subr.bf16.mxu0 0
    %3948 = vmatpush1.bf16.msra.mxu0 %v3813
    %3949 = vmatprep.subr.bf16.mxu0 0
    %3950 = vmatpush1.bf16.msra.mxu0 %v3814
    %3951 = vmatprep.subr.bf16.mxu0 0
    %3952 = vmatpush1.bf16.msra.mxu0 %v3815
    %3953 = vmatprep.subr.bf16.mxu0 0
    %3954 = vmatpush1.bf16.msra.mxu0 0
    %3955 = vmatprep.subr.bf16.mxu0 0
    %3956 = vmatpush1.bf16.msra.mxu0 0
    %3957 = vmatprep.subr.bf16.mxu0 0
    %3958 = vmatpush1.bf16.msra.mxu0 0
    %3959 = vmatprep.subr.bf16.mxu0 0
    %3960 = vmatpush1.bf16.msra.mxu0 0
    %3961 = vmatprep.subr.bf16.mxu0 0
    %3962 = vmatpush1.bf16.msra.mxu0 0
    %3963 = vmatprep.subr.bf16.mxu0 0
    %3964 = vmatpush1.bf16.msra.mxu0 0
    %3965 = vmatprep.subr.bf16.mxu0 0
    %3966 = vmatpush1.bf16.msra.mxu0 0
    %3967 = vmatprep.subr.bf16.mxu0 0
    %3968 = vmatpush1.bf16.msra.mxu0 0
    %3969 = vmatprep.mubr.bf16.mxu0 0
    %3970 = vmatmul.mubr.bf16.gmra.mrb[0].mxu0 %v3631
    %v3971 = vpop.f32.mrb[0].mxu0
    %v3972 = vadd.f32 %v3875, %v3971
    %v3973 = vpop.f32.mrb[0].mxu0
    %v3974 = vpop.f32.mrb[0].mxu0
    %v3975 = vadd.f32 %v3878, %v3974
    %v3976 = vpop.f32.mrb[0].mxu0
    %3977 = vmatprep.mubr.bf16.mxu0 0
    %3978 = vmatmul.mubr.bf16.gmra.mrb[0].mxu0 %v3632
    %v3979 = vpop.f32.mrb[0].mxu0
    %v3980 = vadd.f32 %v3883, %v3979
    %v3981 = vpop.f32.mrb[0].mxu0
    %v3982 = vpop.f32.mrb[0].mxu0
    %v3983 = vadd.f32 %v3886, %v3982
    %v3984 = vpop.f32.mrb[0].mxu0
    %3985 = vmatprep.mubr.bf16.mxu0 0
    %3986 = vmatmul.mubr.bf16.gmra.mrb[0].mxu0 %v3633
    %v3987 = vpop.f32.mrb[0].mxu0
    %v3988 = vadd.f32 %v3891, %v3987
    %v3989 = vpop.f32.mrb[0].mxu0
    %v3990 = vpop.f32.mrb[0].mxu0
    %v3991 = vadd.f32 %v3894, %v3990
    %v3992 = vpop.f32.mrb[0].mxu0
    %3993 = vmatprep.mubr.bf16.mxu0 0
    %3994 = vmatmul.mubr.bf16.gmra.mrb[0].mxu0 %v3634
    %v3995 = vpop.f32.mrb[0].mxu0
    %v3996 = vadd.f32 %v3899, %v3995
    %v3997 = vpop.f32.mrb[0].mxu0
    %v3998 = vpop.f32.mrb[0].mxu0
    %v3999 = vadd.f32 %v3902, %v3998
    %v4000 = vpop.f32.mrb[0].mxu0
    %4001 = vmatprep.mubr.bf16.mxu0 0
    %4002 = vmatmul.mubr.bf16.gmra.mrb[0].mxu0 %v3635
    %v4003 = vpop.f32.mrb[0].mxu0
    %v4004 = vadd.f32 %v3907, %v4003
    %v4005 = vpop.f32.mrb[0].mxu0
    %v4006 = vpop.f32.mrb[0].mxu0
    %v4007 = vadd.f32 %v3910, %v4006
    %v4008 = vpop.f32.mrb[0].mxu0
    %4009 = vmatprep.mubr.bf16.mxu0 0
    %4010 = vmatmul.mubr.bf16.gmra.mrb[0].mxu0 %v3636
    %v4011 = vpop.f32.mrb[0].mxu0
    %v4012 = vadd.f32 %v3915, %v4011
    %v4013 = vpop.f32.mrb[0].mxu0
    %v4014 = vpop.f32.mrb[0].mxu0
    %v4015 = vadd.f32 %v3918, %v4014
    %v4016 = vpop.f32.mrb[0].mxu0
    %4017 = vmatprep.mubr.bf16.mxu0 0
    %4018 = vmatmul.mubr.bf16.gmra.mrb[0].mxu0 %v3637
    %v4019 = vpop.f32.mrb[0].mxu0
    %v4020 = vadd.f32 %v3923, %v4019
    %v4021 = vpop.f32.mrb[0].mxu0
    %v4022 = vpop.f32.mrb[0].mxu0
    %v4023 = vadd.f32 %v3926, %v4022
    %v4024 = vpop.f32.mrb[0].mxu0
    %4025 = vmatprep.mubr.bf16.mxu0 0
    %4026 = vmatmul.mubr.bf16.gmra.mrb[0].mxu0 %v3638
    %v4027 = vpop.f32.mrb[0].mxu0
    %v4028 = vadd.f32 %v3931, %v4027
    %v4029 = vpop.f32.mrb[0].mxu0
    %v4030 = vpop.f32.mrb[0].mxu0
    %v4031 = vadd.f32 %v3934, %v4030
    %v4032 = vpop.f32.mrb[0].mxu0
    %4033 = vdwg.mxu0
    %v4082 = vunpack.c.l.b16 %v2975
    %v4083 = vunpack.c.l.b16 %v2976
    %v4084 = vunpack.c.l.b16 %v2977
    %v4085 = vunpack.c.l.b16 %v2978
    %v4086 = vunpack.c.l.b16 %v2979
    %v4087 = vunpack.c.l.b16 %v2980
    %v4088 = vunpack.c.l.b16 %v2981
    %v4089 = vunpack.c.l.b16 %v2982
    %v4090 = vunpack.c.l.b16 %v2983
    %v4091 = vunpack.c.l.b16 %v2984
    %v4092 = vunpack.c.l.b16 %v2985
    %v4093 = vunpack.c.l.b16 %v2986
    %v4094 = vunpack.c.l.b16 %v2987
    %v4095 = vunpack.c.l.b16 %v2988
    %v4096 = vunpack.c.l.b16 %v2989
    %v4097 = vunpack.c.l.b16 %v2990
    %v4098 = vunpack.c.l.b16 %v2991
    %v4099 = vunpack.c.l.b16 %v2992
    %v4100 = vunpack.c.l.b16 %v2993
    %v4101 = vunpack.c.l.b16 %v2994
    %v4102 = vunpack.c.l.b16 %v2995
    %v4103 = vunpack.c.l.b16 %v2996
    %v4104 = vunpack.c.l.b16 %v2997
    %v4105 = vunpack.c.l.b16 %v2998
    %v4106 = vunpack.c.l.b16 %v2999
    %v4107 = vunpack.c.l.b16 %v3000
    %v4108 = vunpack.c.l.b16 %v3001
    %v4109 = vunpack.c.l.b16 %v3002
    %v4110 = vunpack.c.l.b16 %v3003
    %v4111 = vunpack.c.l.b16 %v3004
    %v4112 = vunpack.c.l.b16 %v3005
    %v4113 = vunpack.c.l.b16 %v3006
    %v4114 = vunpack.c.l.b16 %v3007
    %v4115 = vunpack.c.l.b16 %v3008
    %v4116 = vunpack.c.l.b16 %v3009
    %v4117 = vunpack.c.l.b16 %v3010
    %v4118 = vunpack.c.l.b16 %v3011
    %v4119 = vunpack.c.l.b16 %v3012
    %v4120 = vunpack.c.l.b16 %v3013
    %v4121 = vunpack.c.l.b16 %v3014
    %v4122 = vunpack.c.l.b16 %v3015
    %v4123 = vunpack.c.l.b16 %v3016
    %v4124 = vunpack.c.l.b16 %v3017
    %v4125 = vunpack.c.l.b16 %v3018
    %v4126 = vunpack.c.l.b16 %v3019
    %v4127 = vunpack.c.l.b16 %v3020
    %v4128 = vunpack.c.l.b16 %v3021
    %v4129 = vunpack.c.l.b16 %v3022
    %v4130 = vpack.c.b16 %v4083, %v4082
    %v4131 = vpack.c.b16 %v4085, %v4084
    %v4132 = vpack.c.b16 %v4087, %v4086
    %v4133 = vpack.c.b16 %v4089, %v4088
    %v4134 = vpack.c.b16 %v4091, %v4090
    %v4135 = vpack.c.b16 %v4093, %v4092
    %v4136 = vpack.c.b16 %v4095, %v4094
    %v4137 = vpack.c.b16 %v4097, %v4096
    %v4138 = vpack.c.b16 %v4099, %v4098
    %v4139 = vpack.c.b16 %v4101, %v4100
    %v4140 = vpack.c.b16 %v4103, %v4102
    %v4141 = vpack.c.b16 %v4105, %v4104
    %v4142 = vpack.c.b16 %v4107, %v4106
    %v4143 = vpack.c.b16 %v4109, %v4108
    %v4144 = vpack.c.b16 %v4111, %v4110
    %v4145 = vpack.c.b16 %v4113, %v4112
    %v4146 = vpack.c.b16 %v4115, %v4114
    %v4147 = vpack.c.b16 %v4117, %v4116
    %v4148 = vpack.c.b16 %v4119, %v4118
    %v4149 = vpack.c.b16 %v4121, %v4120
    %v4150 = vpack.c.b16 %v4123, %v4122
    %v4151 = vpack.c.b16 %v4125, %v4124
    %v4152 = vpack.c.b16 %v4127, %v4126
    %v4153 = vpack.c.b16 %v4129, %v4128
    %4178 = vmatprep.subr.bf16.mxu0 0
    %4179 = vmatpush1.bf16.msra.mxu0 %v4130
    %4180 = vmatprep.subr.bf16.mxu0 0
    %4181 = vmatpush1.bf16.msra.mxu0 %v4131
    %4182 = vmatprep.subr.bf16.mxu0 0
    %4183 = vmatpush1.bf16.msra.mxu0 %v4132
    %4184 = vmatprep.subr.bf16.mxu0 0
    %4185 = vmatpush1.bf16.msra.mxu0 %v4133
    %4186 = vmatprep.subr.bf16.mxu0 0
    %4187 = vmatpush1.bf16.msra.mxu0 %v4134
    %4188 = vmatprep.subr.bf16.mxu0 0
    %4189 = vmatpush1.bf16.msra.mxu0 %v4135
    %4190 = vmatprep.subr.bf16.mxu0 0
    %4191 = vmatpush1.bf16.msra.mxu0 %v4136
    %4192 = vmatprep.subr.bf16.mxu0 0
    %4193 = vmatpush1.bf16.msra.mxu0 %v4137
    %4194 = vmatprep.subr.bf16.mxu0 0
    %4195 = vmatpush1.bf16.msra.mxu0 %v4138
    %4196 = vmatprep.subr.bf16.mxu0 0
    %4197 = vmatpush1.bf16.msra.mxu0 %v4139
    %4198 = vmatprep.subr.bf16.mxu0 0
    %4199 = vmatpush1.bf16.msra.mxu0 %v4140
    %4200 = vmatprep.subr.bf16.mxu0 0
    %4201 = vmatpush1.bf16.msra.mxu0 %v4141
    %4202 = vmatprep.subr.bf16.mxu0 0
    %4203 = vmatpush1.bf16.msra.mxu0 %v4142
    %4204 = vmatprep.subr.bf16.mxu0 0
    %4205 = vmatpush1.bf16.msra.mxu0 %v4143
    %4206 = vmatprep.subr.bf16.mxu0 0
    %4207 = vmatpush1.bf16.msra.mxu0 %v4144
    %4208 = vmatprep.subr.bf16.mxu0 0
    %4209 = vmatpush1.bf16.msra.mxu0 %v4145
    %4210 = vmatprep.mubr.bf16.mxu0 %v2927
    %4211 = vmatmul.mubr.bf16.gmra.mrb[0].mxu0 %v2895
    %v4212 = vpop.f32.mrb[0].mxu0
    %v4213 = vadd.f32 %v3972, %v4212
    %v4214 = vpop.f32.mrb[0].mxu0
    %v4215 = vpop.f32.mrb[0].mxu0
    %v4216 = vadd.f32 %v3975, %v4215
    %v4217 = vpop.f32.mrb[0].mxu0
    %4218 = vmatprep.mubr.bf16.mxu0 %v2928
    %4219 = vmatmul.mubr.bf16.gmra.mrb[0].mxu0 %v2896
    %v4220 = vpop.f32.mrb[0].mxu0
    %v4221 = vadd.f32 %v3980, %v4220
    %v4222 = vpop.f32.mrb[0].mxu0
    %v4223 = vpop.f32.mrb[0].mxu0
    %v4224 = vadd.f32 %v3983, %v4223
    %v4225 = vpop.f32.mrb[0].mxu0
    %4226 = vmatprep.mubr.bf16.mxu0 %v2929
    %4227 = vmatmul.mubr.bf16.gmra.mrb[0].mxu0 %v2897
    %v4228 = vpop.f32.mrb[0].mxu0
    %v4229 = vadd.f32 %v3988, %v4228
    %v4230 = vpop.f32.mrb[0].mxu0
    %v4231 = vpop.f32.mrb[0].mxu0
    %v4232 = vadd.f32 %v3991, %v4231
    %v4233 = vpop.f32.mrb[0].mxu0
    %4234 = vmatprep.mubr.bf16.mxu0 %v2930
    %4235 = vmatmul.mubr.bf16.gmra.mrb[0].mxu0 %v2898
    %v4236 = vpop.f32.mrb[0].mxu0
    %v4237 = vadd.f32 %v3996, %v4236
    %v4238 = vpop.f32.mrb[0].mxu0
    %v4239 = vpop.f32.mrb[0].mxu0
    %v4240 = vadd.f32 %v3999, %v4239
    %v4241 = vpop.f32.mrb[0].mxu0
    %4242 = vmatprep.mubr.bf16.mxu0 %v2931
    %4243 = vmatmul.mubr.bf16.gmra.mrb[0].mxu0 %v2899
    %v4244 = vpop.f32.mrb[0].mxu0
    %v4245 = vadd.f32 %v4004, %v4244
    %v4246 = vpop.f32.mrb[0].mxu0
    %v4247 = vpop.f32.mrb[0].mxu0
    %v4248 = vadd.f32 %v4007, %v4247
    %v4249 = vpop.f32.mrb[0].mxu0
    %4250 = vmatprep.mubr.bf16.mxu0 %v2932
    %4251 = vmatmul.mubr.bf16.gmra.mrb[0].mxu0 %v2900
    %v4252 = vpop.f32.mrb[0].mxu0
    %v4253 = vadd.f32 %v4012, %v4252
    %v4254 = vpop.f32.mrb[0].mxu0
    %v4255 = vpop.f32.mrb[0].mxu0
    %v4256 = vadd.f32 %v4015, %v4255
    %v4257 = vpop.f32.mrb[0].mxu0
    %4258 = vmatprep.mubr.bf16.mxu0 %v2933
    %4259 = vmatmul.mubr.bf16.gmra.mrb[0].mxu0 %v2901
    %v4260 = vpop.f32.mrb[0].mxu0
    %v4261 = vadd.f32 %v4020, %v4260
    %v4262 = vpop.f32.mrb[0].mxu0
    %v4263 = vpop.f32.mrb[0].mxu0
    %v4264 = vadd.f32 %v4023, %v4263
    %v4265 = vpop.f32.mrb[0].mxu0
    %4266 = vmatprep.mubr.bf16.mxu0 %v2934
    %4267 = vmatmul.mubr.bf16.gmra.mrb[0].mxu0 %v2902
    %v4268 = vpop.f32.mrb[0].mxu0
    %v4269 = vadd.f32 %v4028, %v4268
    %v4270 = vpop.f32.mrb[0].mxu0
    %v4271 = vpop.f32.mrb[0].mxu0
    %v4272 = vadd.f32 %v4031, %v4271
    %v4273 = vpop.f32.mrb[0].mxu0
    %4274 = vdwg.mxu0
    %4275 = vmatprep.subr.bf16.mxu0 0
    %4276 = vmatpush1.bf16.msra.mxu0 %v4146
    %4277 = vmatprep.subr.bf16.mxu0 0
    %4278 = vmatpush1.bf16.msra.mxu0 %v4147
    %4279 = vmatprep.subr.bf16.mxu0 0
    %4280 = vmatpush1.bf16.msra.mxu0 %v4148
    %4281 = vmatprep.subr.bf16.mxu0 0
    %4282 = vmatpush1.bf16.msra.mxu0 %v4149
    %4283 = vmatprep.subr.bf16.mxu0 0
    %4284 = vmatpush1.bf16.msra.mxu0 %v4150
    %4285 = vmatprep.subr.bf16.mxu0 0
    %4286 = vmatpush1.bf16.msra.mxu0 %v4151
    %4287 = vmatprep.subr.bf16.mxu0 0
    %4288 = vmatpush1.bf16.msra.mxu0 %v4152
    %4289 = vmatprep.subr.bf16.mxu0 0
    %4290 = vmatpush1.bf16.msra.mxu0 %v4153
    %4291 = vmatprep.subr.bf16.mxu0 0
    %4292 = vmatpush1.bf16.msra.mxu0 0
    %4293 = vmatprep.subr.bf16.mxu0 0
    %4294 = vmatpush1.bf16.msra.mxu0 0
    %4295 = vmatprep.subr.bf16.mxu0 0
    %4296 = vmatpush1.bf16.msra.mxu0 0
    %4297 = vmatprep.subr.bf16.mxu0 0
    %4298 = vmatpush1.bf16.msra.mxu0 0
    %4299 = vmatprep.subr.bf16.mxu0 0
    %4300 = vmatpush1.bf16.msra.mxu0 0
    %4301 = vmatprep.subr.bf16.mxu0 0
    %4302 = vmatpush1.bf16.msra.mxu0 0
    %4303 = vmatprep.subr.bf16.mxu0 0
    %4304 = vmatpush1.bf16.msra.mxu0 0
    %4305 = vmatprep.subr.bf16.mxu0 0
    %4306 = vmatpush1.bf16.msra.mxu0 0
    %4307 = vmatprep.mubr.bf16.mxu0 0
    %4308 = vmatmul.mubr.bf16.gmra.mrb[0].mxu0 %v2959
    %v4309 = vpop.f32.mrb[0].mxu0
    %v4310 = vadd.f32 %v4213, %v4309
    %v4311 = vpop.f32.mrb[0].mxu0
    %v4312 = vpop.f32.mrb[0].mxu0
    %v4313 = vadd.f32 %v4216, %v4312
    %v4314 = vpop.f32.mrb[0].mxu0
    %4315 = vmatprep.mubr.bf16.mxu0 0
    %4316 = vmatmul.mubr.bf16.gmra.mrb[0].mxu0 %v2960
    %v4317 = vpop.f32.mrb[0].mxu0
    %v4318 = vadd.f32 %v4221, %v4317
    %v4319 = vpop.f32.mrb[0].mxu0
    %v4320 = vpop.f32.mrb[0].mxu0
    %v4321 = vadd.f32 %v4224, %v4320
    %v4322 = vpop.f32.mrb[0].mxu0
    %4323 = vmatprep.mubr.bf16.mxu0 0
    %4324 = vmatmul.mubr.bf16.gmra.mrb[0].mxu0 %v2961
    %v4325 = vpop.f32.mrb[0].mxu0
    %v4326 = vadd.f32 %v4229, %v4325
    %v4327 = vpop.f32.mrb[0].mxu0
    %v4328 = vpop.f32.mrb[0].mxu0
    %v4329 = vadd.f32 %v4232, %v4328
    %v4330 = vpop.f32.mrb[0].mxu0
    %4331 = vmatprep.mubr.bf16.mxu0 0
    %4332 = vmatmul.mubr.bf16.gmra.mrb[0].mxu0 %v2962
    %v4333 = vpop.f32.mrb[0].mxu0
    %v4334 = vadd.f32 %v4237, %v4333
    %v4335 = vpop.f32.mrb[0].mxu0
    %v4336 = vpop.f32.mrb[0].mxu0
    %v4337 = vadd.f32 %v4240, %v4336
    %v4338 = vpop.f32.mrb[0].mxu0
    %4339 = vmatprep.mubr.bf16.mxu0 0
    %4340 = vmatmul.mubr.bf16.gmra.mrb[0].mxu0 %v2963
    %v4341 = vpop.f32.mrb[0].mxu0
    %v4342 = vadd.f32 %v4245, %v4341
    %v4343 = vpop.f32.mrb[0].mxu0
    %v4344 = vpop.f32.mrb[0].mxu0
    %v4345 = vadd.f32 %v4248, %v4344
    %v4346 = vpop.f32.mrb[0].mxu0
    %4347 = vmatprep.mubr.bf16.mxu0 0
    %4348 = vmatmul.mubr.bf16.gmra.mrb[0].mxu0 %v2964
    %v4349 = vpop.f32.mrb[0].mxu0
    %v4350 = vadd.f32 %v4253, %v4349
    %v4351 = vpop.f32.mrb[0].mxu0
    %v4352 = vpop.f32.mrb[0].mxu0
    %v4353 = vadd.f32 %v4256, %v4352
    %v4354 = vpop.f32.mrb[0].mxu0
    %4355 = vmatprep.mubr.bf16.mxu0 0
    %4356 = vmatmul.mubr.bf16.gmra.mrb[0].mxu0 %v2965
    %v4357 = vpop.f32.mrb[0].mxu0
    %v4358 = vadd.f32 %v4261, %v4357
    %v4359 = vpop.f32.mrb[0].mxu0
    %v4360 = vpop.f32.mrb[0].mxu0
    %v4361 = vadd.f32 %v4264, %v4360
    %v4362 = vpop.f32.mrb[0].mxu0
    %4363 = vmatprep.mubr.bf16.mxu0 0
    %4364 = vmatmul.mubr.bf16.gmra.mrb[0].mxu0 %v2966
    %v4365 = vpop.f32.mrb[0].mxu0
    %v4366 = vadd.f32 %v4269, %v4365
    %v4367 = vpop.f32.mrb[0].mxu0
    %v4368 = vpop.f32.mrb[0].mxu0
    %v4369 = vadd.f32 %v4272, %v4368
    %v4370 = vpop.f32.mrb[0].mxu0
    %4371 = vdwg.mxu0
    %v4372 = vld [vmem:[%s2186] sm:$0xf]
    %v4373 = vld [vmem:[%s2186 + $0x8] sm:$0xf]
    %v4374 = vld [vmem:[%s2186 + $0x10] sm:$0xf]
    %v4375 = vld [vmem:[%s2186 + $0x18] sm:$0xf]
    %v4376 = vld [vmem:[%s2186 + $0x20] sm:$0xf]
    %v4377 = vld [vmem:[%s2186 + $0x28] sm:$0xf]
    %v4378 = vld [vmem:[%s2186 + $0x30] sm:$0xf]
    %v4379 = vld [vmem:[%s2186 + $0x38] sm:$0xf]
    %v4380 = vld [vmem:[%s2186 + $0x48] sm:$0xf]
    %v4381 = vld [vmem:[%s2186 + $0x50] sm:$0xf]
    %v4382 = vld [vmem:[%s2186 + $0x58] sm:$0xf]
    %v4383 = vld [vmem:[%s2186 + $0x60] sm:$0xf]
    %v4384 = vld [vmem:[%s2186 + $0x68] sm:$0xf]
    %v4385 = vld [vmem:[%s2186 + $0x70] sm:$0xf]
    %v4386 = vld [vmem:[%s2186 + $0x78] sm:$0xf]
    %v4387 = vld [vmem:[%s2186 + $0x80] sm:$0xf]
    %v4388 = vld [vmem:[%s1867] sm:$0xf]
    %v4389 = vld [vmem:[%s1867 + $0x4] sm:$0x1]
    %v4390 = vld [vmem:[%s1867 + $0x8] sm:$0xf]
    %v4391 = vld [vmem:[%s1867 + $0xc] sm:$0x1]
    %v4392 = vld [vmem:[%s1867 + $0x10] sm:$0xf]
    %v4393 = vld [vmem:[%s1867 + $0x14] sm:$0x1]
    %v4394 = vld [vmem:[%s1867 + $0x18] sm:$0xf]
    %v4395 = vld [vmem:[%s1867 + $0x1c] sm:$0x1]
    %v4396 = vld [vmem:[%s1867 + $0x20] sm:$0xf]
    %v4397 = vld [vmem:[%s1867 + $0x24] sm:$0x1]
    %v4398 = vld [vmem:[%s1867 + $0x28] sm:$0xf]
    %v4399 = vld [vmem:[%s1867 + $0x2c] sm:$0x1]
    %v4400 = vld [vmem:[%s1867 + $0x30] sm:$0xf]
    %v4401 = vld [vmem:[%s1867 + $0x34] sm:$0x1]
    %v4402 = vld [vmem:[%s1867 + $0x38] sm:$0xf]
    %v4403 = vld [vmem:[%s1867 + $0x3c] sm:$0x1]
    %v4404 = vld [vmem:[%s1867 + $0x48] sm:$0xf]
    %v4405 = vld [vmem:[%s1867 + $0x4c] sm:$0x1]
    %v4406 = vld [vmem:[%s1867 + $0x50] sm:$0xf]
    %v4407 = vld [vmem:[%s1867 + $0x54] sm:$0x1]
    %v4408 = vld [vmem:[%s1867 + $0x58] sm:$0xf]
    %v4409 = vld [vmem:[%s1867 + $0x5c] sm:$0x1]
    %v4410 = vld [vmem:[%s1867 + $0x60] sm:$0xf]
    %v4411 = vld [vmem:[%s1867 + $0x64] sm:$0x1]
    %v4412 = vld [vmem:[%s1867 + $0x68] sm:$0xf]
    %v4413 = vld [vmem:[%s1867 + $0x6c] sm:$0x1]
    %v4414 = vld [vmem:[%s1867 + $0x70] sm:$0xf]
    %v4415 = vld [vmem:[%s1867 + $0x74] sm:$0x1]
    %v4416 = vld [vmem:[%s1867 + $0x78] sm:$0xf]
    %v4417 = vld [vmem:[%s1867 + $0x7c] sm:$0x1]
    %v4418 = vld [vmem:[%s1867 + $0x80] sm:$0xf]
    %v4419 = vld [vmem:[%s1867 + $0x84] sm:$0x1]
    %v4421 = vshrl.u32 %v4388, 16
    %v4423 = vrot.slane %v4421, 4
    %v4424 = vshll.u32 %v4388, 16
    %v4426 = vrot.slane %v4424, 5
    %v4427 = vor.u32 %v4423, %v4426
    %v4428 = vrot.slane %v4427, 4
    %v4430 = vshll.u32 %v4389, 16
    %v4432 = vrot.slane %v4430, 5
    %v4433 = vsel %vm2398, %v4428, %v4432
    %v4435 = vshrl.u32 %v4390, 16
    %v4437 = vrot.slane %v4435, 4
    %v4438 = vshll.u32 %v4390, 16
    %v4440 = vrot.slane %v4438, 5
    %v4441 = vor.u32 %v4437, %v4440
    %v4442 = vrot.slane %v4441, 4
    %v4444 = vshll.u32 %v4391, 16
    %v4446 = vrot.slane %v4444, 5
    %v4447 = vsel %vm2398, %v4442, %v4446
    %v4449 = vshrl.u32 %v4392, 16
    %v4451 = vrot.slane %v4449, 4
    %v4452 = vshll.u32 %v4392, 16
    %v4454 = vrot.slane %v4452, 5
    %v4455 = vor.u32 %v4451, %v4454
    %v4456 = vrot.slane %v4455, 4
    %v4458 = vshll.u32 %v4393, 16
    %v4460 = vrot.slane %v4458, 5
    %v4461 = vsel %vm2398, %v4456, %v4460
    %v4463 = vshrl.u32 %v4394, 16
    %v4465 = vrot.slane %v4463, 4
    %v4466 = vshll.u32 %v4394, 16
    %v4468 = vrot.slane %v4466, 5
    %v4469 = vor.u32 %v4465, %v4468
    %v4470 = vrot.slane %v4469, 4
    %v4472 = vshll.u32 %v4395, 16
    %v4474 = vrot.slane %v4472, 5
    %v4475 = vsel %vm2398, %v4470, %v4474
    %v4477 = vshrl.u32 %v4396, 16
    %v4479 = vrot.slane %v4477, 4
    %v4480 = vshll.u32 %v4396, 16
    %v4482 = vrot.slane %v4480, 5
    %v4483 = vor.u32 %v4479, %v4482
    %v4484 = vrot.slane %v4483, 4
    %v4486 = vshll.u32 %v4397, 16
    %v4488 = vrot.slane %v4486, 5
    %v4489 = vsel %vm2398, %v4484, %v4488
    %v4491 = vshrl.u32 %v4398, 16
    %v4493 = vrot.slane %v4491, 4
    %v4494 = vshll.u32 %v4398, 16
    %v4496 = vrot.slane %v4494, 5
    %v4497 = vor.u32 %v4493, %v4496
    %v4498 = vrot.slane %v4497, 4
    %v4500 = vshll.u32 %v4399, 16
    %v4502 = vrot.slane %v4500, 5
    %v4503 = vsel %vm2398, %v4498, %v4502
    %v4505 = vshrl.u32 %v4400, 16
    %v4507 = vrot.slane %v4505, 4
    %v4508 = vshll.u32 %v4400, 16
    %v4510 = vrot.slane %v4508, 5
    %v4511 = vor.u32 %v4507, %v4510
    %v4512 = vrot.slane %v4511, 4
    %v4514 = vshll.u32 %v4401, 16
    %v4516 = vrot.slane %v4514, 5
    %v4517 = vsel %vm2398, %v4512, %v4516
    %v4519 = vshrl.u32 %v4402, 16
    %v4521 = vrot.slane %v4519, 4
    %v4522 = vshll.u32 %v4402, 16
    %v4524 = vrot.slane %v4522, 5
    %v4525 = vor.u32 %v4521, %v4524
    %v4526 = vrot.slane %v4525, 4
    %v4528 = vshll.u32 %v4403, 16
    %v4530 = vrot.slane %v4528, 5
    %v4531 = vsel %vm2398, %v4526, %v4530
    %v4533 = vshrl.u32 %v4404, 16
    %v4535 = vrot.slane %v4533, 4
    %v4536 = vshll.u32 %v4404, 16
    %v4538 = vrot.slane %v4536, 5
    %v4539 = vor.u32 %v4535, %v4538
    %v4540 = vrot.slane %v4539, 4
    %v4542 = vshll.u32 %v4405, 16
    %v4544 = vrot.slane %v4542, 5
    %v4545 = vsel %vm2398, %v4540, %v4544
    %v4547 = vshrl.u32 %v4406, 16
    %v4549 = vrot.slane %v4547, 4
    %v4550 = vshll.u32 %v4406, 16
    %v4552 = vrot.slane %v4550, 5
    %v4553 = vor.u32 %v4549, %v4552
    %v4554 = vrot.slane %v4553, 4
    %v4556 = vshll.u32 %v4407, 16
    %v4558 = vrot.slane %v4556, 5
    %v4559 = vsel %vm2398, %v4554, %v4558
    %v4561 = vshrl.u32 %v4408, 16
    %v4563 = vrot.slane %v4561, 4
    %v4564 = vshll.u32 %v4408, 16
    %v4566 = vrot.slane %v4564, 5
    %v4567 = vor.u32 %v4563, %v4566
    %v4568 = vrot.slane %v4567, 4
    %v4570 = vshll.u32 %v4409, 16
    %v4572 = vrot.slane %v4570, 5
    %v4573 = vsel %vm2398, %v4568, %v4572
    %v4575 = vshrl.u32 %v4410, 16
    %v4577 = vrot.slane %v4575, 4
    %v4578 = vshll.u32 %v4410, 16
    %v4580 = vrot.slane %v4578, 5
    %v4581 = vor.u32 %v4577, %v4580
    %v4582 = vrot.slane %v4581, 4
    %v4584 = vshll.u32 %v4411, 16
    %v4586 = vrot.slane %v4584, 5
    %v4587 = vsel %vm2398, %v4582, %v4586
    %v4589 = vshrl.u32 %v4412, 16
    %v4591 = vrot.slane %v4589, 4
    %v4592 = vshll.u32 %v4412, 16
    %v4594 = vrot.slane %v4592, 5
    %v4595 = vor.u32 %v4591, %v4594
    %v4596 = vrot.slane %v4595, 4
    %v4598 = vshll.u32 %v4413, 16
    %v4600 = vrot.slane %v4598, 5
    %v4601 = vsel %vm2398, %v4596, %v4600
    %v4603 = vshrl.u32 %v4414, 16
    %v4605 = vrot.slane %v4603, 4
    %v4606 = vshll.u32 %v4414, 16
    %v4608 = vrot.slane %v4606, 5
    %v4609 = vor.u32 %v4605, %v4608
    %v4610 = vrot.slane %v4609, 4
    %v4612 = vshll.u32 %v4415, 16
    %v4614 = vrot.slane %v4612, 5
    %v4615 = vsel %vm2398, %v4610, %v4614
    %v4617 = vshrl.u32 %v4416, 16
    %v4619 = vrot.slane %v4617, 4
    %v4620 = vshll.u32 %v4416, 16
    %v4622 = vrot.slane %v4620, 5
    %v4623 = vor.u32 %v4619, %v4622
    %v4624 = vrot.slane %v4623, 4
    %v4626 = vshll.u32 %v4417, 16
    %v4628 = vrot.slane %v4626, 5
    %v4629 = vsel %vm2398, %v4624, %v4628
    %v4631 = vshrl.u32 %v4418, 16
    %v4633 = vrot.slane %v4631, 4
    %v4634 = vshll.u32 %v4418, 16
    %v4636 = vrot.slane %v4634, 5
    %v4637 = vor.u32 %v4633, %v4636
    %v4638 = vrot.slane %v4637, 4
    %v4640 = vshll.u32 %v4419, 16
    %v4642 = vrot.slane %v4640, 5
    %v4643 = vsel %vm2398, %v4638, %v4642
    %v4644 = vld [vmem:[%s2186 + $0x4] sm:$0x1]
    %v4645 = vld [vmem:[%s2186 + $0xc] sm:$0x1]
    %v4646 = vld [vmem:[%s2186 + $0x14] sm:$0x1]
    %v4647 = vld [vmem:[%s2186 + $0x1c] sm:$0x1]
    %v4648 = vld [vmem:[%s2186 + $0x24] sm:$0x1]
    %v4649 = vld [vmem:[%s2186 + $0x2c] sm:$0x1]
    %v4650 = vld [vmem:[%s2186 + $0x34] sm:$0x1]
    %v4651 = vld [vmem:[%s2186 + $0x3c] sm:$0x1]
    %v4652 = vld [vmem:[%s2186 + $0x4c] sm:$0x1]
    %v4653 = vld [vmem:[%s2186 + $0x54] sm:$0x1]
    %v4654 = vld [vmem:[%s2186 + $0x5c] sm:$0x1]
    %v4655 = vld [vmem:[%s2186 + $0x64] sm:$0x1]
    %v4656 = vld [vmem:[%s2186 + $0x6c] sm:$0x1]
    %v4657 = vld [vmem:[%s2186 + $0x74] sm:$0x1]
    %v4658 = vld [vmem:[%s2186 + $0x7c] sm:$0x1]
    %v4659 = vld [vmem:[%s2186 + $0x84] sm:$0x1]
    %v4661 = vshrl.u32 %v4372, 16
    %v4663 = vrot.slane %v4661, 4
    %v4664 = vshll.u32 %v4372, 16
    %v4666 = vrot.slane %v4664, 5
    %v4667 = vor.u32 %v4663, %v4666
    %v4668 = vrot.slane %v4667, 4
    %v4670 = vshll.u32 %v4644, 16
    %v4672 = vrot.slane %v4670, 5
    %v4673 = vsel %vm2398, %v4668, %v4672
    %v4675 = vshrl.u32 %v4373, 16
    %v4677 = vrot.slane %v4675, 4
    %v4678 = vshll.u32 %v4373, 16
    %v4680 = vrot.slane %v4678, 5
    %v4681 = vor.u32 %v4677, %v4680
    %v4682 = vrot.slane %v4681, 4
    %v4684 = vshll.u32 %v4645, 16
    %v4686 = vrot.slane %v4684, 5
    %v4687 = vsel %vm2398, %v4682, %v4686
    %v4689 = vshrl.u32 %v4374, 16
    %v4691 = vrot.slane %v4689, 4
    %v4692 = vshll.u32 %v4374, 16
    %v4694 = vrot.slane %v4692, 5
    %v4695 = vor.u32 %v4691, %v4694
    %v4696 = vrot.slane %v4695, 4
    %v4698 = vshll.u32 %v4646, 16
    %v4700 = vrot.slane %v4698, 5
    %v4701 = vsel %vm2398, %v4696, %v4700
    %v4703 = vshrl.u32 %v4375, 16
    %v4705 = vrot.slane %v4703, 4
    %v4706 = vshll.u32 %v4375, 16
    %v4708 = vrot.slane %v4706, 5
    %v4709 = vor.u32 %v4705, %v4708
    %v4710 = vrot.slane %v4709, 4
    %v4712 = vshll.u32 %v4647, 16
    %v4714 = vrot.slane %v4712, 5
    %v4715 = vsel %vm2398, %v4710, %v4714
    %v4717 = vshrl.u32 %v4376, 16
    %v4719 = vrot.slane %v4717, 4
    %v4720 = vshll.u32 %v4376, 16
    %v4722 = vrot.slane %v4720, 5
    %v4723 = vor.u32 %v4719, %v4722
    %v4724 = vrot.slane %v4723, 4
    %v4726 = vshll.u32 %v4648, 16
    %v4728 = vrot.slane %v4726, 5
    %v4729 = vsel %vm2398, %v4724, %v4728
    %v4731 = vshrl.u32 %v4377, 16
    %v4733 = vrot.slane %v4731, 4
    %v4734 = vshll.u32 %v4377, 16
    %v4736 = vrot.slane %v4734, 5
    %v4737 = vor.u32 %v4733, %v4736
    %v4738 = vrot.slane %v4737, 4
    %v4740 = vshll.u32 %v4649, 16
    %v4742 = vrot.slane %v4740, 5
    %v4743 = vsel %vm2398, %v4738, %v4742
    %v4745 = vshrl.u32 %v4378, 16
    %v4747 = vrot.slane %v4745, 4
    %v4748 = vshll.u32 %v4378, 16
    %v4750 = vrot.slane %v4748, 5
    %v4751 = vor.u32 %v4747, %v4750
    %v4752 = vrot.slane %v4751, 4
    %v4754 = vshll.u32 %v4650, 16
    %v4756 = vrot.slane %v4754, 5
    %v4757 = vsel %vm2398, %v4752, %v4756
    %v4759 = vshrl.u32 %v4379, 16
    %v4761 = vrot.slane %v4759, 4
    %v4762 = vshll.u32 %v4379, 16
    %v4764 = vrot.slane %v4762, 5
    %v4765 = vor.u32 %v4761, %v4764
    %v4766 = vrot.slane %v4765, 4
    %v4768 = vshll.u32 %v4651, 16
    %v4770 = vrot.slane %v4768, 5
    %v4771 = vsel %vm2398, %v4766, %v4770
    %v4773 = vshrl.u32 %v4380, 16
    %v4775 = vrot.slane %v4773, 4
    %v4776 = vshll.u32 %v4380, 16
    %v4778 = vrot.slane %v4776, 5
    %v4779 = vor.u32 %v4775, %v4778
    %v4780 = vrot.slane %v4779, 4
    %v4782 = vshll.u32 %v4652, 16
    %v4784 = vrot.slane %v4782, 5
    %v4785 = vsel %vm2398, %v4780, %v4784
    %v4787 = vshrl.u32 %v4381, 16
    %v4789 = vrot.slane %v4787, 4
    %v4790 = vshll.u32 %v4381, 16
    %v4792 = vrot.slane %v4790, 5
    %v4793 = vor.u32 %v4789, %v4792
    %v4794 = vrot.slane %v4793, 4
    %v4796 = vshll.u32 %v4653, 16
    %v4798 = vrot.slane %v4796, 5
    %v4799 = vsel %vm2398, %v4794, %v4798
    %v4801 = vshrl.u32 %v4382, 16
    %v4803 = vrot.slane %v4801, 4
    %v4804 = vshll.u32 %v4382, 16
    %v4806 = vrot.slane %v4804, 5
    %v4807 = vor.u32 %v4803, %v4806
    %v4808 = vrot.slane %v4807, 4
    %v4810 = vshll.u32 %v4654, 16
    %v4812 = vrot.slane %v4810, 5
    %v4813 = vsel %vm2398, %v4808, %v4812
    %v4815 = vshrl.u32 %v4383, 16
    %v4817 = vrot.slane %v4815, 4
    %v4818 = vshll.u32 %v4383, 16
    %v4820 = vrot.slane %v4818, 5
    %v4821 = vor.u32 %v4817, %v4820
    %v4822 = vrot.slane %v4821, 4
    %v4824 = vshll.u32 %v4655, 16
    %v4826 = vrot.slane %v4824, 5
    %v4827 = vsel %vm2398, %v4822, %v4826
    %v4829 = vshrl.u32 %v4384, 16
    %v4831 = vrot.slane %v4829, 4
    %v4832 = vshll.u32 %v4384, 16
    %v4834 = vrot.slane %v4832, 5
    %v4835 = vor.u32 %v4831, %v4834
    %v4836 = vrot.slane %v4835, 4
    %v4838 = vshll.u32 %v4656, 16
    %v4840 = vrot.slane %v4838, 5
    %v4841 = vsel %vm2398, %v4836, %v4840
    %v4843 = vshrl.u32 %v4385, 16
    %v4845 = vrot.slane %v4843, 4
    %v4846 = vshll.u32 %v4385, 16
    %v4848 = vrot.slane %v4846, 5
    %v4849 = vor.u32 %v4845, %v4848
    %v4850 = vrot.slane %v4849, 4
    %v4852 = vshll.u32 %v4657, 16
    %v4854 = vrot.slane %v4852, 5
    %v4855 = vsel %vm2398, %v4850, %v4854
    %v4857 = vshrl.u32 %v4386, 16
    %v4859 = vrot.slane %v4857, 4
    %v4860 = vshll.u32 %v4386, 16
    %v4862 = vrot.slane %v4860, 5
    %v4863 = vor.u32 %v4859, %v4862
    %v4864 = vrot.slane %v4863, 4
    %v4866 = vshll.u32 %v4658, 16
    %v4868 = vrot.slane %v4866, 5
    %v4869 = vsel %vm2398, %v4864, %v4868
    %v4871 = vshrl.u32 %v4387, 16
    %v4873 = vrot.slane %v4871, 4
    %v4874 = vshll.u32 %v4387, 16
    %v4876 = vrot.slane %v4874, 5
    %v4877 = vor.u32 %v4873, %v4876
    %v4878 = vrot.slane %v4877, 4
    %v4880 = vshll.u32 %v4659, 16
    %v4882 = vrot.slane %v4880, 5
    %v4883 = vsel %vm2398, %v4878, %v4882
    %v4900 = vunpack.c.l.b16 %v4372
    %v4901 = vunpack.c.l.b16 %v4373
    %v4902 = vunpack.c.l.b16 %v4374
    %v4903 = vunpack.c.l.b16 %v4375
    %v4904 = vunpack.c.l.b16 %v4376
    %v4905 = vunpack.c.l.b16 %v4377
    %v4906 = vunpack.c.l.b16 %v4378
    %v4907 = vunpack.c.l.b16 %v4379
    %v4908 = vunpack.c.l.b16 %v4380
    %v4909 = vunpack.c.l.b16 %v4381
    %v4910 = vunpack.c.l.b16 %v4382
    %v4911 = vunpack.c.l.b16 %v4383
    %v4912 = vunpack.c.l.b16 %v4384
    %v4913 = vunpack.c.l.b16 %v4385
    %v4914 = vunpack.c.l.b16 %v4386
    %v4915 = vunpack.c.l.b16 %v4387
    %v4916 = vpack.c.b16 %v4901, %v4900
    %v4917 = vpack.c.b16 %v4903, %v4902
    %v4918 = vpack.c.b16 %v4905, %v4904
    %v4919 = vpack.c.b16 %v4907, %v4906
    %v4920 = vpack.c.b16 %v4909, %v4908
    %v4921 = vpack.c.b16 %v4911, %v4910
    %v4922 = vpack.c.b16 %v4913, %v4912
    %v4923 = vpack.c.b16 %v4915, %v4914
    %v4932 = vunpack.c.l.b16 %v4433
    %v4933 = vunpack.c.l.b16 %v4447
    %v4934 = vunpack.c.l.b16 %v4461
    %v4935 = vunpack.c.l.b16 %v4475
    %v4936 = vunpack.c.l.b16 %v4489
    %v4937 = vunpack.c.l.b16 %v4503
    %v4938 = vunpack.c.l.b16 %v4517
    %v4939 = vunpack.c.l.b16 %v4531
    %v4940 = vunpack.c.l.b16 %v4545
    %v4941 = vunpack.c.l.b16 %v4559
    %v4942 = vunpack.c.l.b16 %v4573
    %v4943 = vunpack.c.l.b16 %v4587
    %v4944 = vunpack.c.l.b16 %v4601
    %v4945 = vunpack.c.l.b16 %v4615
    %v4946 = vunpack.c.l.b16 %v4629
    %v4947 = vunpack.c.l.b16 %v4643
    %v4948 = vpack.c.b16 %v4933, %v4932
    %v4949 = vpack.c.b16 %v4935, %v4934
    %v4950 = vpack.c.b16 %v4937, %v4936
    %v4951 = vpack.c.b16 %v4939, %v4938
    %v4952 = vpack.c.b16 %v4941, %v4940
    %v4953 = vpack.c.b16 %v4943, %v4942
    %v4954 = vpack.c.b16 %v4945, %v4944
    %v4955 = vpack.c.b16 %v4947, %v4946
    %v4964 = vunpack.c.l.b16 %v4673
    %v4965 = vunpack.c.l.b16 %v4687
    %v4966 = vunpack.c.l.b16 %v4701
    %v4967 = vunpack.c.l.b16 %v4715
    %v4968 = vunpack.c.l.b16 %v4729
    %v4969 = vunpack.c.l.b16 %v4743
    %v4970 = vunpack.c.l.b16 %v4757
    %v4971 = vunpack.c.l.b16 %v4771
    %v4972 = vunpack.c.l.b16 %v4785
    %v4973 = vunpack.c.l.b16 %v4799
    %v4974 = vunpack.c.l.b16 %v4813
    %v4975 = vunpack.c.l.b16 %v4827
    %v4976 = vunpack.c.l.b16 %v4841
    %v4977 = vunpack.c.l.b16 %v4855
    %v4978 = vunpack.c.l.b16 %v4869
    %v4979 = vunpack.c.l.b16 %v4883
    %v4980 = vpack.c.b16 %v4965, %v4964
    %v4981 = vpack.c.b16 %v4967, %v4966
    %v4982 = vpack.c.b16 %v4969, %v4968
    %v4983 = vpack.c.b16 %v4971, %v4970
    %v4984 = vpack.c.b16 %v4973, %v4972
    %v4985 = vpack.c.b16 %v4975, %v4974
    %v4986 = vpack.c.b16 %v4977, %v4976
    %v4987 = vpack.c.b16 %v4979, %v4978
    %s4996 = scalar_lea.vmem [#allocation10], 384
    %v4997 = vld [vmem:[%s4996] sm:$0xf]
    %v4998 = vld [vmem:[%s4996 + $0x4] sm:$0xf]
    %v4999 = vld [vmem:[%s4996 + $0x8] sm:$0xf]
    %v5000 = vld [vmem:[%s4996 + $0xc] sm:$0xf]
    %v5001 = vld [vmem:[%s4996 + $0x10] sm:$0xf]
    %v5002 = vld [vmem:[%s4996 + $0x14] sm:$0xf]
    %v5003 = vld [vmem:[%s4996 + $0x18] sm:$0xf]
    %v5004 = vld [vmem:[%s4996 + $0x1c] sm:$0xf]
    %v5005 = vld [vmem:[%s4996 + $0x20] sm:$0xf]
    %v5006 = vld [vmem:[%s4996 + $0x24] sm:$0xf]
    %v5007 = vld [vmem:[%s4996 + $0x28] sm:$0xf]
    %v5008 = vld [vmem:[%s4996 + $0x2c] sm:$0xf]
    %v5009 = vld [vmem:[%s4996 + $0x30] sm:$0xf]
    %v5010 = vld [vmem:[%s4996 + $0x34] sm:$0xf]
    %v5011 = vld [vmem:[%s4996 + $0x38] sm:$0xf]
    %v5012 = vld [vmem:[%s4996 + $0x3c] sm:$0xf]
    %v5013 = vld [vmem:[%s4996 + $0x40] sm:$0xf]
    %v5014 = vld [vmem:[%s4996 + $0x44] sm:$0xf]
    %v5015 = vld [vmem:[%s4996 + $0x48] sm:$0xf]
    %v5016 = vld [vmem:[%s4996 + $0x4c] sm:$0xf]
    %v5017 = vld [vmem:[%s4996 + $0x50] sm:$0xf]
    %v5018 = vld [vmem:[%s4996 + $0x54] sm:$0xf]
    %v5019 = vld [vmem:[%s4996 + $0x58] sm:$0xf]
    %v5020 = vld [vmem:[%s4996 + $0x5c] sm:$0xf]
    %v5021 = vld [vmem:[%s4996 + $0x60] sm:$0xf]
    %v5022 = vld [vmem:[%s4996 + $0x64] sm:$0xf]
    %v5023 = vld [vmem:[%s4996 + $0x68] sm:$0xf]
    %v5024 = vld [vmem:[%s4996 + $0x6c] sm:$0xf]
    %v5025 = vld [vmem:[%s4996 + $0x70] sm:$0xf]
    %v5026 = vld [vmem:[%s4996 + $0x74] sm:$0xf]
    %v5027 = vld [vmem:[%s4996 + $0x78] sm:$0xf]
    %v5028 = vld [vmem:[%s4996 + $0x7c] sm:$0xf]
    %v5029 = vld [vmem:[%s4996 + $0x80] sm:$0xf]
    %v5030 = vld [vmem:[%s4996 + $0x84] sm:$0xf]
    %v5031 = vld [vmem:[%s4996 + $0x88] sm:$0xf]
    %v5032 = vld [vmem:[%s4996 + $0x8c] sm:$0xf]
    %v5033 = vld [vmem:[%s4996 + $0x90] sm:$0xf]
    %v5034 = vld [vmem:[%s4996 + $0x94] sm:$0xf]
    %v5035 = vld [vmem:[%s4996 + $0x98] sm:$0xf]
    %v5036 = vld [vmem:[%s4996 + $0x9c] sm:$0xf]
    %v5037 = vld [vmem:[%s4996 + $0xa0] sm:$0xf]
    %v5038 = vld [vmem:[%s4996 + $0xa4] sm:$0xf]
    %v5039 = vld [vmem:[%s4996 + $0xa8] sm:$0xf]
    %v5040 = vld [vmem:[%s4996 + $0xac] sm:$0xf]
    %v5041 = vld [vmem:[%s4996 + $0xb0] sm:$0xf]
    %v5042 = vld [vmem:[%s4996 + $0xb4] sm:$0xf]
    %v5043 = vld [vmem:[%s4996 + $0xb8] sm:$0xf]
    %v5044 = vld [vmem:[%s4996 + $0xbc] sm:$0xf]
    %v5093 = vunpack.c.l.b16 %v4997
    %v5094 = vunpack.c.l.b16 %v4998
    %v5095 = vunpack.c.l.b16 %v4999
    %v5096 = vunpack.c.l.b16 %v5000
    %v5097 = vunpack.c.l.b16 %v5001
    %v5098 = vunpack.c.l.b16 %v5002
    %v5099 = vunpack.c.l.b16 %v5003
    %v5100 = vunpack.c.l.b16 %v5004
    %v5101 = vunpack.c.l.b16 %v5005
    %v5102 = vunpack.c.l.b16 %v5006
    %v5103 = vunpack.c.l.b16 %v5007
    %v5104 = vunpack.c.l.b16 %v5008
    %v5105 = vunpack.c.l.b16 %v5009
    %v5106 = vunpack.c.l.b16 %v5010
    %v5107 = vunpack.c.l.b16 %v5011
    %v5108 = vunpack.c.l.b16 %v5012
    %v5109 = vunpack.c.l.b16 %v5013
    %v5110 = vunpack.c.l.b16 %v5014
    %v5111 = vunpack.c.l.b16 %v5015
    %v5112 = vunpack.c.l.b16 %v5016
    %v5113 = vunpack.c.l.b16 %v5017
    %v5114 = vunpack.c.l.b16 %v5018
    %v5115 = vunpack.c.l.b16 %v5019
    %v5116 = vunpack.c.l.b16 %v5020
    %v5117 = vunpack.c.l.b16 %v5021
    %v5118 = vunpack.c.l.b16 %v5022
    %v5119 = vunpack.c.l.b16 %v5023
    %v5120 = vunpack.c.l.b16 %v5024
    %v5121 = vunpack.c.l.b16 %v5025
    %v5122 = vunpack.c.l.b16 %v5026
    %v5123 = vunpack.c.l.b16 %v5027
    %v5124 = vunpack.c.l.b16 %v5028
    %v5125 = vunpack.c.l.b16 %v5029
    %v5126 = vunpack.c.l.b16 %v5030
    %v5127 = vunpack.c.l.b16 %v5031
    %v5128 = vunpack.c.l.b16 %v5032
    %v5129 = vunpack.c.l.b16 %v5033
    %v5130 = vunpack.c.l.b16 %v5034
    %v5131 = vunpack.c.l.b16 %v5035
    %v5132 = vunpack.c.l.b16 %v5036
    %v5133 = vunpack.c.l.b16 %v5037
    %v5134 = vunpack.c.l.b16 %v5038
    %v5135 = vunpack.c.l.b16 %v5039
    %v5136 = vunpack.c.l.b16 %v5040
    %v5137 = vunpack.c.l.b16 %v5041
    %v5138 = vunpack.c.l.b16 %v5042
    %v5139 = vunpack.c.l.b16 %v5043
    %v5140 = vunpack.c.l.b16 %v5044
    %v5141 = vpack.c.b16 %v5094, %v5093
    %v5142 = vpack.c.b16 %v5096, %v5095
    %v5143 = vpack.c.b16 %v5098, %v5097
    %v5144 = vpack.c.b16 %v5100, %v5099
    %v5145 = vpack.c.b16 %v5102, %v5101
    %v5146 = vpack.c.b16 %v5104, %v5103
    %v5147 = vpack.c.b16 %v5106, %v5105
    %v5148 = vpack.c.b16 %v5108, %v5107
    %v5149 = vpack.c.b16 %v5110, %v5109
    %v5150 = vpack.c.b16 %v5112, %v5111
    %v5151 = vpack.c.b16 %v5114, %v5113
    %v5152 = vpack.c.b16 %v5116, %v5115
    %v5153 = vpack.c.b16 %v5118, %v5117
    %v5154 = vpack.c.b16 %v5120, %v5119
    %v5155 = vpack.c.b16 %v5122, %v5121
    %v5156 = vpack.c.b16 %v5124, %v5123
    %v5157 = vpack.c.b16 %v5126, %v5125
    %v5158 = vpack.c.b16 %v5128, %v5127
    %v5159 = vpack.c.b16 %v5130, %v5129
    %v5160 = vpack.c.b16 %v5132, %v5131
    %v5161 = vpack.c.b16 %v5134, %v5133
    %v5162 = vpack.c.b16 %v5136, %v5135
    %v5163 = vpack.c.b16 %v5138, %v5137
    %v5164 = vpack.c.b16 %v5140, %v5139
    %5189 = vmatprep.subr.bf16.mxu0 0
    %5190 = vmatpush1.bf16.msra.mxu0 %v5141
    %5191 = vmatprep.subr.bf16.mxu0 0
    %5192 = vmatpush1.bf16.msra.mxu0 %v5142
    %5193 = vmatprep.subr.bf16.mxu0 0
    %5194 = vmatpush1.bf16.msra.mxu0 %v5143
    %5195 = vmatprep.subr.bf16.mxu0 0
    %5196 = vmatpush1.bf16.msra.mxu0 %v5144
    %5197 = vmatprep.subr.bf16.mxu0 0
    %5198 = vmatpush1.bf16.msra.mxu0 %v5145
    %5199 = vmatprep.subr.bf16.mxu0 0
    %5200 = vmatpush1.bf16.msra.mxu0 %v5146
    %5201 = vmatprep.subr.bf16.mxu0 0
    %5202 = vmatpush1.bf16.msra.mxu0 %v5147
    %5203 = vmatprep.subr.bf16.mxu0 0
    %5204 = vmatpush1.bf16.msra.mxu0 %v5148
    %5205 = vmatprep.subr.bf16.mxu0 0
    %5206 = vmatpush1.bf16.msra.mxu0 %v5149
    %5207 = vmatprep.subr.bf16.mxu0 0
    %5208 = vmatpush1.bf16.msra.mxu0 %v5150
    %5209 = vmatprep.subr.bf16.mxu0 0
    %5210 = vmatpush1.bf16.msra.mxu0 %v5151
    %5211 = vmatprep.subr.bf16.mxu0 0
    %5212 = vmatpush1.bf16.msra.mxu0 %v5152
    %5213 = vmatprep.subr.bf16.mxu0 0
    %5214 = vmatpush1.bf16.msra.mxu0 %v5153
    %5215 = vmatprep.subr.bf16.mxu0 0
    %5216 = vmatpush1.bf16.msra.mxu0 %v5154
    %5217 = vmatprep.subr.bf16.mxu0 0
    %5218 = vmatpush1.bf16.msra.mxu0 %v5155
    %5219 = vmatprep.subr.bf16.mxu0 0
    %5220 = vmatpush1.bf16.msra.mxu0 %v5156
    %5221 = vmatprep.mubr.bf16.mxu0 %v4948
    %5222 = vmatmul.mubr.bf16.gmra.mrb[0].mxu0 %v4916
    %v5223 = vpop.f32.mrb[0].mxu0
    %v5224 = vadd.f32 0.0, %v5223
    %v5225 = vpop.f32.mrb[0].mxu0
    %v5226 = vpop.f32.mrb[0].mxu0
    %v5227 = vadd.f32 0.0, %v5226
    %v5228 = vpop.f32.mrb[0].mxu0
    %5229 = vmatprep.mubr.bf16.mxu0 %v4949
    %5230 = vmatmul.mubr.bf16.gmra.mrb[0].mxu0 %v4917
    %v5231 = vpop.f32.mrb[0].mxu0
    %v5232 = vadd.f32 0.0, %v5231
    %v5233 = vpop.f32.mrb[0].mxu0
    %v5234 = vpop.f32.mrb[0].mxu0
    %v5235 = vadd.f32 0.0, %v5234
    %v5236 = vpop.f32.mrb[0].mxu0
    %5237 = vmatprep.mubr.bf16.mxu0 %v4950
    %5238 = vmatmul.mubr.bf16.gmra.mrb[0].mxu0 %v4918
    %v5239 = vpop.f32.mrb[0].mxu0
    %v5240 = vadd.f32 0.0, %v5239
    %v5241 = vpop.f32.mrb[0].mxu0
    %v5242 = vpop.f32.mrb[0].mxu0
    %v5243 = vadd.f32 0.0, %v5242
    %v5244 = vpop.f32.mrb[0].mxu0
    %5245 = vmatprep.mubr.bf16.mxu0 %v4951
    %5246 = vmatmul.mubr.bf16.gmra.mrb[0].mxu0 %v4919
    %v5247 = vpop.f32.mrb[0].mxu0
    %v5248 = vadd.f32 0.0, %v5247
    %v5249 = vpop.f32.mrb[0].mxu0
    %v5250 = vpop.f32.mrb[0].mxu0
    %v5251 = vadd.f32 0.0, %v5250
    %v5252 = vpop.f32.mrb[0].mxu0
    %5253 = vmatprep.mubr.bf16.mxu0 %v4952
    %5254 = vmatmul.mubr.bf16.gmra.mrb[0].mxu0 %v4920
    %v5255 = vpop.f32.mrb[0].mxu0
    %v5256 = vadd.f32 0.0, %v5255
    %v5257 = vpop.f32.mrb[0].mxu0
    %v5258 = vpop.f32.mrb[0].mxu0
    %v5259 = vadd.f32 0.0, %v5258
    %v5260 = vpop.f32.mrb[0].mxu0
    %5261 = vmatprep.mubr.bf16.mxu0 %v4953
    %5262 = vmatmul.mubr.bf16.gmra.mrb[0].mxu0 %v4921
    %v5263 = vpop.f32.mrb[0].mxu0
    %v5264 = vadd.f32 0.0, %v5263
    %v5265 = vpop.f32.mrb[0].mxu0
    %v5266 = vpop.f32.mrb[0].mxu0
    %v5267 = vadd.f32 0.0, %v5266
    %v5268 = vpop.f32.mrb[0].mxu0
    %5269 = vmatprep.mubr.bf16.mxu0 %v4954
    %5270 = vmatmul.mubr.bf16.gmra.mrb[0].mxu0 %v4922
    %v5271 = vpop.f32.mrb[0].mxu0
    %v5272 = vadd.f32 0.0, %v5271
    %v5273 = vpop.f32.mrb[0].mxu0
    %v5274 = vpop.f32.mrb[0].mxu0
    %v5275 = vadd.f32 0.0, %v5274
    %v5276 = vpop.f32.mrb[0].mxu0
    %5277 = vmatprep.mubr.bf16.mxu0 %v4955
    %5278 = vmatmul.mubr.bf16.gmra.mrb[0].mxu0 %v4923
    %v5279 = vpop.f32.mrb[0].mxu0
    %v5280 = vadd.f32 0.0, %v5279
    %v5281 = vpop.f32.mrb[0].mxu0
    %v5282 = vpop.f32.mrb[0].mxu0
    %v5283 = vadd.f32 0.0, %v5282
    %v5284 = vpop.f32.mrb[0].mxu0
    %5285 = vdwg.mxu0
    %5286 = vmatprep.subr.bf16.mxu0 0
    %5287 = vmatpush1.bf16.msra.mxu0 %v5157
    %5288 = vmatprep.subr.bf16.mxu0 0
    %5289 = vmatpush1.bf16.msra.mxu0 %v5158
    %5290 = vmatprep.subr.bf16.mxu0 0
    %5291 = vmatpush1.bf16.msra.mxu0 %v5159
    %5292 = vmatprep.subr.bf16.mxu0 0
    %5293 = vmatpush1.bf16.msra.mxu0 %v5160
    %5294 = vmatprep.subr.bf16.mxu0 0
    %5295 = vmatpush1.bf16.msra.mxu0 %v5161
    %5296 = vmatprep.subr.bf16.mxu0 0
    %5297 = vmatpush1.bf16.msra.mxu0 %v5162
    %5298 = vmatprep.subr.bf16.mxu0 0
    %5299 = vmatpush1.bf16.msra.mxu0 %v5163
    %5300 = vmatprep.subr.bf16.mxu0 0
    %5301 = vmatpush1.bf16.msra.mxu0 %v5164
    %5302 = vmatprep.subr.bf16.mxu0 0
    %5303 = vmatpush1.bf16.msra.mxu0 0
    %5304 = vmatprep.subr.bf16.mxu0 0
    %5305 = vmatpush1.bf16.msra.mxu0 0
    %5306 = vmatprep.subr.bf16.mxu0 0
    %5307 = vmatpush1.bf16.msra.mxu0 0
    %5308 = vmatprep.subr.bf16.mxu0 0
    %5309 = vmatpush1.bf16.msra.mxu0 0
    %5310 = vmatprep.subr.bf16.mxu0 0
    %5311 = vmatpush1.bf16.msra.mxu0 0
    %5312 = vmatprep.subr.bf16.mxu0 0
    %5313 = vmatpush1.bf16.msra.mxu0 0
    %5314 = vmatprep.subr.bf16.mxu0 0
    %5315 = vmatpush1.bf16.msra.mxu0 0
    %5316 = vmatprep.subr.bf16.mxu0 0
    %5317 = vmatpush1.bf16.msra.mxu0 0
    %5318 = vmatprep.mubr.bf16.mxu0 0
    %5319 = vmatmul.mubr.bf16.gmra.mrb[0].mxu0 %v4980
    %v5320 = vpop.f32.mrb[0].mxu0
    %v5321 = vadd.f32 %v5224, %v5320
    %v5322 = vpop.f32.mrb[0].mxu0
    %v5323 = vpop.f32.mrb[0].mxu0
    %v5324 = vadd.f32 %v5227, %v5323
    %v5325 = vpop.f32.mrb[0].mxu0
    %5326 = vmatprep.mubr.bf16.mxu0 0
    %5327 = vmatmul.mubr.bf16.gmra.mrb[0].mxu0 %v4981
    %v5328 = vpop.f32.mrb[0].mxu0
    %v5329 = vadd.f32 %v5232, %v5328
    %v5330 = vpop.f32.mrb[0].mxu0
    %v5331 = vpop.f32.mrb[0].mxu0
    %v5332 = vadd.f32 %v5235, %v5331
    %v5333 = vpop.f32.mrb[0].mxu0
    %5334 = vmatprep.mubr.bf16.mxu0 0
    %5335 = vmatmul.mubr.bf16.gmra.mrb[0].mxu0 %v4982
    %v5336 = vpop.f32.mrb[0].mxu0
    %v5337 = vadd.f32 %v5240, %v5336
    %v5338 = vpop.f32.mrb[0].mxu0
    %v5339 = vpop.f32.mrb[0].mxu0
    %v5340 = vadd.f32 %v5243, %v5339
    %v5341 = vpop.f32.mrb[0].mxu0
    %5342 = vmatprep.mubr.bf16.mxu0 0
    %5343 = vmatmul.mubr.bf16.gmra.mrb[0].mxu0 %v4983
    %v5344 = vpop.f32.mrb[0].mxu0
    %v5345 = vadd.f32 %v5248, %v5344
    %v5346 = vpop.f32.mrb[0].mxu0
    %v5347 = vpop.f32.mrb[0].mxu0
    %v5348 = vadd.f32 %v5251, %v5347
    %v5349 = vpop.f32.mrb[0].mxu0
    %5350 = vmatprep.mubr.bf16.mxu0 0
    %5351 = vmatmul.mubr.bf16.gmra.mrb[0].mxu0 %v4984
    %v5352 = vpop.f32.mrb[0].mxu0
    %v5353 = vadd.f32 %v5256, %v5352
    %v5354 = vpop.f32.mrb[0].mxu0
    %v5355 = vpop.f32.mrb[0].mxu0
    %v5356 = vadd.f32 %v5259, %v5355
    %v5357 = vpop.f32.mrb[0].mxu0
    %5358 = vmatprep.mubr.bf16.mxu0 0
    %5359 = vmatmul.mubr.bf16.gmra.mrb[0].mxu0 %v4985
    %v5360 = vpop.f32.mrb[0].mxu0
    %v5361 = vadd.f32 %v5264, %v5360
    %v5362 = vpop.f32.mrb[0].mxu0
    %v5363 = vpop.f32.mrb[0].mxu0
    %v5364 = vadd.f32 %v5267, %v5363
    %v5365 = vpop.f32.mrb[0].mxu0
    %5366 = vmatprep.mubr.bf16.mxu0 0
    %5367 = vmatmul.mubr.bf16.gmra.mrb[0].mxu0 %v4986
    %v5368 = vpop.f32.mrb[0].mxu0
    %v5369 = vadd.f32 %v5272, %v5368
    %v5370 = vpop.f32.mrb[0].mxu0
    %v5371 = vpop.f32.mrb[0].mxu0
    %v5372 = vadd.f32 %v5275, %v5371
    %v5373 = vpop.f32.mrb[0].mxu0
    %5374 = vmatprep.mubr.bf16.mxu0 0
    %5375 = vmatmul.mubr.bf16.gmra.mrb[0].mxu0 %v4987
    %v5376 = vpop.f32.mrb[0].mxu0
    %v5377 = vadd.f32 %v5280, %v5376
    %v5378 = vpop.f32.mrb[0].mxu0
    %v5379 = vpop.f32.mrb[0].mxu0
    %v5380 = vadd.f32 %v5283, %v5379
    %v5381 = vpop.f32.mrb[0].mxu0
    %5382 = vdwg.mxu0
    %v5383 = vadd.f32 %v4310, %v5321
    %v5384 = vadd.f32 %v4313, %v5324
    %v5385 = vadd.f32 %v4318, %v5329
    %v5386 = vadd.f32 %v4321, %v5332
    %v5387 = vadd.f32 %v4326, %v5337
    %v5388 = vadd.f32 %v4329, %v5340
    %v5389 = vadd.f32 %v4334, %v5345
    %v5390 = vadd.f32 %v4337, %v5348
    %v5391 = vadd.f32 %v4342, %v5353
    %v5392 = vadd.f32 %v4345, %v5356
    %v5393 = vadd.f32 %v4350, %v5361
    %v5394 = vadd.f32 %v4353, %v5364
    %v5395 = vadd.f32 %v4358, %v5369
    %v5396 = vadd.f32 %v4361, %v5372
    %v5397 = vadd.f32 %v4366, %v5377
    %v5398 = vadd.f32 %v4369, %v5380
    %v5399 = vld [vmem:[%s5] sm:$0x1]
    %v5400 = vld [vmem:[%s6] sm:$0x1]
    %v5401 = vadd.f32 %v5383, %v5384
    %v5402 = vadd.f32 %v5401, %v5385
    %v5403 = vadd.f32 %v5402, %v5386
    %v5404 = vadd.f32 %v5403, %v5387
    %v5405 = vadd.f32 %v5404, %v5388
    %v5406 = vadd.f32 %v5405, %v5389
    %v5407 = vadd.f32 %v5406, %v5390
    %v5408 = vadd.f32 %v5407, %v5391
    %v5409 = vadd.f32 %v5408, %v5392
    %v5410 = vadd.f32 %v5409, %v5393
    %v5411 = vadd.f32 %v5410, %v5394
    %v5412 = vadd.f32 %v5411, %v5395
    %v5413 = vadd.f32 %v5412, %v5396
    %v5414 = vadd.f32 %v5413, %v5397
    %v5415 = vadd.f32 %v5414, %v5398
    %v5416 = vrot.slane %v5415, 4
    %v5417 = vadd.f32 %v5415, %v5416
    %v5418 = vrot.slane %v5417, 2
    %v5419 = vadd.f32 %v5417, %v5418
    %v5420 = vrot.slane %v5419, 1
    %v5421 = vadd.f32 %v5419, %v5420
    %v5422 = vrcp.pop 128.0
    %v5423 = vmul.f32 %v5421, %v5422
    %v5424 = vsub.f32 %v5383, %v5423
    %v5425 = vsub.f32 %v5384, %v5423
    %v5426 = vsub.f32 %v5385, %v5423
    %v5427 = vsub.f32 %v5386, %v5423
    %v5428 = vsub.f32 %v5387, %v5423
    %v5429 = vsub.f32 %v5388, %v5423
    %v5430 = vsub.f32 %v5389, %v5423
    %v5431 = vsub.f32 %v5390, %v5423
    %v5432 = vsub.f32 %v5391, %v5423
    %v5433 = vsub.f32 %v5392, %v5423
    %v5434 = vsub.f32 %v5393, %v5423
    %v5435 = vsub.f32 %v5394, %v5423
    %v5436 = vsub.f32 %v5395, %v5423
    %v5437 = vsub.f32 %v5396, %v5423
    %v5438 = vsub.f32 %v5397, %v5423
    %v5439 = vsub.f32 %v5398, %v5423
    %v5440 = vmul.f32 %v5424, %v5424
    %v5441 = vmul.f32 %v5425, %v5425
    %v5442 = vmul.f32 %v5426, %v5426
    %v5443 = vmul.f32 %v5427, %v5427
    %v5444 = vmul.f32 %v5428, %v5428
    %v5445 = vmul.f32 %v5429, %v5429
    %v5446 = vmul.f32 %v5430, %v5430
    %v5447 = vmul.f32 %v5431, %v5431
    %v5448 = vmul.f32 %v5432, %v5432
    %v5449 = vmul.f32 %v5433, %v5433
    %v5450 = vmul.f32 %v5434, %v5434
    %v5451 = vmul.f32 %v5435, %v5435
    %v5452 = vmul.f32 %v5436, %v5436
    %v5453 = vmul.f32 %v5437, %v5437
    %v5454 = vmul.f32 %v5438, %v5438
    %v5455 = vmul.f32 %v5439, %v5439
    %v5456 = vadd.f32 %v5440, %v5441
    %v5457 = vadd.f32 %v5456, %v5442
    %v5458 = vadd.f32 %v5457, %v5443
    %v5459 = vadd.f32 %v5458, %v5444
    %v5460 = vadd.f32 %v5459, %v5445
    %v5461 = vadd.f32 %v5460, %v5446
    %v5462 = vadd.f32 %v5461, %v5447
    %v5463 = vadd.f32 %v5462, %v5448
    %v5464 = vadd.f32 %v5463, %v5449
    %v5465 = vadd.f32 %v5464, %v5450
    %v5466 = vadd.f32 %v5465, %v5451
    %v5467 = vadd.f32 %v5466, %v5452
    %v5468 = vadd.f32 %v5467, %v5453
    %v5469 = vadd.f32 %v5468, %v5454
    %v5470 = vadd.f32 %v5469, %v5455
    %v5471 = vrot.slane %v5470, 4
    %v5472 = vadd.f32 %v5470, %v5471
    %v5473 = vrot.slane %v5472, 2
    %v5474 = vadd.f32 %v5472, %v5473
    %v5475 = vrot.slane %v5474, 1
    %v5476 = vadd.f32 %v5474, %v5475
    %v5477 = vmul.f32 %v5476, %v5422
    %v5478 = vadd.f32 %v5477, 1e-05
    %v5479 = vrsqrt.pop %v5478
    %v5480 = vmul.f32 %v5424, %v5479
    %v5481 = vmul.f32 %v5425, %v5479
    %v5482 = vmul.f32 %v5426, %v5479
    %v5483 = vmul.f32 %v5427, %v5479
    %v5484 = vmul.f32 %v5428, %v5479
    %v5485 = vmul.f32 %v5429, %v5479
    %v5486 = vmul.f32 %v5430, %v5479
    %v5487 = vmul.f32 %v5431, %v5479
    %v5488 = vmul.f32 %v5432, %v5479
    %v5489 = vmul.f32 %v5433, %v5479
    %v5490 = vmul.f32 %v5434, %v5479
    %v5491 = vmul.f32 %v5435, %v5479
    %v5492 = vmul.f32 %v5436, %v5479
    %v5493 = vmul.f32 %v5437, %v5479
    %v5494 = vmul.f32 %v5438, %v5479
    %v5495 = vmul.f32 %v5439, %v5479
    %v5497 = vlaneseq
    %v5498 = vshrl.u32 %v5497, 7
    %v5499 = vsub.s32 0, %v5498
    %v5500 = vrot.slane %v5399, %v5499
    %v5502 = vmul.f32 %v5480, %v5500
    %v5503 = vmul.f32 %v5481, %v5500
    %v5504 = vmul.f32 %v5482, %v5500
    %v5505 = vmul.f32 %v5483, %v5500
    %v5506 = vmul.f32 %v5484, %v5500
    %v5507 = vmul.f32 %v5485, %v5500
    %v5508 = vmul.f32 %v5486, %v5500
    %v5509 = vmul.f32 %v5487, %v5500
    %v5510 = vmul.f32 %v5488, %v5500
    %v5511 = vmul.f32 %v5489, %v5500
    %v5512 = vmul.f32 %v5490, %v5500
    %v5513 = vmul.f32 %v5491, %v5500
    %v5514 = vmul.f32 %v5492, %v5500
    %v5515 = vmul.f32 %v5493, %v5500
    %v5516 = vmul.f32 %v5494, %v5500
    %v5517 = vmul.f32 %v5495, %v5500
    %v5519 = vlaneseq
    %v5520 = vshrl.u32 %v5519, 7
    %v5521 = vsub.s32 0, %v5520
    %v5522 = vrot.slane %v5400, %v5521
    %v5524 = vadd.f32 %v5502, %v5522
    %v5525 = vadd.f32 %v5503, %v5522
    %v5526 = vadd.f32 %v5504, %v5522
    %v5527 = vadd.f32 %v5505, %v5522
    %v5528 = vadd.f32 %v5506, %v5522
    %v5529 = vadd.f32 %v5507, %v5522
    %v5530 = vadd.f32 %v5508, %v5522
    %v5531 = vadd.f32 %v5509, %v5522
    %v5532 = vadd.f32 %v5510, %v5522
    %v5533 = vadd.f32 %v5511, %v5522
    %v5534 = vadd.f32 %v5512, %v5522
    %v5535 = vadd.f32 %v5513, %v5522
    %v5536 = vadd.f32 %v5514, %v5522
    %v5537 = vadd.f32 %v5515, %v5522
    %v5538 = vadd.f32 %v5516, %v5522
    %v5539 = vadd.f32 %v5517, %v5522
    %v5540 = vmax.f32 %v5524, 0.0
    %v5541 = vmax.f32 %v5525, 0.0
    %v5542 = vmax.f32 %v5526, 0.0
    %v5543 = vmax.f32 %v5527, 0.0
    %v5544 = vmax.f32 %v5528, 0.0
    %v5545 = vmax.f32 %v5529, 0.0
    %v5546 = vmax.f32 %v5530, 0.0
    %v5547 = vmax.f32 %v5531, 0.0
    %v5548 = vmax.f32 %v5532, 0.0
    %v5549 = vmax.f32 %v5533, 0.0
    %v5550 = vmax.f32 %v5534, 0.0
    %v5551 = vmax.f32 %v5535, 0.0
    %v5552 = vmax.f32 %v5536, 0.0
    %v5553 = vmax.f32 %v5537, 0.0
    %v5554 = vmax.f32 %v5538, 0.0
    %v5555 = vmax.f32 %v5539, 0.0
    %v5556 = vpack.c.bf16 %v5541, %v5540
    %v5557 = vpack.c.bf16 %v5543, %v5542
    %v5558 = vpack.c.bf16 %v5545, %v5544
    %v5559 = vpack.c.bf16 %v5547, %v5546
    %v5560 = vpack.c.bf16 %v5549, %v5548
    %v5561 = vpack.c.bf16 %v5551, %v5550
    %v5562 = vpack.c.bf16 %v5553, %v5552
    %v5563 = vpack.c.bf16 %v5555, %v5554
    %5564 = vst [vmem:[#allocation6] sm:$0xf] 0
    %5565 = vst [vmem:[#allocation6 + $0x4] sm:$0x1] 0
    %5566 = vst [vmem:[#allocation6 + $0x50] sm:$0xf] 0
    %5567 = vst [vmem:[#allocation6 + $0x54] sm:$0x1] 0
    %s5568 = scalar_lea.vmem [#allocation6], 72
    %5569 = vst [vmem:[%s5568] sm:$0xf] 0
    %5570 = vst [vmem:[%s5568 + $0x4] sm:$0x1] 0
    %5571 = vst [vmem:[%s5568 + $0x50] sm:$0xf] 0
    %5572 = vst [vmem:[%s5568 + $0x54] sm:$0x1] 0
    %v5573 = vld [vmem:[#allocation6] sm:$0x1]
    %v5574 = vsel %vm1004, 0, %v5573
    %5575 = vst [vmem:[#allocation6] sm:$0x1] %v5574
    %v5576 = vld [vmem:[#allocation6 + $0x8] sm:$0x1]
    %v5577 = vsel %vm1004, 0, %v5576
    %5578 = vst [vmem:[#allocation6 + $0x8] sm:$0x1] %v5577
    %v5579 = vld [vmem:[#allocation6 + $0x10] sm:$0x1]
    %v5580 = vsel %vm1004, 0, %v5579
    %5581 = vst [vmem:[#allocation6 + $0x10] sm:$0x1] %v5580
    %v5582 = vld [vmem:[#allocation6 + $0x18] sm:$0x1]
    %v5583 = vsel %vm1004, 0, %v5582
    %5584 = vst [vmem:[#allocation6 + $0x18] sm:$0x1] %v5583
    %v5585 = vld [vmem:[#allocation6 + $0x20] sm:$0x1]
    %v5586 = vsel %vm1004, 0, %v5585
    %5587 = vst [vmem:[#allocation6 + $0x20] sm:$0x1] %v5586
    %v5588 = vld [vmem:[#allocation6 + $0x28] sm:$0x1]
    %v5589 = vsel %vm1004, 0, %v5588
    %5590 = vst [vmem:[#allocation6 + $0x28] sm:$0x1] %v5589
    %v5591 = vld [vmem:[#allocation6 + $0x30] sm:$0x1]
    %v5592 = vsel %vm1004, 0, %v5591
    %5593 = vst [vmem:[#allocation6 + $0x30] sm:$0x1] %v5592
    %v5594 = vld [vmem:[#allocation6 + $0x38] sm:$0x1]
    %v5595 = vsel %vm1004, 0, %v5594
    %5596 = vst [vmem:[#allocation6 + $0x38] sm:$0x1] %v5595
    %v5597 = vld [vmem:[#allocation6 + $0x40] sm:$0x1]
    %v5598 = vsel %vm1004, 0, %v5597
    %5599 = vst [vmem:[#allocation6 + $0x40] sm:$0x1] %v5598
    %v5600 = vld [vmem:[#allocation6 + $0x48] sm:$0x1]
    %v5601 = vsel %vm1004, 0, %v5600
    %5602 = vst [vmem:[#allocation6 + $0x48] sm:$0x1] %v5601
    %v5603 = vld [vmem:[#allocation6 + $0x50] sm:$0x1]
    %v5604 = vsel %vm1004, 0, %v5603
    %5605 = vst [vmem:[#allocation6 + $0x50] sm:$0x1] %v5604
    %v5606 = vld [vmem:[#allocation6 + $0x58] sm:$0x1]
    %v5607 = vsel %vm1004, 0, %v5606
    %5608 = vst [vmem:[#allocation6 + $0x58] sm:$0x1] %v5607
    %v5609 = vld [vmem:[#allocation6 + $0x60] sm:$0x1]
    %v5610 = vsel %vm1004, 0, %v5609
    %5611 = vst [vmem:[#allocation6 + $0x60] sm:$0x1] %v5610
    %v5612 = vld [vmem:[#allocation6 + $0x68] sm:$0x1]
    %v5613 = vsel %vm1004, 0, %v5612
    %5614 = vst [vmem:[#allocation6 + $0x68] sm:$0x1] %v5613
    %v5615 = vld [vmem:[#allocation6 + $0x70] sm:$0x1]
    %v5616 = vsel %vm1004, 0, %v5615
    %5617 = vst [vmem:[#allocation6 + $0x70] sm:$0x1] %v5616
    %v5618 = vld [vmem:[#allocation6 + $0x78] sm:$0x1]
    %v5619 = vsel %vm1004, 0, %v5618
    %5620 = vst [vmem:[#allocation6 + $0x78] sm:$0x1] %v5619
    %v5621 = vld [vmem:[#allocation6 + $0x80] sm:$0x1]
    %v5622 = vsel %vm1004, 0, %v5621
    %5623 = vst [vmem:[#allocation6 + $0x80] sm:$0x1] %v5622
    %v5624 = vld [vmem:[#allocation6 + $0x88] sm:$0x1]
    %v5625 = vsel %vm1004, 0, %v5624
    %5626 = vst [vmem:[#allocation6 + $0x88] sm:$0x1] %v5625
    %v5627 = vld [vmem:[#allocation6 + $0x90] sm:$0x1]
    %v5628 = vsel %vm1004, 0, %v5627
    %5629 = vst [vmem:[#allocation6 + $0x90] sm:$0x1] %v5628
    %v5630 = vld [vmem:[#allocation6 + $0x98] sm:$0x1]
    %v5631 = vsel %vm1004, 0, %v5630
    %5632 = vst [vmem:[#allocation6 + $0x98] sm:$0x1] %v5631
    %vm5633 = vmand %vm1002, %vm1228
    %v5634 = vld [vmem:[#allocation6 + $0x4] sm:$0x1]
    %v5635 = vsel %vm5633, 0, %v5634
    %5636 = vst [vmem:[#allocation6 + $0x4] sm:$0x1] %v5635
    %v5637 = vld [vmem:[#allocation6 + $0xc] sm:$0x1]
    %v5638 = vsel %vm5633, 0, %v5637
    %5639 = vst [vmem:[#allocation6 + $0xc] sm:$0x1] %v5638
    %v5640 = vld [vmem:[#allocation6 + $0x14] sm:$0x1]
    %v5641 = vsel %vm5633, 0, %v5640
    %5642 = vst [vmem:[#allocation6 + $0x14] sm:$0x1] %v5641
    %v5643 = vld [vmem:[#allocation6 + $0x1c] sm:$0x1]
    %v5644 = vsel %vm5633, 0, %v5643
    %5645 = vst [vmem:[#allocation6 + $0x1c] sm:$0x1] %v5644
    %v5646 = vld [vmem:[#allocation6 + $0x24] sm:$0x1]
    %v5647 = vsel %vm5633, 0, %v5646
    %5648 = vst [vmem:[#allocation6 + $0x24] sm:$0x1] %v5647
    %v5649 = vld [vmem:[#allocation6 + $0x2c] sm:$0x1]
    %v5650 = vsel %vm5633, 0, %v5649
    %5651 = vst [vmem:[#allocation6 + $0x2c] sm:$0x1] %v5650
    %v5652 = vld [vmem:[#allocation6 + $0x34] sm:$0x1]
    %v5653 = vsel %vm5633, 0, %v5652
    %5654 = vst [vmem:[#allocation6 + $0x34] sm:$0x1] %v5653
    %v5655 = vld [vmem:[#allocation6 + $0x3c] sm:$0x1]
    %v5656 = vsel %vm5633, 0, %v5655
    %5657 = vst [vmem:[#allocation6 + $0x3c] sm:$0x1] %v5656
    %v5658 = vld [vmem:[#allocation6 + $0x44] sm:$0x1]
    %v5659 = vsel %vm5633, 0, %v5658
    %5660 = vst [vmem:[#allocation6 + $0x44] sm:$0x1] %v5659
    %v5661 = vld [vmem:[#allocation6 + $0x4c] sm:$0x1]
    %v5662 = vsel %vm5633, 0, %v5661
    %5663 = vst [vmem:[#allocation6 + $0x4c] sm:$0x1] %v5662
    %v5664 = vld [vmem:[#allocation6 + $0x54] sm:$0x1]
    %v5665 = vsel %vm5633, 0, %v5664
    %5666 = vst [vmem:[#allocation6 + $0x54] sm:$0x1] %v5665
    %v5667 = vld [vmem:[#allocation6 + $0x5c] sm:$0x1]
    %v5668 = vsel %vm5633, 0, %v5667
    %5669 = vst [vmem:[#allocation6 + $0x5c] sm:$0x1] %v5668
    %v5670 = vld [vmem:[#allocation6 + $0x64] sm:$0x1]
    %v5671 = vsel %vm5633, 0, %v5670
    %5672 = vst [vmem:[#allocation6 + $0x64] sm:$0x1] %v5671
    %v5673 = vld [vmem:[#allocation6 + $0x6c] sm:$0x1]
    %v5674 = vsel %vm5633, 0, %v5673
    %5675 = vst [vmem:[#allocation6 + $0x6c] sm:$0x1] %v5674
    %v5676 = vld [vmem:[#allocation6 + $0x74] sm:$0x1]
    %v5677 = vsel %vm5633, 0, %v5676
    %5678 = vst [vmem:[#allocation6 + $0x74] sm:$0x1] %v5677
    %v5679 = vld [vmem:[#allocation6 + $0x7c] sm:$0x1]
    %v5680 = vsel %vm5633, 0, %v5679
    %5681 = vst [vmem:[#allocation6 + $0x7c] sm:$0x1] %v5680
    %v5682 = vld [vmem:[#allocation6 + $0x84] sm:$0x1]
    %v5683 = vsel %vm5633, 0, %v5682
    %5684 = vst [vmem:[#allocation6 + $0x84] sm:$0x1] %v5683
    %v5685 = vld [vmem:[#allocation6 + $0x8c] sm:$0x1]
    %v5686 = vsel %vm5633, 0, %v5685
    %5687 = vst [vmem:[#allocation6 + $0x8c] sm:$0x1] %v5686
    %v5688 = vld [vmem:[#allocation6 + $0x94] sm:$0x1]
    %v5689 = vsel %vm5633, 0, %v5688
    %5690 = vst [vmem:[#allocation6 + $0x94] sm:$0x1] %v5689
    %v5691 = vld [vmem:[#allocation6 + $0x9c] sm:$0x1]
    %v5692 = vsel %vm5633, 0, %v5691
    %5693 = vst [vmem:[#allocation6 + $0x9c] sm:$0x1] %v5692
    %v5702 = vunpack.c.l.b16 %v5556
    %v5703 = vunpack.c.h.b16 %v5556
    %v5704 = vunpack.c.l.b16 %v5557
    %v5705 = vunpack.c.h.b16 %v5557
    %v5706 = vunpack.c.l.b16 %v5558
    %v5707 = vunpack.c.h.b16 %v5558
    %v5708 = vunpack.c.l.b16 %v5559
    %v5709 = vunpack.c.h.b16 %v5559
    %v5710 = vunpack.c.l.b16 %v5560
    %v5711 = vunpack.c.h.b16 %v5560
    %v5712 = vunpack.c.l.b16 %v5561
    %v5713 = vunpack.c.h.b16 %v5561
    %v5714 = vunpack.c.l.b16 %v5562
    %v5715 = vunpack.c.h.b16 %v5562
    %v5716 = vunpack.c.l.b16 %v5563
    %v5717 = vunpack.c.h.b16 %v5563
    %v5718 = vpack.c.b16 %v5702, %v5702
    %v5719 = vpack.c.b16 %v5703, %v5703
    %v5720 = vpack.c.b16 %v5704, %v5704
    %v5721 = vpack.c.b16 %v5705, %v5705
    %v5722 = vpack.c.b16 %v5706, %v5706
    %v5723 = vpack.c.b16 %v5707, %v5707
    %v5724 = vpack.c.b16 %v5708, %v5708
    %v5725 = vpack.c.b16 %v5709, %v5709
    %v5726 = vpack.c.b16 %v5710, %v5710
    %v5727 = vpack.c.b16 %v5711, %v5711
    %v5728 = vpack.c.b16 %v5712, %v5712
    %v5729 = vpack.c.b16 %v5713, %v5713
    %v5730 = vpack.c.b16 %v5714, %v5714
    %v5731 = vpack.c.b16 %v5715, %v5715
    %v5732 = vpack.c.b16 %v5716, %v5716
    %v5733 = vpack.c.b16 %v5717, %v5717
    %v5735 = vshrl.u32 %v5718, 16
    %v5737 = vrot.slane %v5735, 7
    %v5738 = vshll.u32 %v5718, 16
    %v5740 = vor.u32 %v5737, %v5738
    %v5741 = vrot.slane %v5737, 4
    %v5743 = vshrl.u32 %v5719, 16
    %v5745 = vrot.slane %v5743, 7
    %v5746 = vshll.u32 %v5719, 16
    %v5748 = vor.u32 %v5745, %v5746
    %v5749 = vrot.slane %v5745, 4
    %v5751 = vshrl.u32 %v5720, 16
    %v5753 = vrot.slane %v5751, 7
    %v5754 = vshll.u32 %v5720, 16
    %v5756 = vor.u32 %v5753, %v5754
    %v5757 = vrot.slane %v5753, 4
    %v5759 = vshrl.u32 %v5721, 16
    %v5761 = vrot.slane %v5759, 7
    %v5762 = vshll.u32 %v5721, 16
    %v5764 = vor.u32 %v5761, %v5762
    %v5765 = vrot.slane %v5761, 4
    %v5767 = vshrl.u32 %v5722, 16
    %v5769 = vrot.slane %v5767, 7
    %v5770 = vshll.u32 %v5722, 16
    %v5772 = vor.u32 %v5769, %v5770
    %v5773 = vrot.slane %v5769, 4
    %v5775 = vshrl.u32 %v5723, 16
    %v5777 = vrot.slane %v5775, 7
    %v5778 = vshll.u32 %v5723, 16
    %v5780 = vor.u32 %v5777, %v5778
    %v5781 = vrot.slane %v5777, 4
    %v5783 = vshrl.u32 %v5724, 16
    %v5785 = vrot.slane %v5783, 7
    %v5786 = vshll.u32 %v5724, 16
    %v5788 = vor.u32 %v5785, %v5786
    %v5789 = vrot.slane %v5785, 4
    %v5791 = vshrl.u32 %v5725, 16
    %v5793 = vrot.slane %v5791, 7
    %v5794 = vshll.u32 %v5725, 16
    %v5796 = vor.u32 %v5793, %v5794
    %v5797 = vrot.slane %v5793, 4
    %v5799 = vshrl.u32 %v5726, 16
    %v5801 = vrot.slane %v5799, 7
    %v5802 = vshll.u32 %v5726, 16
    %v5804 = vor.u32 %v5801, %v5802
    %v5805 = vrot.slane %v5801, 4
    %v5807 = vshrl.u32 %v5727, 16
    %v5809 = vrot.slane %v5807, 7
    %v5810 = vshll.u32 %v5727, 16
    %v5812 = vor.u32 %v5809, %v5810
    %v5813 = vrot.slane %v5809, 4
    %v5815 = vshrl.u32 %v5728, 16
    %v5817 = vrot.slane %v5815, 7
    %v5818 = vshll.u32 %v5728, 16
    %v5820 = vor.u32 %v5817, %v5818
    %v5821 = vrot.slane %v5817, 4
    %v5823 = vshrl.u32 %v5729, 16
    %v5825 = vrot.slane %v5823, 7
    %v5826 = vshll.u32 %v5729, 16
    %v5828 = vor.u32 %v5825, %v5826
    %v5829 = vrot.slane %v5825, 4
    %v5831 = vshrl.u32 %v5730, 16
    %v5833 = vrot.slane %v5831, 7
    %v5834 = vshll.u32 %v5730, 16
    %v5836 = vor.u32 %v5833, %v5834
    %v5837 = vrot.slane %v5833, 4
    %v5839 = vshrl.u32 %v5731, 16
    %v5841 = vrot.slane %v5839, 7
    %v5842 = vshll.u32 %v5731, 16
    %v5844 = vor.u32 %v5841, %v5842
    %v5845 = vrot.slane %v5841, 4
    %v5847 = vshrl.u32 %v5732, 16
    %v5849 = vrot.slane %v5847, 7
    %v5850 = vshll.u32 %v5732, 16
    %v5852 = vor.u32 %v5849, %v5850
    %v5853 = vrot.slane %v5849, 4
    %v5855 = vshrl.u32 %v5733, 16
    %v5857 = vrot.slane %v5855, 7
    %v5858 = vshll.u32 %v5733, 16
    %v5860 = vor.u32 %v5857, %v5858
    %v5861 = vrot.slane %v5857, 4
    %s5894 = scalar_lea.vmem [#allocation6], 8
    %v5895 = vld [vmem:[%s5894] sm:$0xf]
    %v5896 = vsel %vm1229, %v5740, %v5895
    %5897 = vst [vmem:[%s5894] sm:$0xf] %v5896
    %v5898 = vld [vmem:[%s5894 + $0x4] sm:$0x1]
    %v5899 = vsel %vm1004, %v5741, %v5898
    %5900 = vst [vmem:[%s5894 + $0x4] sm:$0x1] %v5899
    %v5901 = vld [vmem:[%s5894 + $0x8] sm:$0xf]
    %v5902 = vsel %vm1229, %v5748, %v5901
    %5903 = vst [vmem:[%s5894 + $0x8] sm:$0xf] %v5902
    %v5904 = vld [vmem:[%s5894 + $0xc] sm:$0x1]
    %v5905 = vsel %vm1004, %v5749, %v5904
    %5906 = vst [vmem:[%s5894 + $0xc] sm:$0x1] %v5905
    %v5907 = vld [vmem:[%s5894 + $0x10] sm:$0xf]
    %v5908 = vsel %vm1229, %v5756, %v5907
    %5909 = vst [vmem:[%s5894 + $0x10] sm:$0xf] %v5908
    %v5910 = vld [vmem:[%s5894 + $0x14] sm:$0x1]
    %v5911 = vsel %vm1004, %v5757, %v5910
    %5912 = vst [vmem:[%s5894 + $0x14] sm:$0x1] %v5911
    %v5913 = vld [vmem:[%s5894 + $0x18] sm:$0xf]
    %v5914 = vsel %vm1229, %v5764, %v5913
    %5915 = vst [vmem:[%s5894 + $0x18] sm:$0xf] %v5914
    %v5916 = vld [vmem:[%s5894 + $0x1c] sm:$0x1]
    %v5917 = vsel %vm1004, %v5765, %v5916
    %5918 = vst [vmem:[%s5894 + $0x1c] sm:$0x1] %v5917
    %v5919 = vld [vmem:[%s5894 + $0x20] sm:$0xf]
    %v5920 = vsel %vm1229, %v5772, %v5919
    %5921 = vst [vmem:[%s5894 + $0x20] sm:$0xf] %v5920
    %v5922 = vld [vmem:[%s5894 + $0x24] sm:$0x1]
    %v5923 = vsel %vm1004, %v5773, %v5922
    %5924 = vst [vmem:[%s5894 + $0x24] sm:$0x1] %v5923
    %v5925 = vld [vmem:[%s5894 + $0x28] sm:$0xf]
    %v5926 = vsel %vm1229, %v5780, %v5925
    %5927 = vst [vmem:[%s5894 + $0x28] sm:$0xf] %v5926
    %v5928 = vld [vmem:[%s5894 + $0x2c] sm:$0x1]
    %v5929 = vsel %vm1004, %v5781, %v5928
    %5930 = vst [vmem:[%s5894 + $0x2c] sm:$0x1] %v5929
    %v5931 = vld [vmem:[%s5894 + $0x30] sm:$0xf]
    %v5932 = vsel %vm1229, %v5788, %v5931
    %5933 = vst [vmem:[%s5894 + $0x30] sm:$0xf] %v5932
    %v5934 = vld [vmem:[%s5894 + $0x34] sm:$0x1]
    %v5935 = vsel %vm1004, %v5789, %v5934
    %5936 = vst [vmem:[%s5894 + $0x34] sm:$0x1] %v5935
    %v5937 = vld [vmem:[%s5894 + $0x38] sm:$0xf]
    %v5938 = vsel %vm1229, %v5796, %v5937
    %5939 = vst [vmem:[%s5894 + $0x38] sm:$0xf] %v5938
    %v5940 = vld [vmem:[%s5894 + $0x3c] sm:$0x1]
    %v5941 = vsel %vm1004, %v5797, %v5940
    %5942 = vst [vmem:[%s5894 + $0x3c] sm:$0x1] %v5941
    %v5943 = vld [vmem:[%s5894 + $0x50] sm:$0xf]
    %v5944 = vsel %vm1229, %v5804, %v5943
    %5945 = vst [vmem:[%s5894 + $0x50] sm:$0xf] %v5944
    %v5946 = vld [vmem:[%s5894 + $0x54] sm:$0x1]
    %v5947 = vsel %vm1004, %v5805, %v5946
    %5948 = vst [vmem:[%s5894 + $0x54] sm:$0x1] %v5947
    %v5949 = vld [vmem:[%s5894 + $0x58] sm:$0xf]
    %v5950 = vsel %vm1229, %v5812, %v5949
    %5951 = vst [vmem:[%s5894 + $0x58] sm:$0xf] %v5950
    %v5952 = vld [vmem:[%s5894 + $0x5c] sm:$0x1]
    %v5953 = vsel %vm1004, %v5813, %v5952
    %5954 = vst [vmem:[%s5894 + $0x5c] sm:$0x1] %v5953
    %v5955 = vld [vmem:[%s5894 + $0x60] sm:$0xf]
    %v5956 = vsel %vm1229, %v5820, %v5955
    %5957 = vst [vmem:[%s5894 + $0x60] sm:$0xf] %v5956
    %v5958 = vld [vmem:[%s5894 + $0x64] sm:$0x1]
    %v5959 = vsel %vm1004, %v5821, %v5958
    %5960 = vst [vmem:[%s5894 + $0x64] sm:$0x1] %v5959
    %v5961 = vld [vmem:[%s5894 + $0x68] sm:$0xf]
    %v5962 = vsel %vm1229, %v5828, %v5961
    %5963 = vst [vmem:[%s5894 + $0x68] sm:$0xf] %v5962
    %v5964 = vld [vmem:[%s5894 + $0x6c] sm:$0x1]
    %v5965 = vsel %vm1004, %v5829, %v5964
    %5966 = vst [vmem:[%s5894 + $0x6c] sm:$0x1] %v5965
    %v5967 = vld [vmem:[%s5894 + $0x70] sm:$0xf]
    %v5968 = vsel %vm1229, %v5836, %v5967
    %5969 = vst [vmem:[%s5894 + $0x70] sm:$0xf] %v5968
    %v5970 = vld [vmem:[%s5894 + $0x74] sm:$0x1]
    %v5971 = vsel %vm1004, %v5837, %v5970
    %5972 = vst [vmem:[%s5894 + $0x74] sm:$0x1] %v5971
    %v5973 = vld [vmem:[%s5894 + $0x78] sm:$0xf]
    %v5974 = vsel %vm1229, %v5844, %v5973
    %5975 = vst [vmem:[%s5894 + $0x78] sm:$0xf] %v5974
    %v5976 = vld [vmem:[%s5894 + $0x7c] sm:$0x1]
    %v5977 = vsel %vm1004, %v5845, %v5976
    %5978 = vst [vmem:[%s5894 + $0x7c] sm:$0x1] %v5977
    %v5979 = vld [vmem:[%s5894 + $0x80] sm:$0xf]
    %v5980 = vsel %vm1229, %v5852, %v5979
    %5981 = vst [vmem:[%s5894 + $0x80] sm:$0xf] %v5980
    %v5982 = vld [vmem:[%s5894 + $0x84] sm:$0x1]
    %v5983 = vsel %vm1004, %v5853, %v5982
    %5984 = vst [vmem:[%s5894 + $0x84] sm:$0x1] %v5983
    %v5985 = vld [vmem:[%s5894 + $0x88] sm:$0xf]
    %v5986 = vsel %vm1229, %v5860, %v5985
    %5987 = vst [vmem:[%s5894 + $0x88] sm:$0xf] %v5986
    %v5988 = vld [vmem:[%s5894 + $0x8c] sm:$0x1]
    %v5989 = vsel %vm1004, %v5861, %v5988
    %5990 = vst [vmem:[%s5894 + $0x8c] sm:$0x1] %v5989
    %v5991 = vld [vmem:[#allocation6] sm:$0xf]
    %v5992 = vld [vmem:[#allocation6 + $0x8] sm:$0xf]
    %v5993 = vld [vmem:[#allocation6 + $0x10] sm:$0xf]
    %v5994 = vld [vmem:[#allocation6 + $0x18] sm:$0xf]
    %v5995 = vld [vmem:[#allocation6 + $0x20] sm:$0xf]
    %v5996 = vld [vmem:[#allocation6 + $0x28] sm:$0xf]
    %v5997 = vld [vmem:[#allocation6 + $0x30] sm:$0xf]
    %v5998 = vld [vmem:[#allocation6 + $0x38] sm:$0xf]
    %v5999 = vld [vmem:[#allocation6 + $0x50] sm:$0xf]
    %v6000 = vld [vmem:[#allocation6 + $0x58] sm:$0xf]
    %v6001 = vld [vmem:[#allocation6 + $0x60] sm:$0xf]
    %v6002 = vld [vmem:[#allocation6 + $0x68] sm:$0xf]
    %v6003 = vld [vmem:[#allocation6 + $0x70] sm:$0xf]
    %v6004 = vld [vmem:[#allocation6 + $0x78] sm:$0xf]
    %v6005 = vld [vmem:[#allocation6 + $0x80] sm:$0xf]
    %v6006 = vld [vmem:[#allocation6 + $0x88] sm:$0xf]
    %v6007 = vld [vmem:[#allocation6 + $0x4] sm:$0x1]
    %v6008 = vld [vmem:[#allocation6 + $0xc] sm:$0x1]
    %v6009 = vld [vmem:[#allocation6 + $0x14] sm:$0x1]
    %v6010 = vld [vmem:[#allocation6 + $0x1c] sm:$0x1]
    %v6011 = vld [vmem:[#allocation6 + $0x24] sm:$0x1]
    %v6012 = vld [vmem:[#allocation6 + $0x2c] sm:$0x1]
    %v6013 = vld [vmem:[#allocation6 + $0x34] sm:$0x1]
    %v6014 = vld [vmem:[#allocation6 + $0x3c] sm:$0x1]
    %v6015 = vld [vmem:[#allocation6 + $0x54] sm:$0x1]
    %v6016 = vld [vmem:[#allocation6 + $0x5c] sm:$0x1]
    %v6017 = vld [vmem:[#allocation6 + $0x64] sm:$0x1]
    %v6018 = vld [vmem:[#allocation6 + $0x6c] sm:$0x1]
    %v6019 = vld [vmem:[#allocation6 + $0x74] sm:$0x1]
    %v6020 = vld [vmem:[#allocation6 + $0x7c] sm:$0x1]
    %v6021 = vld [vmem:[#allocation6 + $0x84] sm:$0x1]
    %v6022 = vld [vmem:[#allocation6 + $0x8c] sm:$0x1]
    %v6024 = vshrl.u32 %v5991, 16
    %v6026 = vrot.slane %v6024, 4
    %v6027 = vshll.u32 %v5991, 16
    %v6029 = vrot.slane %v6027, 5
    %v6030 = vor.u32 %v6026, %v6029
    %v6031 = vrot.slane %v6030, 4
    %v6033 = vshll.u32 %v6007, 16
    %v6035 = vrot.slane %v6033, 5
    %v6036 = vsel %vm2398, %v6031, %v6035
    %v6038 = vshrl.u32 %v5992, 16
    %v6040 = vrot.slane %v6038, 4
    %v6041 = vshll.u32 %v5992, 16
    %v6043 = vrot.slane %v6041, 5
    %v6044 = vor.u32 %v6040, %v6043
    %v6045 = vrot.slane %v6044, 4
    %v6047 = vshll.u32 %v6008, 16
    %v6049 = vrot.slane %v6047, 5
    %v6050 = vsel %vm2398, %v6045, %v6049
    %v6052 = vshrl.u32 %v5993, 16
    %v6054 = vrot.slane %v6052, 4
    %v6055 = vshll.u32 %v5993, 16
    %v6057 = vrot.slane %v6055, 5
    %v6058 = vor.u32 %v6054, %v6057
    %v6059 = vrot.slane %v6058, 4
    %v6061 = vshll.u32 %v6009, 16
    %v6063 = vrot.slane %v6061, 5
    %v6064 = vsel %vm2398, %v6059, %v6063
    %v6066 = vshrl.u32 %v5994, 16
    %v6068 = vrot.slane %v6066, 4
    %v6069 = vshll.u32 %v5994, 16
    %v6071 = vrot.slane %v6069, 5
    %v6072 = vor.u32 %v6068, %v6071
    %v6073 = vrot.slane %v6072, 4
    %v6075 = vshll.u32 %v6010, 16
    %v6077 = vrot.slane %v6075, 5
    %v6078 = vsel %vm2398, %v6073, %v6077
    %v6080 = vshrl.u32 %v5995, 16
    %v6082 = vrot.slane %v6080, 4
    %v6083 = vshll.u32 %v5995, 16
    %v6085 = vrot.slane %v6083, 5
    %v6086 = vor.u32 %v6082, %v6085
    %v6087 = vrot.slane %v6086, 4
    %v6089 = vshll.u32 %v6011, 16
    %v6091 = vrot.slane %v6089, 5
    %v6092 = vsel %vm2398, %v6087, %v6091
    %v6094 = vshrl.u32 %v5996, 16
    %v6096 = vrot.slane %v6094, 4
    %v6097 = vshll.u32 %v5996, 16
    %v6099 = vrot.slane %v6097, 5
    %v6100 = vor.u32 %v6096, %v6099
    %v6101 = vrot.slane %v6100, 4
    %v6103 = vshll.u32 %v6012, 16
    %v6105 = vrot.slane %v6103, 5
    %v6106 = vsel %vm2398, %v6101, %v6105
    %v6108 = vshrl.u32 %v5997, 16
    %v6110 = vrot.slane %v6108, 4
    %v6111 = vshll.u32 %v5997, 16
    %v6113 = vrot.slane %v6111, 5
    %v6114 = vor.u32 %v6110, %v6113
    %v6115 = vrot.slane %v6114, 4
    %v6117 = vshll.u32 %v6013, 16
    %v6119 = vrot.slane %v6117, 5
    %v6120 = vsel %vm2398, %v6115, %v6119
    %v6122 = vshrl.u32 %v5998, 16
    %v6124 = vrot.slane %v6122, 4
    %v6125 = vshll.u32 %v5998, 16
    %v6127 = vrot.slane %v6125, 5
    %v6128 = vor.u32 %v6124, %v6127
    %v6129 = vrot.slane %v6128, 4
    %v6131 = vshll.u32 %v6014, 16
    %v6133 = vrot.slane %v6131, 5
    %v6134 = vsel %vm2398, %v6129, %v6133
    %v6136 = vshrl.u32 %v5999, 16
    %v6138 = vrot.slane %v6136, 4
    %v6139 = vshll.u32 %v5999, 16
    %v6141 = vrot.slane %v6139, 5
    %v6142 = vor.u32 %v6138, %v6141
    %v6143 = vrot.slane %v6142, 4
    %v6145 = vshll.u32 %v6015, 16
    %v6147 = vrot.slane %v6145, 5
    %v6148 = vsel %vm2398, %v6143, %v6147
    %v6150 = vshrl.u32 %v6000, 16
    %v6152 = vrot.slane %v6150, 4
    %v6153 = vshll.u32 %v6000, 16
    %v6155 = vrot.slane %v6153, 5
    %v6156 = vor.u32 %v6152, %v6155
    %v6157 = vrot.slane %v6156, 4
    %v6159 = vshll.u32 %v6016, 16
    %v6161 = vrot.slane %v6159, 5
    %v6162 = vsel %vm2398, %v6157, %v6161
    %v6164 = vshrl.u32 %v6001, 16
    %v6166 = vrot.slane %v6164, 4
    %v6167 = vshll.u32 %v6001, 16
    %v6169 = vrot.slane %v6167, 5
    %v6170 = vor.u32 %v6166, %v6169
    %v6171 = vrot.slane %v6170, 4
    %v6173 = vshll.u32 %v6017, 16
    %v6175 = vrot.slane %v6173, 5
    %v6176 = vsel %vm2398, %v6171, %v6175
    %v6178 = vshrl.u32 %v6002, 16
    %v6180 = vrot.slane %v6178, 4
    %v6181 = vshll.u32 %v6002, 16
    %v6183 = vrot.slane %v6181, 5
    %v6184 = vor.u32 %v6180, %v6183
    %v6185 = vrot.slane %v6184, 4
    %v6187 = vshll.u32 %v6018, 16
    %v6189 = vrot.slane %v6187, 5
    %v6190 = vsel %vm2398, %v6185, %v6189
    %v6192 = vshrl.u32 %v6003, 16
    %v6194 = vrot.slane %v6192, 4
    %v6195 = vshll.u32 %v6003, 16
    %v6197 = vrot.slane %v6195, 5
    %v6198 = vor.u32 %v6194, %v6197
    %v6199 = vrot.slane %v6198, 4
    %v6201 = vshll.u32 %v6019, 16
    %v6203 = vrot.slane %v6201, 5
    %v6204 = vsel %vm2398, %v6199, %v6203
    %v6206 = vshrl.u32 %v6004, 16
    %v6208 = vrot.slane %v6206, 4
    %v6209 = vshll.u32 %v6004, 16
    %v6211 = vrot.slane %v6209, 5
    %v6212 = vor.u32 %v6208, %v6211
    %v6213 = vrot.slane %v6212, 4
    %v6215 = vshll.u32 %v6020, 16
    %v6217 = vrot.slane %v6215, 5
    %v6218 = vsel %vm2398, %v6213, %v6217
    %v6220 = vshrl.u32 %v6005, 16
    %v6222 = vrot.slane %v6220, 4
    %v6223 = vshll.u32 %v6005, 16
    %v6225 = vrot.slane %v6223, 5
    %v6226 = vor.u32 %v6222, %v6225
    %v6227 = vrot.slane %v6226, 4
    %v6229 = vshll.u32 %v6021, 16
    %v6231 = vrot.slane %v6229, 5
    %v6232 = vsel %vm2398, %v6227, %v6231
    %v6234 = vshrl.u32 %v6006, 16
    %v6236 = vrot.slane %v6234, 4
    %v6237 = vshll.u32 %v6006, 16
    %v6239 = vrot.slane %v6237, 5
    %v6240 = vor.u32 %v6236, %v6239
    %v6241 = vrot.slane %v6240, 4
    %v6243 = vshll.u32 %v6022, 16
    %v6245 = vrot.slane %v6243, 5
    %v6246 = vsel %vm2398, %v6241, %v6245
    %v6247 = vld [vmem:[#allocation6] sm:$0xe]
    %v6248 = vld [vmem:[#allocation6 + $0x8] sm:$0xe]
    %v6249 = vld [vmem:[#allocation6 + $0x10] sm:$0xe]
    %v6250 = vld [vmem:[#allocation6 + $0x18] sm:$0xe]
    %v6251 = vld [vmem:[#allocation6 + $0x20] sm:$0xe]
    %v6252 = vld [vmem:[#allocation6 + $0x28] sm:$0xe]
    %v6253 = vld [vmem:[#allocation6 + $0x30] sm:$0xe]
    %v6254 = vld [vmem:[#allocation6 + $0x38] sm:$0xe]
    %v6255 = vld [vmem:[#allocation6 + $0x50] sm:$0xe]
    %v6256 = vld [vmem:[#allocation6 + $0x58] sm:$0xe]
    %v6257 = vld [vmem:[#allocation6 + $0x60] sm:$0xe]
    %v6258 = vld [vmem:[#allocation6 + $0x68] sm:$0xe]
    %v6259 = vld [vmem:[#allocation6 + $0x70] sm:$0xe]
    %v6260 = vld [vmem:[#allocation6 + $0x78] sm:$0xe]
    %v6261 = vld [vmem:[#allocation6 + $0x80] sm:$0xe]
    %v6262 = vld [vmem:[#allocation6 + $0x88] sm:$0xe]
    %vm6295 = vcmask 1042432
    %vm6296 = vcmask 1046532
    %vm6297 = vmor %vm6295, %vm6296
    %v6298 = vrot.slane %v6247, 5
    %v6299 = vrot.slane %v6298, 4
    %v6300 = vrot.slane %v6007, 5
    %v6301 = vsel %vm6297, %v6299, %v6300
    %v6302 = vrot.slane %v6248, 5
    %v6303 = vrot.slane %v6302, 4
    %v6304 = vrot.slane %v6008, 5
    %v6305 = vsel %vm6297, %v6303, %v6304
    %v6306 = vrot.slane %v6249, 5
    %v6307 = vrot.slane %v6306, 4
    %v6308 = vrot.slane %v6009, 5
    %v6309 = vsel %vm6297, %v6307, %v6308
    %v6310 = vrot.slane %v6250, 5
    %v6311 = vrot.slane %v6310, 4
    %v6312 = vrot.slane %v6010, 5
    %v6313 = vsel %vm6297, %v6311, %v6312
    %v6314 = vrot.slane %v6251, 5
    %v6315 = vrot.slane %v6314, 4
    %v6316 = vrot.slane %v6011, 5
    %v6317 = vsel %vm6297, %v6315, %v6316
    %v6318 = vrot.slane %v6252, 5
    %v6319 = vrot.slane %v6318, 4
    %v6320 = vrot.slane %v6012, 5
    %v6321 = vsel %vm6297, %v6319, %v6320
    %v6322 = vrot.slane %v6253, 5
    %v6323 = vrot.slane %v6322, 4
    %v6324 = vrot.slane %v6013, 5
    %v6325 = vsel %vm6297, %v6323, %v6324
    %v6326 = vrot.slane %v6254, 5
    %v6327 = vrot.slane %v6326, 4
    %v6328 = vrot.slane %v6014, 5
    %v6329 = vsel %vm6297, %v6327, %v6328
    %v6330 = vrot.slane %v6255, 5
    %v6331 = vrot.slane %v6330, 4
    %v6332 = vrot.slane %v6015, 5
    %v6333 = vsel %vm6297, %v6331, %v6332
    %v6334 = vrot.slane %v6256, 5
    %v6335 = vrot.slane %v6334, 4
    %v6336 = vrot.slane %v6016, 5
    %v6337 = vsel %vm6297, %v6335, %v6336
    %v6338 = vrot.slane %v6257, 5
    %v6339 = vrot.slane %v6338, 4
    %v6340 = vrot.slane %v6017, 5
    %v6341 = vsel %vm6297, %v6339, %v6340
    %v6342 = vrot.slane %v6258, 5
    %v6343 = vrot.slane %v6342, 4
    %v6344 = vrot.slane %v6018, 5
    %v6345 = vsel %vm6297, %v6343, %v6344
    %v6346 = vrot.slane %v6259, 5
    %v6347 = vrot.slane %v6346, 4
    %v6348 = vrot.slane %v6019, 5
    %v6349 = vsel %vm6297, %v6347, %v6348
    %v6350 = vrot.slane %v6260, 5
    %v6351 = vrot.slane %v6350, 4
    %v6352 = vrot.slane %v6020, 5
    %v6353 = vsel %vm6297, %v6351, %v6352
    %v6354 = vrot.slane %v6261, 5
    %v6355 = vrot.slane %v6354, 4
    %v6356 = vrot.slane %v6021, 5
    %v6357 = vsel %vm6297, %v6355, %v6356
    %v6358 = vrot.slane %v6262, 5
    %v6359 = vrot.slane %v6358, 4
    %v6360 = vrot.slane %v6022, 5
    %v6361 = vsel %vm6297, %v6359, %v6360
    %v6378 = vunpack.c.l.b16 %v5991
    %v6379 = vunpack.c.l.b16 %v5992
    %v6380 = vunpack.c.l.b16 %v5993
    %v6381 = vunpack.c.l.b16 %v5994
    %v6382 = vunpack.c.l.b16 %v5995
    %v6383 = vunpack.c.l.b16 %v5996
    %v6384 = vunpack.c.l.b16 %v5997
    %v6385 = vunpack.c.l.b16 %v5998
    %v6386 = vunpack.c.l.b16 %v5999
    %v6387 = vunpack.c.l.b16 %v6000
    %v6388 = vunpack.c.l.b16 %v6001
    %v6389 = vunpack.c.l.b16 %v6002
    %v6390 = vunpack.c.l.b16 %v6003
    %v6391 = vunpack.c.l.b16 %v6004
    %v6392 = vunpack.c.l.b16 %v6005
    %v6393 = vunpack.c.l.b16 %v6006
    %v6394 = vpack.c.b16 %v6379, %v6378
    %v6395 = vpack.c.b16 %v6381, %v6380
    %v6396 = vpack.c.b16 %v6383, %v6382
    %v6397 = vpack.c.b16 %v6385, %v6384
    %v6398 = vpack.c.b16 %v6387, %v6386
    %v6399 = vpack.c.b16 %v6389, %v6388
    %v6400 = vpack.c.b16 %v6391, %v6390
    %v6401 = vpack.c.b16 %v6393, %v6392
    %v6410 = vunpack.c.l.b16 %v6036
    %v6411 = vunpack.c.l.b16 %v6050
    %v6412 = vunpack.c.l.b16 %v6064
    %v6413 = vunpack.c.l.b16 %v6078
    %v6414 = vunpack.c.l.b16 %v6092
    %v6415 = vunpack.c.l.b16 %v6106
    %v6416 = vunpack.c.l.b16 %v6120
    %v6417 = vunpack.c.l.b16 %v6134
    %v6418 = vunpack.c.l.b16 %v6148
    %v6419 = vunpack.c.l.b16 %v6162
    %v6420 = vunpack.c.l.b16 %v6176
    %v6421 = vunpack.c.l.b16 %v6190
    %v6422 = vunpack.c.l.b16 %v6204
    %v6423 = vunpack.c.l.b16 %v6218
    %v6424 = vunpack.c.l.b16 %v6232
    %v6425 = vunpack.c.l.b16 %v6246
    %v6426 = vpack.c.b16 %v6411, %v6410
    %v6427 = vpack.c.b16 %v6413, %v6412
    %v6428 = vpack.c.b16 %v6415, %v6414
    %v6429 = vpack.c.b16 %v6417, %v6416
    %v6430 = vpack.c.b16 %v6419, %v6418
    %v6431 = vpack.c.b16 %v6421, %v6420
    %v6432 = vpack.c.b16 %v6423, %v6422
    %v6433 = vpack.c.b16 %v6425, %v6424
    %v6442 = vunpack.c.l.b16 %v6301
    %v6443 = vunpack.c.l.b16 %v6305
    %v6444 = vunpack.c.l.b16 %v6309
    %v6445 = vunpack.c.l.b16 %v6313
    %v6446 = vunpack.c.l.b16 %v6317
    %v6447 = vunpack.c.l.b16 %v6321
    %v6448 = vunpack.c.l.b16 %v6325
    %v6449 = vunpack.c.l.b16 %v6329
    %v6450 = vunpack.c.l.b16 %v6333
    %v6451 = vunpack.c.l.b16 %v6337
    %v6452 = vunpack.c.l.b16 %v6341
    %v6453 = vunpack.c.l.b16 %v6345
    %v6454 = vunpack.c.l.b16 %v6349
    %v6455 = vunpack.c.l.b16 %v6353
    %v6456 = vunpack.c.l.b16 %v6357
    %v6457 = vunpack.c.l.b16 %v6361
    %v6458 = vpack.c.b16 %v6443, %v6442
    %v6459 = vpack.c.b16 %v6445, %v6444
    %v6460 = vpack.c.b16 %v6447, %v6446
    %v6461 = vpack.c.b16 %v6449, %v6448
    %v6462 = vpack.c.b16 %v6451, %v6450
    %v6463 = vpack.c.b16 %v6453, %v6452
    %v6464 = vpack.c.b16 %v6455, %v6454
    %v6465 = vpack.c.b16 %v6457, %v6456
    %v6474 = vld [vmem:[#allocation12] sm:$0xf]
    %v6475 = vld [vmem:[#allocation12 + $0x4] sm:$0xf]
    %v6476 = vld [vmem:[#allocation12 + $0x8] sm:$0xf]
    %v6477 = vld [vmem:[#allocation12 + $0xc] sm:$0xf]
    %v6478 = vld [vmem:[#allocation12 + $0x10] sm:$0xf]
    %v6479 = vld [vmem:[#allocation12 + $0x14] sm:$0xf]
    %v6480 = vld [vmem:[#allocation12 + $0x18] sm:$0xf]
    %v6481 = vld [vmem:[#allocation12 + $0x1c] sm:$0xf]
    %v6482 = vld [vmem:[#allocation12 + $0x20] sm:$0xf]
    %v6483 = vld [vmem:[#allocation12 + $0x24] sm:$0xf]
    %v6484 = vld [vmem:[#allocation12 + $0x28] sm:$0xf]
    %v6485 = vld [vmem:[#allocation12 + $0x2c] sm:$0xf]
    %v6486 = vld [vmem:[#allocation12 + $0x30] sm:$0xf]
    %v6487 = vld [vmem:[#allocation12 + $0x34] sm:$0xf]
    %v6488 = vld [vmem:[#allocation12 + $0x38] sm:$0xf]
    %v6489 = vld [vmem:[#allocation12 + $0x3c] sm:$0xf]
    %v6490 = vld [vmem:[#allocation12 + $0x40] sm:$0xf]
    %v6491 = vld [vmem:[#allocation12 + $0x44] sm:$0xf]
    %v6492 = vld [vmem:[#allocation12 + $0x48] sm:$0xf]
    %v6493 = vld [vmem:[#allocation12 + $0x4c] sm:$0xf]
    %v6494 = vld [vmem:[#allocation12 + $0x50] sm:$0xf]
    %v6495 = vld [vmem:[#allocation12 + $0x54] sm:$0xf]
    %v6496 = vld [vmem:[#allocation12 + $0x58] sm:$0xf]
    %v6497 = vld [vmem:[#allocation12 + $0x5c] sm:$0xf]
    %v6498 = vld [vmem:[#allocation12 + $0x60] sm:$0xf]
    %v6499 = vld [vmem:[#allocation12 + $0x64] sm:$0xf]
    %v6500 = vld [vmem:[#allocation12 + $0x68] sm:$0xf]
    %v6501 = vld [vmem:[#allocation12 + $0x6c] sm:$0xf]
    %v6502 = vld [vmem:[#allocation12 + $0x70] sm:$0xf]
    %v6503 = vld [vmem:[#allocation12 + $0x74] sm:$0xf]
    %v6504 = vld [vmem:[#allocation12 + $0x78] sm:$0xf]
    %v6505 = vld [vmem:[#allocation12 + $0x7c] sm:$0xf]
    %v6506 = vld [vmem:[#allocation12 + $0x80] sm:$0xf]
    %v6507 = vld [vmem:[#allocation12 + $0x84] sm:$0xf]
    %v6508 = vld [vmem:[#allocation12 + $0x88] sm:$0xf]
    %v6509 = vld [vmem:[#allocation12 + $0x8c] sm:$0xf]
    %v6510 = vld [vmem:[#allocation12 + $0x90] sm:$0xf]
    %v6511 = vld [vmem:[#allocation12 + $0x94] sm:$0xf]
    %v6512 = vld [vmem:[#allocation12 + $0x98] sm:$0xf]
    %v6513 = vld [vmem:[#allocation12 + $0x9c] sm:$0xf]
    %v6514 = vld [vmem:[#allocation12 + $0xa0] sm:$0xf]
    %v6515 = vld [vmem:[#allocation12 + $0xa4] sm:$0xf]
    %v6516 = vld [vmem:[#allocation12 + $0xa8] sm:$0xf]
    %v6517 = vld [vmem:[#allocation12 + $0xac] sm:$0xf]
    %v6518 = vld [vmem:[#allocation12 + $0xb0] sm:$0xf]
    %v6519 = vld [vmem:[#allocation12 + $0xb4] sm:$0xf]
    %v6520 = vld [vmem:[#allocation12 + $0xb8] sm:$0xf]
    %v6521 = vld [vmem:[#allocation12 + $0xbc] sm:$0xf]
    %v6522 = vld [vmem:[%s5894] sm:$0xf]
    %v6523 = vld [vmem:[%s5894 + $0x8] sm:$0xf]
    %v6524 = vld [vmem:[%s5894 + $0x10] sm:$0xf]
    %v6525 = vld [vmem:[%s5894 + $0x18] sm:$0xf]
    %v6526 = vld [vmem:[%s5894 + $0x20] sm:$0xf]
    %v6527 = vld [vmem:[%s5894 + $0x28] sm:$0xf]
    %v6528 = vld [vmem:[%s5894 + $0x30] sm:$0xf]
    %v6529 = vld [vmem:[%s5894 + $0x38] sm:$0xf]
    %v6530 = vld [vmem:[%s5894 + $0x50] sm:$0xf]
    %v6531 = vld [vmem:[%s5894 + $0x58] sm:$0xf]
    %v6532 = vld [vmem:[%s5894 + $0x60] sm:$0xf]
    %v6533 = vld [vmem:[%s5894 + $0x68] sm:$0xf]
    %v6534 = vld [vmem:[%s5894 + $0x70] sm:$0xf]
    %v6535 = vld [vmem:[%s5894 + $0x78] sm:$0xf]
    %v6536 = vld [vmem:[%s5894 + $0x80] sm:$0xf]
    %v6537 = vld [vmem:[%s5894 + $0x88] sm:$0xf]
    %v6538 = vld [vmem:[%s5894 + $0x4] sm:$0x1]
    %v6539 = vld [vmem:[%s5894 + $0xc] sm:$0x1]
    %v6540 = vld [vmem:[%s5894 + $0x14] sm:$0x1]
    %v6541 = vld [vmem:[%s5894 + $0x1c] sm:$0x1]
    %v6542 = vld [vmem:[%s5894 + $0x24] sm:$0x1]
    %v6543 = vld [vmem:[%s5894 + $0x2c] sm:$0x1]
    %v6544 = vld [vmem:[%s5894 + $0x34] sm:$0x1]
    %v6545 = vld [vmem:[%s5894 + $0x3c] sm:$0x1]
    %v6546 = vld [vmem:[%s5894 + $0x54] sm:$0x1]
    %v6547 = vld [vmem:[%s5894 + $0x5c] sm:$0x1]
    %v6548 = vld [vmem:[%s5894 + $0x64] sm:$0x1]
    %v6549 = vld [vmem:[%s5894 + $0x6c] sm:$0x1]
    %v6550 = vld [vmem:[%s5894 + $0x74] sm:$0x1]
    %v6551 = vld [vmem:[%s5894 + $0x7c] sm:$0x1]
    %v6552 = vld [vmem:[%s5894 + $0x84] sm:$0x1]
    %v6553 = vld [vmem:[%s5894 + $0x8c] sm:$0x1]
    %v6555 = vshrl.u32 %v6522, 16
    %v6557 = vrot.slane %v6555, 4
    %v6558 = vshll.u32 %v6522, 16
    %v6560 = vrot.slane %v6558, 5
    %v6561 = vor.u32 %v6557, %v6560
    %v6562 = vrot.slane %v6561, 4
    %v6564 = vshll.u32 %v6538, 16
    %v6566 = vrot.slane %v6564, 5
    %v6567 = vsel %vm2398, %v6562, %v6566
    %v6569 = vshrl.u32 %v6523, 16
    %v6571 = vrot.slane %v6569, 4
    %v6572 = vshll.u32 %v6523, 16
    %v6574 = vrot.slane %v6572, 5
    %v6575 = vor.u32 %v6571, %v6574
    %v6576 = vrot.slane %v6575, 4
    %v6578 = vshll.u32 %v6539, 16
    %v6580 = vrot.slane %v6578, 5
    %v6581 = vsel %vm2398, %v6576, %v6580
    %v6583 = vshrl.u32 %v6524, 16
    %v6585 = vrot.slane %v6583, 4
    %v6586 = vshll.u32 %v6524, 16
    %v6588 = vrot.slane %v6586, 5
    %v6589 = vor.u32 %v6585, %v6588
    %v6590 = vrot.slane %v6589, 4
    %v6592 = vshll.u32 %v6540, 16
    %v6594 = vrot.slane %v6592, 5
    %v6595 = vsel %vm2398, %v6590, %v6594
    %v6597 = vshrl.u32 %v6525, 16
    %v6599 = vrot.slane %v6597, 4
    %v6600 = vshll.u32 %v6525, 16
    %v6602 = vrot.slane %v6600, 5
    %v6603 = vor.u32 %v6599, %v6602
    %v6604 = vrot.slane %v6603, 4
    %v6606 = vshll.u32 %v6541, 16
    %v6608 = vrot.slane %v6606, 5
    %v6609 = vsel %vm2398, %v6604, %v6608
    %v6611 = vshrl.u32 %v6526, 16
    %v6613 = vrot.slane %v6611, 4
    %v6614 = vshll.u32 %v6526, 16
    %v6616 = vrot.slane %v6614, 5
    %v6617 = vor.u32 %v6613, %v6616
    %v6618 = vrot.slane %v6617, 4
    %v6620 = vshll.u32 %v6542, 16
    %v6622 = vrot.slane %v6620, 5
    %v6623 = vsel %vm2398, %v6618, %v6622
    %v6625 = vshrl.u32 %v6527, 16
    %v6627 = vrot.slane %v6625, 4
    %v6628 = vshll.u32 %v6527, 16
    %v6630 = vrot.slane %v6628, 5
    %v6631 = vor.u32 %v6627, %v6630
    %v6632 = vrot.slane %v6631, 4
    %v6634 = vshll.u32 %v6543, 16
    %v6636 = vrot.slane %v6634, 5
    %v6637 = vsel %vm2398, %v6632, %v6636
    %v6639 = vshrl.u32 %v6528, 16
    %v6641 = vrot.slane %v6639, 4
    %v6642 = vshll.u32 %v6528, 16
    %v6644 = vrot.slane %v6642, 5
    %v6645 = vor.u32 %v6641, %v6644
    %v6646 = vrot.slane %v6645, 4
    %v6648 = vshll.u32 %v6544, 16
    %v6650 = vrot.slane %v6648, 5
    %v6651 = vsel %vm2398, %v6646, %v6650
    %v6653 = vshrl.u32 %v6529, 16
    %v6655 = vrot.slane %v6653, 4
    %v6656 = vshll.u32 %v6529, 16
    %v6658 = vrot.slane %v6656, 5
    %v6659 = vor.u32 %v6655, %v6658
    %v6660 = vrot.slane %v6659, 4
    %v6662 = vshll.u32 %v6545, 16
    %v6664 = vrot.slane %v6662, 5
    %v6665 = vsel %vm2398, %v6660, %v6664
    %v6667 = vshrl.u32 %v6530, 16
    %v6669 = vrot.slane %v6667, 4
    %v6670 = vshll.u32 %v6530, 16
    %v6672 = vrot.slane %v6670, 5
    %v6673 = vor.u32 %v6669, %v6672
    %v6674 = vrot.slane %v6673, 4
    %v6676 = vshll.u32 %v6546, 16
    %v6678 = vrot.slane %v6676, 5
    %v6679 = vsel %vm2398, %v6674, %v6678
    %v6681 = vshrl.u32 %v6531, 16
    %v6683 = vrot.slane %v6681, 4
    %v6684 = vshll.u32 %v6531, 16
    %v6686 = vrot.slane %v6684, 5
    %v6687 = vor.u32 %v6683, %v6686
    %v6688 = vrot.slane %v6687, 4
    %v6690 = vshll.u32 %v6547, 16
    %v6692 = vrot.slane %v6690, 5
    %v6693 = vsel %vm2398, %v6688, %v6692
    %v6695 = vshrl.u32 %v6532, 16
    %v6697 = vrot.slane %v6695, 4
    %v6698 = vshll.u32 %v6532, 16
    %v6700 = vrot.slane %v6698, 5
    %v6701 = vor.u32 %v6697, %v6700
    %v6702 = vrot.slane %v6701, 4
    %v6704 = vshll.u32 %v6548, 16
    %v6706 = vrot.slane %v6704, 5
    %v6707 = vsel %vm2398, %v6702, %v6706
    %v6709 = vshrl.u32 %v6533, 16
    %v6711 = vrot.slane %v6709, 4
    %v6712 = vshll.u32 %v6533, 16
    %v6714 = vrot.slane %v6712, 5
    %v6715 = vor.u32 %v6711, %v6714
    %v6716 = vrot.slane %v6715, 4
    %v6718 = vshll.u32 %v6549, 16
    %v6720 = vrot.slane %v6718, 5
    %v6721 = vsel %vm2398, %v6716, %v6720
    %v6723 = vshrl.u32 %v6534, 16
    %v6725 = vrot.slane %v6723, 4
    %v6726 = vshll.u32 %v6534, 16
    %v6728 = vrot.slane %v6726, 5
    %v6729 = vor.u32 %v6725, %v6728
    %v6730 = vrot.slane %v6729, 4
    %v6732 = vshll.u32 %v6550, 16
    %v6734 = vrot.slane %v6732, 5
    %v6735 = vsel %vm2398, %v6730, %v6734
    %v6737 = vshrl.u32 %v6535, 16
    %v6739 = vrot.slane %v6737, 4
    %v6740 = vshll.u32 %v6535, 16
    %v6742 = vrot.slane %v6740, 5
    %v6743 = vor.u32 %v6739, %v6742
    %v6744 = vrot.slane %v6743, 4
    %v6746 = vshll.u32 %v6551, 16
    %v6748 = vrot.slane %v6746, 5
    %v6749 = vsel %vm2398, %v6744, %v6748
    %v6751 = vshrl.u32 %v6536, 16
    %v6753 = vrot.slane %v6751, 4
    %v6754 = vshll.u32 %v6536, 16
    %v6756 = vrot.slane %v6754, 5
    %v6757 = vor.u32 %v6753, %v6756
    %v6758 = vrot.slane %v6757, 4
    %v6760 = vshll.u32 %v6552, 16
    %v6762 = vrot.slane %v6760, 5
    %v6763 = vsel %vm2398, %v6758, %v6762
    %v6765 = vshrl.u32 %v6537, 16
    %v6767 = vrot.slane %v6765, 4
    %v6768 = vshll.u32 %v6537, 16
    %v6770 = vrot.slane %v6768, 5
    %v6771 = vor.u32 %v6767, %v6770
    %v6772 = vrot.slane %v6771, 4
    %v6774 = vshll.u32 %v6553, 16
    %v6776 = vrot.slane %v6774, 5
    %v6777 = vsel %vm2398, %v6772, %v6776
    %v6778 = vld [vmem:[%s5894] sm:$0xe]
    %v6779 = vld [vmem:[%s5894 + $0x8] sm:$0xe]
    %v6780 = vld [vmem:[%s5894 + $0x10] sm:$0xe]
    %v6781 = vld [vmem:[%s5894 + $0x18] sm:$0xe]
    %v6782 = vld [vmem:[%s5894 + $0x20] sm:$0xe]
    %v6783 = vld [vmem:[%s5894 + $0x28] sm:$0xe]
    %v6784 = vld [vmem:[%s5894 + $0x30] sm:$0xe]
    %v6785 = vld [vmem:[%s5894 + $0x38] sm:$0xe]
    %v6786 = vld [vmem:[%s5894 + $0x50] sm:$0xe]
    %v6787 = vld [vmem:[%s5894 + $0x58] sm:$0xe]
    %v6788 = vld [vmem:[%s5894 + $0x60] sm:$0xe]
    %v6789 = vld [vmem:[%s5894 + $0x68] sm:$0xe]
    %v6790 = vld [vmem:[%s5894 + $0x70] sm:$0xe]
    %v6791 = vld [vmem:[%s5894 + $0x78] sm:$0xe]
    %v6792 = vld [vmem:[%s5894 + $0x80] sm:$0xe]
    %v6793 = vld [vmem:[%s5894 + $0x88] sm:$0xe]
    %v6826 = vrot.slane %v6778, 5
    %v6827 = vrot.slane %v6826, 4
    %v6828 = vrot.slane %v6538, 5
    %v6829 = vsel %vm6297, %v6827, %v6828
    %v6830 = vrot.slane %v6779, 5
    %v6831 = vrot.slane %v6830, 4
    %v6832 = vrot.slane %v6539, 5
    %v6833 = vsel %vm6297, %v6831, %v6832
    %v6834 = vrot.slane %v6780, 5
    %v6835 = vrot.slane %v6834, 4
    %v6836 = vrot.slane %v6540, 5
    %v6837 = vsel %vm6297, %v6835, %v6836
    %v6838 = vrot.slane %v6781, 5
    %v6839 = vrot.slane %v6838, 4
    %v6840 = vrot.slane %v6541, 5
    %v6841 = vsel %vm6297, %v6839, %v6840
    %v6842 = vrot.slane %v6782, 5
    %v6843 = vrot.slane %v6842, 4
    %v6844 = vrot.slane %v6542, 5
    %v6845 = vsel %vm6297, %v6843, %v6844
    %v6846 = vrot.slane %v6783, 5
    %v6847 = vrot.slane %v6846, 4
    %v6848 = vrot.slane %v6543, 5
    %v6849 = vsel %vm6297, %v6847, %v6848
    %v6850 = vrot.slane %v6784, 5
    %v6851 = vrot.slane %v6850, 4
    %v6852 = vrot.slane %v6544, 5
    %v6853 = vsel %vm6297, %v6851, %v6852
    %v6854 = vrot.slane %v6785, 5
    %v6855 = vrot.slane %v6854, 4
    %v6856 = vrot.slane %v6545, 5
    %v6857 = vsel %vm6297, %v6855, %v6856
    %v6858 = vrot.slane %v6786, 5
    %v6859 = vrot.slane %v6858, 4
    %v6860 = vrot.slane %v6546, 5
    %v6861 = vsel %vm6297, %v6859, %v6860
    %v6862 = vrot.slane %v6787, 5
    %v6863 = vrot.slane %v6862, 4
    %v6864 = vrot.slane %v6547, 5
    %v6865 = vsel %vm6297, %v6863, %v6864
    %v6866 = vrot.slane %v6788, 5
    %v6867 = vrot.slane %v6866, 4
    %v6868 = vrot.slane %v6548, 5
    %v6869 = vsel %vm6297, %v6867, %v6868
    %v6870 = vrot.slane %v6789, 5
    %v6871 = vrot.slane %v6870, 4
    %v6872 = vrot.slane %v6549, 5
    %v6873 = vsel %vm6297, %v6871, %v6872
    %v6874 = vrot.slane %v6790, 5
    %v6875 = vrot.slane %v6874, 4
    %v6876 = vrot.slane %v6550, 5
    %v6877 = vsel %vm6297, %v6875, %v6876
    %v6878 = vrot.slane %v6791, 5
    %v6879 = vrot.slane %v6878, 4
    %v6880 = vrot.slane %v6551, 5
    %v6881 = vsel %vm6297, %v6879, %v6880
    %v6882 = vrot.slane %v6792, 5
    %v6883 = vrot.slane %v6882, 4
    %v6884 = vrot.slane %v6552, 5
    %v6885 = vsel %vm6297, %v6883, %v6884
    %v6886 = vrot.slane %v6793, 5
    %v6887 = vrot.slane %v6886, 4
    %v6888 = vrot.slane %v6553, 5
    %v6889 = vsel %vm6297, %v6887, %v6888
    %v6906 = vunpack.c.l.b16 %v6522
    %v6907 = vunpack.c.l.b16 %v6523
    %v6908 = vunpack.c.l.b16 %v6524
    %v6909 = vunpack.c.l.b16 %v6525
    %v6910 = vunpack.c.l.b16 %v6526
    %v6911 = vunpack.c.l.b16 %v6527
    %v6912 = vunpack.c.l.b16 %v6528
    %v6913 = vunpack.c.l.b16 %v6529
    %v6914 = vunpack.c.l.b16 %v6530
    %v6915 = vunpack.c.l.b16 %v6531
    %v6916 = vunpack.c.l.b16 %v6532
    %v6917 = vunpack.c.l.b16 %v6533
    %v6918 = vunpack.c.l.b16 %v6534
    %v6919 = vunpack.c.l.b16 %v6535
    %v6920 = vunpack.c.l.b16 %v6536
    %v6921 = vunpack.c.l.b16 %v6537
    %v6922 = vpack.c.b16 %v6907, %v6906
    %v6923 = vpack.c.b16 %v6909, %v6908
    %v6924 = vpack.c.b16 %v6911, %v6910
    %v6925 = vpack.c.b16 %v6913, %v6912
    %v6926 = vpack.c.b16 %v6915, %v6914
    %v6927 = vpack.c.b16 %v6917, %v6916
    %v6928 = vpack.c.b16 %v6919, %v6918
    %v6929 = vpack.c.b16 %v6921, %v6920
    %v6938 = vunpack.c.l.b16 %v6567
    %v6939 = vunpack.c.l.b16 %v6581
    %v6940 = vunpack.c.l.b16 %v6595
    %v6941 = vunpack.c.l.b16 %v6609
    %v6942 = vunpack.c.l.b16 %v6623
    %v6943 = vunpack.c.l.b16 %v6637
    %v6944 = vunpack.c.l.b16 %v6651
    %v6945 = vunpack.c.l.b16 %v6665
    %v6946 = vunpack.c.l.b16 %v6679
    %v6947 = vunpack.c.l.b16 %v6693
    %v6948 = vunpack.c.l.b16 %v6707
    %v6949 = vunpack.c.l.b16 %v6721
    %v6950 = vunpack.c.l.b16 %v6735
    %v6951 = vunpack.c.l.b16 %v6749
    %v6952 = vunpack.c.l.b16 %v6763
    %v6953 = vunpack.c.l.b16 %v6777
    %v6954 = vpack.c.b16 %v6939, %v6938
    %v6955 = vpack.c.b16 %v6941, %v6940
    %v6956 = vpack.c.b16 %v6943, %v6942
    %v6957 = vpack.c.b16 %v6945, %v6944
    %v6958 = vpack.c.b16 %v6947, %v6946
    %v6959 = vpack.c.b16 %v6949, %v6948
    %v6960 = vpack.c.b16 %v6951, %v6950
    %v6961 = vpack.c.b16 %v6953, %v6952
    %v6970 = vunpack.c.l.b16 %v6829
    %v6971 = vunpack.c.l.b16 %v6833
    %v6972 = vunpack.c.l.b16 %v6837
    %v6973 = vunpack.c.l.b16 %v6841
    %v6974 = vunpack.c.l.b16 %v6845
    %v6975 = vunpack.c.l.b16 %v6849
    %v6976 = vunpack.c.l.b16 %v6853
    %v6977 = vunpack.c.l.b16 %v6857
    %v6978 = vunpack.c.l.b16 %v6861
    %v6979 = vunpack.c.l.b16 %v6865
    %v6980 = vunpack.c.l.b16 %v6869
    %v6981 = vunpack.c.l.b16 %v6873
    %v6982 = vunpack.c.l.b16 %v6877
    %v6983 = vunpack.c.l.b16 %v6881
    %v6984 = vunpack.c.l.b16 %v6885
    %v6985 = vunpack.c.l.b16 %v6889
    %v6986 = vpack.c.b16 %v6971, %v6970
    %v6987 = vpack.c.b16 %v6973, %v6972
    %v6988 = vpack.c.b16 %v6975, %v6974
    %v6989 = vpack.c.b16 %v6977, %v6976
    %v6990 = vpack.c.b16 %v6979, %v6978
    %v6991 = vpack.c.b16 %v6981, %v6980
    %v6992 = vpack.c.b16 %v6983, %v6982
    %v6993 = vpack.c.b16 %v6985, %v6984
    %s7002 = scalar_lea.vmem [#allocation12], 192
    %v7003 = vld [vmem:[%s7002] sm:$0xf]
    %v7004 = vld [vmem:[%s7002 + $0x4] sm:$0xf]
    %v7005 = vld [vmem:[%s7002 + $0x8] sm:$0xf]
    %v7006 = vld [vmem:[%s7002 + $0xc] sm:$0xf]
    %v7007 = vld [vmem:[%s7002 + $0x10] sm:$0xf]
    %v7008 = vld [vmem:[%s7002 + $0x14] sm:$0xf]
    %v7009 = vld [vmem:[%s7002 + $0x18] sm:$0xf]
    %v7010 = vld [vmem:[%s7002 + $0x1c] sm:$0xf]
    %v7011 = vld [vmem:[%s7002 + $0x20] sm:$0xf]
    %v7012 = vld [vmem:[%s7002 + $0x24] sm:$0xf]
    %v7013 = vld [vmem:[%s7002 + $0x28] sm:$0xf]
    %v7014 = vld [vmem:[%s7002 + $0x2c] sm:$0xf]
    %v7015 = vld [vmem:[%s7002 + $0x30] sm:$0xf]
    %v7016 = vld [vmem:[%s7002 + $0x34] sm:$0xf]
    %v7017 = vld [vmem:[%s7002 + $0x38] sm:$0xf]
    %v7018 = vld [vmem:[%s7002 + $0x3c] sm:$0xf]
    %v7019 = vld [vmem:[%s7002 + $0x40] sm:$0xf]
    %v7020 = vld [vmem:[%s7002 + $0x44] sm:$0xf]
    %v7021 = vld [vmem:[%s7002 + $0x48] sm:$0xf]
    %v7022 = vld [vmem:[%s7002 + $0x4c] sm:$0xf]
    %v7023 = vld [vmem:[%s7002 + $0x50] sm:$0xf]
    %v7024 = vld [vmem:[%s7002 + $0x54] sm:$0xf]
    %v7025 = vld [vmem:[%s7002 + $0x58] sm:$0xf]
    %v7026 = vld [vmem:[%s7002 + $0x5c] sm:$0xf]
    %v7027 = vld [vmem:[%s7002 + $0x60] sm:$0xf]
    %v7028 = vld [vmem:[%s7002 + $0x64] sm:$0xf]
    %v7029 = vld [vmem:[%s7002 + $0x68] sm:$0xf]
    %v7030 = vld [vmem:[%s7002 + $0x6c] sm:$0xf]
    %v7031 = vld [vmem:[%s7002 + $0x70] sm:$0xf]
    %v7032 = vld [vmem:[%s7002 + $0x74] sm:$0xf]
    %v7033 = vld [vmem:[%s7002 + $0x78] sm:$0xf]
    %v7034 = vld [vmem:[%s7002 + $0x7c] sm:$0xf]
    %v7035 = vld [vmem:[%s7002 + $0x80] sm:$0xf]
    %v7036 = vld [vmem:[%s7002 + $0x84] sm:$0xf]
    %v7037 = vld [vmem:[%s7002 + $0x88] sm:$0xf]
    %v7038 = vld [vmem:[%s7002 + $0x8c] sm:$0xf]
    %v7039 = vld [vmem:[%s7002 + $0x90] sm:$0xf]
    %v7040 = vld [vmem:[%s7002 + $0x94] sm:$0xf]
    %v7041 = vld [vmem:[%s7002 + $0x98] sm:$0xf]
    %v7042 = vld [vmem:[%s7002 + $0x9c] sm:$0xf]
    %v7043 = vld [vmem:[%s7002 + $0xa0] sm:$0xf]
    %v7044 = vld [vmem:[%s7002 + $0xa4] sm:$0xf]
    %v7045 = vld [vmem:[%s7002 + $0xa8] sm:$0xf]
    %v7046 = vld [vmem:[%s7002 + $0xac] sm:$0xf]
    %v7047 = vld [vmem:[%s7002 + $0xb0] sm:$0xf]
    %v7048 = vld [vmem:[%s7002 + $0xb4] sm:$0xf]
    %v7049 = vld [vmem:[%s7002 + $0xb8] sm:$0xf]
    %v7050 = vld [vmem:[%s7002 + $0xbc] sm:$0xf]
    %v7099 = vunpack.c.l.b16 %v7003
    %v7100 = vunpack.c.l.b16 %v7004
    %v7101 = vunpack.c.l.b16 %v7005
    %v7102 = vunpack.c.l.b16 %v7006
    %v7103 = vunpack.c.l.b16 %v7007
    %v7104 = vunpack.c.l.b16 %v7008
    %v7105 = vunpack.c.l.b16 %v7009
    %v7106 = vunpack.c.l.b16 %v7010
    %v7107 = vunpack.c.l.b16 %v7011
    %v7108 = vunpack.c.l.b16 %v7012
    %v7109 = vunpack.c.l.b16 %v7013
    %v7110 = vunpack.c.l.b16 %v7014
    %v7111 = vunpack.c.l.b16 %v7015
    %v7112 = vunpack.c.l.b16 %v7016
    %v7113 = vunpack.c.l.b16 %v7017
    %v7114 = vunpack.c.l.b16 %v7018
    %v7115 = vunpack.c.l.b16 %v7019
    %v7116 = vunpack.c.l.b16 %v7020
    %v7117 = vunpack.c.l.b16 %v7021
    %v7118 = vunpack.c.l.b16 %v7022
    %v7119 = vunpack.c.l.b16 %v7023
    %v7120 = vunpack.c.l.b16 %v7024
    %v7121 = vunpack.c.l.b16 %v7025
    %v7122 = vunpack.c.l.b16 %v7026
    %v7123 = vunpack.c.l.b16 %v7027
    %v7124 = vunpack.c.l.b16 %v7028
    %v7125 = vunpack.c.l.b16 %v7029
    %v7126 = vunpack.c.l.b16 %v7030
    %v7127 = vunpack.c.l.b16 %v7031
    %v7128 = vunpack.c.l.b16 %v7032
    %v7129 = vunpack.c.l.b16 %v7033
    %v7130 = vunpack.c.l.b16 %v7034
    %v7131 = vunpack.c.l.b16 %v7035
    %v7132 = vunpack.c.l.b16 %v7036
    %v7133 = vunpack.c.l.b16 %v7037
    %v7134 = vunpack.c.l.b16 %v7038
    %v7135 = vunpack.c.l.b16 %v7039
    %v7136 = vunpack.c.l.b16 %v7040
    %v7137 = vunpack.c.l.b16 %v7041
    %v7138 = vunpack.c.l.b16 %v7042
    %v7139 = vunpack.c.l.b16 %v7043
    %v7140 = vunpack.c.l.b16 %v7044
    %v7141 = vunpack.c.l.b16 %v7045
    %v7142 = vunpack.c.l.b16 %v7046
    %v7143 = vunpack.c.l.b16 %v7047
    %v7144 = vunpack.c.l.b16 %v7048
    %v7145 = vunpack.c.l.b16 %v7049
    %v7146 = vunpack.c.l.b16 %v7050
    %v7147 = vpack.c.b16 %v7100, %v7099
    %v7148 = vpack.c.b16 %v7102, %v7101
    %v7149 = vpack.c.b16 %v7104, %v7103
    %v7150 = vpack.c.b16 %v7106, %v7105
    %v7151 = vpack.c.b16 %v7108, %v7107
    %v7152 = vpack.c.b16 %v7110, %v7109
    %v7153 = vpack.c.b16 %v7112, %v7111
    %v7154 = vpack.c.b16 %v7114, %v7113
    %v7155 = vpack.c.b16 %v7116, %v7115
    %v7156 = vpack.c.b16 %v7118, %v7117
    %v7157 = vpack.c.b16 %v7120, %v7119
    %v7158 = vpack.c.b16 %v7122, %v7121
    %v7159 = vpack.c.b16 %v7124, %v7123
    %v7160 = vpack.c.b16 %v7126, %v7125
    %v7161 = vpack.c.b16 %v7128, %v7127
    %v7162 = vpack.c.b16 %v7130, %v7129
    %v7163 = vpack.c.b16 %v7132, %v7131
    %v7164 = vpack.c.b16 %v7134, %v7133
    %v7165 = vpack.c.b16 %v7136, %v7135
    %v7166 = vpack.c.b16 %v7138, %v7137
    %v7167 = vpack.c.b16 %v7140, %v7139
    %v7168 = vpack.c.b16 %v7142, %v7141
    %v7169 = vpack.c.b16 %v7144, %v7143
    %v7170 = vpack.c.b16 %v7146, %v7145
    %7195 = vmatprep.subr.bf16.mxu0 0
    %7196 = vmatpush1.bf16.msra.mxu0 %v7147
    %7197 = vmatprep.subr.bf16.mxu0 0
    %7198 = vmatpush1.bf16.msra.mxu0 %v7148
    %7199 = vmatprep.subr.bf16.mxu0 0
    %7200 = vmatpush1.bf16.msra.mxu0 %v7149
    %7201 = vmatprep.subr.bf16.mxu0 0
    %7202 = vmatpush1.bf16.msra.mxu0 %v7150
    %7203 = vmatprep.subr.bf16.mxu0 0
    %7204 = vmatpush1.bf16.msra.mxu0 %v7151
    %7205 = vmatprep.subr.bf16.mxu0 0
    %7206 = vmatpush1.bf16.msra.mxu0 %v7152
    %7207 = vmatprep.subr.bf16.mxu0 0
    %7208 = vmatpush1.bf16.msra.mxu0 %v7153
    %7209 = vmatprep.subr.bf16.mxu0 0
    %7210 = vmatpush1.bf16.msra.mxu0 %v7154
    %7211 = vmatprep.subr.bf16.mxu0 0
    %7212 = vmatpush1.bf16.msra.mxu0 %v7155
    %7213 = vmatprep.subr.bf16.mxu0 0
    %7214 = vmatpush1.bf16.msra.mxu0 %v7156
    %7215 = vmatprep.subr.bf16.mxu0 0
    %7216 = vmatpush1.bf16.msra.mxu0 %v7157
    %7217 = vmatprep.subr.bf16.mxu0 0
    %7218 = vmatpush1.bf16.msra.mxu0 %v7158
    %7219 = vmatprep.subr.bf16.mxu0 0
    %7220 = vmatpush1.bf16.msra.mxu0 %v7159
    %7221 = vmatprep.subr.bf16.mxu0 0
    %7222 = vmatpush1.bf16.msra.mxu0 %v7160
    %7223 = vmatprep.subr.bf16.mxu0 0
    %7224 = vmatpush1.bf16.msra.mxu0 %v7161
    %7225 = vmatprep.subr.bf16.mxu0 0
    %7226 = vmatpush1.bf16.msra.mxu0 %v7162
    %7227 = vmatprep.mubr.bf16.mxu0 %v6954
    %7228 = vmatmul.mubr.bf16.gmra.mrb[0].mxu0 %v6922
    %v7229 = vpop.f32.mrb[0].mxu0
    %v7230 = vadd.f32 0.0, %v7229
    %v7231 = vpop.f32.mrb[0].mxu0
    %v7232 = vpop.f32.mrb[0].mxu0
    %v7233 = vadd.f32 0.0, %v7232
    %v7234 = vpop.f32.mrb[0].mxu0
    %7235 = vmatprep.mubr.bf16.mxu0 %v6955
    %7236 = vmatmul.mubr.bf16.gmra.mrb[0].mxu0 %v6923
    %v7237 = vpop.f32.mrb[0].mxu0
    %v7238 = vadd.f32 0.0, %v7237
    %v7239 = vpop.f32.mrb[0].mxu0
    %v7240 = vpop.f32.mrb[0].mxu0
    %v7241 = vadd.f32 0.0, %v7240
    %v7242 = vpop.f32.mrb[0].mxu0
    %7243 = vmatprep.mubr.bf16.mxu0 %v6956
    %7244 = vmatmul.mubr.bf16.gmra.mrb[0].mxu0 %v6924
    %v7245 = vpop.f32.mrb[0].mxu0
    %v7246 = vadd.f32 0.0, %v7245
    %v7247 = vpop.f32.mrb[0].mxu0
    %v7248 = vpop.f32.mrb[0].mxu0
    %v7249 = vadd.f32 0.0, %v7248
    %v7250 = vpop.f32.mrb[0].mxu0
    %7251 = vmatprep.mubr.bf16.mxu0 %v6957
    %7252 = vmatmul.mubr.bf16.gmra.mrb[0].mxu0 %v6925
    %v7253 = vpop.f32.mrb[0].mxu0
    %v7254 = vadd.f32 0.0, %v7253
    %v7255 = vpop.f32.mrb[0].mxu0
    %v7256 = vpop.f32.mrb[0].mxu0
    %v7257 = vadd.f32 0.0, %v7256
    %v7258 = vpop.f32.mrb[0].mxu0
    %7259 = vmatprep.mubr.bf16.mxu0 %v6958
    %7260 = vmatmul.mubr.bf16.gmra.mrb[0].mxu0 %v6926
    %v7261 = vpop.f32.mrb[0].mxu0
    %v7262 = vadd.f32 0.0, %v7261
    %v7263 = vpop.f32.mrb[0].mxu0
    %v7264 = vpop.f32.mrb[0].mxu0
    %v7265 = vadd.f32 0.0, %v7264
    %v7266 = vpop.f32.mrb[0].mxu0
    %7267 = vmatprep.mubr.bf16.mxu0 %v6959
    %7268 = vmatmul.mubr.bf16.gmra.mrb[0].mxu0 %v6927
    %v7269 = vpop.f32.mrb[0].mxu0
    %v7270 = vadd.f32 0.0, %v7269
    %v7271 = vpop.f32.mrb[0].mxu0
    %v7272 = vpop.f32.mrb[0].mxu0
    %v7273 = vadd.f32 0.0, %v7272
    %v7274 = vpop.f32.mrb[0].mxu0
    %7275 = vmatprep.mubr.bf16.mxu0 %v6960
    %7276 = vmatmul.mubr.bf16.gmra.mrb[0].mxu0 %v6928
    %v7277 = vpop.f32.mrb[0].mxu0
    %v7278 = vadd.f32 0.0, %v7277
    %v7279 = vpop.f32.mrb[0].mxu0
    %v7280 = vpop.f32.mrb[0].mxu0
    %v7281 = vadd.f32 0.0, %v7280
    %v7282 = vpop.f32.mrb[0].mxu0
    %7283 = vmatprep.mubr.bf16.mxu0 %v6961
    %7284 = vmatmul.mubr.bf16.gmra.mrb[0].mxu0 %v6929
    %v7285 = vpop.f32.mrb[0].mxu0
    %v7286 = vadd.f32 0.0, %v7285
    %v7287 = vpop.f32.mrb[0].mxu0
    %v7288 = vpop.f32.mrb[0].mxu0
    %v7289 = vadd.f32 0.0, %v7288
    %v7290 = vpop.f32.mrb[0].mxu0
    %7291 = vdwg.mxu0
    %7292 = vmatprep.subr.bf16.mxu0 0
    %7293 = vmatpush1.bf16.msra.mxu0 %v7163
    %7294 = vmatprep.subr.bf16.mxu0 0
    %7295 = vmatpush1.bf16.msra.mxu0 %v7164
    %7296 = vmatprep.subr.bf16.mxu0 0
    %7297 = vmatpush1.bf16.msra.mxu0 %v7165
    %7298 = vmatprep.subr.bf16.mxu0 0
    %7299 = vmatpush1.bf16.msra.mxu0 %v7166
    %7300 = vmatprep.subr.bf16.mxu0 0
    %7301 = vmatpush1.bf16.msra.mxu0 %v7167
    %7302 = vmatprep.subr.bf16.mxu0 0
    %7303 = vmatpush1.bf16.msra.mxu0 %v7168
    %7304 = vmatprep.subr.bf16.mxu0 0
    %7305 = vmatpush1.bf16.msra.mxu0 %v7169
    %7306 = vmatprep.subr.bf16.mxu0 0
    %7307 = vmatpush1.bf16.msra.mxu0 %v7170
    %7308 = vmatprep.subr.bf16.mxu0 0
    %7309 = vmatpush1.bf16.msra.mxu0 0
    %7310 = vmatprep.subr.bf16.mxu0 0
    %7311 = vmatpush1.bf16.msra.mxu0 0
    %7312 = vmatprep.subr.bf16.mxu0 0
    %7313 = vmatpush1.bf16.msra.mxu0 0
    %7314 = vmatprep.subr.bf16.mxu0 0
    %7315 = vmatpush1.bf16.msra.mxu0 0
    %7316 = vmatprep.subr.bf16.mxu0 0
    %7317 = vmatpush1.bf16.msra.mxu0 0
    %7318 = vmatprep.subr.bf16.mxu0 0
    %7319 = vmatpush1.bf16.msra.mxu0 0
    %7320 = vmatprep.subr.bf16.mxu0 0
    %7321 = vmatpush1.bf16.msra.mxu0 0
    %7322 = vmatprep.subr.bf16.mxu0 0
    %7323 = vmatpush1.bf16.msra.mxu0 0
    %7324 = vmatprep.mubr.bf16.mxu0 0
    %7325 = vmatmul.mubr.bf16.gmra.mrb[0].mxu0 %v6986
    %v7326 = vpop.f32.mrb[0].mxu0
    %v7327 = vadd.f32 %v7230, %v7326
    %v7328 = vpop.f32.mrb[0].mxu0
    %v7329 = vpop.f32.mrb[0].mxu0
    %v7330 = vadd.f32 %v7233, %v7329
    %v7331 = vpop.f32.mrb[0].mxu0
    %7332 = vmatprep.mubr.bf16.mxu0 0
    %7333 = vmatmul.mubr.bf16.gmra.mrb[0].mxu0 %v6987
    %v7334 = vpop.f32.mrb[0].mxu0
    %v7335 = vadd.f32 %v7238, %v7334
    %v7336 = vpop.f32.mrb[0].mxu0
    %v7337 = vpop.f32.mrb[0].mxu0
    %v7338 = vadd.f32 %v7241, %v7337
    %v7339 = vpop.f32.mrb[0].mxu0
    %7340 = vmatprep.mubr.bf16.mxu0 0
    %7341 = vmatmul.mubr.bf16.gmra.mrb[0].mxu0 %v6988
    %v7342 = vpop.f32.mrb[0].mxu0
    %v7343 = vadd.f32 %v7246, %v7342
    %v7344 = vpop.f32.mrb[0].mxu0
    %v7345 = vpop.f32.mrb[0].mxu0
    %v7346 = vadd.f32 %v7249, %v7345
    %v7347 = vpop.f32.mrb[0].mxu0
    %7348 = vmatprep.mubr.bf16.mxu0 0
    %7349 = vmatmul.mubr.bf16.gmra.mrb[0].mxu0 %v6989
    %v7350 = vpop.f32.mrb[0].mxu0
    %v7351 = vadd.f32 %v7254, %v7350
    %v7352 = vpop.f32.mrb[0].mxu0
    %v7353 = vpop.f32.mrb[0].mxu0
    %v7354 = vadd.f32 %v7257, %v7353
    %v7355 = vpop.f32.mrb[0].mxu0
    %7356 = vmatprep.mubr.bf16.mxu0 0
    %7357 = vmatmul.mubr.bf16.gmra.mrb[0].mxu0 %v6990
    %v7358 = vpop.f32.mrb[0].mxu0
    %v7359 = vadd.f32 %v7262, %v7358
    %v7360 = vpop.f32.mrb[0].mxu0
    %v7361 = vpop.f32.mrb[0].mxu0
    %v7362 = vadd.f32 %v7265, %v7361
    %v7363 = vpop.f32.mrb[0].mxu0
    %7364 = vmatprep.mubr.bf16.mxu0 0
    %7365 = vmatmul.mubr.bf16.gmra.mrb[0].mxu0 %v6991
    %v7366 = vpop.f32.mrb[0].mxu0
    %v7367 = vadd.f32 %v7270, %v7366
    %v7368 = vpop.f32.mrb[0].mxu0
    %v7369 = vpop.f32.mrb[0].mxu0
    %v7370 = vadd.f32 %v7273, %v7369
    %v7371 = vpop.f32.mrb[0].mxu0
    %7372 = vmatprep.mubr.bf16.mxu0 0
    %7373 = vmatmul.mubr.bf16.gmra.mrb[0].mxu0 %v6992
    %v7374 = vpop.f32.mrb[0].mxu0
    %v7375 = vadd.f32 %v7278, %v7374
    %v7376 = vpop.f32.mrb[0].mxu0
    %v7377 = vpop.f32.mrb[0].mxu0
    %v7378 = vadd.f32 %v7281, %v7377
    %v7379 = vpop.f32.mrb[0].mxu0
    %7380 = vmatprep.mubr.bf16.mxu0 0
    %7381 = vmatmul.mubr.bf16.gmra.mrb[0].mxu0 %v6993
    %v7382 = vpop.f32.mrb[0].mxu0
    %v7383 = vadd.f32 %v7286, %v7382
    %v7384 = vpop.f32.mrb[0].mxu0
    %v7385 = vpop.f32.mrb[0].mxu0
    %v7386 = vadd.f32 %v7289, %v7385
    %v7387 = vpop.f32.mrb[0].mxu0
    %7388 = vdwg.mxu0
    %v7437 = vunpack.c.l.b16 %v6474
    %v7438 = vunpack.c.l.b16 %v6475
    %v7439 = vunpack.c.l.b16 %v6476
    %v7440 = vunpack.c.l.b16 %v6477
    %v7441 = vunpack.c.l.b16 %v6478
    %v7442 = vunpack.c.l.b16 %v6479
    %v7443 = vunpack.c.l.b16 %v6480
    %v7444 = vunpack.c.l.b16 %v6481
    %v7445 = vunpack.c.l.b16 %v6482
    %v7446 = vunpack.c.l.b16 %v6483
    %v7447 = vunpack.c.l.b16 %v6484
    %v7448 = vunpack.c.l.b16 %v6485
    %v7449 = vunpack.c.l.b16 %v6486
    %v7450 = vunpack.c.l.b16 %v6487
    %v7451 = vunpack.c.l.b16 %v6488
    %v7452 = vunpack.c.l.b16 %v6489
    %v7453 = vunpack.c.l.b16 %v6490
    %v7454 = vunpack.c.l.b16 %v6491
    %v7455 = vunpack.c.l.b16 %v6492
    %v7456 = vunpack.c.l.b16 %v6493
    %v7457 = vunpack.c.l.b16 %v6494
    %v7458 = vunpack.c.l.b16 %v6495
    %v7459 = vunpack.c.l.b16 %v6496
    %v7460 = vunpack.c.l.b16 %v6497
    %v7461 = vunpack.c.l.b16 %v6498
    %v7462 = vunpack.c.l.b16 %v6499
    %v7463 = vunpack.c.l.b16 %v6500
    %v7464 = vunpack.c.l.b16 %v6501
    %v7465 = vunpack.c.l.b16 %v6502
    %v7466 = vunpack.c.l.b16 %v6503
    %v7467 = vunpack.c.l.b16 %v6504
    %v7468 = vunpack.c.l.b16 %v6505
    %v7469 = vunpack.c.l.b16 %v6506
    %v7470 = vunpack.c.l.b16 %v6507
    %v7471 = vunpack.c.l.b16 %v6508
    %v7472 = vunpack.c.l.b16 %v6509
    %v7473 = vunpack.c.l.b16 %v6510
    %v7474 = vunpack.c.l.b16 %v6511
    %v7475 = vunpack.c.l.b16 %v6512
    %v7476 = vunpack.c.l.b16 %v6513
    %v7477 = vunpack.c.l.b16 %v6514
    %v7478 = vunpack.c.l.b16 %v6515
    %v7479 = vunpack.c.l.b16 %v6516
    %v7480 = vunpack.c.l.b16 %v6517
    %v7481 = vunpack.c.l.b16 %v6518
    %v7482 = vunpack.c.l.b16 %v6519
    %v7483 = vunpack.c.l.b16 %v6520
    %v7484 = vunpack.c.l.b16 %v6521
    %v7485 = vpack.c.b16 %v7438, %v7437
    %v7486 = vpack.c.b16 %v7440, %v7439
    %v7487 = vpack.c.b16 %v7442, %v7441
    %v7488 = vpack.c.b16 %v7444, %v7443
    %v7489 = vpack.c.b16 %v7446, %v7445
    %v7490 = vpack.c.b16 %v7448, %v7447
    %v7491 = vpack.c.b16 %v7450, %v7449
    %v7492 = vpack.c.b16 %v7452, %v7451
    %v7493 = vpack.c.b16 %v7454, %v7453
    %v7494 = vpack.c.b16 %v7456, %v7455
    %v7495 = vpack.c.b16 %v7458, %v7457
    %v7496 = vpack.c.b16 %v7460, %v7459
    %v7497 = vpack.c.b16 %v7462, %v7461
    %v7498 = vpack.c.b16 %v7464, %v7463
    %v7499 = vpack.c.b16 %v7466, %v7465
    %v7500 = vpack.c.b16 %v7468, %v7467
    %v7501 = vpack.c.b16 %v7470, %v7469
    %v7502 = vpack.c.b16 %v7472, %v7471
    %v7503 = vpack.c.b16 %v7474, %v7473
    %v7504 = vpack.c.b16 %v7476, %v7475
    %v7505 = vpack.c.b16 %v7478, %v7477
    %v7506 = vpack.c.b16 %v7480, %v7479
    %v7507 = vpack.c.b16 %v7482, %v7481
    %v7508 = vpack.c.b16 %v7484, %v7483
    %7533 = vmatprep.subr.bf16.mxu0 0
    %7534 = vmatpush1.bf16.msra.mxu0 %v7485
    %7535 = vmatprep.subr.bf16.mxu0 0
    %7536 = vmatpush1.bf16.msra.mxu0 %v7486
    %7537 = vmatprep.subr.bf16.mxu0 0
    %7538 = vmatpush1.bf16.msra.mxu0 %v7487
    %7539 = vmatprep.subr.bf16.mxu0 0
    %7540 = vmatpush1.bf16.msra.mxu0 %v7488
    %7541 = vmatprep.subr.bf16.mxu0 0
    %7542 = vmatpush1.bf16.msra.mxu0 %v7489
    %7543 = vmatprep.subr.bf16.mxu0 0
    %7544 = vmatpush1.bf16.msra.mxu0 %v7490
    %7545 = vmatprep.subr.bf16.mxu0 0
    %7546 = vmatpush1.bf16.msra.mxu0 %v7491
    %7547 = vmatprep.subr.bf16.mxu0 0
    %7548 = vmatpush1.bf16.msra.mxu0 %v7492
    %7549 = vmatprep.subr.bf16.mxu0 0
    %7550 = vmatpush1.bf16.msra.mxu0 %v7493
    %7551 = vmatprep.subr.bf16.mxu0 0
    %7552 = vmatpush1.bf16.msra.mxu0 %v7494
    %7553 = vmatprep.subr.bf16.mxu0 0
    %7554 = vmatpush1.bf16.msra.mxu0 %v7495
    %7555 = vmatprep.subr.bf16.mxu0 0
    %7556 = vmatpush1.bf16.msra.mxu0 %v7496
    %7557 = vmatprep.subr.bf16.mxu0 0
    %7558 = vmatpush1.bf16.msra.mxu0 %v7497
    %7559 = vmatprep.subr.bf16.mxu0 0
    %7560 = vmatpush1.bf16.msra.mxu0 %v7498
    %7561 = vmatprep.subr.bf16.mxu0 0
    %7562 = vmatpush1.bf16.msra.mxu0 %v7499
    %7563 = vmatprep.subr.bf16.mxu0 0
    %7564 = vmatpush1.bf16.msra.mxu0 %v7500
    %7565 = vmatprep.mubr.bf16.mxu0 %v6426
    %7566 = vmatmul.mubr.bf16.gmra.mrb[0].mxu0 %v6394
    %v7567 = vpop.f32.mrb[0].mxu0
    %v7568 = vadd.f32 %v7327, %v7567
    %v7569 = vpop.f32.mrb[0].mxu0
    %v7570 = vpop.f32.mrb[0].mxu0
    %v7571 = vadd.f32 %v7330, %v7570
    %v7572 = vpop.f32.mrb[0].mxu0
    %7573 = vmatprep.mubr.bf16.mxu0 %v6427
    %7574 = vmatmul.mubr.bf16.gmra.mrb[0].mxu0 %v6395
    %v7575 = vpop.f32.mrb[0].mxu0
    %v7576 = vadd.f32 %v7335, %v7575
    %v7577 = vpop.f32.mrb[0].mxu0
    %v7578 = vpop.f32.mrb[0].mxu0
    %v7579 = vadd.f32 %v7338, %v7578
    %v7580 = vpop.f32.mrb[0].mxu0
    %7581 = vmatprep.mubr.bf16.mxu0 %v6428
    %7582 = vmatmul.mubr.bf16.gmra.mrb[0].mxu0 %v6396
    %v7583 = vpop.f32.mrb[0].mxu0
    %v7584 = vadd.f32 %v7343, %v7583
    %v7585 = vpop.f32.mrb[0].mxu0
    %v7586 = vpop.f32.mrb[0].mxu0
    %v7587 = vadd.f32 %v7346, %v7586
    %v7588 = vpop.f32.mrb[0].mxu0
    %7589 = vmatprep.mubr.bf16.mxu0 %v6429
    %7590 = vmatmul.mubr.bf16.gmra.mrb[0].mxu0 %v6397
    %v7591 = vpop.f32.mrb[0].mxu0
    %v7592 = vadd.f32 %v7351, %v7591
    %v7593 = vpop.f32.mrb[0].mxu0
    %v7594 = vpop.f32.mrb[0].mxu0
    %v7595 = vadd.f32 %v7354, %v7594
    %v7596 = vpop.f32.mrb[0].mxu0
    %7597 = vmatprep.mubr.bf16.mxu0 %v6430
    %7598 = vmatmul.mubr.bf16.gmra.mrb[0].mxu0 %v6398
    %v7599 = vpop.f32.mrb[0].mxu0
    %v7600 = vadd.f32 %v7359, %v7599
    %v7601 = vpop.f32.mrb[0].mxu0
    %v7602 = vpop.f32.mrb[0].mxu0
    %v7603 = vadd.f32 %v7362, %v7602
    %v7604 = vpop.f32.mrb[0].mxu0
    %7605 = vmatprep.mubr.bf16.mxu0 %v6431
    %7606 = vmatmul.mubr.bf16.gmra.mrb[0].mxu0 %v6399
    %v7607 = vpop.f32.mrb[0].mxu0
    %v7608 = vadd.f32 %v7367, %v7607
    %v7609 = vpop.f32.mrb[0].mxu0
    %v7610 = vpop.f32.mrb[0].mxu0
    %v7611 = vadd.f32 %v7370, %v7610
    %v7612 = vpop.f32.mrb[0].mxu0
    %7613 = vmatprep.mubr.bf16.mxu0 %v6432
    %7614 = vmatmul.mubr.bf16.gmra.mrb[0].mxu0 %v6400
    %v7615 = vpop.f32.mrb[0].mxu0
    %v7616 = vadd.f32 %v7375, %v7615
    %v7617 = vpop.f32.mrb[0].mxu0
    %v7618 = vpop.f32.mrb[0].mxu0
    %v7619 = vadd.f32 %v7378, %v7618
    %v7620 = vpop.f32.mrb[0].mxu0
    %7621 = vmatprep.mubr.bf16.mxu0 %v6433
    %7622 = vmatmul.mubr.bf16.gmra.mrb[0].mxu0 %v6401
    %v7623 = vpop.f32.mrb[0].mxu0
    %v7624 = vadd.f32 %v7383, %v7623
    %v7625 = vpop.f32.mrb[0].mxu0
    %v7626 = vpop.f32.mrb[0].mxu0
    %v7627 = vadd.f32 %v7386, %v7626
    %v7628 = vpop.f32.mrb[0].mxu0
    %7629 = vdwg.mxu0
    %7630 = vmatprep.subr.bf16.mxu0 0
    %7631 = vmatpush1.bf16.msra.mxu0 %v7501
    %7632 = vmatprep.subr.bf16.mxu0 0
    %7633 = vmatpush1.bf16.msra.mxu0 %v7502
    %7634 = vmatprep.subr.bf16.mxu0 0
    %7635 = vmatpush1.bf16.msra.mxu0 %v7503
    %7636 = vmatprep.subr.bf16.mxu0 0
    %7637 = vmatpush1.bf16.msra.mxu0 %v7504
    %7638 = vmatprep.subr.bf16.mxu0 0
    %7639 = vmatpush1.bf16.msra.mxu0 %v7505
    %7640 = vmatprep.subr.bf16.mxu0 0
    %7641 = vmatpush1.bf16.msra.mxu0 %v7506
    %7642 = vmatprep.subr.bf16.mxu0 0
    %7643 = vmatpush1.bf16.msra.mxu0 %v7507
    %7644 = vmatprep.subr.bf16.mxu0 0
    %7645 = vmatpush1.bf16.msra.mxu0 %v7508
    %7646 = vmatprep.subr.bf16.mxu0 0
    %7647 = vmatpush1.bf16.msra.mxu0 0
    %7648 = vmatprep.subr.bf16.mxu0 0
    %7649 = vmatpush1.bf16.msra.mxu0 0
    %7650 = vmatprep.subr.bf16.mxu0 0
    %7651 = vmatpush1.bf16.msra.mxu0 0
    %7652 = vmatprep.subr.bf16.mxu0 0
    %7653 = vmatpush1.bf16.msra.mxu0 0
    %7654 = vmatprep.subr.bf16.mxu0 0
    %7655 = vmatpush1.bf16.msra.mxu0 0
    %7656 = vmatprep.subr.bf16.mxu0 0
    %7657 = vmatpush1.bf16.msra.mxu0 0
    %7658 = vmatprep.subr.bf16.mxu0 0
    %7659 = vmatpush1.bf16.msra.mxu0 0
    %7660 = vmatprep.subr.bf16.mxu0 0
    %7661 = vmatpush1.bf16.msra.mxu0 0
    %7662 = vmatprep.mubr.bf16.mxu0 0
    %7663 = vmatmul.mubr.bf16.gmra.mrb[0].mxu0 %v6458
    %v7664 = vpop.f32.mrb[0].mxu0
    %v7665 = vadd.f32 %v7568, %v7664
    %v7666 = vpop.f32.mrb[0].mxu0
    %v7667 = vpop.f32.mrb[0].mxu0
    %v7668 = vadd.f32 %v7571, %v7667
    %v7669 = vpop.f32.mrb[0].mxu0
    %7670 = vmatprep.mubr.bf16.mxu0 0
    %7671 = vmatmul.mubr.bf16.gmra.mrb[0].mxu0 %v6459
    %v7672 = vpop.f32.mrb[0].mxu0
    %v7673 = vadd.f32 %v7576, %v7672
    %v7674 = vpop.f32.mrb[0].mxu0
    %v7675 = vpop.f32.mrb[0].mxu0
    %v7676 = vadd.f32 %v7579, %v7675
    %v7677 = vpop.f32.mrb[0].mxu0
    %7678 = vmatprep.mubr.bf16.mxu0 0
    %7679 = vmatmul.mubr.bf16.gmra.mrb[0].mxu0 %v6460
    %v7680 = vpop.f32.mrb[0].mxu0
    %v7681 = vadd.f32 %v7584, %v7680
    %v7682 = vpop.f32.mrb[0].mxu0
    %v7683 = vpop.f32.mrb[0].mxu0
    %v7684 = vadd.f32 %v7587, %v7683
    %v7685 = vpop.f32.mrb[0].mxu0
    %7686 = vmatprep.mubr.bf16.mxu0 0
    %7687 = vmatmul.mubr.bf16.gmra.mrb[0].mxu0 %v6461
    %v7688 = vpop.f32.mrb[0].mxu0
    %v7689 = vadd.f32 %v7592, %v7688
    %v7690 = vpop.f32.mrb[0].mxu0
    %v7691 = vpop.f32.mrb[0].mxu0
    %v7692 = vadd.f32 %v7595, %v7691
    %v7693 = vpop.f32.mrb[0].mxu0
    %7694 = vmatprep.mubr.bf16.mxu0 0
    %7695 = vmatmul.mubr.bf16.gmra.mrb[0].mxu0 %v6462
    %v7696 = vpop.f32.mrb[0].mxu0
    %v7697 = vadd.f32 %v7600, %v7696
    %v7698 = vpop.f32.mrb[0].mxu0
    %v7699 = vpop.f32.mrb[0].mxu0
    %v7700 = vadd.f32 %v7603, %v7699
    %v7701 = vpop.f32.mrb[0].mxu0
    %7702 = vmatprep.mubr.bf16.mxu0 0
    %7703 = vmatmul.mubr.bf16.gmra.mrb[0].mxu0 %v6463
    %v7704 = vpop.f32.mrb[0].mxu0
    %v7705 = vadd.f32 %v7608, %v7704
    %v7706 = vpop.f32.mrb[0].mxu0
    %v7707 = vpop.f32.mrb[0].mxu0
    %v7708 = vadd.f32 %v7611, %v7707
    %v7709 = vpop.f32.mrb[0].mxu0
    %7710 = vmatprep.mubr.bf16.mxu0 0
    %7711 = vmatmul.mubr.bf16.gmra.mrb[0].mxu0 %v6464
    %v7712 = vpop.f32.mrb[0].mxu0
    %v7713 = vadd.f32 %v7616, %v7712
    %v7714 = vpop.f32.mrb[0].mxu0
    %v7715 = vpop.f32.mrb[0].mxu0
    %v7716 = vadd.f32 %v7619, %v7715
    %v7717 = vpop.f32.mrb[0].mxu0
    %7718 = vmatprep.mubr.bf16.mxu0 0
    %7719 = vmatmul.mubr.bf16.gmra.mrb[0].mxu0 %v6465
    %v7720 = vpop.f32.mrb[0].mxu0
    %v7721 = vadd.f32 %v7624, %v7720
    %v7722 = vpop.f32.mrb[0].mxu0
    %v7723 = vpop.f32.mrb[0].mxu0
    %v7724 = vadd.f32 %v7627, %v7723
    %v7725 = vpop.f32.mrb[0].mxu0
    %7726 = vdwg.mxu0
    %s7727 = scalar_lea.vmem [#allocation6], 16
    %v7728 = vld [vmem:[%s7727] sm:$0xf]
    %v7729 = vld [vmem:[%s7727 + $0x8] sm:$0xf]
    %v7730 = vld [vmem:[%s7727 + $0x10] sm:$0xf]
    %v7731 = vld [vmem:[%s7727 + $0x18] sm:$0xf]
    %v7732 = vld [vmem:[%s7727 + $0x20] sm:$0xf]
    %v7733 = vld [vmem:[%s7727 + $0x28] sm:$0xf]
    %v7734 = vld [vmem:[%s7727 + $0x30] sm:$0xf]
    %v7735 = vld [vmem:[%s7727 + $0x38] sm:$0xf]
    %v7736 = vld [vmem:[%s7727 + $0x50] sm:$0xf]
    %v7737 = vld [vmem:[%s7727 + $0x58] sm:$0xf]
    %v7738 = vld [vmem:[%s7727 + $0x60] sm:$0xf]
    %v7739 = vld [vmem:[%s7727 + $0x68] sm:$0xf]
    %v7740 = vld [vmem:[%s7727 + $0x70] sm:$0xf]
    %v7741 = vld [vmem:[%s7727 + $0x78] sm:$0xf]
    %v7742 = vld [vmem:[%s7727 + $0x80] sm:$0xf]
    %v7743 = vld [vmem:[%s7727 + $0x88] sm:$0xf]
    %v7744 = vld [vmem:[%s7727 + $0x4] sm:$0x1]
    %v7745 = vld [vmem:[%s7727 + $0xc] sm:$0x1]
    %v7746 = vld [vmem:[%s7727 + $0x14] sm:$0x1]
    %v7747 = vld [vmem:[%s7727 + $0x1c] sm:$0x1]
    %v7748 = vld [vmem:[%s7727 + $0x24] sm:$0x1]
    %v7749 = vld [vmem:[%s7727 + $0x2c] sm:$0x1]
    %v7750 = vld [vmem:[%s7727 + $0x34] sm:$0x1]
    %v7751 = vld [vmem:[%s7727 + $0x3c] sm:$0x1]
    %v7752 = vld [vmem:[%s7727 + $0x54] sm:$0x1]
    %v7753 = vld [vmem:[%s7727 + $0x5c] sm:$0x1]
    %v7754 = vld [vmem:[%s7727 + $0x64] sm:$0x1]
    %v7755 = vld [vmem:[%s7727 + $0x6c] sm:$0x1]
    %v7756 = vld [vmem:[%s7727 + $0x74] sm:$0x1]
    %v7757 = vld [vmem:[%s7727 + $0x7c] sm:$0x1]
    %v7758 = vld [vmem:[%s7727 + $0x84] sm:$0x1]
    %v7759 = vld [vmem:[%s7727 + $0x8c] sm:$0x1]
    %v7761 = vshrl.u32 %v7728, 16
    %v7763 = vrot.slane %v7761, 4
    %v7764 = vshll.u32 %v7728, 16
    %v7766 = vrot.slane %v7764, 5
    %v7767 = vor.u32 %v7763, %v7766
    %v7768 = vrot.slane %v7767, 4
    %v7770 = vshll.u32 %v7744, 16
    %v7772 = vrot.slane %v7770, 5
    %v7773 = vsel %vm2398, %v7768, %v7772
    %v7775 = vshrl.u32 %v7729, 16
    %v7777 = vrot.slane %v7775, 4
    %v7778 = vshll.u32 %v7729, 16
    %v7780 = vrot.slane %v7778, 5
    %v7781 = vor.u32 %v7777, %v7780
    %v7782 = vrot.slane %v7781, 4
    %v7784 = vshll.u32 %v7745, 16
    %v7786 = vrot.slane %v7784, 5
    %v7787 = vsel %vm2398, %v7782, %v7786
    %v7789 = vshrl.u32 %v7730, 16
    %v7791 = vrot.slane %v7789, 4
    %v7792 = vshll.u32 %v7730, 16
    %v7794 = vrot.slane %v7792, 5
    %v7795 = vor.u32 %v7791, %v7794
    %v7796 = vrot.slane %v7795, 4
    %v7798 = vshll.u32 %v7746, 16
    %v7800 = vrot.slane %v7798, 5
    %v7801 = vsel %vm2398, %v7796, %v7800
    %v7803 = vshrl.u32 %v7731, 16
    %v7805 = vrot.slane %v7803, 4
    %v7806 = vshll.u32 %v7731, 16
    %v7808 = vrot.slane %v7806, 5
    %v7809 = vor.u32 %v7805, %v7808
    %v7810 = vrot.slane %v7809, 4
    %v7812 = vshll.u32 %v7747, 16
    %v7814 = vrot.slane %v7812, 5
    %v7815 = vsel %vm2398, %v7810, %v7814
    %v7817 = vshrl.u32 %v7732, 16
    %v7819 = vrot.slane %v7817, 4
    %v7820 = vshll.u32 %v7732, 16
    %v7822 = vrot.slane %v7820, 5
    %v7823 = vor.u32 %v7819, %v7822
    %v7824 = vrot.slane %v7823, 4
    %v7826 = vshll.u32 %v7748, 16
    %v7828 = vrot.slane %v7826, 5
    %v7829 = vsel %vm2398, %v7824, %v7828
    %v7831 = vshrl.u32 %v7733, 16
    %v7833 = vrot.slane %v7831, 4
    %v7834 = vshll.u32 %v7733, 16
    %v7836 = vrot.slane %v7834, 5
    %v7837 = vor.u32 %v7833, %v7836
    %v7838 = vrot.slane %v7837, 4
    %v7840 = vshll.u32 %v7749, 16
    %v7842 = vrot.slane %v7840, 5
    %v7843 = vsel %vm2398, %v7838, %v7842
    %v7845 = vshrl.u32 %v7734, 16
    %v7847 = vrot.slane %v7845, 4
    %v7848 = vshll.u32 %v7734, 16
    %v7850 = vrot.slane %v7848, 5
    %v7851 = vor.u32 %v7847, %v7850
    %v7852 = vrot.slane %v7851, 4
    %v7854 = vshll.u32 %v7750, 16
    %v7856 = vrot.slane %v7854, 5
    %v7857 = vsel %vm2398, %v7852, %v7856
    %v7859 = vshrl.u32 %v7735, 16
    %v7861 = vrot.slane %v7859, 4
    %v7862 = vshll.u32 %v7735, 16
    %v7864 = vrot.slane %v7862, 5
    %v7865 = vor.u32 %v7861, %v7864
    %v7866 = vrot.slane %v7865, 4
    %v7868 = vshll.u32 %v7751, 16
    %v7870 = vrot.slane %v7868, 5
    %v7871 = vsel %vm2398, %v7866, %v7870
    %v7873 = vshrl.u32 %v7736, 16
    %v7875 = vrot.slane %v7873, 4
    %v7876 = vshll.u32 %v7736, 16
    %v7878 = vrot.slane %v7876, 5
    %v7879 = vor.u32 %v7875, %v7878
    %v7880 = vrot.slane %v7879, 4
    %v7882 = vshll.u32 %v7752, 16
    %v7884 = vrot.slane %v7882, 5
    %v7885 = vsel %vm2398, %v7880, %v7884
    %v7887 = vshrl.u32 %v7737, 16
    %v7889 = vrot.slane %v7887, 4
    %v7890 = vshll.u32 %v7737, 16
    %v7892 = vrot.slane %v7890, 5
    %v7893 = vor.u32 %v7889, %v7892
    %v7894 = vrot.slane %v7893, 4
    %v7896 = vshll.u32 %v7753, 16
    %v7898 = vrot.slane %v7896, 5
    %v7899 = vsel %vm2398, %v7894, %v7898
    %v7901 = vshrl.u32 %v7738, 16
    %v7903 = vrot.slane %v7901, 4
    %v7904 = vshll.u32 %v7738, 16
    %v7906 = vrot.slane %v7904, 5
    %v7907 = vor.u32 %v7903, %v7906
    %v7908 = vrot.slane %v7907, 4
    %v7910 = vshll.u32 %v7754, 16
    %v7912 = vrot.slane %v7910, 5
    %v7913 = vsel %vm2398, %v7908, %v7912
    %v7915 = vshrl.u32 %v7739, 16
    %v7917 = vrot.slane %v7915, 4
    %v7918 = vshll.u32 %v7739, 16
    %v7920 = vrot.slane %v7918, 5
    %v7921 = vor.u32 %v7917, %v7920
    %v7922 = vrot.slane %v7921, 4
    %v7924 = vshll.u32 %v7755, 16
    %v7926 = vrot.slane %v7924, 5
    %v7927 = vsel %vm2398, %v7922, %v7926
    %v7929 = vshrl.u32 %v7740, 16
    %v7931 = vrot.slane %v7929, 4
    %v7932 = vshll.u32 %v7740, 16
    %v7934 = vrot.slane %v7932, 5
    %v7935 = vor.u32 %v7931, %v7934
    %v7936 = vrot.slane %v7935, 4
    %v7938 = vshll.u32 %v7756, 16
    %v7940 = vrot.slane %v7938, 5
    %v7941 = vsel %vm2398, %v7936, %v7940
    %v7943 = vshrl.u32 %v7741, 16
    %v7945 = vrot.slane %v7943, 4
    %v7946 = vshll.u32 %v7741, 16
    %v7948 = vrot.slane %v7946, 5
    %v7949 = vor.u32 %v7945, %v7948
    %v7950 = vrot.slane %v7949, 4
    %v7952 = vshll.u32 %v7757, 16
    %v7954 = vrot.slane %v7952, 5
    %v7955 = vsel %vm2398, %v7950, %v7954
    %v7957 = vshrl.u32 %v7742, 16
    %v7959 = vrot.slane %v7957, 4
    %v7960 = vshll.u32 %v7742, 16
    %v7962 = vrot.slane %v7960, 5
    %v7963 = vor.u32 %v7959, %v7962
    %v7964 = vrot.slane %v7963, 4
    %v7966 = vshll.u32 %v7758, 16
    %v7968 = vrot.slane %v7966, 5
    %v7969 = vsel %vm2398, %v7964, %v7968
    %v7971 = vshrl.u32 %v7743, 16
    %v7973 = vrot.slane %v7971, 4
    %v7974 = vshll.u32 %v7743, 16
    %v7976 = vrot.slane %v7974, 5
    %v7977 = vor.u32 %v7973, %v7976
    %v7978 = vrot.slane %v7977, 4
    %v7980 = vshll.u32 %v7759, 16
    %v7982 = vrot.slane %v7980, 5
    %v7983 = vsel %vm2398, %v7978, %v7982
    %v7984 = vld [vmem:[%s7727] sm:$0xe]
    %v7985 = vld [vmem:[%s7727 + $0x8] sm:$0xe]
    %v7986 = vld [vmem:[%s7727 + $0x10] sm:$0xe]
    %v7987 = vld [vmem:[%s7727 + $0x18] sm:$0xe]
    %v7988 = vld [vmem:[%s7727 + $0x20] sm:$0xe]
    %v7989 = vld [vmem:[%s7727 + $0x28] sm:$0xe]
    %v7990 = vld [vmem:[%s7727 + $0x30] sm:$0xe]
    %v7991 = vld [vmem:[%s7727 + $0x38] sm:$0xe]
    %v7992 = vld [vmem:[%s7727 + $0x50] sm:$0xe]
    %v7993 = vld [vmem:[%s7727 + $0x58] sm:$0xe]
    %v7994 = vld [vmem:[%s7727 + $0x60] sm:$0xe]
    %v7995 = vld [vmem:[%s7727 + $0x68] sm:$0xe]
    %v7996 = vld [vmem:[%s7727 + $0x70] sm:$0xe]
    %v7997 = vld [vmem:[%s7727 + $0x78] sm:$0xe]
    %v7998 = vld [vmem:[%s7727 + $0x80] sm:$0xe]
    %v7999 = vld [vmem:[%s7727 + $0x88] sm:$0xe]
    %v8032 = vrot.slane %v7984, 5
    %v8033 = vrot.slane %v8032, 4
    %v8034 = vrot.slane %v7744, 5
    %v8035 = vsel %vm6297, %v8033, %v8034
    %v8036 = vrot.slane %v7985, 5
    %v8037 = vrot.slane %v8036, 4
    %v8038 = vrot.slane %v7745, 5
    %v8039 = vsel %vm6297, %v8037, %v8038
    %v8040 = vrot.slane %v7986, 5
    %v8041 = vrot.slane %v8040, 4
    %v8042 = vrot.slane %v7746, 5
    %v8043 = vsel %vm6297, %v8041, %v8042
    %v8044 = vrot.slane %v7987, 5
    %v8045 = vrot.slane %v8044, 4
    %v8046 = vrot.slane %v7747, 5
    %v8047 = vsel %vm6297, %v8045, %v8046
    %v8048 = vrot.slane %v7988, 5
    %v8049 = vrot.slane %v8048, 4
    %v8050 = vrot.slane %v7748, 5
    %v8051 = vsel %vm6297, %v8049, %v8050
    %v8052 = vrot.slane %v7989, 5
    %v8053 = vrot.slane %v8052, 4
    %v8054 = vrot.slane %v7749, 5
    %v8055 = vsel %vm6297, %v8053, %v8054
    %v8056 = vrot.slane %v7990, 5
    %v8057 = vrot.slane %v8056, 4
    %v8058 = vrot.slane %v7750, 5
    %v8059 = vsel %vm6297, %v8057, %v8058
    %v8060 = vrot.slane %v7991, 5
    %v8061 = vrot.slane %v8060, 4
    %v8062 = vrot.slane %v7751, 5
    %v8063 = vsel %vm6297, %v8061, %v8062
    %v8064 = vrot.slane %v7992, 5
    %v8065 = vrot.slane %v8064, 4
    %v8066 = vrot.slane %v7752, 5
    %v8067 = vsel %vm6297, %v8065, %v8066
    %v8068 = vrot.slane %v7993, 5
    %v8069 = vrot.slane %v8068, 4
    %v8070 = vrot.slane %v7753, 5
    %v8071 = vsel %vm6297, %v8069, %v8070
    %v8072 = vrot.slane %v7994, 5
    %v8073 = vrot.slane %v8072, 4
    %v8074 = vrot.slane %v7754, 5
    %v8075 = vsel %vm6297, %v8073, %v8074
    %v8076 = vrot.slane %v7995, 5
    %v8077 = vrot.slane %v8076, 4
    %v8078 = vrot.slane %v7755, 5
    %v8079 = vsel %vm6297, %v8077, %v8078
    %v8080 = vrot.slane %v7996, 5
    %v8081 = vrot.slane %v8080, 4
    %v8082 = vrot.slane %v7756, 5
    %v8083 = vsel %vm6297, %v8081, %v8082
    %v8084 = vrot.slane %v7997, 5
    %v8085 = vrot.slane %v8084, 4
    %v8086 = vrot.slane %v7757, 5
    %v8087 = vsel %vm6297, %v8085, %v8086
    %v8088 = vrot.slane %v7998, 5
    %v8089 = vrot.slane %v8088, 4
    %v8090 = vrot.slane %v7758, 5
    %v8091 = vsel %vm6297, %v8089, %v8090
    %v8092 = vrot.slane %v7999, 5
    %v8093 = vrot.slane %v8092, 4
    %v8094 = vrot.slane %v7759, 5
    %v8095 = vsel %vm6297, %v8093, %v8094
    %v8112 = vunpack.c.l.b16 %v7728
    %v8113 = vunpack.c.l.b16 %v7729
    %v8114 = vunpack.c.l.b16 %v7730
    %v8115 = vunpack.c.l.b16 %v7731
    %v8116 = vunpack.c.l.b16 %v7732
    %v8117 = vunpack.c.l.b16 %v7733
    %v8118 = vunpack.c.l.b16 %v7734
    %v8119 = vunpack.c.l.b16 %v7735
    %v8120 = vunpack.c.l.b16 %v7736
    %v8121 = vunpack.c.l.b16 %v7737
    %v8122 = vunpack.c.l.b16 %v7738
    %v8123 = vunpack.c.l.b16 %v7739
    %v8124 = vunpack.c.l.b16 %v7740
    %v8125 = vunpack.c.l.b16 %v7741
    %v8126 = vunpack.c.l.b16 %v7742
    %v8127 = vunpack.c.l.b16 %v7743
    %v8128 = vpack.c.b16 %v8113, %v8112
    %v8129 = vpack.c.b16 %v8115, %v8114
    %v8130 = vpack.c.b16 %v8117, %v8116
    %v8131 = vpack.c.b16 %v8119, %v8118
    %v8132 = vpack.c.b16 %v8121, %v8120
    %v8133 = vpack.c.b16 %v8123, %v8122
    %v8134 = vpack.c.b16 %v8125, %v8124
    %v8135 = vpack.c.b16 %v8127, %v8126
    %v8144 = vunpack.c.l.b16 %v7773
    %v8145 = vunpack.c.l.b16 %v7787
    %v8146 = vunpack.c.l.b16 %v7801
    %v8147 = vunpack.c.l.b16 %v7815
    %v8148 = vunpack.c.l.b16 %v7829
    %v8149 = vunpack.c.l.b16 %v7843
    %v8150 = vunpack.c.l.b16 %v7857
    %v8151 = vunpack.c.l.b16 %v7871
    %v8152 = vunpack.c.l.b16 %v7885
    %v8153 = vunpack.c.l.b16 %v7899
    %v8154 = vunpack.c.l.b16 %v7913
    %v8155 = vunpack.c.l.b16 %v7927
    %v8156 = vunpack.c.l.b16 %v7941
    %v8157 = vunpack.c.l.b16 %v7955
    %v8158 = vunpack.c.l.b16 %v7969
    %v8159 = vunpack.c.l.b16 %v7983
    %v8160 = vpack.c.b16 %v8145, %v8144
    %v8161 = vpack.c.b16 %v8147, %v8146
    %v8162 = vpack.c.b16 %v8149, %v8148
    %v8163 = vpack.c.b16 %v8151, %v8150
    %v8164 = vpack.c.b16 %v8153, %v8152
    %v8165 = vpack.c.b16 %v8155, %v8154
    %v8166 = vpack.c.b16 %v8157, %v8156
    %v8167 = vpack.c.b16 %v8159, %v8158
    %v8176 = vunpack.c.l.b16 %v8035
    %v8177 = vunpack.c.l.b16 %v8039
    %v8178 = vunpack.c.l.b16 %v8043
    %v8179 = vunpack.c.l.b16 %v8047
    %v8180 = vunpack.c.l.b16 %v8051
    %v8181 = vunpack.c.l.b16 %v8055
    %v8182 = vunpack.c.l.b16 %v8059
    %v8183 = vunpack.c.l.b16 %v8063
    %v8184 = vunpack.c.l.b16 %v8067
    %v8185 = vunpack.c.l.b16 %v8071
    %v8186 = vunpack.c.l.b16 %v8075
    %v8187 = vunpack.c.l.b16 %v8079
    %v8188 = vunpack.c.l.b16 %v8083
    %v8189 = vunpack.c.l.b16 %v8087
    %v8190 = vunpack.c.l.b16 %v8091
    %v8191 = vunpack.c.l.b16 %v8095
    %v8192 = vpack.c.b16 %v8177, %v8176
    %v8193 = vpack.c.b16 %v8179, %v8178
    %v8194 = vpack.c.b16 %v8181, %v8180
    %v8195 = vpack.c.b16 %v8183, %v8182
    %v8196 = vpack.c.b16 %v8185, %v8184
    %v8197 = vpack.c.b16 %v8187, %v8186
    %v8198 = vpack.c.b16 %v8189, %v8188
    %v8199 = vpack.c.b16 %v8191, %v8190
    %s8208 = scalar_lea.vmem [#allocation12], 384
    %v8209 = vld [vmem:[%s8208] sm:$0xf]
    %v8210 = vld [vmem:[%s8208 + $0x4] sm:$0xf]
    %v8211 = vld [vmem:[%s8208 + $0x8] sm:$0xf]
    %v8212 = vld [vmem:[%s8208 + $0xc] sm:$0xf]
    %v8213 = vld [vmem:[%s8208 + $0x10] sm:$0xf]
    %v8214 = vld [vmem:[%s8208 + $0x14] sm:$0xf]
    %v8215 = vld [vmem:[%s8208 + $0x18] sm:$0xf]
    %v8216 = vld [vmem:[%s8208 + $0x1c] sm:$0xf]
    %v8217 = vld [vmem:[%s8208 + $0x20] sm:$0xf]
    %v8218 = vld [vmem:[%s8208 + $0x24] sm:$0xf]
    %v8219 = vld [vmem:[%s8208 + $0x28] sm:$0xf]
    %v8220 = vld [vmem:[%s8208 + $0x2c] sm:$0xf]
    %v8221 = vld [vmem:[%s8208 + $0x30] sm:$0xf]
    %v8222 = vld [vmem:[%s8208 + $0x34] sm:$0xf]
    %v8223 = vld [vmem:[%s8208 + $0x38] sm:$0xf]
    %v8224 = vld [vmem:[%s8208 + $0x3c] sm:$0xf]
    %v8225 = vld [vmem:[%s8208 + $0x40] sm:$0xf]
    %v8226 = vld [vmem:[%s8208 + $0x44] sm:$0xf]
    %v8227 = vld [vmem:[%s8208 + $0x48] sm:$0xf]
    %v8228 = vld [vmem:[%s8208 + $0x4c] sm:$0xf]
    %v8229 = vld [vmem:[%s8208 + $0x50] sm:$0xf]
    %v8230 = vld [vmem:[%s8208 + $0x54] sm:$0xf]
    %v8231 = vld [vmem:[%s8208 + $0x58] sm:$0xf]
    %v8232 = vld [vmem:[%s8208 + $0x5c] sm:$0xf]
    %v8233 = vld [vmem:[%s8208 + $0x60] sm:$0xf]
    %v8234 = vld [vmem:[%s8208 + $0x64] sm:$0xf]
    %v8235 = vld [vmem:[%s8208 + $0x68] sm:$0xf]
    %v8236 = vld [vmem:[%s8208 + $0x6c] sm:$0xf]
    %v8237 = vld [vmem:[%s8208 + $0x70] sm:$0xf]
    %v8238 = vld [vmem:[%s8208 + $0x74] sm:$0xf]
    %v8239 = vld [vmem:[%s8208 + $0x78] sm:$0xf]
    %v8240 = vld [vmem:[%s8208 + $0x7c] sm:$0xf]
    %v8241 = vld [vmem:[%s8208 + $0x80] sm:$0xf]
    %v8242 = vld [vmem:[%s8208 + $0x84] sm:$0xf]
    %v8243 = vld [vmem:[%s8208 + $0x88] sm:$0xf]
    %v8244 = vld [vmem:[%s8208 + $0x8c] sm:$0xf]
    %v8245 = vld [vmem:[%s8208 + $0x90] sm:$0xf]
    %v8246 = vld [vmem:[%s8208 + $0x94] sm:$0xf]
    %v8247 = vld [vmem:[%s8208 + $0x98] sm:$0xf]
    %v8248 = vld [vmem:[%s8208 + $0x9c] sm:$0xf]
    %v8249 = vld [vmem:[%s8208 + $0xa0] sm:$0xf]
    %v8250 = vld [vmem:[%s8208 + $0xa4] sm:$0xf]
    %v8251 = vld [vmem:[%s8208 + $0xa8] sm:$0xf]
    %v8252 = vld [vmem:[%s8208 + $0xac] sm:$0xf]
    %v8253 = vld [vmem:[%s8208 + $0xb0] sm:$0xf]
    %v8254 = vld [vmem:[%s8208 + $0xb4] sm:$0xf]
    %v8255 = vld [vmem:[%s8208 + $0xb8] sm:$0xf]
    %v8256 = vld [vmem:[%s8208 + $0xbc] sm:$0xf]
    %v8305 = vunpack.c.l.b16 %v8209
    %v8306 = vunpack.c.l.b16 %v8210
    %v8307 = vunpack.c.l.b16 %v8211
    %v8308 = vunpack.c.l.b16 %v8212
    %v8309 = vunpack.c.l.b16 %v8213
    %v8310 = vunpack.c.l.b16 %v8214
    %v8311 = vunpack.c.l.b16 %v8215
    %v8312 = vunpack.c.l.b16 %v8216
    %v8313 = vunpack.c.l.b16 %v8217
    %v8314 = vunpack.c.l.b16 %v8218
    %v8315 = vunpack.c.l.b16 %v8219
    %v8316 = vunpack.c.l.b16 %v8220
    %v8317 = vunpack.c.l.b16 %v8221
    %v8318 = vunpack.c.l.b16 %v8222
    %v8319 = vunpack.c.l.b16 %v8223
    %v8320 = vunpack.c.l.b16 %v8224
    %v8321 = vunpack.c.l.b16 %v8225
    %v8322 = vunpack.c.l.b16 %v8226
    %v8323 = vunpack.c.l.b16 %v8227
    %v8324 = vunpack.c.l.b16 %v8228
    %v8325 = vunpack.c.l.b16 %v8229
    %v8326 = vunpack.c.l.b16 %v8230
    %v8327 = vunpack.c.l.b16 %v8231
    %v8328 = vunpack.c.l.b16 %v8232
    %v8329 = vunpack.c.l.b16 %v8233
    %v8330 = vunpack.c.l.b16 %v8234
    %v8331 = vunpack.c.l.b16 %v8235
    %v8332 = vunpack.c.l.b16 %v8236
    %v8333 = vunpack.c.l.b16 %v8237
    %v8334 = vunpack.c.l.b16 %v8238
    %v8335 = vunpack.c.l.b16 %v8239
    %v8336 = vunpack.c.l.b16 %v8240
    %v8337 = vunpack.c.l.b16 %v8241
    %v8338 = vunpack.c.l.b16 %v8242
    %v8339 = vunpack.c.l.b16 %v8243
    %v8340 = vunpack.c.l.b16 %v8244
    %v8341 = vunpack.c.l.b16 %v8245
    %v8342 = vunpack.c.l.b16 %v8246
    %v8343 = vunpack.c.l.b16 %v8247
    %v8344 = vunpack.c.l.b16 %v8248
    %v8345 = vunpack.c.l.b16 %v8249
    %v8346 = vunpack.c.l.b16 %v8250
    %v8347 = vunpack.c.l.b16 %v8251
    %v8348 = vunpack.c.l.b16 %v8252
    %v8349 = vunpack.c.l.b16 %v8253
    %v8350 = vunpack.c.l.b16 %v8254
    %v8351 = vunpack.c.l.b16 %v8255
    %v8352 = vunpack.c.l.b16 %v8256
    %v8353 = vpack.c.b16 %v8306, %v8305
    %v8354 = vpack.c.b16 %v8308, %v8307
    %v8355 = vpack.c.b16 %v8310, %v8309
    %v8356 = vpack.c.b16 %v8312, %v8311
    %v8357 = vpack.c.b16 %v8314, %v8313
    %v8358 = vpack.c.b16 %v8316, %v8315
    %v8359 = vpack.c.b16 %v8318, %v8317
    %v8360 = vpack.c.b16 %v8320, %v8319
    %v8361 = vpack.c.b16 %v8322, %v8321
    %v8362 = vpack.c.b16 %v8324, %v8323
    %v8363 = vpack.c.b16 %v8326, %v8325
    %v8364 = vpack.c.b16 %v8328, %v8327
    %v8365 = vpack.c.b16 %v8330, %v8329
    %v8366 = vpack.c.b16 %v8332, %v8331
    %v8367 = vpack.c.b16 %v8334, %v8333
    %v8368 = vpack.c.b16 %v8336, %v8335
    %v8369 = vpack.c.b16 %v8338, %v8337
    %v8370 = vpack.c.b16 %v8340, %v8339
    %v8371 = vpack.c.b16 %v8342, %v8341
    %v8372 = vpack.c.b16 %v8344, %v8343
    %v8373 = vpack.c.b16 %v8346, %v8345
    %v8374 = vpack.c.b16 %v8348, %v8347
    %v8375 = vpack.c.b16 %v8350, %v8349
    %v8376 = vpack.c.b16 %v8352, %v8351
    %8401 = vmatprep.subr.bf16.mxu0 0
    %8402 = vmatpush1.bf16.msra.mxu0 %v8353
    %8403 = vmatprep.subr.bf16.mxu0 0
    %8404 = vmatpush1.bf16.msra.mxu0 %v8354
    %8405 = vmatprep.subr.bf16.mxu0 0
    %8406 = vmatpush1.bf16.msra.mxu0 %v8355
    %8407 = vmatprep.subr.bf16.mxu0 0
    %8408 = vmatpush1.bf16.msra.mxu0 %v8356
    %8409 = vmatprep.subr.bf16.mxu0 0
    %8410 = vmatpush1.bf16.msra.mxu0 %v8357
    %8411 = vmatprep.subr.bf16.mxu0 0
    %8412 = vmatpush1.bf16.msra.mxu0 %v8358
    %8413 = vmatprep.subr.bf16.mxu0 0
    %8414 = vmatpush1.bf16.msra.mxu0 %v8359
    %8415 = vmatprep.subr.bf16.mxu0 0
    %8416 = vmatpush1.bf16.msra.mxu0 %v8360
    %8417 = vmatprep.subr.bf16.mxu0 0
    %8418 = vmatpush1.bf16.msra.mxu0 %v8361
    %8419 = vmatprep.subr.bf16.mxu0 0
    %8420 = vmatpush1.bf16.msra.mxu0 %v8362
    %8421 = vmatprep.subr.bf16.mxu0 0
    %8422 = vmatpush1.bf16.msra.mxu0 %v8363
    %8423 = vmatprep.subr.bf16.mxu0 0
    %8424 = vmatpush1.bf16.msra.mxu0 %v8364
    %8425 = vmatprep.subr.bf16.mxu0 0
    %8426 = vmatpush1.bf16.msra.mxu0 %v8365
    %8427 = vmatprep.subr.bf16.mxu0 0
    %8428 = vmatpush1.bf16.msra.mxu0 %v8366
    %8429 = vmatprep.subr.bf16.mxu0 0
    %8430 = vmatpush1.bf16.msra.mxu0 %v8367
    %8431 = vmatprep.subr.bf16.mxu0 0
    %8432 = vmatpush1.bf16.msra.mxu0 %v8368
    %8433 = vmatprep.mubr.bf16.mxu0 %v8160
    %8434 = vmatmul.mubr.bf16.gmra.mrb[0].mxu0 %v8128
    %v8435 = vpop.f32.mrb[0].mxu0
    %v8436 = vadd.f32 0.0, %v8435
    %v8437 = vpop.f32.mrb[0].mxu0
    %v8438 = vpop.f32.mrb[0].mxu0
    %v8439 = vadd.f32 0.0, %v8438
    %v8440 = vpop.f32.mrb[0].mxu0
    %8441 = vmatprep.mubr.bf16.mxu0 %v8161
    %8442 = vmatmul.mubr.bf16.gmra.mrb[0].mxu0 %v8129
    %v8443 = vpop.f32.mrb[0].mxu0
    %v8444 = vadd.f32 0.0, %v8443
    %v8445 = vpop.f32.mrb[0].mxu0
    %v8446 = vpop.f32.mrb[0].mxu0
    %v8447 = vadd.f32 0.0, %v8446
    %v8448 = vpop.f32.mrb[0].mxu0
    %8449 = vmatprep.mubr.bf16.mxu0 %v8162
    %8450 = vmatmul.mubr.bf16.gmra.mrb[0].mxu0 %v8130
    %v8451 = vpop.f32.mrb[0].mxu0
    %v8452 = vadd.f32 0.0, %v8451
    %v8453 = vpop.f32.mrb[0].mxu0
    %v8454 = vpop.f32.mrb[0].mxu0
    %v8455 = vadd.f32 0.0, %v8454
    %v8456 = vpop.f32.mrb[0].mxu0
    %8457 = vmatprep.mubr.bf16.mxu0 %v8163
    %8458 = vmatmul.mubr.bf16.gmra.mrb[0].mxu0 %v8131
    %v8459 = vpop.f32.mrb[0].mxu0
    %v8460 = vadd.f32 0.0, %v8459
    %v8461 = vpop.f32.mrb[0].mxu0
    %v8462 = vpop.f32.mrb[0].mxu0
    %v8463 = vadd.f32 0.0, %v8462
    %v8464 = vpop.f32.mrb[0].mxu0
    %8465 = vmatprep.mubr.bf16.mxu0 %v8164
    %8466 = vmatmul.mubr.bf16.gmra.mrb[0].mxu0 %v8132
    %v8467 = vpop.f32.mrb[0].mxu0
    %v8468 = vadd.f32 0.0, %v8467
    %v8469 = vpop.f32.mrb[0].mxu0
    %v8470 = vpop.f32.mrb[0].mxu0
    %v8471 = vadd.f32 0.0, %v8470
    %v8472 = vpop.f32.mrb[0].mxu0
    %8473 = vmatprep.mubr.bf16.mxu0 %v8165
    %8474 = vmatmul.mubr.bf16.gmra.mrb[0].mxu0 %v8133
    %v8475 = vpop.f32.mrb[0].mxu0
    %v8476 = vadd.f32 0.0, %v8475
    %v8477 = vpop.f32.mrb[0].mxu0
    %v8478 = vpop.f32.mrb[0].mxu0
    %v8479 = vadd.f32 0.0, %v8478
    %v8480 = vpop.f32.mrb[0].mxu0
    %8481 = vmatprep.mubr.bf16.mxu0 %v8166
    %8482 = vmatmul.mubr.bf16.gmra.mrb[0].mxu0 %v8134
    %v8483 = vpop.f32.mrb[0].mxu0
    %v8484 = vadd.f32 0.0, %v8483
    %v8485 = vpop.f32.mrb[0].mxu0
    %v8486 = vpop.f32.mrb[0].mxu0
    %v8487 = vadd.f32 0.0, %v8486
    %v8488 = vpop.f32.mrb[0].mxu0
    %8489 = vmatprep.mubr.bf16.mxu0 %v8167
    %8490 = vmatmul.mubr.bf16.gmra.mrb[0].mxu0 %v8135
    %v8491 = vpop.f32.mrb[0].mxu0
    %v8492 = vadd.f32 0.0, %v8491
    %v8493 = vpop.f32.mrb[0].mxu0
    %v8494 = vpop.f32.mrb[0].mxu0
    %v8495 = vadd.f32 0.0, %v8494
    %v8496 = vpop.f32.mrb[0].mxu0
    %8497 = vdwg.mxu0
    %8498 = vmatprep.subr.bf16.mxu0 0
    %8499 = vmatpush1.bf16.msra.mxu0 %v8369
    %8500 = vmatprep.subr.bf16.mxu0 0
    %8501 = vmatpush1.bf16.msra.mxu0 %v8370
    %8502 = vmatprep.subr.bf16.mxu0 0
    %8503 = vmatpush1.bf16.msra.mxu0 %v8371
    %8504 = vmatprep.subr.bf16.mxu0 0
    %8505 = vmatpush1.bf16.msra.mxu0 %v8372
    %8506 = vmatprep.subr.bf16.mxu0 0
    %8507 = vmatpush1.bf16.msra.mxu0 %v8373
    %8508 = vmatprep.subr.bf16.mxu0 0
    %8509 = vmatpush1.bf16.msra.mxu0 %v8374
    %8510 = vmatprep.subr.bf16.mxu0 0
    %8511 = vmatpush1.bf16.msra.mxu0 %v8375
    %8512 = vmatprep.subr.bf16.mxu0 0
    %8513 = vmatpush1.bf16.msra.mxu0 %v8376
    %8514 = vmatprep.subr.bf16.mxu0 0
    %8515 = vmatpush1.bf16.msra.mxu0 0
    %8516 = vmatprep.subr.bf16.mxu0 0
    %8517 = vmatpush1.bf16.msra.mxu0 0
    %8518 = vmatprep.subr.bf16.mxu0 0
    %8519 = vmatpush1.bf16.msra.mxu0 0
    %8520 = vmatprep.subr.bf16.mxu0 0
    %8521 = vmatpush1.bf16.msra.mxu0 0
    %8522 = vmatprep.subr.bf16.mxu0 0
    %8523 = vmatpush1.bf16.msra.mxu0 0
    %8524 = vmatprep.subr.bf16.mxu0 0
    %8525 = vmatpush1.bf16.msra.mxu0 0
    %8526 = vmatprep.subr.bf16.mxu0 0
    %8527 = vmatpush1.bf16.msra.mxu0 0
    %8528 = vmatprep.subr.bf16.mxu0 0
    %8529 = vmatpush1.bf16.msra.mxu0 0
    %8530 = vmatprep.mubr.bf16.mxu0 0
    %8531 = vmatmul.mubr.bf16.gmra.mrb[0].mxu0 %v8192
    %v8532 = vpop.f32.mrb[0].mxu0
    %v8533 = vadd.f32 %v8436, %v8532
    %v8534 = vpop.f32.mrb[0].mxu0
    %v8535 = vpop.f32.mrb[0].mxu0
    %v8536 = vadd.f32 %v8439, %v8535
    %v8537 = vpop.f32.mrb[0].mxu0
    %8538 = vmatprep.mubr.bf16.mxu0 0
    %8539 = vmatmul.mubr.bf16.gmra.mrb[0].mxu0 %v8193
    %v8540 = vpop.f32.mrb[0].mxu0
    %v8541 = vadd.f32 %v8444, %v8540
    %v8542 = vpop.f32.mrb[0].mxu0
    %v8543 = vpop.f32.mrb[0].mxu0
    %v8544 = vadd.f32 %v8447, %v8543
    %v8545 = vpop.f32.mrb[0].mxu0
    %8546 = vmatprep.mubr.bf16.mxu0 0
    %8547 = vmatmul.mubr.bf16.gmra.mrb[0].mxu0 %v8194
    %v8548 = vpop.f32.mrb[0].mxu0
    %v8549 = vadd.f32 %v8452, %v8548
    %v8550 = vpop.f32.mrb[0].mxu0
    %v8551 = vpop.f32.mrb[0].mxu0
    %v8552 = vadd.f32 %v8455, %v8551
    %v8553 = vpop.f32.mrb[0].mxu0
    %8554 = vmatprep.mubr.bf16.mxu0 0
    %8555 = vmatmul.mubr.bf16.gmra.mrb[0].mxu0 %v8195
    %v8556 = vpop.f32.mrb[0].mxu0
    %v8557 = vadd.f32 %v8460, %v8556
    %v8558 = vpop.f32.mrb[0].mxu0
    %v8559 = vpop.f32.mrb[0].mxu0
    %v8560 = vadd.f32 %v8463, %v8559
    %v8561 = vpop.f32.mrb[0].mxu0
    %8562 = vmatprep.mubr.bf16.mxu0 0
    %8563 = vmatmul.mubr.bf16.gmra.mrb[0].mxu0 %v8196
    %v8564 = vpop.f32.mrb[0].mxu0
    %v8565 = vadd.f32 %v8468, %v8564
    %v8566 = vpop.f32.mrb[0].mxu0
    %v8567 = vpop.f32.mrb[0].mxu0
    %v8568 = vadd.f32 %v8471, %v8567
    %v8569 = vpop.f32.mrb[0].mxu0
    %8570 = vmatprep.mubr.bf16.mxu0 0
    %8571 = vmatmul.mubr.bf16.gmra.mrb[0].mxu0 %v8197
    %v8572 = vpop.f32.mrb[0].mxu0
    %v8573 = vadd.f32 %v8476, %v8572
    %v8574 = vpop.f32.mrb[0].mxu0
    %v8575 = vpop.f32.mrb[0].mxu0
    %v8576 = vadd.f32 %v8479, %v8575
    %v8577 = vpop.f32.mrb[0].mxu0
    %8578 = vmatprep.mubr.bf16.mxu0 0
    %8579 = vmatmul.mubr.bf16.gmra.mrb[0].mxu0 %v8198
    %v8580 = vpop.f32.mrb[0].mxu0
    %v8581 = vadd.f32 %v8484, %v8580
    %v8582 = vpop.f32.mrb[0].mxu0
    %v8583 = vpop.f32.mrb[0].mxu0
    %v8584 = vadd.f32 %v8487, %v8583
    %v8585 = vpop.f32.mrb[0].mxu0
    %8586 = vmatprep.mubr.bf16.mxu0 0
    %8587 = vmatmul.mubr.bf16.gmra.mrb[0].mxu0 %v8199
    %v8588 = vpop.f32.mrb[0].mxu0
    %v8589 = vadd.f32 %v8492, %v8588
    %v8590 = vpop.f32.mrb[0].mxu0
    %v8591 = vpop.f32.mrb[0].mxu0
    %v8592 = vadd.f32 %v8495, %v8591
    %v8593 = vpop.f32.mrb[0].mxu0
    %8594 = vdwg.mxu0
    %v8595 = vadd.f32 %v7665, %v8533
    %v8596 = vadd.f32 %v7668, %v8536
    %v8597 = vadd.f32 %v7673, %v8541
    %v8598 = vadd.f32 %v7676, %v8544
    %v8599 = vadd.f32 %v7681, %v8549
    %v8600 = vadd.f32 %v7684, %v8552
    %v8601 = vadd.f32 %v7689, %v8557
    %v8602 = vadd.f32 %v7692, %v8560
    %v8603 = vadd.f32 %v7697, %v8565
    %v8604 = vadd.f32 %v7700, %v8568
    %v8605 = vadd.f32 %v7705, %v8573
    %v8606 = vadd.f32 %v7708, %v8576
    %v8607 = vadd.f32 %v7713, %v8581
    %v8608 = vadd.f32 %v7716, %v8584
    %v8609 = vadd.f32 %v7721, %v8589
    %v8610 = vadd.f32 %v7724, %v8592
    %v8611 = vld [vmem:[%s7] sm:$0x1]
    %v8612 = vld [vmem:[%s8] sm:$0x1]
    %v8613 = vadd.f32 %v8595, %v8596
    %v8614 = vadd.f32 %v8613, %v8597
    %v8615 = vadd.f32 %v8614, %v8598
    %v8616 = vadd.f32 %v8615, %v8599
    %v8617 = vadd.f32 %v8616, %v8600
    %v8618 = vadd.f32 %v8617, %v8601
    %v8619 = vadd.f32 %v8618, %v8602
    %v8620 = vadd.f32 %v8619, %v8603
    %v8621 = vadd.f32 %v8620, %v8604
    %v8622 = vadd.f32 %v8621, %v8605
    %v8623 = vadd.f32 %v8622, %v8606
    %v8624 = vadd.f32 %v8623, %v8607
    %v8625 = vadd.f32 %v8624, %v8608
    %v8626 = vadd.f32 %v8625, %v8609
    %v8627 = vadd.f32 %v8626, %v8610
    %v8628 = vrot.slane %v8627, 4
    %v8629 = vadd.f32 %v8627, %v8628
    %v8630 = vrot.slane %v8629, 2
    %v8631 = vadd.f32 %v8629, %v8630
    %v8632 = vrot.slane %v8631, 1
    %v8633 = vadd.f32 %v8631, %v8632
    %v8634 = vmul.f32 %v8633, %v5422
    %v8635 = vsub.f32 %v8595, %v8634
    %v8636 = vsub.f32 %v8596, %v8634
    %v8637 = vsub.f32 %v8597, %v8634
    %v8638 = vsub.f32 %v8598, %v8634
    %v8639 = vsub.f32 %v8599, %v8634
    %v8640 = vsub.f32 %v8600, %v8634
    %v8641 = vsub.f32 %v8601, %v8634
    %v8642 = vsub.f32 %v8602, %v8634
    %v8643 = vsub.f32 %v8603, %v8634
    %v8644 = vsub.f32 %v8604, %v8634
    %v8645 = vsub.f32 %v8605, %v8634
    %v8646 = vsub.f32 %v8606, %v8634
    %v8647 = vsub.f32 %v8607, %v8634
    %v8648 = vsub.f32 %v8608, %v8634
    %v8649 = vsub.f32 %v8609, %v8634
    %v8650 = vsub.f32 %v8610, %v8634
    %v8651 = vmul.f32 %v8635, %v8635
    %v8652 = vmul.f32 %v8636, %v8636
    %v8653 = vmul.f32 %v8637, %v8637
    %v8654 = vmul.f32 %v8638, %v8638
    %v8655 = vmul.f32 %v8639, %v8639
    %v8656 = vmul.f32 %v8640, %v8640
    %v8657 = vmul.f32 %v8641, %v8641
    %v8658 = vmul.f32 %v8642, %v8642
    %v8659 = vmul.f32 %v8643, %v8643
    %v8660 = vmul.f32 %v8644, %v8644
    %v8661 = vmul.f32 %v8645, %v8645
    %v8662 = vmul.f32 %v8646, %v8646
    %v8663 = vmul.f32 %v8647, %v8647
    %v8664 = vmul.f32 %v8648, %v8648
    %v8665 = vmul.f32 %v8649, %v8649
    %v8666 = vmul.f32 %v8650, %v8650
    %v8667 = vadd.f32 %v8651, %v8652
    %v8668 = vadd.f32 %v8667, %v8653
    %v8669 = vadd.f32 %v8668, %v8654
    %v8670 = vadd.f32 %v8669, %v8655
    %v8671 = vadd.f32 %v8670, %v8656
    %v8672 = vadd.f32 %v8671, %v8657
    %v8673 = vadd.f32 %v8672, %v8658
    %v8674 = vadd.f32 %v8673, %v8659
    %v8675 = vadd.f32 %v8674, %v8660
    %v8676 = vadd.f32 %v8675, %v8661
    %v8677 = vadd.f32 %v8676, %v8662
    %v8678 = vadd.f32 %v8677, %v8663
    %v8679 = vadd.f32 %v8678, %v8664
    %v8680 = vadd.f32 %v8679, %v8665
    %v8681 = vadd.f32 %v8680, %v8666
    %v8682 = vrot.slane %v8681, 4
    %v8683 = vadd.f32 %v8681, %v8682
    %v8684 = vrot.slane %v8683, 2
    %v8685 = vadd.f32 %v8683, %v8684
    %v8686 = vrot.slane %v8685, 1
    %v8687 = vadd.f32 %v8685, %v8686
    %v8688 = vmul.f32 %v8687, %v5422
    %v8689 = vadd.f32 %v8688, 1e-05
    %v8690 = vrsqrt.pop %v8689
    %v8691 = vmul.f32 %v8635, %v8690
    %v8692 = vmul.f32 %v8636, %v8690
    %v8693 = vmul.f32 %v8637, %v8690
    %v8694 = vmul.f32 %v8638, %v8690
    %v8695 = vmul.f32 %v8639, %v8690
    %v8696 = vmul.f32 %v8640, %v8690
    %v8697 = vmul.f32 %v8641, %v8690
    %v8698 = vmul.f32 %v8642, %v8690
    %v8699 = vmul.f32 %v8643, %v8690
    %v8700 = vmul.f32 %v8644, %v8690
    %v8701 = vmul.f32 %v8645, %v8690
    %v8702 = vmul.f32 %v8646, %v8690
    %v8703 = vmul.f32 %v8647, %v8690
    %v8704 = vmul.f32 %v8648, %v8690
    %v8705 = vmul.f32 %v8649, %v8690
    %v8706 = vmul.f32 %v8650, %v8690
    %v8708 = vlaneseq
    %v8709 = vshrl.u32 %v8708, 7
    %v8710 = vsub.s32 0, %v8709
    %v8711 = vrot.slane %v8611, %v8710
    %v8713 = vmul.f32 %v8691, %v8711
    %v8714 = vmul.f32 %v8692, %v8711
    %v8715 = vmul.f32 %v8693, %v8711
    %v8716 = vmul.f32 %v8694, %v8711
    %v8717 = vmul.f32 %v8695, %v8711
    %v8718 = vmul.f32 %v8696, %v8711
    %v8719 = vmul.f32 %v8697, %v8711
    %v8720 = vmul.f32 %v8698, %v8711
    %v8721 = vmul.f32 %v8699, %v8711
    %v8722 = vmul.f32 %v8700, %v8711
    %v8723 = vmul.f32 %v8701, %v8711
    %v8724 = vmul.f32 %v8702, %v8711
    %v8725 = vmul.f32 %v8703, %v8711
    %v8726 = vmul.f32 %v8704, %v8711
    %v8727 = vmul.f32 %v8705, %v8711
    %v8728 = vmul.f32 %v8706, %v8711
    %v8730 = vlaneseq
    %v8731 = vshrl.u32 %v8730, 7
    %v8732 = vsub.s32 0, %v8731
    %v8733 = vrot.slane %v8612, %v8732
    %v8735 = vadd.f32 %v8713, %v8733
    %v8736 = vadd.f32 %v8714, %v8733
    %v8737 = vadd.f32 %v8715, %v8733
    %v8738 = vadd.f32 %v8716, %v8733
    %v8739 = vadd.f32 %v8717, %v8733
    %v8740 = vadd.f32 %v8718, %v8733
    %v8741 = vadd.f32 %v8719, %v8733
    %v8742 = vadd.f32 %v8720, %v8733
    %v8743 = vadd.f32 %v8721, %v8733
    %v8744 = vadd.f32 %v8722, %v8733
    %v8745 = vadd.f32 %v8723, %v8733
    %v8746 = vadd.f32 %v8724, %v8733
    %v8747 = vadd.f32 %v8725, %v8733
    %v8748 = vadd.f32 %v8726, %v8733
    %v8749 = vadd.f32 %v8727, %v8733
    %v8750 = vadd.f32 %v8728, %v8733
    %v8751 = vsel %vm141, %v2332, 0.0
    %v8752 = vsel %vm141, %v2333, 0.0
    %v8753 = vsel %vm141, %v2334, 0.0
    %v8754 = vsel %vm141, %v2335, 0.0
    %v8755 = vsel %vm141, %v2336, 0.0
    %v8756 = vsel %vm141, %v2337, 0.0
    %v8757 = vsel %vm141, %v2338, 0.0
    %v8758 = vsel %vm141, %v2339, 0.0
    %v8759 = vsel %vm141, %v2340, 0.0
    %v8760 = vsel %vm141, %v2341, 0.0
    %v8761 = vsel %vm141, %v2342, 0.0
    %v8762 = vsel %vm141, %v2343, 0.0
    %v8763 = vsel %vm141, %v2344, 0.0
    %v8764 = vsel %vm141, %v2345, 0.0
    %v8765 = vsel %vm141, %v2346, 0.0
    %v8766 = vsel %vm141, %v2347, 0.0
    %v8767 = vadd.f32 %v8735, %v8751
    %v8768 = vadd.f32 %v8736, %v8752
    %v8769 = vadd.f32 %v8737, %v8753
    %v8770 = vadd.f32 %v8738, %v8754
    %v8771 = vadd.f32 %v8739, %v8755
    %v8772 = vadd.f32 %v8740, %v8756
    %v8773 = vadd.f32 %v8741, %v8757
    %v8774 = vadd.f32 %v8742, %v8758
    %v8775 = vadd.f32 %v8743, %v8759
    %v8776 = vadd.f32 %v8744, %v8760
    %v8777 = vadd.f32 %v8745, %v8761
    %v8778 = vadd.f32 %v8746, %v8762
    %v8779 = vadd.f32 %v8747, %v8763
    %v8780 = vadd.f32 %v8748, %v8764
    %v8781 = vadd.f32 %v8749, %v8765
    %v8782 = vadd.f32 %v8750, %v8766
    %vm8783 = vcmask 195584
    %8784 = vst.msk [vmem:[#allocation13] sm:$0xff] %vm8783, %v8767
    %8785 = vst.msk [vmem:[#allocation13 + $0x8] sm:$0xff] %vm8783, %v8768
    %8786 = vst.msk [vmem:[#allocation13 + $0x10] sm:$0xff] %vm8783, %v8769
    %8787 = vst.msk [vmem:[#allocation13 + $0x18] sm:$0xff] %vm8783, %v8770
    %8788 = vst.msk [vmem:[#allocation13 + $0x20] sm:$0xff] %vm8783, %v8771
    %8789 = vst.msk [vmem:[#allocation13 + $0x28] sm:$0xff] %vm8783, %v8772
    %8790 = vst.msk [vmem:[#allocation13 + $0x30] sm:$0xff] %vm8783, %v8773
    %8791 = vst.msk [vmem:[#allocation13 + $0x38] sm:$0xff] %vm8783, %v8774
    %8792 = vst.msk [vmem:[#allocation13 + $0x40] sm:$0xff] %vm8783, %v8775
    %8793 = vst.msk [vmem:[#allocation13 + $0x48] sm:$0xff] %vm8783, %v8776
    %8794 = vst.msk [vmem:[#allocation13 + $0x50] sm:$0xff] %vm8783, %v8777
    %8795 = vst.msk [vmem:[#allocation13 + $0x58] sm:$0xff] %vm8783, %v8778
    %8796 = vst.msk [vmem:[#allocation13 + $0x60] sm:$0xff] %vm8783, %v8779
    %8797 = vst.msk [vmem:[#allocation13 + $0x68] sm:$0xff] %vm8783, %v8780
    %8798 = vst.msk [vmem:[#allocation13 + $0x70] sm:$0xff] %vm8783, %v8781
    %8799 = vst.msk [vmem:[#allocation13 + $0x78] sm:$0xff] %vm8783, %v8782
    // Predicated region
    $region50: #{tpu_custom_call.1} parent=1 // pred_check
      _
    $region51: #{tpu_custom_call.1} parent=1 // pred_check_branch
      %8801 = sbr.rel (0) target = $region53
    $region52: #{tpu_custom_call.1} parent=1 // pred_region
      %s8803 = ssub.s32 2048, 2048
      %8804 = vsyncadd [#allocation9], %s8803
      %s8805 = sshll.u32 [#allocation13], 4
      %s8806 = int_to_ptr.vmem [resolvable:$true] %s8805
      %8811 = dma.vmem_to_hbm [thread:$0]  %s8806, 2048, %s9, [#allocation9], 128, 128, 8
    $region53: #{tpu_custom_call.1} parent=1 // pred_fallthru
      _
    // Predicated region
    $region54: #{tpu_custom_call.1} parent=1 // pred_check
      _
    $region55: #{tpu_custom_call.1} parent=1 // pred_check_branch
      %8813 = sbr.rel (0) target = $region57
    $region56: #{tpu_custom_call.1} parent=1 // pred_region
      %8814 = dma.done [#allocation9], 2048
    $region57: #{tpu_custom_call.1} parent=1 // pred_fallthru
      _
    %8815 = vsyncpa [#allocation8], 1
    %8816 = vsyncpa [#allocation11], 1
    %8817 = vsyncpa [#allocation9], 1

</llo_original>
